<compile_context>
chip_gen: v7x
topology: tpu7x:2x2x1
jax: 0.10.0
libtpu: 0.0.40
codegen_flags: <defaults>
</compile_context>

<pallas_src>
import math
from functools import partial

import jax
import jax.numpy as jnp
from jax import lax
from jax.experimental import pallas as pl
from jax.experimental.pallas import tpu as pltpu


_VMEM_LIMIT_BYTES = 48 * 1024 * 1024   # above default scoped limits, safe on v5e/v6e/v7x


def _pick_tile(n, cap):
    """Largest power-of-two tile <= cap that divides n (falls back to n)."""
    best = n
    for t in (8, 16, 32, 64, 128, 256, 512):
        if t <= cap and t <= n and n % t == 0:
            best = t
    return best


def qkv_proj_kernel(x_ref, wq_ref, wk_ref, wv_ref, bq_ref, bk_ref, bv_ref,
                    q_ref, k_ref, v_ref, *, num_heads, scale):
    # x_ref: (1, TS, D) bf16; w*_ref: (H, D, hd) bf16 (pre-transposed); b*_ref: (H, 1, hd) f32
    # outputs: (1, H, TS, hd) bf16 -- heads on a leading axis, head_dim on lanes.
    x = x_ref[0]
    for h in range(num_heads):                       # static, unrolled
        q = jnp.dot(x, wq_ref[h], preferred_element_type=jnp.float32) + bq_ref[h]
        k = jnp.dot(x, wk_ref[h], preferred_element_type=jnp.float32) + bk_ref[h]
        v = jnp.dot(x, wv_ref[h], preferred_element_type=jnp.float32) + bv_ref[h]
        # fold the 1/sqrt(head_dim) attention scale into q (in f32, before the bf16 cast)
        q_ref[0, h] = (q * scale).astype(q_ref.dtype)
        k_ref[0, h] = k.astype(k_ref.dtype)
        v_ref[0, h] = v.astype(v_ref.dtype)


def attn_kernel(q_ref, k_ref, v_ref, wo_ref, bo_ref, o_ref, acc_ref, *, num_heads):
    # q_ref: (1, H, TQ, hd) bf16 (pre-scaled); k_ref/v_ref: (1, H, S, hd) bf16
    # wo_ref: (H, hd, E) bf16 (pre-transposed, head-major); bo_ref: (1, E) f32
    # o_ref: (1, TQ, E); acc_ref: (TQ, E) f32 VMEM scratch accumulator
    acc_ref[...] = jnp.zeros_like(acc_ref)
    for h in range(num_heads):                       # static, unrolled
        q = q_ref[0, h]                              # (TQ, hd)
        k = k_ref[0, h]                              # (S, hd)
        v = v_ref[0, h]                              # (S, hd)
        # contract head_dim of both operands -> (TQ, S); no k transpose materialized
        logits = lax.dot_general(q, k, (((1,), (1,)), ((), ())),
                                 preferred_element_type=jnp.float32)
        # numerically stable softmax in f32 (v5e has no bf16 VPU/EUP)
        m = jnp.max(logits, axis=-1, keepdims=True)
        p = jnp.exp(logits - m)
        denom = jnp.sum(p, axis=-1, keepdims=True)
        attn = p * pl.reciprocal(denom, approx=True)
        vals = jnp.dot(attn.astype(v.dtype), v,
                       preferred_element_type=jnp.float32)              # (TQ, hd)
        # fused output projection, accumulated per head (no concatenate, lane-dense)
        acc_ref[...] += jnp.dot(vals.astype(wo_ref.dtype), wo_ref[h],
                                preferred_element_type=jnp.float32)     # (TQ, E)
    o_ref[0] = (acc_ref[...] + bo_ref[...]).astype(o_ref.dtype)


def multihead_attention(x, wqkv, bqkv, wo, bo, *, num_heads):
    """Forward pass of the PyTorch MultiheadAttention module (no mask, no attn return)."""
    B, S, D = x.shape
    E = wo.shape[0]
    assert E % num_heads == 0
    hd = E // num_heads
    out_dtype = x.dtype
    cdt = jnp.bfloat16                               # MXU operand dtype

    # ---- wrapper-side weight repacking (layout work outside the kernels) ----
    # qkv_proj.weight is (3E, D) with interleaved per-head [q_h | k_h | v_h] rows.
    w4 = wqkv.reshape(num_heads, 3, hd, D)
    wq = jnp.transpose(w4[:, 0], (0, 2, 1)).astype(cdt)            # (H, D, hd)
    wk = jnp.transpose(w4[:, 1], (0, 2, 1)).astype(cdt)
    wv = jnp.transpose(w4[:, 2], (0, 2, 1)).astype(cdt)
    b4 = bqkv.reshape(num_heads, 3, 1, hd).astype(jnp.float32)
    bq, bk, bv = b4[:, 0], b4[:, 1], b4[:, 2]                      # (H, 1, hd)
    wo_hm = jnp.transpose(wo).reshape(num_heads, hd, E).astype(cdt)  # (H, hd, E)
    bo2 = bo.reshape(1, E).astype(jnp.float32)

    xc = x.astype(cdt)

    s_tile = _pick_tile(S, 512)
    q_tile = _pick_tile(S, 256)          # conservative for v7x's 64 MiB VMEM
    scale = 1.0 / math.sqrt(hd)

    # ---- kernel 1: head-major Q/K/V projection ----
    qkv_out_shape = tuple(
        jax.ShapeDtypeStruct((B, num_heads, S, hd), cdt) for _ in range(3))
    q, k, v = pl.pallas_call(
        partial(qkv_proj_kernel, num_heads=num_heads, scale=scale),
        out_shape=qkv_out_shape,
        grid_spec=pltpu.PrefetchScalarGridSpec(
            num_scalar_prefetch=0,
            grid=(B, S // s_tile),
            in_specs=[
                pl.BlockSpec((1, s_tile, D), lambda b, s: (b, s, 0)),
                pl.BlockSpec((num_heads, D, hd), lambda b, s: (0, 0, 0)),
                pl.BlockSpec((num_heads, D, hd), lambda b, s: (0, 0, 0)),
                pl.BlockSpec((num_heads, D, hd), lambda b, s: (0, 0, 0)),
                pl.BlockSpec((num_heads, 1, hd), lambda b, s: (0, 0, 0)),
                pl.BlockSpec((num_heads, 1, hd), lambda b, s: (0, 0, 0)),
                pl.BlockSpec((num_heads, 1, hd), lambda b, s: (0, 0, 0)),
            ],
            out_specs=tuple(
                pl.BlockSpec((1, num_heads, s_tile, hd), lambda b, s: (b, 0, s, 0))
                for _ in range(3)),
        ),
        compiler_params=pltpu.CompilerParams(
            dimension_semantics=("parallel", "parallel"),
            vmem_limit_bytes=_VMEM_LIMIT_BYTES),
    )(xc, wq, wk, wv, bq, bk, bv)

    # ---- kernel 2: attention + fused output projection, Q tiled, full K/V resident ----
    out = pl.pallas_call(
        partial(attn_kernel, num_heads=num_heads),
        out_shape=jax.ShapeDtypeStruct((B, S, E), out_dtype),
        grid_spec=pltpu.PrefetchScalarGridSpec(
            num_scalar_prefetch=0,
            grid=(B, S // q_tile),
            in_specs=[
                pl.BlockSpec((1, num_heads, q_tile, hd), lambda b, t: (b, 0, t, 0)),
                pl.BlockSpec((1, num_heads, S, hd), lambda b, t: (b, 0, 0, 0)),
                pl.BlockSpec((1, num_heads, S, hd), lambda b, t: (b, 0, 0, 0)),
                pl.BlockSpec((num_heads, hd, E), lambda b, t: (0, 0, 0)),
                pl.BlockSpec((1, E), lambda b, t: (0, 0)),
            ],
            out_specs=pl.BlockSpec((1, q_tile, E), lambda b, t: (b, t, 0)),
            scratch_shapes=[pltpu.VMEM((q_tile, E), jnp.float32)],
        ),
        compiler_params=pltpu.CompilerParams(
            dimension_semantics=("parallel", "parallel"),
            vmem_limit_bytes=_VMEM_LIMIT_BYTES),
    )(q, k, v, wo_hm, bo2)

    return out


def xavier_uniform(key, shape):
    # PyTorch xavier_uniform_ for a Linear weight of shape (fan_out, fan_in)
    fan_out, fan_in = shape
    bound = math.sqrt(6.0 / (fan_in + fan_out))
    return jax.random.uniform(key, shape, jnp.float32, -bound, bound)


def reference_mha(x, wqkv, bqkv, wo, bo, *, num_heads):
    # Pure-JAX f32 reference matching the PyTorch module's forward exactly.
    B, S, D = x.shape
    E = wo.shape[0]
    hd = E // num_heads
    qkv = x @ wqkv.T + bqkv                                   # (B, S, 3E)
    qkv = qkv.reshape(B, S, num_heads, 3 * hd).transpose(0, 2, 1, 3)
    q, k, v = jnp.split(qkv, 3, axis=-1)
    logits = jnp.einsum("bhqd,bhkd->bhqk", q, k) / math.sqrt(hd)
    attn = jax.nn.softmax(logits, axis=-1)
    vals = jnp.einsum("bhqk,bhkd->bhqd", attn, v)
    vals = vals.transpose(0, 2, 1, 3).reshape(B, S, E)
    return vals @ wo.T + bo


if __name__ == "__main__":
    # Small but lane-aligned demo config: E multiple of 128 -> lane-dense output stores.
    B, S, input_dim = 2, 128, 64
    embed_dim, num_heads = 128, 4

    key = jax.random.PRNGKey(0)
    kx, kw1, kw2, kb1, kb2 = jax.random.split(key, 5)

    x = jax.random.normal(kx, (B, S, input_dim), jnp.float32)
    wqkv = xavier_uniform(kw1, (3 * embed_dim, input_dim))
    bqkv = 0.05 * jax.random.normal(kb1, (3 * embed_dim,), jnp.float32)
    wo = xavier_uniform(kw2, (embed_dim, embed_dim))
    bo = 0.05 * jax.random.normal(kb2, (embed_dim,), jnp.float32)

    mha = jax.jit(partial(multihead_attention, num_heads=num_heads))
    out = mha(x, wqkv, bqkv, wo, bo)
    out = jax.block_until_ready(out)

    ref = reference_mha(x, wqkv, bqkv, wo, bo, num_heads=num_heads)
    assert out.shape == (B, S, embed_dim)
    max_err = float(jnp.max(jnp.abs(out - ref)))
    # bf16 MXU operands -> loose-but-safe tolerance vs the f32 reference
    assert jnp.allclose(out, ref, atol=2e-2, rtol=2e-2), (
        f"mismatch vs reference, max abs err = {max_err}")

    print("KERNEL_OK")
</pallas_src>

<mosaic_0001>
module attributes {stable_mosaic.version = 11 : i64} {
  func.func @qkv_proj_kernel(%arg0: i32, %arg1: i32, %arg2: memref<1x128x64xbf16, #tpu.memory_space<vmem>>, %arg3: memref<4x64x32xbf16, #tpu.memory_space<vmem>>, %arg4: memref<4x64x32xbf16, #tpu.memory_space<vmem>>, %arg5: memref<4x64x32xbf16, #tpu.memory_space<vmem>>, %arg6: memref<4x1x32xf32, #tpu.memory_space<vmem>>, %arg7: memref<4x1x32xf32, #tpu.memory_space<vmem>>, %arg8: memref<4x1x32xf32, #tpu.memory_space<vmem>>, %arg9: memref<1x4x128x32xbf16, #tpu.memory_space<vmem>>, %arg10: memref<1x4x128x32xbf16, #tpu.memory_space<vmem>>, %arg11: memref<1x4x128x32xbf16, #tpu.memory_space<vmem>>) attributes {dimension_semantics = [#tpu.dimension_semantics<parallel>, #tpu.dimension_semantics<parallel>], iteration_bounds = array<i64: 2, 1>, scalar_prefetch = 0 : i64, scratch_operands = 0 : i64, tpu.core_type = #tpu.core_type<tc>, window_params = [{transform_indices = @transform_0, window_bounds = array<i64: 1, 128, 64>}, {pipeline_mode = #tpu.pipeline_mode<synchronous>, transform_indices = @transform_1, window_bounds = array<i64: 4, 64, 32>}, {pipeline_mode = #tpu.pipeline_mode<synchronous>, transform_indices = @transform_2, window_bounds = array<i64: 4, 64, 32>}, {pipeline_mode = #tpu.pipeline_mode<synchronous>, transform_indices = @transform_3, window_bounds = array<i64: 4, 64, 32>}, {pipeline_mode = #tpu.pipeline_mode<synchronous>, transform_indices = @transform_4, window_bounds = array<i64: 4, 1, 32>}, {pipeline_mode = #tpu.pipeline_mode<synchronous>, transform_indices = @transform_5, window_bounds = array<i64: 4, 1, 32>}, {pipeline_mode = #tpu.pipeline_mode<synchronous>, transform_indices = @transform_6, window_bounds = array<i64: 4, 1, 32>}, {transform_indices = @transform_7, window_bounds = array<i64: 1, 4, 128, 32>}, {transform_indices = @transform_8, window_bounds = array<i64: 1, 4, 128, 32>}, {transform_indices = @transform_9, window_bounds = array<i64: 1, 4, 128, 32>}]} {
    %c0 = arith.constant 0 : index
    %c0_0 = arith.constant 0 : index
    %c0_1 = arith.constant 0 : index
    %0 = vector.load %arg2[%c0, %c0_0, %c0_1] : memref<1x128x64xbf16, #tpu.memory_space<vmem>>, vector<1x128x64xbf16>
    %1 = vector.shape_cast %0 : vector<1x128x64xbf16> to vector<128x64xbf16>
    %c0_2 = arith.constant 0 : index
    %c0_3 = arith.constant 0 : index
    %c0_4 = arith.constant 0 : index
    %2 = vector.load %arg3[%c0_2, %c0_3, %c0_4] : memref<4x64x32xbf16, #tpu.memory_space<vmem>>, vector<1x64x32xbf16>
    %3 = vector.shape_cast %2 : vector<1x64x32xbf16> to vector<64x32xbf16>
    %cst = arith.constant dense<0.000000e+00> : vector<128x32xf32>
    %4 = tpu.matmul %1, %3, %cst {dimension_numbers = #tpu.dot_dimension_numbers<[1], [0], [0], [1], [0, 0, 1, 1], [], []>} : vector<128x64xbf16>, vector<64x32xbf16>, vector<128x32xf32> -> vector<128x32xf32>
    %c0_5 = arith.constant 0 : index
    %c0_6 = arith.constant 0 : index
    %c0_7 = arith.constant 0 : index
    %5 = vector.load %arg6[%c0_5, %c0_6, %c0_7] : memref<4x1x32xf32, #tpu.memory_space<vmem>>, vector<1x1x32xf32>
    %6 = vector.shape_cast %5 : vector<1x1x32xf32> to vector<1x32xf32>
    %7 = vector.broadcast %6 : vector<1x32xf32> to vector<128x32xf32>
    %8 = arith.addf %4, %7 : vector<128x32xf32>
    %c0_8 = arith.constant 0 : index
    %c0_9 = arith.constant 0 : index
    %c0_10 = arith.constant 0 : index
    %9 = vector.load %arg4[%c0_8, %c0_9, %c0_10] : memref<4x64x32xbf16, #tpu.memory_space<vmem>>, vector<1x64x32xbf16>
    %10 = vector.shape_cast %9 : vector<1x64x32xbf16> to vector<64x32xbf16>
    %cst_11 = arith.constant dense<0.000000e+00> : vector<128x32xf32>
    %11 = tpu.matmul %1, %10, %cst_11 {dimension_numbers = #tpu.dot_dimension_numbers<[1], [0], [0], [1], [0, 0, 1, 1], [], []>} : vector<128x64xbf16>, vector<64x32xbf16>, vector<128x32xf32> -> vector<128x32xf32>
    %c0_12 = arith.constant 0 : index
    %c0_13 = arith.constant 0 : index
    %c0_14 = arith.constant 0 : index
    %12 = vector.load %arg7[%c0_12, %c0_13, %c0_14] : memref<4x1x32xf32, #tpu.memory_space<vmem>>, vector<1x1x32xf32>
    %13 = vector.shape_cast %12 : vector<1x1x32xf32> to vector<1x32xf32>
    %14 = vector.broadcast %13 : vector<1x32xf32> to vector<128x32xf32>
    %15 = arith.addf %11, %14 : vector<128x32xf32>
    %c0_15 = arith.constant 0 : index
    %c0_16 = arith.constant 0 : index
    %c0_17 = arith.constant 0 : index
    %16 = vector.load %arg5[%c0_15, %c0_16, %c0_17] : memref<4x64x32xbf16, #tpu.memory_space<vmem>>, vector<1x64x32xbf16>
    %17 = vector.shape_cast %16 : vector<1x64x32xbf16> to vector<64x32xbf16>
    %cst_18 = arith.constant dense<0.000000e+00> : vector<128x32xf32>
    %18 = tpu.matmul %1, %17, %cst_18 {dimension_numbers = #tpu.dot_dimension_numbers<[1], [0], [0], [1], [0, 0, 1, 1], [], []>} : vector<128x64xbf16>, vector<64x32xbf16>, vector<128x32xf32> -> vector<128x32xf32>
    %c0_19 = arith.constant 0 : index
    %c0_20 = arith.constant 0 : index
    %c0_21 = arith.constant 0 : index
    %19 = vector.load %arg8[%c0_19, %c0_20, %c0_21] : memref<4x1x32xf32, #tpu.memory_space<vmem>>, vector<1x1x32xf32>
    %20 = vector.shape_cast %19 : vector<1x1x32xf32> to vector<1x32xf32>
    %21 = vector.broadcast %20 : vector<1x32xf32> to vector<128x32xf32>
    %22 = arith.addf %18, %21 : vector<128x32xf32>
    %cst_22 = arith.constant 0.176776692 : f32
    %23 = vector.broadcast %cst_22 : f32 to vector<128x32xf32>
    %24 = arith.mulf %8, %23 : vector<128x32xf32>
    %25 = arith.truncf %24 : vector<128x32xf32> to vector<128x32xbf16>
    %c0_23 = arith.constant 0 : index
    %c0_24 = arith.constant 0 : index
    %c0_25 = arith.constant 0 : index
    %c0_26 = arith.constant 0 : index
    %26 = vector.load %arg9[%c0_23, %c0_24, %c0_25, %c0_26] : memref<1x4x128x32xbf16, #tpu.memory_space<vmem>>, vector<1x1x128x32xbf16>
    %27 = vector.shape_cast %26 : vector<1x1x128x32xbf16> to vector<128x32xbf16>
    %28 = vector.shape_cast %25 : vector<128x32xbf16> to vector<1x1x128x32xbf16>
    tpu.vector_store %arg9[%c0_23, %c0_24, %c0_25, %c0_26], %28 {strides = array<i32>} : memref<1x4x128x32xbf16, #tpu.memory_space<vmem>>, vector<1x1x128x32xbf16>,
    %29 = arith.truncf %15 : vector<128x32xf32> to vector<128x32xbf16>
    %c0_27 = arith.constant 0 : index
    %c0_28 = arith.constant 0 : index
    %c0_29 = arith.constant 0 : index
    %c0_30 = arith.constant 0 : index
    %30 = vector.load %arg10[%c0_27, %c0_28, %c0_29, %c0_30] : memref<1x4x128x32xbf16, #tpu.memory_space<vmem>>, vector<1x1x128x32xbf16>
    %31 = vector.shape_cast %30 : vector<1x1x128x32xbf16> to vector<128x32xbf16>
    %32 = vector.shape_cast %29 : vector<128x32xbf16> to vector<1x1x128x32xbf16>
    tpu.vector_store %arg10[%c0_27, %c0_28, %c0_29, %c0_30], %32 {strides = array<i32>} : memref<1x4x128x32xbf16, #tpu.memory_space<vmem>>, vector<1x1x128x32xbf16>,
    %33 = arith.truncf %22 : vector<128x32xf32> to vector<128x32xbf16>
    %c0_31 = arith.constant 0 : index
    %c0_32 = arith.constant 0 : index
    %c0_33 = arith.constant 0 : index
    %c0_34 = arith.constant 0 : index
    %34 = vector.load %arg11[%c0_31, %c0_32, %c0_33, %c0_34] : memref<1x4x128x32xbf16, #tpu.memory_space<vmem>>, vector<1x1x128x32xbf16>
    %35 = vector.shape_cast %34 : vector<1x1x128x32xbf16> to vector<128x32xbf16>
    %36 = vector.shape_cast %33 : vector<128x32xbf16> to vector<1x1x128x32xbf16>
    tpu.vector_store %arg11[%c0_31, %c0_32, %c0_33, %c0_34], %36 {strides = array<i32>} : memref<1x4x128x32xbf16, #tpu.memory_space<vmem>>, vector<1x1x128x32xbf16>,
    %c1 = arith.constant 1 : index
    %c0_35 = arith.constant 0 : index
    %c0_36 = arith.constant 0 : index
    %37 = vector.load %arg3[%c1, %c0_35, %c0_36] : memref<4x64x32xbf16, #tpu.memory_space<vmem>>, vector<1x64x32xbf16>
    %38 = vector.shape_cast %37 : vector<1x64x32xbf16> to vector<64x32xbf16>
    %cst_37 = arith.constant dense<0.000000e+00> : vector<128x32xf32>
    %39 = tpu.matmul %1, %38, %cst_37 {dimension_numbers = #tpu.dot_dimension_numbers<[1], [0], [0], [1], [0, 0, 1, 1], [], []>} : vector<128x64xbf16>, vector<64x32xbf16>, vector<128x32xf32> -> vector<128x32xf32>
    %c1_38 = arith.constant 1 : index
    %c0_39 = arith.constant 0 : index
    %c0_40 = arith.constant 0 : index
    %40 = vector.load %arg6[%c1_38, %c0_39, %c0_40] : memref<4x1x32xf32, #tpu.memory_space<vmem>>, vector<1x1x32xf32>
    %41 = vector.shape_cast %40 : vector<1x1x32xf32> to vector<1x32xf32>
    %42 = vector.broadcast %41 : vector<1x32xf32> to vector<128x32xf32>
    %43 = arith.addf %39, %42 : vector<128x32xf32>
    %c1_41 = arith.constant 1 : index
    %c0_42 = arith.constant 0 : index
    %c0_43 = arith.constant 0 : index
    %44 = vector.load %arg4[%c1_41, %c0_42, %c0_43] : memref<4x64x32xbf16, #tpu.memory_space<vmem>>, vector<1x64x32xbf16>
    %45 = vector.shape_cast %44 : vector<1x64x32xbf16> to vector<64x32xbf16>
    %cst_44 = arith.constant dense<0.000000e+00> : vector<128x32xf32>
    %46 = tpu.matmul %1, %45, %cst_44 {dimension_numbers = #tpu.dot_dimension_numbers<[1], [0], [0], [1], [0, 0, 1, 1], [], []>} : vector<128x64xbf16>, vector<64x32xbf16>, vector<128x32xf32> -> vector<128x32xf32>
    %c1_45 = arith.constant 1 : index
    %c0_46 = arith.constant 0 : index
    %c0_47 = arith.constant 0 : index
    %47 = vector.load %arg7[%c1_45, %c0_46, %c0_47] : memref<4x1x32xf32, #tpu.memory_space<vmem>>, vector<1x1x32xf32>
    %48 = vector.shape_cast %47 : vector<1x1x32xf32> to vector<1x32xf32>
    %49 = vector.broadcast %48 : vector<1x32xf32> to vector<128x32xf32>
    %50 = arith.addf %46, %49 : vector<128x32xf32>
    %c1_48 = arith.constant 1 : index
    %c0_49 = arith.constant 0 : index
    %c0_50 = arith.constant 0 : index
    %51 = vector.load %arg5[%c1_48, %c0_49, %c0_50] : memref<4x64x32xbf16, #tpu.memory_space<vmem>>, vector<1x64x32xbf16>
    %52 = vector.shape_cast %51 : vector<1x64x32xbf16> to vector<64x32xbf16>
    %cst_51 = arith.constant dense<0.000000e+00> : vector<128x32xf32>
    %53 = tpu.matmul %1, %52, %cst_51 {dimension_numbers = #tpu.dot_dimension_numbers<[1], [0], [0], [1], [0, 0, 1, 1], [], []>} : vector<128x64xbf16>, vector<64x32xbf16>, vector<128x32xf32> -> vector<128x32xf32>
    %c1_52 = arith.constant 1 : index
    %c0_53 = arith.constant 0 : index
    %c0_54 = arith.constant 0 : index
    %54 = vector.load %arg8[%c1_52, %c0_53, %c0_54] : memref<4x1x32xf32, #tpu.memory_space<vmem>>, vector<1x1x32xf32>
    %55 = vector.shape_cast %54 : vector<1x1x32xf32> to vector<1x32xf32>
    %56 = vector.broadcast %55 : vector<1x32xf32> to vector<128x32xf32>
    %57 = arith.addf %53, %56 : vector<128x32xf32>
    %cst_55 = arith.constant 0.176776692 : f32
    %58 = vector.broadcast %cst_55 : f32 to vector<128x32xf32>
    %59 = arith.mulf %43, %58 : vector<128x32xf32>
    %60 = arith.truncf %59 : vector<128x32xf32> to vector<128x32xbf16>
    %c0_56 = arith.constant 0 : index
    %c1_57 = arith.constant 1 : index
    %c0_58 = arith.constant 0 : index
    %c0_59 = arith.constant 0 : index
    %61 = vector.load %arg9[%c0_56, %c1_57, %c0_58, %c0_59] : memref<1x4x128x32xbf16, #tpu.memory_space<vmem>>, vector<1x1x128x32xbf16>
    %62 = vector.shape_cast %61 : vector<1x1x128x32xbf16> to vector<128x32xbf16>
    %63 = vector.shape_cast %60 : vector<128x32xbf16> to vector<1x1x128x32xbf16>
    tpu.vector_store %arg9[%c0_56, %c1_57, %c0_58, %c0_59], %63 {strides = array<i32>} : memref<1x4x128x32xbf16, #tpu.memory_space<vmem>>, vector<1x1x128x32xbf16>,
    %64 = arith.truncf %50 : vector<128x32xf32> to vector<128x32xbf16>
    %c0_60 = arith.constant 0 : index
    %c1_61 = arith.constant 1 : index
    %c0_62 = arith.constant 0 : index
    %c0_63 = arith.constant 0 : index
    %65 = vector.load %arg10[%c0_60, %c1_61, %c0_62, %c0_63] : memref<1x4x128x32xbf16, #tpu.memory_space<vmem>>, vector<1x1x128x32xbf16>
    %66 = vector.shape_cast %65 : vector<1x1x128x32xbf16> to vector<128x32xbf16>
    %67 = vector.shape_cast %64 : vector<128x32xbf16> to vector<1x1x128x32xbf16>
    tpu.vector_store %arg10[%c0_60, %c1_61, %c0_62, %c0_63], %67 {strides = array<i32>} : memref<1x4x128x32xbf16, #tpu.memory_space<vmem>>, vector<1x1x128x32xbf16>,
    %68 = arith.truncf %57 : vector<128x32xf32> to vector<128x32xbf16>
    %c0_64 = arith.constant 0 : index
    %c1_65 = arith.constant 1 : index
    %c0_66 = arith.constant 0 : index
    %c0_67 = arith.constant 0 : index
    %69 = vector.load %arg11[%c0_64, %c1_65, %c0_66, %c0_67] : memref<1x4x128x32xbf16, #tpu.memory_space<vmem>>, vector<1x1x128x32xbf16>
    %70 = vector.shape_cast %69 : vector<1x1x128x32xbf16> to vector<128x32xbf16>
    %71 = vector.shape_cast %68 : vector<128x32xbf16> to vector<1x1x128x32xbf16>
    tpu.vector_store %arg11[%c0_64, %c1_65, %c0_66, %c0_67], %71 {strides = array<i32>} : memref<1x4x128x32xbf16, #tpu.memory_space<vmem>>, vector<1x1x128x32xbf16>,
    %c2 = arith.constant 2 : index
    %c0_68 = arith.constant 0 : index
    %c0_69 = arith.constant 0 : index
    %72 = vector.load %arg3[%c2, %c0_68, %c0_69] : memref<4x64x32xbf16, #tpu.memory_space<vmem>>, vector<1x64x32xbf16>
    %73 = vector.shape_cast %72 : vector<1x64x32xbf16> to vector<64x32xbf16>
    %cst_70 = arith.constant dense<0.000000e+00> : vector<128x32xf32>
    %74 = tpu.matmul %1, %73, %cst_70 {dimension_numbers = #tpu.dot_dimension_numbers<[1], [0], [0], [1], [0, 0, 1, 1], [], []>} : vector<128x64xbf16>, vector<64x32xbf16>, vector<128x32xf32> -> vector<128x32xf32>
    %c2_71 = arith.constant 2 : index
    %c0_72 = arith.constant 0 : index
    %c0_73 = arith.constant 0 : index
    %75 = vector.load %arg6[%c2_71, %c0_72, %c0_73] : memref<4x1x32xf32, #tpu.memory_space<vmem>>, vector<1x1x32xf32>
    %76 = vector.shape_cast %75 : vector<1x1x32xf32> to vector<1x32xf32>
    %77 = vector.broadcast %76 : vector<1x32xf32> to vector<128x32xf32>
    %78 = arith.addf %74, %77 : vector<128x32xf32>
    %c2_74 = arith.constant 2 : index
    %c0_75 = arith.constant 0 : index
    %c0_76 = arith.constant 0 : index
    %79 = vector.load %arg4[%c2_74, %c0_75, %c0_76] : memref<4x64x32xbf16, #tpu.memory_space<vmem>>, vector<1x64x32xbf16>
    %80 = vector.shape_cast %79 : vector<1x64x32xbf16> to vector<64x32xbf16>
    %cst_77 = arith.constant dense<0.000000e+00> : vector<128x32xf32>
    %81 = tpu.matmul %1, %80, %cst_77 {dimension_numbers = #tpu.dot_dimension_numbers<[1], [0], [0], [1], [0, 0, 1, 1], [], []>} : vector<128x64xbf16>, vector<64x32xbf16>, vector<128x32xf32> -> vector<128x32xf32>
    %c2_78 = arith.constant 2 : index
    %c0_79 = arith.constant 0 : index
    %c0_80 = arith.constant 0 : index
    %82 = vector.load %arg7[%c2_78, %c0_79, %c0_80] : memref<4x1x32xf32, #tpu.memory_space<vmem>>, vector<1x1x32xf32>
    %83 = vector.shape_cast %82 : vector<1x1x32xf32> to vector<1x32xf32>
    %84 = vector.broadcast %83 : vector<1x32xf32> to vector<128x32xf32>
    %85 = arith.addf %81, %84 : vector<128x32xf32>
    %c2_81 = arith.constant 2 : index
    %c0_82 = arith.constant 0 : index
    %c0_83 = arith.constant 0 : index
    %86 = vector.load %arg5[%c2_81, %c0_82, %c0_83] : memref<4x64x32xbf16, #tpu.memory_space<vmem>>, vector<1x64x32xbf16>
    %87 = vector.shape_cast %86 : vector<1x64x32xbf16> to vector<64x32xbf16>
    %cst_84 = arith.constant dense<0.000000e+00> : vector<128x32xf32>
    %88 = tpu.matmul %1, %87, %cst_84 {dimension_numbers = #tpu.dot_dimension_numbers<[1], [0], [0], [1], [0, 0, 1, 1], [], []>} : vector<128x64xbf16>, vector<64x32xbf16>, vector<128x32xf32> -> vector<128x32xf32>
    %c2_85 = arith.constant 2 : index
    %c0_86 = arith.constant 0 : index
    %c0_87 = arith.constant 0 : index
    %89 = vector.load %arg8[%c2_85, %c0_86, %c0_87] : memref<4x1x32xf32, #tpu.memory_space<vmem>>, vector<1x1x32xf32>
    %90 = vector.shape_cast %89 : vector<1x1x32xf32> to vector<1x32xf32>
    %91 = vector.broadcast %90 : vector<1x32xf32> to vector<128x32xf32>
    %92 = arith.addf %88, %91 : vector<128x32xf32>
    %cst_88 = arith.constant 0.176776692 : f32
    %93 = vector.broadcast %cst_88 : f32 to vector<128x32xf32>
    %94 = arith.mulf %78, %93 : vector<128x32xf32>
    %95 = arith.truncf %94 : vector<128x32xf32> to vector<128x32xbf16>
    %c0_89 = arith.constant 0 : index
    %c2_90 = arith.constant 2 : index
    %c0_91 = arith.constant 0 : index
    %c0_92 = arith.constant 0 : index
    %96 = vector.load %arg9[%c0_89, %c2_90, %c0_91, %c0_92] : memref<1x4x128x32xbf16, #tpu.memory_space<vmem>>, vector<1x1x128x32xbf16>
    %97 = vector.shape_cast %96 : vector<1x1x128x32xbf16> to vector<128x32xbf16>
    %98 = vector.shape_cast %95 : vector<128x32xbf16> to vector<1x1x128x32xbf16>
    tpu.vector_store %arg9[%c0_89, %c2_90, %c0_91, %c0_92], %98 {strides = array<i32>} : memref<1x4x128x32xbf16, #tpu.memory_space<vmem>>, vector<1x1x128x32xbf16>,
    %99 = arith.truncf %85 : vector<128x32xf32> to vector<128x32xbf16>
    %c0_93 = arith.constant 0 : index
    %c2_94 = arith.constant 2 : index
    %c0_95 = arith.constant 0 : index
    %c0_96 = arith.constant 0 : index
    %100 = vector.load %arg10[%c0_93, %c2_94, %c0_95, %c0_96] : memref<1x4x128x32xbf16, #tpu.memory_space<vmem>>, vector<1x1x128x32xbf16>
    %101 = vector.shape_cast %100 : vector<1x1x128x32xbf16> to vector<128x32xbf16>
    %102 = vector.shape_cast %99 : vector<128x32xbf16> to vector<1x1x128x32xbf16>
    tpu.vector_store %arg10[%c0_93, %c2_94, %c0_95, %c0_96], %102 {strides = array<i32>} : memref<1x4x128x32xbf16, #tpu.memory_space<vmem>>, vector<1x1x128x32xbf16>,
    %103 = arith.truncf %92 : vector<128x32xf32> to vector<128x32xbf16>
    %c0_97 = arith.constant 0 : index
    %c2_98 = arith.constant 2 : index
    %c0_99 = arith.constant 0 : index
    %c0_100 = arith.constant 0 : index
    %104 = vector.load %arg11[%c0_97, %c2_98, %c0_99, %c0_100] : memref<1x4x128x32xbf16, #tpu.memory_space<vmem>>, vector<1x1x128x32xbf16>
    %105 = vector.shape_cast %104 : vector<1x1x128x32xbf16> to vector<128x32xbf16>
    %106 = vector.shape_cast %103 : vector<128x32xbf16> to vector<1x1x128x32xbf16>
    tpu.vector_store %arg11[%c0_97, %c2_98, %c0_99, %c0_100], %106 {strides = array<i32>} : memref<1x4x128x32xbf16, #tpu.memory_space<vmem>>, vector<1x1x128x32xbf16>,
    %c3 = arith.constant 3 : index
    %c0_101 = arith.constant 0 : index
    %c0_102 = arith.constant 0 : index
    %107 = vector.load %arg3[%c3, %c0_101, %c0_102] : memref<4x64x32xbf16, #tpu.memory_space<vmem>>, vector<1x64x32xbf16>
    %108 = vector.shape_cast %107 : vector<1x64x32xbf16> to vector<64x32xbf16>
    %cst_103 = arith.constant dense<0.000000e+00> : vector<128x32xf32>
    %109 = tpu.matmul %1, %108, %cst_103 {dimension_numbers = #tpu.dot_dimension_numbers<[1], [0], [0], [1], [0, 0, 1, 1], [], []>} : vector<128x64xbf16>, vector<64x32xbf16>, vector<128x32xf32> -> vector<128x32xf32>
    %c3_104 = arith.constant 3 : index
    %c0_105 = arith.constant 0 : index
    %c0_106 = arith.constant 0 : index
    %110 = vector.load %arg6[%c3_104, %c0_105, %c0_106] : memref<4x1x32xf32, #tpu.memory_space<vmem>>, vector<1x1x32xf32>
    %111 = vector.shape_cast %110 : vector<1x1x32xf32> to vector<1x32xf32>
    %112 = vector.broadcast %111 : vector<1x32xf32> to vector<128x32xf32>
    %113 = arith.addf %109, %112 : vector<128x32xf32>
    %c3_107 = arith.constant 3 : index
    %c0_108 = arith.constant 0 : index
    %c0_109 = arith.constant 0 : index
    %114 = vector.load %arg4[%c3_107, %c0_108, %c0_109] : memref<4x64x32xbf16, #tpu.memory_space<vmem>>, vector<1x64x32xbf16>
    %115 = vector.shape_cast %114 : vector<1x64x32xbf16> to vector<64x32xbf16>
    %cst_110 = arith.constant dense<0.000000e+00> : vector<128x32xf32>
    %116 = tpu.matmul %1, %115, %cst_110 {dimension_numbers = #tpu.dot_dimension_numbers<[1], [0], [0], [1], [0, 0, 1, 1], [], []>} : vector<128x64xbf16>, vector<64x32xbf16>, vector<128x32xf32> -> vector<128x32xf32>
    %c3_111 = arith.constant 3 : index
    %c0_112 = arith.constant 0 : index
    %c0_113 = arith.constant 0 : index
    %117 = vector.load %arg7[%c3_111, %c0_112, %c0_113] : memref<4x1x32xf32, #tpu.memory_space<vmem>>, vector<1x1x32xf32>
    %118 = vector.shape_cast %117 : vector<1x1x32xf32> to vector<1x32xf32>
    %119 = vector.broadcast %118 : vector<1x32xf32> to vector<128x32xf32>
    %120 = arith.addf %116, %119 : vector<128x32xf32>
    %c3_114 = arith.constant 3 : index
    %c0_115 = arith.constant 0 : index
    %c0_116 = arith.constant 0 : index
    %121 = vector.load %arg5[%c3_114, %c0_115, %c0_116] : memref<4x64x32xbf16, #tpu.memory_space<vmem>>, vector<1x64x32xbf16>
    %122 = vector.shape_cast %121 : vector<1x64x32xbf16> to vector<64x32xbf16>
    %cst_117 = arith.constant dense<0.000000e+00> : vector<128x32xf32>
    %123 = tpu.matmul %1, %122, %cst_117 {dimension_numbers = #tpu.dot_dimension_numbers<[1], [0], [0], [1], [0, 0, 1, 1], [], []>} : vector<128x64xbf16>, vector<64x32xbf16>, vector<128x32xf32> -> vector<128x32xf32>
    %c3_118 = arith.constant 3 : index
    %c0_119 = arith.constant 0 : index
    %c0_120 = arith.constant 0 : index
    %124 = vector.load %arg8[%c3_118, %c0_119, %c0_120] : memref<4x1x32xf32, #tpu.memory_space<vmem>>, vector<1x1x32xf32>
    %125 = vector.shape_cast %124 : vector<1x1x32xf32> to vector<1x32xf32>
    %126 = vector.broadcast %125 : vector<1x32xf32> to vector<128x32xf32>
    %127 = arith.addf %123, %126 : vector<128x32xf32>
    %cst_121 = arith.constant 0.176776692 : f32
    %128 = vector.broadcast %cst_121 : f32 to vector<128x32xf32>
    %129 = arith.mulf %113, %128 : vector<128x32xf32>
    %130 = arith.truncf %129 : vector<128x32xf32> to vector<128x32xbf16>
    %c0_122 = arith.constant 0 : index
    %c3_123 = arith.constant 3 : index
    %c0_124 = arith.constant 0 : index
    %c0_125 = arith.constant 0 : index
    %131 = vector.load %arg9[%c0_122, %c3_123, %c0_124, %c0_125] : memref<1x4x128x32xbf16, #tpu.memory_space<vmem>>, vector<1x1x128x32xbf16>
    %132 = vector.shape_cast %131 : vector<1x1x128x32xbf16> to vector<128x32xbf16>
    %133 = vector.shape_cast %130 : vector<128x32xbf16> to vector<1x1x128x32xbf16>
    tpu.vector_store %arg9[%c0_122, %c3_123, %c0_124, %c0_125], %133 {strides = array<i32>} : memref<1x4x128x32xbf16, #tpu.memory_space<vmem>>, vector<1x1x128x32xbf16>,
    %134 = arith.truncf %120 : vector<128x32xf32> to vector<128x32xbf16>
    %c0_126 = arith.constant 0 : index
    %c3_127 = arith.constant 3 : index
    %c0_128 = arith.constant 0 : index
    %c0_129 = arith.constant 0 : index
    %135 = vector.load %arg10[%c0_126, %c3_127, %c0_128, %c0_129] : memref<1x4x128x32xbf16, #tpu.memory_space<vmem>>, vector<1x1x128x32xbf16>
    %136 = vector.shape_cast %135 : vector<1x1x128x32xbf16> to vector<128x32xbf16>
    %137 = vector.shape_cast %134 : vector<128x32xbf16> to vector<1x1x128x32xbf16>
    tpu.vector_store %arg10[%c0_126, %c3_127, %c0_128, %c0_129], %137 {strides = array<i32>} : memref<1x4x128x32xbf16, #tpu.memory_space<vmem>>, vector<1x1x128x32xbf16>,
    %138 = arith.truncf %127 : vector<128x32xf32> to vector<128x32xbf16>
    %c0_130 = arith.constant 0 : index
    %c3_131 = arith.constant 3 : index
    %c0_132 = arith.constant 0 : index
    %c0_133 = arith.constant 0 : index
    %139 = vector.load %arg11[%c0_130, %c3_131, %c0_132, %c0_133] : memref<1x4x128x32xbf16, #tpu.memory_space<vmem>>, vector<1x1x128x32xbf16>
    %140 = vector.shape_cast %139 : vector<1x1x128x32xbf16> to vector<128x32xbf16>
    %141 = vector.shape_cast %138 : vector<128x32xbf16> to vector<1x1x128x32xbf16>
    tpu.vector_store %arg11[%c0_130, %c3_131, %c0_132, %c0_133], %141 {strides = array<i32>} : memref<1x4x128x32xbf16, #tpu.memory_space<vmem>>, vector<1x1x128x32xbf16>,
    return
  }
  func.func @transform_0(%arg0: i32, %arg1: i32) -> (i32, i32, i32) {
    %c0_i32 = arith.constant 0 : i32
    %c0_i32_0 = arith.constant 0 : i32
    return %arg0, %arg1, %c0_i32 : i32, i32, i32
  }
  func.func @transform_1(%arg0: i32, %arg1: i32) -> (i32, i32, i32) {
    %c0_i32 = arith.constant 0 : i32
    %c0_i32_0 = arith.constant 0 : i32
    %c0_i32_1 = arith.constant 0 : i32
    %c0_i32_2 = arith.constant 0 : i32
    return %c0_i32, %c0_i32_0, %c0_i32_1 : i32, i32, i32
  }
  func.func @transform_2(%arg0: i32, %arg1: i32) -> (i32, i32, i32) {
    %c0_i32 = arith.constant 0 : i32
    %c0_i32_0 = arith.constant 0 : i32
    %c0_i32_1 = arith.constant 0 : i32
    %c0_i32_2 = arith.constant 0 : i32
    return %c0_i32, %c0_i32_0, %c0_i32_1 : i32, i32, i32
  }
  func.func @transform_3(%arg0: i32, %arg1: i32) -> (i32, i32, i32) {
    %c0_i32 = arith.constant 0 : i32
    %c0_i32_0 = arith.constant 0 : i32
    %c0_i32_1 = arith.constant 0 : i32
    %c0_i32_2 = arith.constant 0 : i32
    return %c0_i32, %c0_i32_0, %c0_i32_1 : i32, i32, i32
  }
  func.func @transform_4(%arg0: i32, %arg1: i32) -> (i32, i32, i32) {
    %c0_i32 = arith.constant 0 : i32
    %c0_i32_0 = arith.constant 0 : i32
    %c0_i32_1 = arith.constant 0 : i32
    %c0_i32_2 = arith.constant 0 : i32
    return %c0_i32, %c0_i32_0, %c0_i32_1 : i32, i32, i32
  }
  func.func @transform_5(%arg0: i32, %arg1: i32) -> (i32, i32, i32) {
    %c0_i32 = arith.constant 0 : i32
    %c0_i32_0 = arith.constant 0 : i32
    %c0_i32_1 = arith.constant 0 : i32
    %c0_i32_2 = arith.constant 0 : i32
    return %c0_i32, %c0_i32_0, %c0_i32_1 : i32, i32, i32
  }
  func.func @transform_6(%arg0: i32, %arg1: i32) -> (i32, i32, i32) {
    %c0_i32 = arith.constant 0 : i32
    %c0_i32_0 = arith.constant 0 : i32
    %c0_i32_1 = arith.constant 0 : i32
    %c0_i32_2 = arith.constant 0 : i32
    return %c0_i32, %c0_i32_0, %c0_i32_1 : i32, i32, i32
  }
  func.func @transform_7(%arg0: i32, %arg1: i32) -> (i32, i32, i32, i32) {
    %c0_i32 = arith.constant 0 : i32
    %c0_i32_0 = arith.constant 0 : i32
    %c0_i32_1 = arith.constant 0 : i32
    return %arg0, %c0_i32, %arg1, %c0_i32_0 : i32, i32, i32, i32
  }
  func.func @transform_8(%arg0: i32, %arg1: i32) -> (i32, i32, i32, i32) {
    %c0_i32 = arith.constant 0 : i32
    %c0_i32_0 = arith.constant 0 : i32
    %c0_i32_1 = arith.constant 0 : i32
    return %arg0, %c0_i32, %arg1, %c0_i32_0 : i32, i32, i32, i32
  }
  func.func @transform_9(%arg0: i32, %arg1: i32) -> (i32, i32, i32, i32) {
    %c0_i32 = arith.constant 0 : i32
    %c0_i32_0 = arith.constant 0 : i32
    %c0_i32_1 = arith.constant 0 : i32
    return %arg0, %c0_i32, %arg1, %c0_i32_0 : i32, i32, i32, i32
  }
}

module attributes {stable_mosaic.version = 11 : i64} {
  func.func @attn_kernel(%arg0: i32, %arg1: i32, %arg2: memref<1x4x128x32xbf16, #tpu.memory_space<vmem>>, %arg3: memref<1x4x128x32xbf16, #tpu.memory_space<vmem>>, %arg4: memref<1x4x128x32xbf16, #tpu.memory_space<vmem>>, %arg5: memref<4x32x128xbf16, #tpu.memory_space<vmem>>, %arg6: memref<1x128xf32, #tpu.memory_space<vmem>>, %arg7: memref<1x128x128xf32, #tpu.memory_space<vmem>>, %arg8: memref<128x128xf32, #tpu.memory_space<vmem>>) attributes {dimension_semantics = [#tpu.dimension_semantics<parallel>, #tpu.dimension_semantics<parallel>], iteration_bounds = array<i64: 2, 1>, scalar_prefetch = 0 : i64, scratch_operands = 1 : i64, tpu.core_type = #tpu.core_type<tc>, window_params = [{transform_indices = @transform_0, window_bounds = array<i64: 1, 4, 128, 32>}, {transform_indices = @transform_1, window_bounds = array<i64: 1, 4, 128, 32>}, {transform_indices = @transform_2, window_bounds = array<i64: 1, 4, 128, 32>}, {pipeline_mode = #tpu.pipeline_mode<synchronous>, transform_indices = @transform_3, window_bounds = array<i64: 4, 32, 128>}, {pipeline_mode = #tpu.pipeline_mode<synchronous>, transform_indices = @transform_4, window_bounds = array<i64: 1, 128>}, {transform_indices = @transform_5, window_bounds = array<i64: 1, 128, 128>}]} {
    %cst = arith.constant 0.000000e+00 : f32
    %0 = vector.broadcast %cst : f32 to vector<128x128xf32>
    %c0 = arith.constant 0 : index
    %c0_0 = arith.constant 0 : index
    %1 = vector.load %arg8[%c0, %c0_0] : memref<128x128xf32, #tpu.memory_space<vmem>>, vector<128x128xf32>
    tpu.vector_store %arg8[%c0, %c0_0], %0 {strides = array<i32>} : memref<128x128xf32, #tpu.memory_space<vmem>>, vector<128x128xf32>,
    %c0_1 = arith.constant 0 : index
    %c0_2 = arith.constant 0 : index
    %c0_3 = arith.constant 0 : index
    %c0_4 = arith.constant 0 : index
    %2 = vector.load %arg2[%c0_1, %c0_2, %c0_3, %c0_4] : memref<1x4x128x32xbf16, #tpu.memory_space<vmem>>, vector<1x1x128x32xbf16>
    %3 = vector.shape_cast %2 : vector<1x1x128x32xbf16> to vector<128x32xbf16>
    %c0_5 = arith.constant 0 : index
    %c0_6 = arith.constant 0 : index
    %c0_7 = arith.constant 0 : index
    %c0_8 = arith.constant 0 : index
    %4 = vector.load %arg3[%c0_5, %c0_6, %c0_7, %c0_8] : memref<1x4x128x32xbf16, #tpu.memory_space<vmem>>, vector<1x1x128x32xbf16>
    %5 = vector.shape_cast %4 : vector<1x1x128x32xbf16> to vector<128x32xbf16>
    %c0_9 = arith.constant 0 : index
    %c0_10 = arith.constant 0 : index
    %c0_11 = arith.constant 0 : index
    %c0_12 = arith.constant 0 : index
    %6 = vector.load %arg4[%c0_9, %c0_10, %c0_11, %c0_12] : memref<1x4x128x32xbf16, #tpu.memory_space<vmem>>, vector<1x1x128x32xbf16>
    %7 = vector.shape_cast %6 : vector<1x1x128x32xbf16> to vector<128x32xbf16>
    %cst_13 = arith.constant dense<0.000000e+00> : vector<128x128xf32>
    %8 = tpu.matmul %3, %5, %cst_13 {dimension_numbers = #tpu.dot_dimension_numbers<[1], [1], [0], [0], [0, 0, 1, 0], [], []>} : vector<128x32xbf16>, vector<128x32xbf16>, vector<128x128xf32> -> vector<128x128xf32>
    %cst_14 = arith.constant dense<0xFF800000> : vector<128xf32>
    %9 = vector.multi_reduction <maximumf>, %8, %cst_14 [1] : vector<128x128xf32> to vector<128xf32>
    %10 = vector.shape_cast %9 : vector<128xf32> to vector<128x1xf32>
    %11 = vector.broadcast %10 : vector<128x1xf32> to vector<128x128xf32>
    %12 = arith.subf %8, %11 : vector<128x128xf32>
    %13 = math.exp %12 : vector<128x128xf32>
    %cst_15 = arith.constant dense<0.000000e+00> : vector<128xf32>
    %14 = vector.multi_reduction <add>, %13, %cst_15 [1] : vector<128x128xf32> to vector<128xf32>
    %15 = vector.shape_cast %14 : vector<128xf32> to vector<128x1xf32>
    %16 = tpu.reciprocal %15 {approx = true} : vector<128x1xf32> -> vector<128x1xf32>
    %17 = vector.broadcast %16 : vector<128x1xf32> to vector<128x128xf32>
    %18 = arith.mulf %13, %17 : vector<128x128xf32>
    %19 = arith.truncf %18 : vector<128x128xf32> to vector<128x128xbf16>
    %cst_16 = arith.constant dense<0.000000e+00> : vector<128x32xf32>
    %20 = tpu.matmul %19, %7, %cst_16 {dimension_numbers = #tpu.dot_dimension_numbers<[1], [0], [0], [1], [0, 0, 1, 1], [], []>} : vector<128x128xbf16>, vector<128x32xbf16>, vector<128x32xf32> -> vector<128x32xf32>
    %c0_17 = arith.constant 0 : index
    %c0_18 = arith.constant 0 : index
    %21 = vector.load %arg8[%c0_17, %c0_18] : memref<128x128xf32, #tpu.memory_space<vmem>>, vector<128x128xf32>
    %22 = arith.truncf %20 : vector<128x32xf32> to vector<128x32xbf16>
    %c0_19 = arith.constant 0 : index
    %c0_20 = arith.constant 0 : index
    %c0_21 = arith.constant 0 : index
    %23 = vector.load %arg5[%c0_19, %c0_20, %c0_21] : memref<4x32x128xbf16, #tpu.memory_space<vmem>>, vector<1x32x128xbf16>
    %24 = vector.shape_cast %23 : vector<1x32x128xbf16> to vector<32x128xbf16>
    %cst_22 = arith.constant dense<0.000000e+00> : vector<128x128xf32>
    %25 = tpu.matmul %22, %24, %cst_22 {dimension_numbers = #tpu.dot_dimension_numbers<[1], [0], [0], [1], [0, 0, 1, 1], [], []>} : vector<128x32xbf16>, vector<32x128xbf16>, vector<128x128xf32> -> vector<128x128xf32>
    %26 = arith.addf %21, %25 : vector<128x128xf32>
    %c0_23 = arith.constant 0 : index
    %c0_24 = arith.constant 0 : index
    %27 = vector.load %arg8[%c0_23, %c0_24] : memref<128x128xf32, #tpu.memory_space<vmem>>, vector<128x128xf32>
    tpu.vector_store %arg8[%c0_23, %c0_24], %26 {strides = array<i32>} : memref<128x128xf32, #tpu.memory_space<vmem>>, vector<128x128xf32>,
    %c0_25 = arith.constant 0 : index
    %c1 = arith.constant 1 : index
    %c0_26 = arith.constant 0 : index
    %c0_27 = arith.constant 0 : index
    %28 = vector.load %arg2[%c0_25, %c1, %c0_26, %c0_27] : memref<1x4x128x32xbf16, #tpu.memory_space<vmem>>, vector<1x1x128x32xbf16>
    %29 = vector.shape_cast %28 : vector<1x1x128x32xbf16> to vector<128x32xbf16>
    %c0_28 = arith.constant 0 : index
    %c1_29 = arith.constant 1 : index
    %c0_30 = arith.constant 0 : index
    %c0_31 = arith.constant 0 : index
    %30 = vector.load %arg3[%c0_28, %c1_29, %c0_30, %c0_31] : memref<1x4x128x32xbf16, #tpu.memory_space<vmem>>, vector<1x1x128x32xbf16>
    %31 = vector.shape_cast %30 : vector<1x1x128x32xbf16> to vector<128x32xbf16>
    %c0_32 = arith.constant 0 : index
    %c1_33 = arith.constant 1 : index
    %c0_34 = arith.constant 0 : index
    %c0_35 = arith.constant 0 : index
    %32 = vector.load %arg4[%c0_32, %c1_33, %c0_34, %c0_35] : memref<1x4x128x32xbf16, #tpu.memory_space<vmem>>, vector<1x1x128x32xbf16>
    %33 = vector.shape_cast %32 : vector<1x1x128x32xbf16> to vector<128x32xbf16>
    %cst_36 = arith.constant dense<0.000000e+00> : vector<128x128xf32>
    %34 = tpu.matmul %29, %31, %cst_36 {dimension_numbers = #tpu.dot_dimension_numbers<[1], [1], [0], [0], [0, 0, 1, 0], [], []>} : vector<128x32xbf16>, vector<128x32xbf16>, vector<128x128xf32> -> vector<128x128xf32>
    %cst_37 = arith.constant dense<0xFF800000> : vector<128xf32>
    %35 = vector.multi_reduction <maximumf>, %34, %cst_37 [1] : vector<128x128xf32> to vector<128xf32>
    %36 = vector.shape_cast %35 : vector<128xf32> to vector<128x1xf32>
    %37 = vector.broadcast %36 : vector<128x1xf32> to vector<128x128xf32>
    %38 = arith.subf %34, %37 : vector<128x128xf32>
    %39 = math.exp %38 : vector<128x128xf32>
    %cst_38 = arith.constant dense<0.000000e+00> : vector<128xf32>
    %40 = vector.multi_reduction <add>, %39, %cst_38 [1] : vector<128x128xf32> to vector<128xf32>
    %41 = vector.shape_cast %40 : vector<128xf32> to vector<128x1xf32>
    %42 = tpu.reciprocal %41 {approx = true} : vector<128x1xf32> -> vector<128x1xf32>
    %43 = vector.broadcast %42 : vector<128x1xf32> to vector<128x128xf32>
    %44 = arith.mulf %39, %43 : vector<128x128xf32>
    %45 = arith.truncf %44 : vector<128x128xf32> to vector<128x128xbf16>
    %cst_39 = arith.constant dense<0.000000e+00> : vector<128x32xf32>
    %46 = tpu.matmul %45, %33, %cst_39 {dimension_numbers = #tpu.dot_dimension_numbers<[1], [0], [0], [1], [0, 0, 1, 1], [], []>} : vector<128x128xbf16>, vector<128x32xbf16>, vector<128x32xf32> -> vector<128x32xf32>
    %c0_40 = arith.constant 0 : index
    %c0_41 = arith.constant 0 : index
    %47 = vector.load %arg8[%c0_40, %c0_41] : memref<128x128xf32, #tpu.memory_space<vmem>>, vector<128x128xf32>
    %48 = arith.truncf %46 : vector<128x32xf32> to vector<128x32xbf16>
    %c1_42 = arith.constant 1 : index
    %c0_43 = arith.constant 0 : index
    %c0_44 = arith.constant 0 : index
    %49 = vector.load %arg5[%c1_42, %c0_43, %c0_44] : memref<4x32x128xbf16, #tpu.memory_space<vmem>>, vector<1x32x128xbf16>
    %50 = vector.shape_cast %49 : vector<1x32x128xbf16> to vector<32x128xbf16>
    %cst_45 = arith.constant dense<0.000000e+00> : vector<128x128xf32>
    %51 = tpu.matmul %48, %50, %cst_45 {dimension_numbers = #tpu.dot_dimension_numbers<[1], [0], [0], [1], [0, 0, 1, 1], [], []>} : vector<128x32xbf16>, vector<32x128xbf16>, vector<128x128xf32> -> vector<128x128xf32>
    %52 = arith.addf %47, %51 : vector<128x128xf32>
    %c0_46 = arith.constant 0 : index
    %c0_47 = arith.constant 0 : index
    %53 = vector.load %arg8[%c0_46, %c0_47] : memref<128x128xf32, #tpu.memory_space<vmem>>, vector<128x128xf32>
    tpu.vector_store %arg8[%c0_46, %c0_47], %52 {strides = array<i32>} : memref<128x128xf32, #tpu.memory_space<vmem>>, vector<128x128xf32>,
    %c0_48 = arith.constant 0 : index
    %c2 = arith.constant 2 : index
    %c0_49 = arith.constant 0 : index
    %c0_50 = arith.constant 0 : index
    %54 = vector.load %arg2[%c0_48, %c2, %c0_49, %c0_50] : memref<1x4x128x32xbf16, #tpu.memory_space<vmem>>, vector<1x1x128x32xbf16>
    %55 = vector.shape_cast %54 : vector<1x1x128x32xbf16> to vector<128x32xbf16>
    %c0_51 = arith.constant 0 : index
    %c2_52 = arith.constant 2 : index
    %c0_53 = arith.constant 0 : index
    %c0_54 = arith.constant 0 : index
    %56 = vector.load %arg3[%c0_51, %c2_52, %c0_53, %c0_54] : memref<1x4x128x32xbf16, #tpu.memory_space<vmem>>, vector<1x1x128x32xbf16>
    %57 = vector.shape_cast %56 : vector<1x1x128x32xbf16> to vector<128x32xbf16>
    %c0_55 = arith.constant 0 : index
    %c2_56 = arith.constant 2 : index
    %c0_57 = arith.constant 0 : index
    %c0_58 = arith.constant 0 : index
    %58 = vector.load %arg4[%c0_55, %c2_56, %c0_57, %c0_58] : memref<1x4x128x32xbf16, #tpu.memory_space<vmem>>, vector<1x1x128x32xbf16>
    %59 = vector.shape_cast %58 : vector<1x1x128x32xbf16> to vector<128x32xbf16>
    %cst_59 = arith.constant dense<0.000000e+00> : vector<128x128xf32>
    %60 = tpu.matmul %55, %57, %cst_59 {dimension_numbers = #tpu.dot_dimension_numbers<[1], [1], [0], [0], [0, 0, 1, 0], [], []>} : vector<128x32xbf16>, vector<128x32xbf16>, vector<128x128xf32> -> vector<128x128xf32>
    %cst_60 = arith.constant dense<0xFF800000> : vector<128xf32>
    %61 = vector.multi_reduction <maximumf>, %60, %cst_60 [1] : vector<128x128xf32> to vector<128xf32>
    %62 = vector.shape_cast %61 : vector<128xf32> to vector<128x1xf32>
    %63 = vector.broadcast %62 : vector<128x1xf32> to vector<128x128xf32>
    %64 = arith.subf %60, %63 : vector<128x128xf32>
    %65 = math.exp %64 : vector<128x128xf32>
    %cst_61 = arith.constant dense<0.000000e+00> : vector<128xf32>
    %66 = vector.multi_reduction <add>, %65, %cst_61 [1] : vector<128x128xf32> to vector<128xf32>
    %67 = vector.shape_cast %66 : vector<128xf32> to vector<128x1xf32>
    %68 = tpu.reciprocal %67 {approx = true} : vector<128x1xf32> -> vector<128x1xf32>
    %69 = vector.broadcast %68 : vector<128x1xf32> to vector<128x128xf32>
    %70 = arith.mulf %65, %69 : vector<128x128xf32>
    %71 = arith.truncf %70 : vector<128x128xf32> to vector<128x128xbf16>
    %cst_62 = arith.constant dense<0.000000e+00> : vector<128x32xf32>
    %72 = tpu.matmul %71, %59, %cst_62 {dimension_numbers = #tpu.dot_dimension_numbers<[1], [0], [0], [1], [0, 0, 1, 1], [], []>} : vector<128x128xbf16>, vector<128x32xbf16>, vector<128x32xf32> -> vector<128x32xf32>
    %c0_63 = arith.constant 0 : index
    %c0_64 = arith.constant 0 : index
    %73 = vector.load %arg8[%c0_63, %c0_64] : memref<128x128xf32, #tpu.memory_space<vmem>>, vector<128x128xf32>
    %74 = arith.truncf %72 : vector<128x32xf32> to vector<128x32xbf16>
    %c2_65 = arith.constant 2 : index
    %c0_66 = arith.constant 0 : index
    %c0_67 = arith.constant 0 : index
    %75 = vector.load %arg5[%c2_65, %c0_66, %c0_67] : memref<4x32x128xbf16, #tpu.memory_space<vmem>>, vector<1x32x128xbf16>
    %76 = vector.shape_cast %75 : vector<1x32x128xbf16> to vector<32x128xbf16>
    %cst_68 = arith.constant dense<0.000000e+00> : vector<128x128xf32>
    %77 = tpu.matmul %74, %76, %cst_68 {dimension_numbers = #tpu.dot_dimension_numbers<[1], [0], [0], [1], [0, 0, 1, 1], [], []>} : vector<128x32xbf16>, vector<32x128xbf16>, vector<128x128xf32> -> vector<128x128xf32>
    %78 = arith.addf %73, %77 : vector<128x128xf32>
    %c0_69 = arith.constant 0 : index
    %c0_70 = arith.constant 0 : index
    %79 = vector.load %arg8[%c0_69, %c0_70] : memref<128x128xf32, #tpu.memory_space<vmem>>, vector<128x128xf32>
    tpu.vector_store %arg8[%c0_69, %c0_70], %78 {strides = array<i32>} : memref<128x128xf32, #tpu.memory_space<vmem>>, vector<128x128xf32>,
    %c0_71 = arith.constant 0 : index
    %c3 = arith.constant 3 : index
    %c0_72 = arith.constant 0 : index
    %c0_73 = arith.constant 0 : index
    %80 = vector.load %arg2[%c0_71, %c3, %c0_72, %c0_73] : memref<1x4x128x32xbf16, #tpu.memory_space<vmem>>, vector<1x1x128x32xbf16>
    %81 = vector.shape_cast %80 : vector<1x1x128x32xbf16> to vector<128x32xbf16>
    %c0_74 = arith.constant 0 : index
    %c3_75 = arith.constant 3 : index
    %c0_76 = arith.constant 0 : index
    %c0_77 = arith.constant 0 : index
    %82 = vector.load %arg3[%c0_74, %c3_75, %c0_76, %c0_77] : memref<1x4x128x32xbf16, #tpu.memory_space<vmem>>, vector<1x1x128x32xbf16>
    %83 = vector.shape_cast %82 : vector<1x1x128x32xbf16> to vector<128x32xbf16>
    %c0_78 = arith.constant 0 : index
    %c3_79 = arith.constant 3 : index
    %c0_80 = arith.constant 0 : index
    %c0_81 = arith.constant 0 : index
    %84 = vector.load %arg4[%c0_78, %c3_79, %c0_80, %c0_81] : memref<1x4x128x32xbf16, #tpu.memory_space<vmem>>, vector<1x1x128x32xbf16>
    %85 = vector.shape_cast %84 : vector<1x1x128x32xbf16> to vector<128x32xbf16>
    %cst_82 = arith.constant dense<0.000000e+00> : vector<128x128xf32>
    %86 = tpu.matmul %81, %83, %cst_82 {dimension_numbers = #tpu.dot_dimension_numbers<[1], [1], [0], [0], [0, 0, 1, 0], [], []>} : vector<128x32xbf16>, vector<128x32xbf16>, vector<128x128xf32> -> vector<128x128xf32>
    %cst_83 = arith.constant dense<0xFF800000> : vector<128xf32>
    %87 = vector.multi_reduction <maximumf>, %86, %cst_83 [1] : vector<128x128xf32> to vector<128xf32>
    %88 = vector.shape_cast %87 : vector<128xf32> to vector<128x1xf32>
    %89 = vector.broadcast %88 : vector<128x1xf32> to vector<128x128xf32>
    %90 = arith.subf %86, %89 : vector<128x128xf32>
    %91 = math.exp %90 : vector<128x128xf32>
    %cst_84 = arith.constant dense<0.000000e+00> : vector<128xf32>
    %92 = vector.multi_reduction <add>, %91, %cst_84 [1] : vector<128x128xf32> to vector<128xf32>
    %93 = vector.shape_cast %92 : vector<128xf32> to vector<128x1xf32>
    %94 = tpu.reciprocal %93 {approx = true} : vector<128x1xf32> -> vector<128x1xf32>
    %95 = vector.broadcast %94 : vector<128x1xf32> to vector<128x128xf32>
    %96 = arith.mulf %91, %95 : vector<128x128xf32>
    %97 = arith.truncf %96 : vector<128x128xf32> to vector<128x128xbf16>
    %cst_85 = arith.constant dense<0.000000e+00> : vector<128x32xf32>
    %98 = tpu.matmul %97, %85, %cst_85 {dimension_numbers = #tpu.dot_dimension_numbers<[1], [0], [0], [1], [0, 0, 1, 1], [], []>} : vector<128x128xbf16>, vector<128x32xbf16>, vector<128x32xf32> -> vector<128x32xf32>
    %c0_86 = arith.constant 0 : index
    %c0_87 = arith.constant 0 : index
    %99 = vector.load %arg8[%c0_86, %c0_87] : memref<128x128xf32, #tpu.memory_space<vmem>>, vector<128x128xf32>
    %100 = arith.truncf %98 : vector<128x32xf32> to vector<128x32xbf16>
    %c3_88 = arith.constant 3 : index
    %c0_89 = arith.constant 0 : index
    %c0_90 = arith.constant 0 : index
    %101 = vector.load %arg5[%c3_88, %c0_89, %c0_90] : memref<4x32x128xbf16, #tpu.memory_space<vmem>>, vector<1x32x128xbf16>
    %102 = vector.shape_cast %101 : vector<1x32x128xbf16> to vector<32x128xbf16>
    %cst_91 = arith.constant dense<0.000000e+00> : vector<128x128xf32>
    %103 = tpu.matmul %100, %102, %cst_91 {dimension_numbers = #tpu.dot_dimension_numbers<[1], [0], [0], [1], [0, 0, 1, 1], [], []>} : vector<128x32xbf16>, vector<32x128xbf16>, vector<128x128xf32> -> vector<128x128xf32>
    %104 = arith.addf %99, %103 : vector<128x128xf32>
    %c0_92 = arith.constant 0 : index
    %c0_93 = arith.constant 0 : index
    %105 = vector.load %arg8[%c0_92, %c0_93] : memref<128x128xf32, #tpu.memory_space<vmem>>, vector<128x128xf32>
    tpu.vector_store %arg8[%c0_92, %c0_93], %104 {strides = array<i32>} : memref<128x128xf32, #tpu.memory_space<vmem>>, vector<128x128xf32>,
    %c0_94 = arith.constant 0 : index
    %c0_95 = arith.constant 0 : index
    %106 = vector.load %arg8[%c0_94, %c0_95] : memref<128x128xf32, #tpu.memory_space<vmem>>, vector<128x128xf32>
    %c0_96 = arith.constant 0 : index
    %c0_97 = arith.constant 0 : index
    %107 = vector.load %arg6[%c0_96, %c0_97] : memref<1x128xf32, #tpu.memory_space<vmem>>, vector<1x128xf32>
    %108 = vector.broadcast %107 : vector<1x128xf32> to vector<128x128xf32>
    %109 = arith.addf %106, %108 : vector<128x128xf32>
    %c0_98 = arith.constant 0 : index
    %c0_99 = arith.constant 0 : index
    %c0_100 = arith.constant 0 : index
    %110 = vector.load %arg7[%c0_98, %c0_99, %c0_100] : memref<1x128x128xf32, #tpu.memory_space<vmem>>, vector<1x128x128xf32>
    %111 = vector.shape_cast %110 : vector<1x128x128xf32> to vector<128x128xf32>
    %112 = vector.shape_cast %109 : vector<128x128xf32> to vector<1x128x128xf32>
    tpu.vector_store %arg7[%c0_98, %c0_99, %c0_100], %112 {strides = array<i32>} : memref<1x128x128xf32, #tpu.memory_space<vmem>>, vector<1x128x128xf32>,
    return
  }
  func.func @transform_0(%arg0: i32, %arg1: i32) -> (i32, i32, i32, i32) {
    %c0_i32 = arith.constant 0 : i32
    %c0_i32_0 = arith.constant 0 : i32
    %c0_i32_1 = arith.constant 0 : i32
    return %arg0, %c0_i32, %arg1, %c0_i32_0 : i32, i32, i32, i32
  }
  func.func @transform_1(%arg0: i32, %arg1: i32) -> (i32, i32, i32, i32) {
    %c0_i32 = arith.constant 0 : i32
    %c0_i32_0 = arith.constant 0 : i32
    %c0_i32_1 = arith.constant 0 : i32
    %c0_i32_2 = arith.constant 0 : i32
    return %arg0, %c0_i32, %c0_i32_0, %c0_i32_1 : i32, i32, i32, i32
  }
  func.func @transform_2(%arg0: i32, %arg1: i32) -> (i32, i32, i32, i32) {
    %c0_i32 = arith.constant 0 : i32
    %c0_i32_0 = arith.constant 0 : i32
    %c0_i32_1 = arith.constant 0 : i32
    %c0_i32_2 = arith.constant 0 : i32
    return %arg0, %c0_i32, %c0_i32_0, %c0_i32_1 : i32, i32, i32, i32
  }
  func.func @transform_3(%arg0: i32, %arg1: i32) -> (i32, i32, i32) {
    %c0_i32 = arith.constant 0 : i32
    %c0_i32_0 = arith.constant 0 : i32
    %c0_i32_1 = arith.constant 0 : i32
    %c0_i32_2 = arith.constant 0 : i32
    return %c0_i32, %c0_i32_0, %c0_i32_1 : i32, i32, i32
  }
  func.func @transform_4(%arg0: i32, %arg1: i32) -> (i32, i32) {
    %c0_i32 = arith.constant 0 : i32
    %c0_i32_0 = arith.constant 0 : i32
    %c0_i32_1 = arith.constant 0 : i32
    return %c0_i32, %c0_i32_0 : i32, i32
  }
  func.func @transform_5(%arg0: i32, %arg1: i32) -> (i32, i32, i32) {
    %c0_i32 = arith.constant 0 : i32
    %c0_i32_0 = arith.constant 0 : i32
    return %arg0, %arg1, %c0_i32 : i32, i32, i32
  }
}

</mosaic_0001>

<llo_original>
// kernel: multihead_attention.3
$region0: #{multihead_attention.3}
  #allocation0 [shape = 'u32[]', space=smem, size = 0x4, offset = 0x4, fixed_abs, tag = 'smem constant byte address 0x4 - core index']
  #allocation1 [shape = 'u32[144,128]{1,0:T(1,128)}', space=vmem, size = 0x12000, scoped, tag = 'internal scratch']
  #allocation2 [shape = 'f32[128,128]{1,0:T(8,128)}', space=vmem, size = 0x10000, scoped, tag = 'scratch operand']
  %s0 = inlined_call_operand.vmem [shape: bf16[2,4,128,32], index: 0, kind: input, shape index: {}]
  %s1 = inlined_call_operand.vmem [shape: bf16[2,4,128,32], index: 1, kind: input, shape index: {}]
  %s2 = inlined_call_operand.vmem [shape: bf16[2,4,128,32], index: 2, kind: input, shape index: {}]
  %s3 = inlined_call_operand.vmem [shape: bf16[4,32,128], index: 3, kind: input, shape index: {}]
  %s4 = inlined_call_operand.vmem [shape: f32[1,128], index: 4, kind: input, shape index: {}]
  %s5 = inlined_call_operand.hbm [shape: f32[2,128,128], index: 5, kind: output, shape index: {}]
  %s6 = sld [smem:[#allocation0]]
  $region53: #{multihead_attention.3} parent=0
    _
  %s8 = ssub.s32 1, %s6
  %s9 = scalar_select 0, %s8, %s6
  $region1: #{multihead_attention.3} parent=0
    #allocation3 [shape = 'u8[131072]{0}', space=vmem, size = 0x20000, scoped, tag = 'output window, operand 0']
    #allocation4 [shape = 's32[2]{0}', space=sflag, size = 0x8, scoped, tag = 'scoped memory for multihead_attention.3']
    %10 = vsyncpa [#allocation4], 0
    %s11 = scalar_lea.sflag [#allocation4], 1
    %12 = vsyncpa %s11, 0
    loop: start=0, step=1, limit=4
    $region2: #{multihead_attention.3} parent=1 // loop_pre_header
      _
    $region3: #{multihead_attention.3} parent=1 // loop_header
      %s14 = sphi 0, %s18
      %p15 = scmp.ge.s32.totalorder %s14, 4
      %s21 = sphi 0, %s33
      %s22 = sphi 0, %s29
      %s23 = sphi 0, %s21
      %s24 = sphi 0, %s22
      %s25 = sphi 0, %s23
      %s26 = sphi 0, %s24
      %s38 = sphi 0, %s40
      %s41 = sphi 0, %s38
      %s42 = sphi 0, %s41
      %s58 = sphi 0, %s42
      %s64 = sphi 0, %s66
      %s67 = sphi 0, %s64
      %s68 = sphi 0, %s67
      %s84 = sphi 0, %s68
      %s90 = sphi 0, %s92
      %s93 = sphi 0, %s90
      %s94 = sphi 0, %s93
      %s110 = sphi 0, %s94
      %s114 = sphi 0, %s114
      %s116 = sphi 0, %s114
      %s117 = sphi 0, %s116
      %s131 = sphi 0, %s117
      %s135 = sphi 0, %s135
      %s137 = sphi 0, %s135
      %s138 = sphi 0, %s137
      %s152 = sphi 0, %s138
      %s160 = sphi 0, %s162
      %s163 = sphi 0, %s160
      %s164 = sphi 0, %s163
      %s180 = sphi 0, %s164
    $region4: #{multihead_attention.3} parent=1 // loop_header_branch
      %17 = sbr.rel (%p15) target = $region8
    $region5: #{multihead_attention.3} parent=1 // loop_body
      %s19 = ssub.s32 %s14, 1
      %s20 = ssub.s32 %s14, 2
      %s27 = sadd.s32 1, %s22
      %p28 = scmp.ge.s32.totalorder %s27, 1
      %s29 = scalar_select %p28, 0, %s27
      %s30 = sadd.s32 1, %s21
      %s31 = scalar_select %p28, %s30, %s21
      %p32 = scmp.ge.s32.totalorder %s31, 2
      %s33 = scalar_select %p32, 0, %s31
      %s34 = ssub.s32 %s21, %s33
      %s35 = ssub.s32 %s22, %s29
      %s36 = sor.u32 %s34, %s35
      %p37 = scmp.eq.s32.totalorder %s36, 0
      %s39 = sadd.s32 %s38, 1
      %s40 = scalar_select %p37, %s38, %s39
      %p43 = pneg %p37
      %p44 = scmp.eq.s32.totalorder %s14, 1
      %p45 = por %p43, %p44
      %p46 = scmp.ne.s32.totalorder %s38, %s41
      %p47 = scmp.eq.s32.totalorder %s14, 0
      %p48 = por %p46, %p47
      %p49 = scmp.ne.s32.totalorder %s38, %s41
      %p50 = scmp.eq.s32.totalorder %s19, 1
      %p51 = por %p49, %p50
      %p52 = scmp.ne.s32.totalorder %s41, %s42
      %p53 = scmp.eq.s32.totalorder %s19, 0
      %p54 = por %p52, %p53
      %p55 = scmp.ne.s32.totalorder %s41, %s42
      %p56 = scmp.eq.s32.totalorder %s20, 1
      %p57 = por %p55, %p56
      %p59 = scmp.ne.s32.totalorder %s42, %s58
      %p60 = scmp.eq.s32.totalorder %s20, 0
      %p61 = por %p59, %p60
      %s62 = ssub.s32 %s21, %s33
      %p63 = scmp.eq.s32.totalorder %s62, 0
      %s65 = sadd.s32 %s64, 1
      %s66 = scalar_select %p63, %s64, %s65
      %p69 = pneg %p63
      %p70 = scmp.eq.s32.totalorder %s14, 1
      %p71 = por %p69, %p70
      %p72 = scmp.ne.s32.totalorder %s64, %s67
      %p73 = scmp.eq.s32.totalorder %s14, 0
      %p74 = por %p72, %p73
      %p75 = scmp.ne.s32.totalorder %s64, %s67
      %p76 = scmp.eq.s32.totalorder %s19, 1
      %p77 = por %p75, %p76
      %p78 = scmp.ne.s32.totalorder %s67, %s68
      %p79 = scmp.eq.s32.totalorder %s19, 0
      %p80 = por %p78, %p79
      %p81 = scmp.ne.s32.totalorder %s67, %s68
      %p82 = scmp.eq.s32.totalorder %s20, 1
      %p83 = por %p81, %p82
      %p85 = scmp.ne.s32.totalorder %s68, %s84
      %p86 = scmp.eq.s32.totalorder %s20, 0
      %p87 = por %p85, %p86
      %s88 = ssub.s32 %s21, %s33
      %p89 = scmp.eq.s32.totalorder %s88, 0
      %s91 = sadd.s32 %s90, 1
      %s92 = scalar_select %p89, %s90, %s91
      %p95 = pneg %p89
      %p96 = scmp.eq.s32.totalorder %s14, 1
      %p97 = por %p95, %p96
      %p98 = scmp.ne.s32.totalorder %s90, %s93
      %p99 = scmp.eq.s32.totalorder %s14, 0
      %p100 = por %p98, %p99
      %p101 = scmp.ne.s32.totalorder %s90, %s93
      %p102 = scmp.eq.s32.totalorder %s19, 1
      %p103 = por %p101, %p102
      %p104 = scmp.ne.s32.totalorder %s93, %s94
      %p105 = scmp.eq.s32.totalorder %s19, 0
      %p106 = por %p104, %p105
      %p107 = scmp.ne.s32.totalorder %s93, %s94
      %p108 = scmp.eq.s32.totalorder %s20, 1
      %p109 = por %p107, %p108
      %p111 = scmp.ne.s32.totalorder %s94, %s110
      %p112 = scmp.eq.s32.totalorder %s20, 0
      %p113 = por %p111, %p112
      %s115 = sadd.s32 %s114, 1
      %p118 = scmp.eq.s32.totalorder %s14, 1
      %p119 = scmp.ne.s32.totalorder %s114, %s116
      %p120 = scmp.eq.s32.totalorder %s14, 0
      %p121 = por %p119, %p120
      %p122 = scmp.ne.s32.totalorder %s114, %s116
      %p123 = scmp.eq.s32.totalorder %s19, 1
      %p124 = por %p122, %p123
      %p125 = scmp.ne.s32.totalorder %s116, %s117
      %p126 = scmp.eq.s32.totalorder %s19, 0
      %p127 = por %p125, %p126
      %p128 = scmp.ne.s32.totalorder %s116, %s117
      %p129 = scmp.eq.s32.totalorder %s20, 1
      %p130 = por %p128, %p129
      %p132 = scmp.ne.s32.totalorder %s117, %s131
      %p133 = scmp.eq.s32.totalorder %s20, 0
      %p134 = por %p132, %p133
      %s136 = sadd.s32 %s135, 1
      %p139 = scmp.eq.s32.totalorder %s14, 1
      %p140 = scmp.ne.s32.totalorder %s135, %s137
      %p141 = scmp.eq.s32.totalorder %s14, 0
      %p142 = por %p140, %p141
      %p143 = scmp.ne.s32.totalorder %s135, %s137
      %p144 = scmp.eq.s32.totalorder %s19, 1
      %p145 = por %p143, %p144
      %p146 = scmp.ne.s32.totalorder %s137, %s138
      %p147 = scmp.eq.s32.totalorder %s19, 0
      %p148 = por %p146, %p147
      %p149 = scmp.ne.s32.totalorder %s137, %s138
      %p150 = scmp.eq.s32.totalorder %s20, 1
      %p151 = por %p149, %p150
      %p153 = scmp.ne.s32.totalorder %s138, %s152
      %p154 = scmp.eq.s32.totalorder %s20, 0
      %p155 = por %p153, %p154
      %s156 = ssub.s32 %s21, %s33
      %s157 = ssub.s32 %s22, %s29
      %s158 = sor.u32 %s156, %s157
      %p159 = scmp.eq.s32.totalorder %s158, 0
      %s161 = sadd.s32 %s160, 1
      %s162 = scalar_select %p159, %s160, %s161
      %p165 = pneg %p159
      %p166 = scmp.eq.s32.totalorder %s14, 1
      %p167 = por %p165, %p166
      %p168 = scmp.ne.s32.totalorder %s160, %s163
      %p169 = scmp.eq.s32.totalorder %s14, 0
      %p170 = por %p168, %p169
      %p171 = scmp.ne.s32.totalorder %s160, %s163
      %p172 = scmp.eq.s32.totalorder %s19, 1
      %p173 = por %p171, %p172
      %p174 = scmp.ne.s32.totalorder %s163, %s164
      %p175 = scmp.eq.s32.totalorder %s19, 0
      %p176 = por %p174, %p175
      %p177 = scmp.ne.s32.totalorder %s163, %s164
      %p178 = scmp.eq.s32.totalorder %s20, 1
      %p179 = por %p177, %p178
      %p181 = scmp.ne.s32.totalorder %s164, %s180
      %p182 = scmp.eq.s32.totalorder %s20, 0
      %p183 = por %p181, %p182
      %p184 = scmp.le.s32.totalorder 1, %s14
      %p185 = scmp.lt.s32.totalorder %s14, 3
      %p186 = pnand %p184, %p185
      %p187 = pneg %p186
      // Predicated region
      $region9: #{multihead_attention.3} parent=5 // pred_check
        _
      $region10: #{multihead_attention.3} parent=5 // pred_check_branch
        %189 = sbr.rel (%p186) target = $region12
      $region11: #{multihead_attention.3} parent=5 // pred_region
        %s190 = ssub.s32 %s14, 1
        // Predicated region
        $region13: #{multihead_attention.3} parent=11 // pred_check
          %p191 = pneg %p127
        $region14: #{multihead_attention.3} parent=11 // pred_check_branch
          %193 = sbr.rel (%p191) target = $region16
        $region15: #{multihead_attention.3} parent=11 // pred_region
          _
        $region16: #{multihead_attention.3} parent=11 // pred_fallthru
          _
        // Predicated region
        $region17: #{multihead_attention.3} parent=11 // pred_check
          %p194 = pneg %p148
        $region18: #{multihead_attention.3} parent=11 // pred_check_branch
          %196 = sbr.rel (%p194) target = $region20
        $region19: #{multihead_attention.3} parent=11 // pred_region
          _
        $region20: #{multihead_attention.3} parent=11 // pred_fallthru
          _
      $region12: #{multihead_attention.3} parent=5 // pred_fallthru
        _
      %p197 = scmp.lt.s32.totalorder %s14, 2
      // Predicated region
      $region21: #{multihead_attention.3} parent=5 // pred_check
        %p198 = pneg %p197
      $region22: #{multihead_attention.3} parent=5 // pred_check_branch
        %200 = sbr.rel (%p198) target = $region24
      $region23: #{multihead_attention.3} parent=5 // pred_region
        // Predicated region
        $region25: #{multihead_attention.3} parent=23 // pred_check
          %p201 = pneg %p48
        $region26: #{multihead_attention.3} parent=23 // pred_check_branch
          %203 = sbr.rel (%p201) target = $region28
        $region27: #{multihead_attention.3} parent=23 // pred_region
          %s204 = smul.u32 16, %s22
          %p205 = scmp.lt.s32.totalorder %s21, 1
          %s206 = scalar_select %p205, %s21, 1
          %p207 = scmp.lt.s32.totalorder %s204, 15
          %s208 = scalar_select %p207, %s204, 15
          %s209 = smul.addr %s206, 64
          %s210 = sadd.s32 %s208, %s209
          %s211 = smul.addr %s210, 4
          %s212 = scalar_lea.vmem %s0, %s211
          %s213 = smul.u32 16, %s22
        $region28: #{multihead_attention.3} parent=23 // pred_fallthru
          _
        // Predicated region
        $region29: #{multihead_attention.3} parent=23 // pred_check
          %p214 = pneg %p74
        $region30: #{multihead_attention.3} parent=23 // pred_check_branch
          %216 = sbr.rel (%p214) target = $region32
        $region31: #{multihead_attention.3} parent=23 // pred_region
          %p217 = scmp.lt.s32.totalorder %s21, 1
          %s218 = scalar_select %p217, %s21, 1
          %s219 = smul.addr %s218, 64
          %s220 = smul.addr %s219, 4
          %s221 = scalar_lea.vmem %s1, %s220
        $region32: #{multihead_attention.3} parent=23 // pred_fallthru
          _
        // Predicated region
        $region33: #{multihead_attention.3} parent=23 // pred_check
          %p222 = pneg %p100
        $region34: #{multihead_attention.3} parent=23 // pred_check_branch
          %224 = sbr.rel (%p222) target = $region36
        $region35: #{multihead_attention.3} parent=23 // pred_region
          %p225 = scmp.lt.s32.totalorder %s21, 1
          %s226 = scalar_select %p225, %s21, 1
          %s227 = smul.addr %s226, 64
          %s228 = smul.addr %s227, 4
          %s229 = scalar_lea.vmem %s2, %s228
        $region36: #{multihead_attention.3} parent=23 // pred_fallthru
          _
      $region24: #{multihead_attention.3} parent=5 // pred_fallthru
        _
      %p230 = scmp.le.s32.totalorder 1, %s14
      %p231 = scmp.lt.s32.totalorder %s14, 3
      %p232 = pnand %p230, %p231
      %p233 = pneg %p232
      // Predicated region
      $region37: #{multihead_attention.3} parent=5 // pred_check
        _
      $region38: #{multihead_attention.3} parent=5 // pred_check_branch
        %235 = sbr.rel (%p232) target = $region40
      $region39: #{multihead_attention.3} parent=5 // pred_region
        %s236 = ssub.s32 %s14, 1
        %s237 = smul.u32 16, %s24
        %p238 = scmp.lt.s32.totalorder %s23, 1
        %s239 = scalar_select %p238, %s23, 1
        %p240 = scmp.lt.s32.totalorder %s237, 15
        %s241 = scalar_select %p240, %s237, 15
        %s242 = smul.addr %s239, 64
        %s243 = sadd.s32 %s241, %s242
        %s244 = smul.addr %s243, 4
        %s245 = scalar_lea.vmem %s0, %s244
        %p246 = pneg %p54
        %p247 = pneg %p51
        %p248 = scmp.lt.s32.totalorder %s23, 1
        %s249 = scalar_select %p248, %s23, 1
        %s250 = smul.addr %s249, 64
        %s251 = smul.addr %s250, 4
        %s252 = scalar_lea.vmem %s1, %s251
        %p253 = pneg %p80
        %p254 = pneg %p77
        %p255 = scmp.lt.s32.totalorder %s23, 1
        %s256 = scalar_select %p255, %s23, 1
        %s257 = smul.addr %s256, 64
        %s258 = smul.addr %s257, 4
        %s259 = scalar_lea.vmem %s2, %s258
        %p260 = pneg %p106
        %p261 = pneg %p103
        %p262 = pneg %p127
        %p263 = pneg %p124
        %p264 = pneg %p148
        %p265 = pneg %p145
        %p266 = pneg %p176
        %p267 = pneg %p173
        %s268 = sand.u32 %s163, 1
        %s269 = scalar_lea.sflag [#allocation4], %s268
        %s270 = sand.u32 %s163, 1
        %s271 = smul.addr %s270, 128
        %s272 = scalar_lea.vmem [#allocation3], %s271
        %s273 = smul.u32 16, %s24
        %p274 = scmp.lt.s32.totalorder %s23, 1
        %s275 = scalar_select %p274, %s23, 1
        %p276 = scmp.lt.s32.totalorder %s273, 15
        %s277 = scalar_select %p276, %s273, 15
        %s278 = smul.addr %s275, 64
        %s279 = sadd.s32 %s277, %s278
        %s280 = smul.addr %s279, 4
        %s281 = scalar_lea.vmem %s0, %s280
        %s282 = smul.u32 16, %s24
        %p283 = scmp.lt.s32.totalorder %s23, 1
        %s284 = scalar_select %p283, %s23, 1
        %s285 = smul.addr %s284, 64
        %s286 = smul.addr %s285, 4
        %s287 = scalar_lea.vmem %s1, %s286
        %p288 = scmp.lt.s32.totalorder %s23, 1
        %s289 = scalar_select %p288, %s23, 1
        %s290 = smul.addr %s289, 64
        %s291 = smul.addr %s290, 4
        %s292 = scalar_lea.vmem %s2, %s291
        %s293 = smul.u32 16, %s24
        %295 = vst [vmem:[#allocation2] sm:$0xff] 0.0
        %296 = vst [vmem:[#allocation2 + $0x8] sm:$0xff] 0.0
        %297 = vst [vmem:[#allocation2 + $0x10] sm:$0xff] 0.0
        %298 = vst [vmem:[#allocation2 + $0x18] sm:$0xff] 0.0
        %299 = vst [vmem:[#allocation2 + $0x20] sm:$0xff] 0.0
        %300 = vst [vmem:[#allocation2 + $0x28] sm:$0xff] 0.0
        %301 = vst [vmem:[#allocation2 + $0x30] sm:$0xff] 0.0
        %302 = vst [vmem:[#allocation2 + $0x38] sm:$0xff] 0.0
        %303 = vst [vmem:[#allocation2 + $0x40] sm:$0xff] 0.0
        %304 = vst [vmem:[#allocation2 + $0x48] sm:$0xff] 0.0
        %305 = vst [vmem:[#allocation2 + $0x50] sm:$0xff] 0.0
        %306 = vst [vmem:[#allocation2 + $0x58] sm:$0xff] 0.0
        %307 = vst [vmem:[#allocation2 + $0x60] sm:$0xff] 0.0
        %308 = vst [vmem:[#allocation2 + $0x68] sm:$0xff] 0.0
        %309 = vst [vmem:[#allocation2 + $0x70] sm:$0xff] 0.0
        %310 = vst [vmem:[#allocation2 + $0x78] sm:$0xff] 0.0
        %v311 = vld [vmem:[%s281] sm:$0xf]
        %v312 = vld [vmem:[%s281 + $0x4] sm:$0xf]
        %v313 = vld [vmem:[%s281 + $0x8] sm:$0xf]
        %v314 = vld [vmem:[%s281 + $0xc] sm:$0xf]
        %v315 = vld [vmem:[%s281 + $0x10] sm:$0xf]
        %v316 = vld [vmem:[%s281 + $0x14] sm:$0xf]
        %v317 = vld [vmem:[%s281 + $0x18] sm:$0xf]
        %v318 = vld [vmem:[%s281 + $0x1c] sm:$0xf]
        %v319 = vld [vmem:[%s281 + $0x20] sm:$0xf]
        %v320 = vld [vmem:[%s281 + $0x24] sm:$0xf]
        %v321 = vld [vmem:[%s281 + $0x28] sm:$0xf]
        %v322 = vld [vmem:[%s281 + $0x2c] sm:$0xf]
        %v323 = vld [vmem:[%s281 + $0x30] sm:$0xf]
        %v324 = vld [vmem:[%s281 + $0x34] sm:$0xf]
        %v325 = vld [vmem:[%s281 + $0x38] sm:$0xf]
        %v326 = vld [vmem:[%s281 + $0x3c] sm:$0xf]
        %v327 = vld [vmem:[%s287] sm:$0xf]
        %v328 = vld [vmem:[%s287 + $0x4] sm:$0xf]
        %v329 = vld [vmem:[%s287 + $0x8] sm:$0xf]
        %v330 = vld [vmem:[%s287 + $0xc] sm:$0xf]
        %v331 = vld [vmem:[%s287 + $0x10] sm:$0xf]
        %v332 = vld [vmem:[%s287 + $0x14] sm:$0xf]
        %v333 = vld [vmem:[%s287 + $0x18] sm:$0xf]
        %v334 = vld [vmem:[%s287 + $0x1c] sm:$0xf]
        %v335 = vld [vmem:[%s287 + $0x20] sm:$0xf]
        %v336 = vld [vmem:[%s287 + $0x24] sm:$0xf]
        %v337 = vld [vmem:[%s287 + $0x28] sm:$0xf]
        %v338 = vld [vmem:[%s287 + $0x2c] sm:$0xf]
        %v339 = vld [vmem:[%s287 + $0x30] sm:$0xf]
        %v340 = vld [vmem:[%s287 + $0x34] sm:$0xf]
        %v341 = vld [vmem:[%s287 + $0x38] sm:$0xf]
        %v342 = vld [vmem:[%s287 + $0x3c] sm:$0xf]
        %v343 = vld [vmem:[%s292] sm:$0xf]
        %v344 = vld [vmem:[%s292 + $0x4] sm:$0xf]
        %v345 = vld [vmem:[%s292 + $0x8] sm:$0xf]
        %v346 = vld [vmem:[%s292 + $0xc] sm:$0xf]
        %v347 = vld [vmem:[%s292 + $0x10] sm:$0xf]
        %v348 = vld [vmem:[%s292 + $0x14] sm:$0xf]
        %v349 = vld [vmem:[%s292 + $0x18] sm:$0xf]
        %v350 = vld [vmem:[%s292 + $0x1c] sm:$0xf]
        %v351 = vld [vmem:[%s292 + $0x20] sm:$0xf]
        %v352 = vld [vmem:[%s292 + $0x24] sm:$0xf]
        %v353 = vld [vmem:[%s292 + $0x28] sm:$0xf]
        %v354 = vld [vmem:[%s292 + $0x2c] sm:$0xf]
        %v355 = vld [vmem:[%s292 + $0x30] sm:$0xf]
        %v356 = vld [vmem:[%s292 + $0x34] sm:$0xf]
        %v357 = vld [vmem:[%s292 + $0x38] sm:$0xf]
        %v358 = vld [vmem:[%s292 + $0x3c] sm:$0xf]
        %v375 = vunpack.c.l.b16 %v311
        %v376 = vunpack.c.l.b16 %v312
        %v377 = vunpack.c.l.b16 %v313
        %v378 = vunpack.c.l.b16 %v314
        %v379 = vunpack.c.l.b16 %v315
        %v380 = vunpack.c.l.b16 %v316
        %v381 = vunpack.c.l.b16 %v317
        %v382 = vunpack.c.l.b16 %v318
        %v383 = vunpack.c.l.b16 %v319
        %v384 = vunpack.c.l.b16 %v320
        %v385 = vunpack.c.l.b16 %v321
        %v386 = vunpack.c.l.b16 %v322
        %v387 = vunpack.c.l.b16 %v323
        %v388 = vunpack.c.l.b16 %v324
        %v389 = vunpack.c.l.b16 %v325
        %v390 = vunpack.c.l.b16 %v326
        %v391 = vpack.c.b16 %v376, %v375
        %v392 = vpack.c.b16 %v378, %v377
        %v393 = vpack.c.b16 %v380, %v379
        %v394 = vpack.c.b16 %v382, %v381
        %v395 = vpack.c.b16 %v384, %v383
        %v396 = vpack.c.b16 %v386, %v385
        %v397 = vpack.c.b16 %v388, %v387
        %v398 = vpack.c.b16 %v390, %v389
        %v415 = vunpack.c.l.b16 %v327
        %v416 = vunpack.c.l.b16 %v328
        %v417 = vunpack.c.l.b16 %v329
        %v418 = vunpack.c.l.b16 %v330
        %v419 = vunpack.c.l.b16 %v331
        %v420 = vunpack.c.l.b16 %v332
        %v421 = vunpack.c.l.b16 %v333
        %v422 = vunpack.c.l.b16 %v334
        %v423 = vunpack.c.l.b16 %v335
        %v424 = vunpack.c.l.b16 %v336
        %v425 = vunpack.c.l.b16 %v337
        %v426 = vunpack.c.l.b16 %v338
        %v427 = vunpack.c.l.b16 %v339
        %v428 = vunpack.c.l.b16 %v340
        %v429 = vunpack.c.l.b16 %v341
        %v430 = vunpack.c.l.b16 %v342
        %v431 = vpack.c.b16 %v416, %v415
        %v432 = vpack.c.b16 %v418, %v417
        %v433 = vpack.c.b16 %v420, %v419
        %v434 = vpack.c.b16 %v422, %v421
        %v435 = vpack.c.b16 %v424, %v423
        %v436 = vpack.c.b16 %v426, %v425
        %v437 = vpack.c.b16 %v428, %v427
        %v438 = vpack.c.b16 %v430, %v429
        %vm439 = vcmask 261120
        %v441 = vsel %vm439, %v391, 0
        %v444 = vsel %vm439, %v392, 0
        %v447 = vsel %vm439, %v393, 0
        %v450 = vsel %vm439, %v394, 0
        %v453 = vsel %vm439, %v395, 0
        %v456 = vsel %vm439, %v396, 0
        %v459 = vsel %vm439, %v397, 0
        %v462 = vsel %vm439, %v398, 0
        %v465 = vsel %vm439, %v431, 0
        %v468 = vsel %vm439, %v432, 0
        %v471 = vsel %vm439, %v433, 0
        %v474 = vsel %vm439, %v434, 0
        %v477 = vsel %vm439, %v435, 0
        %v480 = vsel %vm439, %v436, 0
        %v483 = vsel %vm439, %v437, 0
        %v486 = vsel %vm439, %v438, 0
        %488 = vmatprep.subr.bf16.mxu0 0
        %489 = vmatpush1.bf16.xpose.msra.mxu0 %v465
        %490 = vmatprep.subr.bf16.mxu0 0
        %491 = vmatpush1.bf16.xpose.msra.mxu0 %v468
        %492 = vmatprep.subr.bf16.mxu0 0
        %493 = vmatpush1.bf16.xpose.msra.mxu0 %v471
        %494 = vmatprep.subr.bf16.mxu0 0
        %495 = vmatpush1.bf16.xpose.msra.mxu0 %v474
        %496 = vmatprep.subr.bf16.mxu0 0
        %497 = vmatpush1.bf16.xpose.msra.mxu0 %v477
        %498 = vmatprep.subr.bf16.mxu0 0
        %499 = vmatpush1.bf16.xpose.msra.mxu0 %v480
        %500 = vmatprep.subr.bf16.mxu0 0
        %501 = vmatpush1.bf16.xpose.msra.mxu0 %v483
        %502 = vmatprep.subr.bf16.mxu0 0
        %503 = vmatpush1.bf16.xpose.msra.mxu0 %v486
        %504 = vmatprep.subr.bf16.mxu0 0
        %505 = vmatpush1.bf16.xpose.msra.mxu0 0
        %506 = vmatprep.subr.bf16.mxu0 0
        %507 = vmatpush1.bf16.xpose.msra.mxu0 0
        %508 = vmatprep.subr.bf16.mxu0 0
        %509 = vmatpush1.bf16.xpose.msra.mxu0 0
        %510 = vmatprep.subr.bf16.mxu0 0
        %511 = vmatpush1.bf16.xpose.msra.mxu0 0
        %512 = vmatprep.subr.bf16.mxu0 0
        %513 = vmatpush1.bf16.xpose.msra.mxu0 0
        %514 = vmatprep.subr.bf16.mxu0 0
        %515 = vmatpush1.bf16.xpose.msra.mxu0 0
        %516 = vmatprep.subr.bf16.mxu0 0
        %517 = vmatpush1.bf16.xpose.msra.mxu0 0
        %518 = vmatprep.subr.bf16.mxu0 0
        %519 = vmatpush1.bf16.xpose.msra.mxu0 0
        %520 = vmatprep.mubr.bf16.mxu0 0
        %521 = vmatmul.mubr.bf16.gmra.mrb[0].mxu0 %v441
        %v522 = vpop.f32.mrb[0].mxu0
        %v523 = vadd.f32 0.0, %v522
        %v524 = vpop.f32.mrb[0].mxu0
        %v525 = vpop.f32.mrb[0].mxu0
        %v526 = vadd.f32 0.0, %v525
        %v527 = vpop.f32.mrb[0].mxu0
        %528 = vmatprep.mubr.bf16.mxu0 0
        %529 = vmatmul.mubr.bf16.gmra.mrb[0].mxu0 %v444
        %v530 = vpop.f32.mrb[0].mxu0
        %v531 = vadd.f32 0.0, %v530
        %v532 = vpop.f32.mrb[0].mxu0
        %v533 = vpop.f32.mrb[0].mxu0
        %v534 = vadd.f32 0.0, %v533
        %v535 = vpop.f32.mrb[0].mxu0
        %536 = vmatprep.mubr.bf16.mxu0 0
        %537 = vmatmul.mubr.bf16.gmra.mrb[0].mxu0 %v447
        %v538 = vpop.f32.mrb[0].mxu0
        %v539 = vadd.f32 0.0, %v538
        %v540 = vpop.f32.mrb[0].mxu0
        %v541 = vpop.f32.mrb[0].mxu0
        %v542 = vadd.f32 0.0, %v541
        %v543 = vpop.f32.mrb[0].mxu0
        %544 = vmatprep.mubr.bf16.mxu0 0
        %545 = vmatmul.mubr.bf16.gmra.mrb[0].mxu0 %v450
        %v546 = vpop.f32.mrb[0].mxu0
        %v547 = vadd.f32 0.0, %v546
        %v548 = vpop.f32.mrb[0].mxu0
        %v549 = vpop.f32.mrb[0].mxu0
        %v550 = vadd.f32 0.0, %v549
        %v551 = vpop.f32.mrb[0].mxu0
        %552 = vmatprep.mubr.bf16.mxu0 0
        %553 = vmatmul.mubr.bf16.gmra.mrb[0].mxu0 %v453
        %v554 = vpop.f32.mrb[0].mxu0
        %v555 = vadd.f32 0.0, %v554
        %v556 = vpop.f32.mrb[0].mxu0
        %v557 = vpop.f32.mrb[0].mxu0
        %v558 = vadd.f32 0.0, %v557
        %v559 = vpop.f32.mrb[0].mxu0
        %560 = vmatprep.mubr.bf16.mxu0 0
        %561 = vmatmul.mubr.bf16.gmra.mrb[0].mxu0 %v456
        %v562 = vpop.f32.mrb[0].mxu0
        %v563 = vadd.f32 0.0, %v562
        %v564 = vpop.f32.mrb[0].mxu0
        %v565 = vpop.f32.mrb[0].mxu0
        %v566 = vadd.f32 0.0, %v565
        %v567 = vpop.f32.mrb[0].mxu0
        %568 = vmatprep.mubr.bf16.mxu0 0
        %569 = vmatmul.mubr.bf16.gmra.mrb[0].mxu0 %v459
        %v570 = vpop.f32.mrb[0].mxu0
        %v571 = vadd.f32 0.0, %v570
        %v572 = vpop.f32.mrb[0].mxu0
        %v573 = vpop.f32.mrb[0].mxu0
        %v574 = vadd.f32 0.0, %v573
        %v575 = vpop.f32.mrb[0].mxu0
        %576 = vmatprep.mubr.bf16.mxu0 0
        %577 = vmatmul.mubr.bf16.gmra.mrb[0].mxu0 %v462
        %v578 = vpop.f32.mrb[0].mxu0
        %v579 = vadd.f32 0.0, %v578
        %v580 = vpop.f32.mrb[0].mxu0
        %v581 = vpop.f32.mrb[0].mxu0
        %v582 = vadd.f32 0.0, %v581
        %v583 = vpop.f32.mrb[0].mxu0
        %584 = vdwg.mxu0
        %585 = vmax.xlane.f32.xlu0 %v523
        %v586 = vpop.xlane.xlu0 %585
        %587 = vmax.xlane.f32.xlu0 %v526
        %v588 = vpop.xlane.xlu0 %587
        %589 = vmax.xlane.f32.xlu0 %v531
        %v590 = vpop.xlane.xlu0 %589
        %591 = vmax.xlane.f32.xlu0 %v534
        %v592 = vpop.xlane.xlu0 %591
        %593 = vmax.xlane.f32.xlu0 %v539
        %v594 = vpop.xlane.xlu0 %593
        %595 = vmax.xlane.f32.xlu0 %v542
        %v596 = vpop.xlane.xlu0 %595
        %597 = vmax.xlane.f32.xlu0 %v547
        %v598 = vpop.xlane.xlu0 %597
        %599 = vmax.xlane.f32.xlu0 %v550
        %v600 = vpop.xlane.xlu0 %599
        %601 = vmax.xlane.f32.xlu0 %v555
        %v602 = vpop.xlane.xlu0 %601
        %603 = vmax.xlane.f32.xlu0 %v558
        %v604 = vpop.xlane.xlu0 %603
        %605 = vmax.xlane.f32.xlu0 %v563
        %v606 = vpop.xlane.xlu0 %605
        %607 = vmax.xlane.f32.xlu0 %v566
        %v608 = vpop.xlane.xlu0 %607
        %609 = vmax.xlane.f32.xlu0 %v571
        %v610 = vpop.xlane.xlu0 %609
        %611 = vmax.xlane.f32.xlu0 %v574
        %v612 = vpop.xlane.xlu0 %611
        %613 = vmax.xlane.f32.xlu0 %v579
        %v614 = vpop.xlane.xlu0 %613
        %615 = vmax.xlane.f32.xlu0 %v582
        %v616 = vpop.xlane.xlu0 %615
        %v617 = vsub.f32 %v523, %v586
        %v618 = vsub.f32 %v526, %v588
        %v619 = vsub.f32 %v531, %v590
        %v620 = vsub.f32 %v534, %v592
        %v621 = vsub.f32 %v539, %v594
        %v622 = vsub.f32 %v542, %v596
        %v623 = vsub.f32 %v547, %v598
        %v624 = vsub.f32 %v550, %v600
        %v625 = vsub.f32 %v555, %v602
        %v626 = vsub.f32 %v558, %v604
        %v627 = vsub.f32 %v563, %v606
        %v628 = vsub.f32 %v566, %v608
        %v629 = vsub.f32 %v571, %v610
        %v630 = vsub.f32 %v574, %v612
        %v631 = vsub.f32 %v579, %v614
        %v632 = vsub.f32 %v582, %v616
        %v633 = vmul.f32 %v617, 1.442695
        %v634 = vpow.pop %v633
        %v635 = vmul.f32 %v618, 1.442695
        %v636 = vpow.pop %v635
        %v637 = vmul.f32 %v619, 1.442695
        %v638 = vpow.pop %v637
        %v639 = vmul.f32 %v620, 1.442695
        %v640 = vpow.pop %v639
        %v641 = vmul.f32 %v621, 1.442695
        %v642 = vpow.pop %v641
        %v643 = vmul.f32 %v622, 1.442695
        %v644 = vpow.pop %v643
        %v645 = vmul.f32 %v623, 1.442695
        %v646 = vpow.pop %v645
        %v647 = vmul.f32 %v624, 1.442695
        %v648 = vpow.pop %v647
        %v649 = vmul.f32 %v625, 1.442695
        %v650 = vpow.pop %v649
        %v651 = vmul.f32 %v626, 1.442695
        %v652 = vpow.pop %v651
        %v653 = vmul.f32 %v627, 1.442695
        %v654 = vpow.pop %v653
        %v655 = vmul.f32 %v628, 1.442695
        %v656 = vpow.pop %v655
        %v657 = vmul.f32 %v629, 1.442695
        %v658 = vpow.pop %v657
        %v659 = vmul.f32 %v630, 1.442695
        %v660 = vpow.pop %v659
        %v661 = vmul.f32 %v631, 1.442695
        %v662 = vpow.pop %v661
        %v663 = vmul.f32 %v632, 1.442695
        %v664 = vpow.pop %v663
        %665 = vadd.xlane.f32.xlu0 %v634
        %v666 = vpop.xlane.xlu0 %665
        %667 = vadd.xlane.f32.xlu0 %v636
        %v668 = vpop.xlane.xlu0 %667
        %669 = vadd.xlane.f32.xlu0 %v638
        %v670 = vpop.xlane.xlu0 %669
        %671 = vadd.xlane.f32.xlu0 %v640
        %v672 = vpop.xlane.xlu0 %671
        %673 = vadd.xlane.f32.xlu0 %v642
        %v674 = vpop.xlane.xlu0 %673
        %675 = vadd.xlane.f32.xlu0 %v644
        %v676 = vpop.xlane.xlu0 %675
        %677 = vadd.xlane.f32.xlu0 %v646
        %v678 = vpop.xlane.xlu0 %677
        %679 = vadd.xlane.f32.xlu0 %v648
        %v680 = vpop.xlane.xlu0 %679
        %681 = vadd.xlane.f32.xlu0 %v650
        %v682 = vpop.xlane.xlu0 %681
        %683 = vadd.xlane.f32.xlu0 %v652
        %v684 = vpop.xlane.xlu0 %683
        %685 = vadd.xlane.f32.xlu0 %v654
        %v686 = vpop.xlane.xlu0 %685
        %687 = vadd.xlane.f32.xlu0 %v656
        %v688 = vpop.xlane.xlu0 %687
        %689 = vadd.xlane.f32.xlu0 %v658
        %v690 = vpop.xlane.xlu0 %689
        %691 = vadd.xlane.f32.xlu0 %v660
        %v692 = vpop.xlane.xlu0 %691
        %693 = vadd.xlane.f32.xlu0 %v662
        %v694 = vpop.xlane.xlu0 %693
        %695 = vadd.xlane.f32.xlu0 %v664
        %v696 = vpop.xlane.xlu0 %695
        %v697 = vrcp.pop %v666
        %v698 = vrcp.pop %v668
        %v699 = vrcp.pop %v670
        %v700 = vrcp.pop %v672
        %v701 = vrcp.pop %v674
        %v702 = vrcp.pop %v676
        %v703 = vrcp.pop %v678
        %v704 = vrcp.pop %v680
        %v705 = vrcp.pop %v682
        %v706 = vrcp.pop %v684
        %v707 = vrcp.pop %v686
        %v708 = vrcp.pop %v688
        %v709 = vrcp.pop %v690
        %v710 = vrcp.pop %v692
        %v711 = vrcp.pop %v694
        %v712 = vrcp.pop %v696
        %v713 = vmul.f32 %v634, %v697
        %v714 = vmul.f32 %v636, %v698
        %v715 = vmul.f32 %v638, %v699
        %v716 = vmul.f32 %v640, %v700
        %v717 = vmul.f32 %v642, %v701
        %v718 = vmul.f32 %v644, %v702
        %v719 = vmul.f32 %v646, %v703
        %v720 = vmul.f32 %v648, %v704
        %v721 = vmul.f32 %v650, %v705
        %v722 = vmul.f32 %v652, %v706
        %v723 = vmul.f32 %v654, %v707
        %v724 = vmul.f32 %v656, %v708
        %v725 = vmul.f32 %v658, %v709
        %v726 = vmul.f32 %v660, %v710
        %v727 = vmul.f32 %v662, %v711
        %v728 = vmul.f32 %v664, %v712
        %v729 = vpack.c.bf16 %v714, %v713
        %v730 = vpack.c.bf16 %v716, %v715
        %v731 = vpack.c.bf16 %v718, %v717
        %v732 = vpack.c.bf16 %v720, %v719
        %v733 = vpack.c.bf16 %v722, %v721
        %v734 = vpack.c.bf16 %v724, %v723
        %v735 = vpack.c.bf16 %v726, %v725
        %v736 = vpack.c.bf16 %v728, %v727
        %v753 = vunpack.c.l.b16 %v343
        %v754 = vunpack.c.l.b16 %v344
        %v755 = vunpack.c.l.b16 %v345
        %v756 = vunpack.c.l.b16 %v346
        %v757 = vunpack.c.l.b16 %v347
        %v758 = vunpack.c.l.b16 %v348
        %v759 = vunpack.c.l.b16 %v349
        %v760 = vunpack.c.l.b16 %v350
        %v761 = vunpack.c.l.b16 %v351
        %v762 = vunpack.c.l.b16 %v352
        %v763 = vunpack.c.l.b16 %v353
        %v764 = vunpack.c.l.b16 %v354
        %v765 = vunpack.c.l.b16 %v355
        %v766 = vunpack.c.l.b16 %v356
        %v767 = vunpack.c.l.b16 %v357
        %v768 = vunpack.c.l.b16 %v358
        %v769 = vpack.c.b16 %v754, %v753
        %v770 = vpack.c.b16 %v756, %v755
        %v771 = vpack.c.b16 %v758, %v757
        %v772 = vpack.c.b16 %v760, %v759
        %v773 = vpack.c.b16 %v762, %v761
        %v774 = vpack.c.b16 %v764, %v763
        %v775 = vpack.c.b16 %v766, %v765
        %v776 = vpack.c.b16 %v768, %v767
        %785 = vmatprep.subr.bf16.mxu0 0
        %786 = vmatpush1.bf16.msra.mxu0 %v769
        %787 = vmatprep.subr.bf16.mxu0 0
        %788 = vmatpush1.bf16.msra.mxu0 %v770
        %789 = vmatprep.subr.bf16.mxu0 0
        %790 = vmatpush1.bf16.msra.mxu0 %v771
        %791 = vmatprep.subr.bf16.mxu0 0
        %792 = vmatpush1.bf16.msra.mxu0 %v772
        %793 = vmatprep.subr.bf16.mxu0 0
        %794 = vmatpush1.bf16.msra.mxu0 %v773
        %795 = vmatprep.subr.bf16.mxu0 0
        %796 = vmatpush1.bf16.msra.mxu0 %v774
        %797 = vmatprep.subr.bf16.mxu0 0
        %798 = vmatpush1.bf16.msra.mxu0 %v775
        %799 = vmatprep.subr.bf16.mxu0 0
        %800 = vmatpush1.bf16.msra.mxu0 %v776
        %801 = vmatprep.subr.bf16.mxu0 0
        %802 = vmatpush1.bf16.msra.mxu0 0
        %803 = vmatprep.subr.bf16.mxu0 0
        %804 = vmatpush1.bf16.msra.mxu0 0
        %805 = vmatprep.subr.bf16.mxu0 0
        %806 = vmatpush1.bf16.msra.mxu0 0
        %807 = vmatprep.subr.bf16.mxu0 0
        %808 = vmatpush1.bf16.msra.mxu0 0
        %809 = vmatprep.subr.bf16.mxu0 0
        %810 = vmatpush1.bf16.msra.mxu0 0
        %811 = vmatprep.subr.bf16.mxu0 0
        %812 = vmatpush1.bf16.msra.mxu0 0
        %813 = vmatprep.subr.bf16.mxu0 0
        %814 = vmatpush1.bf16.msra.mxu0 0
        %815 = vmatprep.subr.bf16.mxu0 0
        %816 = vmatpush1.bf16.msra.mxu0 0
        %817 = vmatprep.mubr.bf16.mxu0 0
        %818 = vmatmul.mubr.bf16.gmra.mrb[0].mxu0 %v729
        %v819 = vpop.f32.mrb[0].mxu0
        %v820 = vadd.f32 0.0, %v819
        %v821 = vpop.f32.mrb[0].mxu0
        %v822 = vpop.f32.mrb[0].mxu0
        %v823 = vadd.f32 0.0, %v822
        %v824 = vpop.f32.mrb[0].mxu0
        %825 = vmatprep.mubr.bf16.mxu0 0
        %826 = vmatmul.mubr.bf16.gmra.mrb[0].mxu0 %v730
        %v827 = vpop.f32.mrb[0].mxu0
        %v828 = vadd.f32 0.0, %v827
        %v829 = vpop.f32.mrb[0].mxu0
        %v830 = vpop.f32.mrb[0].mxu0
        %v831 = vadd.f32 0.0, %v830
        %v832 = vpop.f32.mrb[0].mxu0
        %833 = vmatprep.mubr.bf16.mxu0 0
        %834 = vmatmul.mubr.bf16.gmra.mrb[0].mxu0 %v731
        %v835 = vpop.f32.mrb[0].mxu0
        %v836 = vadd.f32 0.0, %v835
        %v837 = vpop.f32.mrb[0].mxu0
        %v838 = vpop.f32.mrb[0].mxu0
        %v839 = vadd.f32 0.0, %v838
        %v840 = vpop.f32.mrb[0].mxu0
        %841 = vmatprep.mubr.bf16.mxu0 0
        %842 = vmatmul.mubr.bf16.gmra.mrb[0].mxu0 %v732
        %v843 = vpop.f32.mrb[0].mxu0
        %v844 = vadd.f32 0.0, %v843
        %v845 = vpop.f32.mrb[0].mxu0
        %v846 = vpop.f32.mrb[0].mxu0
        %v847 = vadd.f32 0.0, %v846
        %v848 = vpop.f32.mrb[0].mxu0
        %849 = vmatprep.mubr.bf16.mxu0 0
        %850 = vmatmul.mubr.bf16.gmra.mrb[0].mxu0 %v733
        %v851 = vpop.f32.mrb[0].mxu0
        %v852 = vadd.f32 0.0, %v851
        %v853 = vpop.f32.mrb[0].mxu0
        %v854 = vpop.f32.mrb[0].mxu0
        %v855 = vadd.f32 0.0, %v854
        %v856 = vpop.f32.mrb[0].mxu0
        %857 = vmatprep.mubr.bf16.mxu0 0
        %858 = vmatmul.mubr.bf16.gmra.mrb[0].mxu0 %v734
        %v859 = vpop.f32.mrb[0].mxu0
        %v860 = vadd.f32 0.0, %v859
        %v861 = vpop.f32.mrb[0].mxu0
        %v862 = vpop.f32.mrb[0].mxu0
        %v863 = vadd.f32 0.0, %v862
        %v864 = vpop.f32.mrb[0].mxu0
        %865 = vmatprep.mubr.bf16.mxu0 0
        %866 = vmatmul.mubr.bf16.gmra.mrb[0].mxu0 %v735
        %v867 = vpop.f32.mrb[0].mxu0
        %v868 = vadd.f32 0.0, %v867
        %v869 = vpop.f32.mrb[0].mxu0
        %v870 = vpop.f32.mrb[0].mxu0
        %v871 = vadd.f32 0.0, %v870
        %v872 = vpop.f32.mrb[0].mxu0
        %873 = vmatprep.mubr.bf16.mxu0 0
        %874 = vmatmul.mubr.bf16.gmra.mrb[0].mxu0 %v736
        %v875 = vpop.f32.mrb[0].mxu0
        %v876 = vadd.f32 0.0, %v875
        %v877 = vpop.f32.mrb[0].mxu0
        %v878 = vpop.f32.mrb[0].mxu0
        %v879 = vadd.f32 0.0, %v878
        %v880 = vpop.f32.mrb[0].mxu0
        %881 = vdwg.mxu0
        %v882 = vld [vmem:[#allocation2] sm:$0xff]
        %v883 = vld [vmem:[#allocation2 + $0x8] sm:$0xff]
        %v884 = vld [vmem:[#allocation2 + $0x10] sm:$0xff]
        %v885 = vld [vmem:[#allocation2 + $0x18] sm:$0xff]
        %v886 = vld [vmem:[#allocation2 + $0x20] sm:$0xff]
        %v887 = vld [vmem:[#allocation2 + $0x28] sm:$0xff]
        %v888 = vld [vmem:[#allocation2 + $0x30] sm:$0xff]
        %v889 = vld [vmem:[#allocation2 + $0x38] sm:$0xff]
        %v890 = vld [vmem:[#allocation2 + $0x40] sm:$0xff]
        %v891 = vld [vmem:[#allocation2 + $0x48] sm:$0xff]
        %v892 = vld [vmem:[#allocation2 + $0x50] sm:$0xff]
        %v893 = vld [vmem:[#allocation2 + $0x58] sm:$0xff]
        %v894 = vld [vmem:[#allocation2 + $0x60] sm:$0xff]
        %v895 = vld [vmem:[#allocation2 + $0x68] sm:$0xff]
        %v896 = vld [vmem:[#allocation2 + $0x70] sm:$0xff]
        %v897 = vld [vmem:[#allocation2 + $0x78] sm:$0xff]
        %v898 = vpack.c.bf16 %v823, %v820
        %v899 = vpack.c.bf16 %v831, %v828
        %v900 = vpack.c.bf16 %v839, %v836
        %v901 = vpack.c.bf16 %v847, %v844
        %v902 = vpack.c.bf16 %v855, %v852
        %v903 = vpack.c.bf16 %v863, %v860
        %v904 = vpack.c.bf16 %v871, %v868
        %v905 = vpack.c.bf16 %v879, %v876
        %v906 = vld [vmem:[%s3] sm:$0xf]
        %v907 = vld [vmem:[%s3 + $0x4] sm:$0xf]
        %v908 = vld [vmem:[%s3 + $0x8] sm:$0xf]
        %v909 = vld [vmem:[%s3 + $0xc] sm:$0xf]
        %v914 = vunpack.c.l.b16 %v906
        %v915 = vunpack.c.l.b16 %v907
        %v916 = vunpack.c.l.b16 %v908
        %v917 = vunpack.c.l.b16 %v909
        %v918 = vpack.c.b16 %v915, %v914
        %v919 = vpack.c.b16 %v917, %v916
        %v923 = vsel %vm439, %v898, 0
        %v926 = vsel %vm439, %v899, 0
        %v929 = vsel %vm439, %v900, 0
        %v932 = vsel %vm439, %v901, 0
        %v935 = vsel %vm439, %v902, 0
        %v938 = vsel %vm439, %v903, 0
        %v941 = vsel %vm439, %v904, 0
        %v944 = vsel %vm439, %v905, 0
        %946 = vmatprep.subr.bf16.mxu0 0
        %947 = vmatpush1.bf16.msra.mxu0 %v918
        %948 = vmatprep.subr.bf16.mxu0 0
        %949 = vmatpush1.bf16.msra.mxu0 %v919
        %950 = vmatprep.subr.bf16.mxu0 0
        %951 = vmatpush1.bf16.msra.mxu0 0
        %952 = vmatprep.subr.bf16.mxu0 0
        %953 = vmatpush1.bf16.msra.mxu0 0
        %954 = vmatprep.subr.bf16.mxu0 0
        %955 = vmatpush1.bf16.msra.mxu0 0
        %956 = vmatprep.subr.bf16.mxu0 0
        %957 = vmatpush1.bf16.msra.mxu0 0
        %958 = vmatprep.subr.bf16.mxu0 0
        %959 = vmatpush1.bf16.msra.mxu0 0
        %960 = vmatprep.subr.bf16.mxu0 0
        %961 = vmatpush1.bf16.msra.mxu0 0
        %962 = vmatprep.subr.bf16.mxu0 0
        %963 = vmatpush1.bf16.msra.mxu0 0
        %964 = vmatprep.subr.bf16.mxu0 0
        %965 = vmatpush1.bf16.msra.mxu0 0
        %966 = vmatprep.subr.bf16.mxu0 0
        %967 = vmatpush1.bf16.msra.mxu0 0
        %968 = vmatprep.subr.bf16.mxu0 0
        %969 = vmatpush1.bf16.msra.mxu0 0
        %970 = vmatprep.subr.bf16.mxu0 0
        %971 = vmatpush1.bf16.msra.mxu0 0
        %972 = vmatprep.subr.bf16.mxu0 0
        %973 = vmatpush1.bf16.msra.mxu0 0
        %974 = vmatprep.subr.bf16.mxu0 0
        %975 = vmatpush1.bf16.msra.mxu0 0
        %976 = vmatprep.subr.bf16.mxu0 0
        %977 = vmatpush1.bf16.msra.mxu0 0
        %978 = vmatprep.mubr.bf16.mxu0 0
        %979 = vmatmul.mubr.bf16.gmra.mrb[0].mxu0 %v923
        %v980 = vpop.f32.mrb[0].mxu0
        %v981 = vadd.f32 0.0, %v980
        %v982 = vpop.f32.mrb[0].mxu0
        %v983 = vpop.f32.mrb[0].mxu0
        %v984 = vadd.f32 0.0, %v983
        %v985 = vpop.f32.mrb[0].mxu0
        %986 = vmatprep.mubr.bf16.mxu0 0
        %987 = vmatmul.mubr.bf16.gmra.mrb[0].mxu0 %v926
        %v988 = vpop.f32.mrb[0].mxu0
        %v989 = vadd.f32 0.0, %v988
        %v990 = vpop.f32.mrb[0].mxu0
        %v991 = vpop.f32.mrb[0].mxu0
        %v992 = vadd.f32 0.0, %v991
        %v993 = vpop.f32.mrb[0].mxu0
        %994 = vmatprep.mubr.bf16.mxu0 0
        %995 = vmatmul.mubr.bf16.gmra.mrb[0].mxu0 %v929
        %v996 = vpop.f32.mrb[0].mxu0
        %v997 = vadd.f32 0.0, %v996
        %v998 = vpop.f32.mrb[0].mxu0
        %v999 = vpop.f32.mrb[0].mxu0
        %v1000 = vadd.f32 0.0, %v999
        %v1001 = vpop.f32.mrb[0].mxu0
        %1002 = vmatprep.mubr.bf16.mxu0 0
        %1003 = vmatmul.mubr.bf16.gmra.mrb[0].mxu0 %v932
        %v1004 = vpop.f32.mrb[0].mxu0
        %v1005 = vadd.f32 0.0, %v1004
        %v1006 = vpop.f32.mrb[0].mxu0
        %v1007 = vpop.f32.mrb[0].mxu0
        %v1008 = vadd.f32 0.0, %v1007
        %v1009 = vpop.f32.mrb[0].mxu0
        %1010 = vmatprep.mubr.bf16.mxu0 0
        %1011 = vmatmul.mubr.bf16.gmra.mrb[0].mxu0 %v935
        %v1012 = vpop.f32.mrb[0].mxu0
        %v1013 = vadd.f32 0.0, %v1012
        %v1014 = vpop.f32.mrb[0].mxu0
        %v1015 = vpop.f32.mrb[0].mxu0
        %v1016 = vadd.f32 0.0, %v1015
        %v1017 = vpop.f32.mrb[0].mxu0
        %1018 = vmatprep.mubr.bf16.mxu0 0
        %1019 = vmatmul.mubr.bf16.gmra.mrb[0].mxu0 %v938
        %v1020 = vpop.f32.mrb[0].mxu0
        %v1021 = vadd.f32 0.0, %v1020
        %v1022 = vpop.f32.mrb[0].mxu0
        %v1023 = vpop.f32.mrb[0].mxu0
        %v1024 = vadd.f32 0.0, %v1023
        %v1025 = vpop.f32.mrb[0].mxu0
        %1026 = vmatprep.mubr.bf16.mxu0 0
        %1027 = vmatmul.mubr.bf16.gmra.mrb[0].mxu0 %v941
        %v1028 = vpop.f32.mrb[0].mxu0
        %v1029 = vadd.f32 0.0, %v1028
        %v1030 = vpop.f32.mrb[0].mxu0
        %v1031 = vpop.f32.mrb[0].mxu0
        %v1032 = vadd.f32 0.0, %v1031
        %v1033 = vpop.f32.mrb[0].mxu0
        %1034 = vmatprep.mubr.bf16.mxu0 0
        %1035 = vmatmul.mubr.bf16.gmra.mrb[0].mxu0 %v944
        %v1036 = vpop.f32.mrb[0].mxu0
        %v1037 = vadd.f32 0.0, %v1036
        %v1038 = vpop.f32.mrb[0].mxu0
        %v1039 = vpop.f32.mrb[0].mxu0
        %v1040 = vadd.f32 0.0, %v1039
        %v1041 = vpop.f32.mrb[0].mxu0
        %1042 = vdwg.mxu0
        %v1043 = vadd.f32 %v882, %v981
        %v1044 = vadd.f32 %v883, %v984
        %v1045 = vadd.f32 %v884, %v989
        %v1046 = vadd.f32 %v885, %v992
        %v1047 = vadd.f32 %v886, %v997
        %v1048 = vadd.f32 %v887, %v1000
        %v1049 = vadd.f32 %v888, %v1005
        %v1050 = vadd.f32 %v889, %v1008
        %v1051 = vadd.f32 %v890, %v1013
        %v1052 = vadd.f32 %v891, %v1016
        %v1053 = vadd.f32 %v892, %v1021
        %v1054 = vadd.f32 %v893, %v1024
        %v1055 = vadd.f32 %v894, %v1029
        %v1056 = vadd.f32 %v895, %v1032
        %v1057 = vadd.f32 %v896, %v1037
        %v1058 = vadd.f32 %v897, %v1040
        %1059 = vst [vmem:[#allocation2] sm:$0xff] %v1043
        %1060 = vst [vmem:[#allocation2 + $0x8] sm:$0xff] %v1044
        %1061 = vst [vmem:[#allocation2 + $0x10] sm:$0xff] %v1045
        %1062 = vst [vmem:[#allocation2 + $0x18] sm:$0xff] %v1046
        %1063 = vst [vmem:[#allocation2 + $0x20] sm:$0xff] %v1047
        %1064 = vst [vmem:[#allocation2 + $0x28] sm:$0xff] %v1048
        %1065 = vst [vmem:[#allocation2 + $0x30] sm:$0xff] %v1049
        %1066 = vst [vmem:[#allocation2 + $0x38] sm:$0xff] %v1050
        %1067 = vst [vmem:[#allocation2 + $0x40] sm:$0xff] %v1051
        %1068 = vst [vmem:[#allocation2 + $0x48] sm:$0xff] %v1052
        %1069 = vst [vmem:[#allocation2 + $0x50] sm:$0xff] %v1053
        %1070 = vst [vmem:[#allocation2 + $0x58] sm:$0xff] %v1054
        %1071 = vst [vmem:[#allocation2 + $0x60] sm:$0xff] %v1055
        %1072 = vst [vmem:[#allocation2 + $0x68] sm:$0xff] %v1056
        %1073 = vst [vmem:[#allocation2 + $0x70] sm:$0xff] %v1057
        %1074 = vst [vmem:[#allocation2 + $0x78] sm:$0xff] %v1058
        %s1075 = scalar_lea.vmem %s281, 64
        %v1076 = vld [vmem:[%s1075] sm:$0xf]
        %v1077 = vld [vmem:[%s1075 + $0x4] sm:$0xf]
        %v1078 = vld [vmem:[%s1075 + $0x8] sm:$0xf]
        %v1079 = vld [vmem:[%s1075 + $0xc] sm:$0xf]
        %v1080 = vld [vmem:[%s1075 + $0x10] sm:$0xf]
        %v1081 = vld [vmem:[%s1075 + $0x14] sm:$0xf]
        %v1082 = vld [vmem:[%s1075 + $0x18] sm:$0xf]
        %v1083 = vld [vmem:[%s1075 + $0x1c] sm:$0xf]
        %v1084 = vld [vmem:[%s1075 + $0x20] sm:$0xf]
        %v1085 = vld [vmem:[%s1075 + $0x24] sm:$0xf]
        %v1086 = vld [vmem:[%s1075 + $0x28] sm:$0xf]
        %v1087 = vld [vmem:[%s1075 + $0x2c] sm:$0xf]
        %v1088 = vld [vmem:[%s1075 + $0x30] sm:$0xf]
        %v1089 = vld [vmem:[%s1075 + $0x34] sm:$0xf]
        %v1090 = vld [vmem:[%s1075 + $0x38] sm:$0xf]
        %v1091 = vld [vmem:[%s1075 + $0x3c] sm:$0xf]
        %s1092 = scalar_lea.vmem %s287, 64
        %v1093 = vld [vmem:[%s1092] sm:$0xf]
        %v1094 = vld [vmem:[%s1092 + $0x4] sm:$0xf]
        %v1095 = vld [vmem:[%s1092 + $0x8] sm:$0xf]
        %v1096 = vld [vmem:[%s1092 + $0xc] sm:$0xf]
        %v1097 = vld [vmem:[%s1092 + $0x10] sm:$0xf]
        %v1098 = vld [vmem:[%s1092 + $0x14] sm:$0xf]
        %v1099 = vld [vmem:[%s1092 + $0x18] sm:$0xf]
        %v1100 = vld [vmem:[%s1092 + $0x1c] sm:$0xf]
        %v1101 = vld [vmem:[%s1092 + $0x20] sm:$0xf]
        %v1102 = vld [vmem:[%s1092 + $0x24] sm:$0xf]
        %v1103 = vld [vmem:[%s1092 + $0x28] sm:$0xf]
        %v1104 = vld [vmem:[%s1092 + $0x2c] sm:$0xf]
        %v1105 = vld [vmem:[%s1092 + $0x30] sm:$0xf]
        %v1106 = vld [vmem:[%s1092 + $0x34] sm:$0xf]
        %v1107 = vld [vmem:[%s1092 + $0x38] sm:$0xf]
        %v1108 = vld [vmem:[%s1092 + $0x3c] sm:$0xf]
        %s1109 = scalar_lea.vmem %s292, 64
        %v1110 = vld [vmem:[%s1109] sm:$0xf]
        %v1111 = vld [vmem:[%s1109 + $0x4] sm:$0xf]
        %v1112 = vld [vmem:[%s1109 + $0x8] sm:$0xf]
        %v1113 = vld [vmem:[%s1109 + $0xc] sm:$0xf]
        %v1114 = vld [vmem:[%s1109 + $0x10] sm:$0xf]
        %v1115 = vld [vmem:[%s1109 + $0x14] sm:$0xf]
        %v1116 = vld [vmem:[%s1109 + $0x18] sm:$0xf]
        %v1117 = vld [vmem:[%s1109 + $0x1c] sm:$0xf]
        %v1118 = vld [vmem:[%s1109 + $0x20] sm:$0xf]
        %v1119 = vld [vmem:[%s1109 + $0x24] sm:$0xf]
        %v1120 = vld [vmem:[%s1109 + $0x28] sm:$0xf]
        %v1121 = vld [vmem:[%s1109 + $0x2c] sm:$0xf]
        %v1122 = vld [vmem:[%s1109 + $0x30] sm:$0xf]
        %v1123 = vld [vmem:[%s1109 + $0x34] sm:$0xf]
        %v1124 = vld [vmem:[%s1109 + $0x38] sm:$0xf]
        %v1125 = vld [vmem:[%s1109 + $0x3c] sm:$0xf]
        %v1142 = vunpack.c.l.b16 %v1076
        %v1143 = vunpack.c.l.b16 %v1077
        %v1144 = vunpack.c.l.b16 %v1078
        %v1145 = vunpack.c.l.b16 %v1079
        %v1146 = vunpack.c.l.b16 %v1080
        %v1147 = vunpack.c.l.b16 %v1081
        %v1148 = vunpack.c.l.b16 %v1082
        %v1149 = vunpack.c.l.b16 %v1083
        %v1150 = vunpack.c.l.b16 %v1084
        %v1151 = vunpack.c.l.b16 %v1085
        %v1152 = vunpack.c.l.b16 %v1086
        %v1153 = vunpack.c.l.b16 %v1087
        %v1154 = vunpack.c.l.b16 %v1088
        %v1155 = vunpack.c.l.b16 %v1089
        %v1156 = vunpack.c.l.b16 %v1090
        %v1157 = vunpack.c.l.b16 %v1091
        %v1158 = vpack.c.b16 %v1143, %v1142
        %v1159 = vpack.c.b16 %v1145, %v1144
        %v1160 = vpack.c.b16 %v1147, %v1146
        %v1161 = vpack.c.b16 %v1149, %v1148
        %v1162 = vpack.c.b16 %v1151, %v1150
        %v1163 = vpack.c.b16 %v1153, %v1152
        %v1164 = vpack.c.b16 %v1155, %v1154
        %v1165 = vpack.c.b16 %v1157, %v1156
        %v1182 = vunpack.c.l.b16 %v1093
        %v1183 = vunpack.c.l.b16 %v1094
        %v1184 = vunpack.c.l.b16 %v1095
        %v1185 = vunpack.c.l.b16 %v1096
        %v1186 = vunpack.c.l.b16 %v1097
        %v1187 = vunpack.c.l.b16 %v1098
        %v1188 = vunpack.c.l.b16 %v1099
        %v1189 = vunpack.c.l.b16 %v1100
        %v1190 = vunpack.c.l.b16 %v1101
        %v1191 = vunpack.c.l.b16 %v1102
        %v1192 = vunpack.c.l.b16 %v1103
        %v1193 = vunpack.c.l.b16 %v1104
        %v1194 = vunpack.c.l.b16 %v1105
        %v1195 = vunpack.c.l.b16 %v1106
        %v1196 = vunpack.c.l.b16 %v1107
        %v1197 = vunpack.c.l.b16 %v1108
        %v1198 = vpack.c.b16 %v1183, %v1182
        %v1199 = vpack.c.b16 %v1185, %v1184
        %v1200 = vpack.c.b16 %v1187, %v1186
        %v1201 = vpack.c.b16 %v1189, %v1188
        %v1202 = vpack.c.b16 %v1191, %v1190
        %v1203 = vpack.c.b16 %v1193, %v1192
        %v1204 = vpack.c.b16 %v1195, %v1194
        %v1205 = vpack.c.b16 %v1197, %v1196
        %v1207 = vsel %vm439, %v1158, 0
        %v1210 = vsel %vm439, %v1159, 0
        %v1213 = vsel %vm439, %v1160, 0
        %v1216 = vsel %vm439, %v1161, 0
        %v1219 = vsel %vm439, %v1162, 0
        %v1222 = vsel %vm439, %v1163, 0
        %v1225 = vsel %vm439, %v1164, 0
        %v1228 = vsel %vm439, %v1165, 0
        %v1231 = vsel %vm439, %v1198, 0
        %v1234 = vsel %vm439, %v1199, 0
        %v1237 = vsel %vm439, %v1200, 0
        %v1240 = vsel %vm439, %v1201, 0
        %v1243 = vsel %vm439, %v1202, 0
        %v1246 = vsel %vm439, %v1203, 0
        %v1249 = vsel %vm439, %v1204, 0
        %v1252 = vsel %vm439, %v1205, 0
        %1254 = vmatprep.subr.bf16.mxu0 0
        %1255 = vmatpush1.bf16.xpose.msra.mxu0 %v1231
        %1256 = vmatprep.subr.bf16.mxu0 0
        %1257 = vmatpush1.bf16.xpose.msra.mxu0 %v1234
        %1258 = vmatprep.subr.bf16.mxu0 0
        %1259 = vmatpush1.bf16.xpose.msra.mxu0 %v1237
        %1260 = vmatprep.subr.bf16.mxu0 0
        %1261 = vmatpush1.bf16.xpose.msra.mxu0 %v1240
        %1262 = vmatprep.subr.bf16.mxu0 0
        %1263 = vmatpush1.bf16.xpose.msra.mxu0 %v1243
        %1264 = vmatprep.subr.bf16.mxu0 0
        %1265 = vmatpush1.bf16.xpose.msra.mxu0 %v1246
        %1266 = vmatprep.subr.bf16.mxu0 0
        %1267 = vmatpush1.bf16.xpose.msra.mxu0 %v1249
        %1268 = vmatprep.subr.bf16.mxu0 0
        %1269 = vmatpush1.bf16.xpose.msra.mxu0 %v1252
        %1270 = vmatprep.subr.bf16.mxu0 0
        %1271 = vmatpush1.bf16.xpose.msra.mxu0 0
        %1272 = vmatprep.subr.bf16.mxu0 0
        %1273 = vmatpush1.bf16.xpose.msra.mxu0 0
        %1274 = vmatprep.subr.bf16.mxu0 0
        %1275 = vmatpush1.bf16.xpose.msra.mxu0 0
        %1276 = vmatprep.subr.bf16.mxu0 0
        %1277 = vmatpush1.bf16.xpose.msra.mxu0 0
        %1278 = vmatprep.subr.bf16.mxu0 0
        %1279 = vmatpush1.bf16.xpose.msra.mxu0 0
        %1280 = vmatprep.subr.bf16.mxu0 0
        %1281 = vmatpush1.bf16.xpose.msra.mxu0 0
        %1282 = vmatprep.subr.bf16.mxu0 0
        %1283 = vmatpush1.bf16.xpose.msra.mxu0 0
        %1284 = vmatprep.subr.bf16.mxu0 0
        %1285 = vmatpush1.bf16.xpose.msra.mxu0 0
        %1286 = vmatprep.mubr.bf16.mxu0 0
        %1287 = vmatmul.mubr.bf16.gmra.mrb[0].mxu0 %v1207
        %v1288 = vpop.f32.mrb[0].mxu0
        %v1289 = vadd.f32 0.0, %v1288
        %v1290 = vpop.f32.mrb[0].mxu0
        %v1291 = vpop.f32.mrb[0].mxu0
        %v1292 = vadd.f32 0.0, %v1291
        %v1293 = vpop.f32.mrb[0].mxu0
        %1294 = vmatprep.mubr.bf16.mxu0 0
        %1295 = vmatmul.mubr.bf16.gmra.mrb[0].mxu0 %v1210
        %v1296 = vpop.f32.mrb[0].mxu0
        %v1297 = vadd.f32 0.0, %v1296
        %v1298 = vpop.f32.mrb[0].mxu0
        %v1299 = vpop.f32.mrb[0].mxu0
        %v1300 = vadd.f32 0.0, %v1299
        %v1301 = vpop.f32.mrb[0].mxu0
        %1302 = vmatprep.mubr.bf16.mxu0 0
        %1303 = vmatmul.mubr.bf16.gmra.mrb[0].mxu0 %v1213
        %v1304 = vpop.f32.mrb[0].mxu0
        %v1305 = vadd.f32 0.0, %v1304
        %v1306 = vpop.f32.mrb[0].mxu0
        %v1307 = vpop.f32.mrb[0].mxu0
        %v1308 = vadd.f32 0.0, %v1307
        %v1309 = vpop.f32.mrb[0].mxu0
        %1310 = vmatprep.mubr.bf16.mxu0 0
        %1311 = vmatmul.mubr.bf16.gmra.mrb[0].mxu0 %v1216
        %v1312 = vpop.f32.mrb[0].mxu0
        %v1313 = vadd.f32 0.0, %v1312
        %v1314 = vpop.f32.mrb[0].mxu0
        %v1315 = vpop.f32.mrb[0].mxu0
        %v1316 = vadd.f32 0.0, %v1315
        %v1317 = vpop.f32.mrb[0].mxu0
        %1318 = vmatprep.mubr.bf16.mxu0 0
        %1319 = vmatmul.mubr.bf16.gmra.mrb[0].mxu0 %v1219
        %v1320 = vpop.f32.mrb[0].mxu0
        %v1321 = vadd.f32 0.0, %v1320
        %v1322 = vpop.f32.mrb[0].mxu0
        %v1323 = vpop.f32.mrb[0].mxu0
        %v1324 = vadd.f32 0.0, %v1323
        %v1325 = vpop.f32.mrb[0].mxu0
        %1326 = vmatprep.mubr.bf16.mxu0 0
        %1327 = vmatmul.mubr.bf16.gmra.mrb[0].mxu0 %v1222
        %v1328 = vpop.f32.mrb[0].mxu0
        %v1329 = vadd.f32 0.0, %v1328
        %v1330 = vpop.f32.mrb[0].mxu0
        %v1331 = vpop.f32.mrb[0].mxu0
        %v1332 = vadd.f32 0.0, %v1331
        %v1333 = vpop.f32.mrb[0].mxu0
        %1334 = vmatprep.mubr.bf16.mxu0 0
        %1335 = vmatmul.mubr.bf16.gmra.mrb[0].mxu0 %v1225
        %v1336 = vpop.f32.mrb[0].mxu0
        %v1337 = vadd.f32 0.0, %v1336
        %v1338 = vpop.f32.mrb[0].mxu0
        %v1339 = vpop.f32.mrb[0].mxu0
        %v1340 = vadd.f32 0.0, %v1339
        %v1341 = vpop.f32.mrb[0].mxu0
        %1342 = vmatprep.mubr.bf16.mxu0 0
        %1343 = vmatmul.mubr.bf16.gmra.mrb[0].mxu0 %v1228
        %v1344 = vpop.f32.mrb[0].mxu0
        %v1345 = vadd.f32 0.0, %v1344
        %v1346 = vpop.f32.mrb[0].mxu0
        %v1347 = vpop.f32.mrb[0].mxu0
        %v1348 = vadd.f32 0.0, %v1347
        %v1349 = vpop.f32.mrb[0].mxu0
        %1350 = vdwg.mxu0
        %1351 = vmax.xlane.f32.xlu0 %v1289
        %v1352 = vpop.xlane.xlu0 %1351
        %1353 = vmax.xlane.f32.xlu0 %v1292
        %v1354 = vpop.xlane.xlu0 %1353
        %1355 = vmax.xlane.f32.xlu0 %v1297
        %v1356 = vpop.xlane.xlu0 %1355
        %1357 = vmax.xlane.f32.xlu0 %v1300
        %v1358 = vpop.xlane.xlu0 %1357
        %1359 = vmax.xlane.f32.xlu0 %v1305
        %v1360 = vpop.xlane.xlu0 %1359
        %1361 = vmax.xlane.f32.xlu0 %v1308
        %v1362 = vpop.xlane.xlu0 %1361
        %1363 = vmax.xlane.f32.xlu0 %v1313
        %v1364 = vpop.xlane.xlu0 %1363
        %1365 = vmax.xlane.f32.xlu0 %v1316
        %v1366 = vpop.xlane.xlu0 %1365
        %1367 = vmax.xlane.f32.xlu0 %v1321
        %v1368 = vpop.xlane.xlu0 %1367
        %1369 = vmax.xlane.f32.xlu0 %v1324
        %v1370 = vpop.xlane.xlu0 %1369
        %1371 = vmax.xlane.f32.xlu0 %v1329
        %v1372 = vpop.xlane.xlu0 %1371
        %1373 = vmax.xlane.f32.xlu0 %v1332
        %v1374 = vpop.xlane.xlu0 %1373
        %1375 = vmax.xlane.f32.xlu0 %v1337
        %v1376 = vpop.xlane.xlu0 %1375
        %1377 = vmax.xlane.f32.xlu0 %v1340
        %v1378 = vpop.xlane.xlu0 %1377
        %1379 = vmax.xlane.f32.xlu0 %v1345
        %v1380 = vpop.xlane.xlu0 %1379
        %1381 = vmax.xlane.f32.xlu0 %v1348
        %v1382 = vpop.xlane.xlu0 %1381
        %v1383 = vsub.f32 %v1289, %v1352
        %v1384 = vsub.f32 %v1292, %v1354
        %v1385 = vsub.f32 %v1297, %v1356
        %v1386 = vsub.f32 %v1300, %v1358
        %v1387 = vsub.f32 %v1305, %v1360
        %v1388 = vsub.f32 %v1308, %v1362
        %v1389 = vsub.f32 %v1313, %v1364
        %v1390 = vsub.f32 %v1316, %v1366
        %v1391 = vsub.f32 %v1321, %v1368
        %v1392 = vsub.f32 %v1324, %v1370
        %v1393 = vsub.f32 %v1329, %v1372
        %v1394 = vsub.f32 %v1332, %v1374
        %v1395 = vsub.f32 %v1337, %v1376
        %v1396 = vsub.f32 %v1340, %v1378
        %v1397 = vsub.f32 %v1345, %v1380
        %v1398 = vsub.f32 %v1348, %v1382
        %v1399 = vmul.f32 %v1383, 1.442695
        %v1400 = vpow.pop %v1399
        %v1401 = vmul.f32 %v1384, 1.442695
        %v1402 = vpow.pop %v1401
        %v1403 = vmul.f32 %v1385, 1.442695
        %v1404 = vpow.pop %v1403
        %v1405 = vmul.f32 %v1386, 1.442695
        %v1406 = vpow.pop %v1405
        %v1407 = vmul.f32 %v1387, 1.442695
        %v1408 = vpow.pop %v1407
        %v1409 = vmul.f32 %v1388, 1.442695
        %v1410 = vpow.pop %v1409
        %v1411 = vmul.f32 %v1389, 1.442695
        %v1412 = vpow.pop %v1411
        %v1413 = vmul.f32 %v1390, 1.442695
        %v1414 = vpow.pop %v1413
        %v1415 = vmul.f32 %v1391, 1.442695
        %v1416 = vpow.pop %v1415
        %v1417 = vmul.f32 %v1392, 1.442695
        %v1418 = vpow.pop %v1417
        %v1419 = vmul.f32 %v1393, 1.442695
        %v1420 = vpow.pop %v1419
        %v1421 = vmul.f32 %v1394, 1.442695
        %v1422 = vpow.pop %v1421
        %v1423 = vmul.f32 %v1395, 1.442695
        %v1424 = vpow.pop %v1423
        %v1425 = vmul.f32 %v1396, 1.442695
        %v1426 = vpow.pop %v1425
        %v1427 = vmul.f32 %v1397, 1.442695
        %v1428 = vpow.pop %v1427
        %v1429 = vmul.f32 %v1398, 1.442695
        %v1430 = vpow.pop %v1429
        %1431 = vadd.xlane.f32.xlu0 %v1400
        %v1432 = vpop.xlane.xlu0 %1431
        %1433 = vadd.xlane.f32.xlu0 %v1402
        %v1434 = vpop.xlane.xlu0 %1433
        %1435 = vadd.xlane.f32.xlu0 %v1404
        %v1436 = vpop.xlane.xlu0 %1435
        %1437 = vadd.xlane.f32.xlu0 %v1406
        %v1438 = vpop.xlane.xlu0 %1437
        %1439 = vadd.xlane.f32.xlu0 %v1408
        %v1440 = vpop.xlane.xlu0 %1439
        %1441 = vadd.xlane.f32.xlu0 %v1410
        %v1442 = vpop.xlane.xlu0 %1441
        %1443 = vadd.xlane.f32.xlu0 %v1412
        %v1444 = vpop.xlane.xlu0 %1443
        %1445 = vadd.xlane.f32.xlu0 %v1414
        %v1446 = vpop.xlane.xlu0 %1445
        %1447 = vadd.xlane.f32.xlu0 %v1416
        %v1448 = vpop.xlane.xlu0 %1447
        %1449 = vadd.xlane.f32.xlu0 %v1418
        %v1450 = vpop.xlane.xlu0 %1449
        %1451 = vadd.xlane.f32.xlu0 %v1420
        %v1452 = vpop.xlane.xlu0 %1451
        %1453 = vadd.xlane.f32.xlu0 %v1422
        %v1454 = vpop.xlane.xlu0 %1453
        %1455 = vadd.xlane.f32.xlu0 %v1424
        %v1456 = vpop.xlane.xlu0 %1455
        %1457 = vadd.xlane.f32.xlu0 %v1426
        %v1458 = vpop.xlane.xlu0 %1457
        %1459 = vadd.xlane.f32.xlu0 %v1428
        %v1460 = vpop.xlane.xlu0 %1459
        %1461 = vadd.xlane.f32.xlu0 %v1430
        %v1462 = vpop.xlane.xlu0 %1461
        %v1463 = vrcp.pop %v1432
        %v1464 = vrcp.pop %v1434
        %v1465 = vrcp.pop %v1436
        %v1466 = vrcp.pop %v1438
        %v1467 = vrcp.pop %v1440
        %v1468 = vrcp.pop %v1442
        %v1469 = vrcp.pop %v1444
        %v1470 = vrcp.pop %v1446
        %v1471 = vrcp.pop %v1448
        %v1472 = vrcp.pop %v1450
        %v1473 = vrcp.pop %v1452
        %v1474 = vrcp.pop %v1454
        %v1475 = vrcp.pop %v1456
        %v1476 = vrcp.pop %v1458
        %v1477 = vrcp.pop %v1460
        %v1478 = vrcp.pop %v1462
        %v1479 = vmul.f32 %v1400, %v1463
        %v1480 = vmul.f32 %v1402, %v1464
        %v1481 = vmul.f32 %v1404, %v1465
        %v1482 = vmul.f32 %v1406, %v1466
        %v1483 = vmul.f32 %v1408, %v1467
        %v1484 = vmul.f32 %v1410, %v1468
        %v1485 = vmul.f32 %v1412, %v1469
        %v1486 = vmul.f32 %v1414, %v1470
        %v1487 = vmul.f32 %v1416, %v1471
        %v1488 = vmul.f32 %v1418, %v1472
        %v1489 = vmul.f32 %v1420, %v1473
        %v1490 = vmul.f32 %v1422, %v1474
        %v1491 = vmul.f32 %v1424, %v1475
        %v1492 = vmul.f32 %v1426, %v1476
        %v1493 = vmul.f32 %v1428, %v1477
        %v1494 = vmul.f32 %v1430, %v1478
        %v1495 = vpack.c.bf16 %v1480, %v1479
        %v1496 = vpack.c.bf16 %v1482, %v1481
        %v1497 = vpack.c.bf16 %v1484, %v1483
        %v1498 = vpack.c.bf16 %v1486, %v1485
        %v1499 = vpack.c.bf16 %v1488, %v1487
        %v1500 = vpack.c.bf16 %v1490, %v1489
        %v1501 = vpack.c.bf16 %v1492, %v1491
        %v1502 = vpack.c.bf16 %v1494, %v1493
        %v1519 = vunpack.c.l.b16 %v1110
        %v1520 = vunpack.c.l.b16 %v1111
        %v1521 = vunpack.c.l.b16 %v1112
        %v1522 = vunpack.c.l.b16 %v1113
        %v1523 = vunpack.c.l.b16 %v1114
        %v1524 = vunpack.c.l.b16 %v1115
        %v1525 = vunpack.c.l.b16 %v1116
        %v1526 = vunpack.c.l.b16 %v1117
        %v1527 = vunpack.c.l.b16 %v1118
        %v1528 = vunpack.c.l.b16 %v1119
        %v1529 = vunpack.c.l.b16 %v1120
        %v1530 = vunpack.c.l.b16 %v1121
        %v1531 = vunpack.c.l.b16 %v1122
        %v1532 = vunpack.c.l.b16 %v1123
        %v1533 = vunpack.c.l.b16 %v1124
        %v1534 = vunpack.c.l.b16 %v1125
        %v1535 = vpack.c.b16 %v1520, %v1519
        %v1536 = vpack.c.b16 %v1522, %v1521
        %v1537 = vpack.c.b16 %v1524, %v1523
        %v1538 = vpack.c.b16 %v1526, %v1525
        %v1539 = vpack.c.b16 %v1528, %v1527
        %v1540 = vpack.c.b16 %v1530, %v1529
        %v1541 = vpack.c.b16 %v1532, %v1531
        %v1542 = vpack.c.b16 %v1534, %v1533
        %1551 = vmatprep.subr.bf16.mxu0 0
        %1552 = vmatpush1.bf16.msra.mxu0 %v1535
        %1553 = vmatprep.subr.bf16.mxu0 0
        %1554 = vmatpush1.bf16.msra.mxu0 %v1536
        %1555 = vmatprep.subr.bf16.mxu0 0
        %1556 = vmatpush1.bf16.msra.mxu0 %v1537
        %1557 = vmatprep.subr.bf16.mxu0 0
        %1558 = vmatpush1.bf16.msra.mxu0 %v1538
        %1559 = vmatprep.subr.bf16.mxu0 0
        %1560 = vmatpush1.bf16.msra.mxu0 %v1539
        %1561 = vmatprep.subr.bf16.mxu0 0
        %1562 = vmatpush1.bf16.msra.mxu0 %v1540
        %1563 = vmatprep.subr.bf16.mxu0 0
        %1564 = vmatpush1.bf16.msra.mxu0 %v1541
        %1565 = vmatprep.subr.bf16.mxu0 0
        %1566 = vmatpush1.bf16.msra.mxu0 %v1542
        %1567 = vmatprep.subr.bf16.mxu0 0
        %1568 = vmatpush1.bf16.msra.mxu0 0
        %1569 = vmatprep.subr.bf16.mxu0 0
        %1570 = vmatpush1.bf16.msra.mxu0 0
        %1571 = vmatprep.subr.bf16.mxu0 0
        %1572 = vmatpush1.bf16.msra.mxu0 0
        %1573 = vmatprep.subr.bf16.mxu0 0
        %1574 = vmatpush1.bf16.msra.mxu0 0
        %1575 = vmatprep.subr.bf16.mxu0 0
        %1576 = vmatpush1.bf16.msra.mxu0 0
        %1577 = vmatprep.subr.bf16.mxu0 0
        %1578 = vmatpush1.bf16.msra.mxu0 0
        %1579 = vmatprep.subr.bf16.mxu0 0
        %1580 = vmatpush1.bf16.msra.mxu0 0
        %1581 = vmatprep.subr.bf16.mxu0 0
        %1582 = vmatpush1.bf16.msra.mxu0 0
        %1583 = vmatprep.mubr.bf16.mxu0 0
        %1584 = vmatmul.mubr.bf16.gmra.mrb[0].mxu0 %v1495
        %v1585 = vpop.f32.mrb[0].mxu0
        %v1586 = vadd.f32 0.0, %v1585
        %v1587 = vpop.f32.mrb[0].mxu0
        %v1588 = vpop.f32.mrb[0].mxu0
        %v1589 = vadd.f32 0.0, %v1588
        %v1590 = vpop.f32.mrb[0].mxu0
        %1591 = vmatprep.mubr.bf16.mxu0 0
        %1592 = vmatmul.mubr.bf16.gmra.mrb[0].mxu0 %v1496
        %v1593 = vpop.f32.mrb[0].mxu0
        %v1594 = vadd.f32 0.0, %v1593
        %v1595 = vpop.f32.mrb[0].mxu0
        %v1596 = vpop.f32.mrb[0].mxu0
        %v1597 = vadd.f32 0.0, %v1596
        %v1598 = vpop.f32.mrb[0].mxu0
        %1599 = vmatprep.mubr.bf16.mxu0 0
        %1600 = vmatmul.mubr.bf16.gmra.mrb[0].mxu0 %v1497
        %v1601 = vpop.f32.mrb[0].mxu0
        %v1602 = vadd.f32 0.0, %v1601
        %v1603 = vpop.f32.mrb[0].mxu0
        %v1604 = vpop.f32.mrb[0].mxu0
        %v1605 = vadd.f32 0.0, %v1604
        %v1606 = vpop.f32.mrb[0].mxu0
        %1607 = vmatprep.mubr.bf16.mxu0 0
        %1608 = vmatmul.mubr.bf16.gmra.mrb[0].mxu0 %v1498
        %v1609 = vpop.f32.mrb[0].mxu0
        %v1610 = vadd.f32 0.0, %v1609
        %v1611 = vpop.f32.mrb[0].mxu0
        %v1612 = vpop.f32.mrb[0].mxu0
        %v1613 = vadd.f32 0.0, %v1612
        %v1614 = vpop.f32.mrb[0].mxu0
        %1615 = vmatprep.mubr.bf16.mxu0 0
        %1616 = vmatmul.mubr.bf16.gmra.mrb[0].mxu0 %v1499
        %v1617 = vpop.f32.mrb[0].mxu0
        %v1618 = vadd.f32 0.0, %v1617
        %v1619 = vpop.f32.mrb[0].mxu0
        %v1620 = vpop.f32.mrb[0].mxu0
        %v1621 = vadd.f32 0.0, %v1620
        %v1622 = vpop.f32.mrb[0].mxu0
        %1623 = vmatprep.mubr.bf16.mxu0 0
        %1624 = vmatmul.mubr.bf16.gmra.mrb[0].mxu0 %v1500
        %v1625 = vpop.f32.mrb[0].mxu0
        %v1626 = vadd.f32 0.0, %v1625
        %v1627 = vpop.f32.mrb[0].mxu0
        %v1628 = vpop.f32.mrb[0].mxu0
        %v1629 = vadd.f32 0.0, %v1628
        %v1630 = vpop.f32.mrb[0].mxu0
        %1631 = vmatprep.mubr.bf16.mxu0 0
        %1632 = vmatmul.mubr.bf16.gmra.mrb[0].mxu0 %v1501
        %v1633 = vpop.f32.mrb[0].mxu0
        %v1634 = vadd.f32 0.0, %v1633
        %v1635 = vpop.f32.mrb[0].mxu0
        %v1636 = vpop.f32.mrb[0].mxu0
        %v1637 = vadd.f32 0.0, %v1636
        %v1638 = vpop.f32.mrb[0].mxu0
        %1639 = vmatprep.mubr.bf16.mxu0 0
        %1640 = vmatmul.mubr.bf16.gmra.mrb[0].mxu0 %v1502
        %v1641 = vpop.f32.mrb[0].mxu0
        %v1642 = vadd.f32 0.0, %v1641
        %v1643 = vpop.f32.mrb[0].mxu0
        %v1644 = vpop.f32.mrb[0].mxu0
        %v1645 = vadd.f32 0.0, %v1644
        %v1646 = vpop.f32.mrb[0].mxu0
        %1647 = vdwg.mxu0
        %v1648 = vld [vmem:[#allocation2] sm:$0xff]
        %v1649 = vld [vmem:[#allocation2 + $0x8] sm:$0xff]
        %v1650 = vld [vmem:[#allocation2 + $0x10] sm:$0xff]
        %v1651 = vld [vmem:[#allocation2 + $0x18] sm:$0xff]
        %v1652 = vld [vmem:[#allocation2 + $0x20] sm:$0xff]
        %v1653 = vld [vmem:[#allocation2 + $0x28] sm:$0xff]
        %v1654 = vld [vmem:[#allocation2 + $0x30] sm:$0xff]
        %v1655 = vld [vmem:[#allocation2 + $0x38] sm:$0xff]
        %v1656 = vld [vmem:[#allocation2 + $0x40] sm:$0xff]
        %v1657 = vld [vmem:[#allocation2 + $0x48] sm:$0xff]
        %v1658 = vld [vmem:[#allocation2 + $0x50] sm:$0xff]
        %v1659 = vld [vmem:[#allocation2 + $0x58] sm:$0xff]
        %v1660 = vld [vmem:[#allocation2 + $0x60] sm:$0xff]
        %v1661 = vld [vmem:[#allocation2 + $0x68] sm:$0xff]
        %v1662 = vld [vmem:[#allocation2 + $0x70] sm:$0xff]
        %v1663 = vld [vmem:[#allocation2 + $0x78] sm:$0xff]
        %v1664 = vpack.c.bf16 %v1589, %v1586
        %v1665 = vpack.c.bf16 %v1597, %v1594
        %v1666 = vpack.c.bf16 %v1605, %v1602
        %v1667 = vpack.c.bf16 %v1613, %v1610
        %v1668 = vpack.c.bf16 %v1621, %v1618
        %v1669 = vpack.c.bf16 %v1629, %v1626
        %v1670 = vpack.c.bf16 %v1637, %v1634
        %v1671 = vpack.c.bf16 %v1645, %v1642
        %s1672 = scalar_lea.vmem %s3, 16
        %v1673 = vld [vmem:[%s1672] sm:$0xf]
        %v1674 = vld [vmem:[%s1672 + $0x4] sm:$0xf]
        %v1675 = vld [vmem:[%s1672 + $0x8] sm:$0xf]
        %v1676 = vld [vmem:[%s1672 + $0xc] sm:$0xf]
        %v1681 = vunpack.c.l.b16 %v1673
        %v1682 = vunpack.c.l.b16 %v1674
        %v1683 = vunpack.c.l.b16 %v1675
        %v1684 = vunpack.c.l.b16 %v1676
        %v1685 = vpack.c.b16 %v1682, %v1681
        %v1686 = vpack.c.b16 %v1684, %v1683
        %v1690 = vsel %vm439, %v1664, 0
        %v1693 = vsel %vm439, %v1665, 0
        %v1696 = vsel %vm439, %v1666, 0
        %v1699 = vsel %vm439, %v1667, 0
        %v1702 = vsel %vm439, %v1668, 0
        %v1705 = vsel %vm439, %v1669, 0
        %v1708 = vsel %vm439, %v1670, 0
        %v1711 = vsel %vm439, %v1671, 0
        %1713 = vmatprep.subr.bf16.mxu0 0
        %1714 = vmatpush1.bf16.msra.mxu0 %v1685
        %1715 = vmatprep.subr.bf16.mxu0 0
        %1716 = vmatpush1.bf16.msra.mxu0 %v1686
        %1717 = vmatprep.subr.bf16.mxu0 0
        %1718 = vmatpush1.bf16.msra.mxu0 0
        %1719 = vmatprep.subr.bf16.mxu0 0
        %1720 = vmatpush1.bf16.msra.mxu0 0
        %1721 = vmatprep.subr.bf16.mxu0 0
        %1722 = vmatpush1.bf16.msra.mxu0 0
        %1723 = vmatprep.subr.bf16.mxu0 0
        %1724 = vmatpush1.bf16.msra.mxu0 0
        %1725 = vmatprep.subr.bf16.mxu0 0
        %1726 = vmatpush1.bf16.msra.mxu0 0
        %1727 = vmatprep.subr.bf16.mxu0 0
        %1728 = vmatpush1.bf16.msra.mxu0 0
        %1729 = vmatprep.subr.bf16.mxu0 0
        %1730 = vmatpush1.bf16.msra.mxu0 0
        %1731 = vmatprep.subr.bf16.mxu0 0
        %1732 = vmatpush1.bf16.msra.mxu0 0
        %1733 = vmatprep.subr.bf16.mxu0 0
        %1734 = vmatpush1.bf16.msra.mxu0 0
        %1735 = vmatprep.subr.bf16.mxu0 0
        %1736 = vmatpush1.bf16.msra.mxu0 0
        %1737 = vmatprep.subr.bf16.mxu0 0
        %1738 = vmatpush1.bf16.msra.mxu0 0
        %1739 = vmatprep.subr.bf16.mxu0 0
        %1740 = vmatpush1.bf16.msra.mxu0 0
        %1741 = vmatprep.subr.bf16.mxu0 0
        %1742 = vmatpush1.bf16.msra.mxu0 0
        %1743 = vmatprep.subr.bf16.mxu0 0
        %1744 = vmatpush1.bf16.msra.mxu0 0
        %1745 = vmatprep.mubr.bf16.mxu0 0
        %1746 = vmatmul.mubr.bf16.gmra.mrb[0].mxu0 %v1690
        %v1747 = vpop.f32.mrb[0].mxu0
        %v1748 = vadd.f32 0.0, %v1747
        %v1749 = vpop.f32.mrb[0].mxu0
        %v1750 = vpop.f32.mrb[0].mxu0
        %v1751 = vadd.f32 0.0, %v1750
        %v1752 = vpop.f32.mrb[0].mxu0
        %1753 = vmatprep.mubr.bf16.mxu0 0
        %1754 = vmatmul.mubr.bf16.gmra.mrb[0].mxu0 %v1693
        %v1755 = vpop.f32.mrb[0].mxu0
        %v1756 = vadd.f32 0.0, %v1755
        %v1757 = vpop.f32.mrb[0].mxu0
        %v1758 = vpop.f32.mrb[0].mxu0
        %v1759 = vadd.f32 0.0, %v1758
        %v1760 = vpop.f32.mrb[0].mxu0
        %1761 = vmatprep.mubr.bf16.mxu0 0
        %1762 = vmatmul.mubr.bf16.gmra.mrb[0].mxu0 %v1696
        %v1763 = vpop.f32.mrb[0].mxu0
        %v1764 = vadd.f32 0.0, %v1763
        %v1765 = vpop.f32.mrb[0].mxu0
        %v1766 = vpop.f32.mrb[0].mxu0
        %v1767 = vadd.f32 0.0, %v1766
        %v1768 = vpop.f32.mrb[0].mxu0
        %1769 = vmatprep.mubr.bf16.mxu0 0
        %1770 = vmatmul.mubr.bf16.gmra.mrb[0].mxu0 %v1699
        %v1771 = vpop.f32.mrb[0].mxu0
        %v1772 = vadd.f32 0.0, %v1771
        %v1773 = vpop.f32.mrb[0].mxu0
        %v1774 = vpop.f32.mrb[0].mxu0
        %v1775 = vadd.f32 0.0, %v1774
        %v1776 = vpop.f32.mrb[0].mxu0
        %1777 = vmatprep.mubr.bf16.mxu0 0
        %1778 = vmatmul.mubr.bf16.gmra.mrb[0].mxu0 %v1702
        %v1779 = vpop.f32.mrb[0].mxu0
        %v1780 = vadd.f32 0.0, %v1779
        %v1781 = vpop.f32.mrb[0].mxu0
        %v1782 = vpop.f32.mrb[0].mxu0
        %v1783 = vadd.f32 0.0, %v1782
        %v1784 = vpop.f32.mrb[0].mxu0
        %1785 = vmatprep.mubr.bf16.mxu0 0
        %1786 = vmatmul.mubr.bf16.gmra.mrb[0].mxu0 %v1705
        %v1787 = vpop.f32.mrb[0].mxu0
        %v1788 = vadd.f32 0.0, %v1787
        %v1789 = vpop.f32.mrb[0].mxu0
        %v1790 = vpop.f32.mrb[0].mxu0
        %v1791 = vadd.f32 0.0, %v1790
        %v1792 = vpop.f32.mrb[0].mxu0
        %1793 = vmatprep.mubr.bf16.mxu0 0
        %1794 = vmatmul.mubr.bf16.gmra.mrb[0].mxu0 %v1708
        %v1795 = vpop.f32.mrb[0].mxu0
        %v1796 = vadd.f32 0.0, %v1795
        %v1797 = vpop.f32.mrb[0].mxu0
        %v1798 = vpop.f32.mrb[0].mxu0
        %v1799 = vadd.f32 0.0, %v1798
        %v1800 = vpop.f32.mrb[0].mxu0
        %1801 = vmatprep.mubr.bf16.mxu0 0
        %1802 = vmatmul.mubr.bf16.gmra.mrb[0].mxu0 %v1711
        %v1803 = vpop.f32.mrb[0].mxu0
        %v1804 = vadd.f32 0.0, %v1803
        %v1805 = vpop.f32.mrb[0].mxu0
        %v1806 = vpop.f32.mrb[0].mxu0
        %v1807 = vadd.f32 0.0, %v1806
        %v1808 = vpop.f32.mrb[0].mxu0
        %1809 = vdwg.mxu0
        %v1810 = vadd.f32 %v1648, %v1748
        %v1811 = vadd.f32 %v1649, %v1751
        %v1812 = vadd.f32 %v1650, %v1756
        %v1813 = vadd.f32 %v1651, %v1759
        %v1814 = vadd.f32 %v1652, %v1764
        %v1815 = vadd.f32 %v1653, %v1767
        %v1816 = vadd.f32 %v1654, %v1772
        %v1817 = vadd.f32 %v1655, %v1775
        %v1818 = vadd.f32 %v1656, %v1780
        %v1819 = vadd.f32 %v1657, %v1783
        %v1820 = vadd.f32 %v1658, %v1788
        %v1821 = vadd.f32 %v1659, %v1791
        %v1822 = vadd.f32 %v1660, %v1796
        %v1823 = vadd.f32 %v1661, %v1799
        %v1824 = vadd.f32 %v1662, %v1804
        %v1825 = vadd.f32 %v1663, %v1807
        %1826 = vst [vmem:[#allocation2] sm:$0xff] %v1810
        %1827 = vst [vmem:[#allocation2 + $0x8] sm:$0xff] %v1811
        %1828 = vst [vmem:[#allocation2 + $0x10] sm:$0xff] %v1812
        %1829 = vst [vmem:[#allocation2 + $0x18] sm:$0xff] %v1813
        %1830 = vst [vmem:[#allocation2 + $0x20] sm:$0xff] %v1814
        %1831 = vst [vmem:[#allocation2 + $0x28] sm:$0xff] %v1815
        %1832 = vst [vmem:[#allocation2 + $0x30] sm:$0xff] %v1816
        %1833 = vst [vmem:[#allocation2 + $0x38] sm:$0xff] %v1817
        %1834 = vst [vmem:[#allocation2 + $0x40] sm:$0xff] %v1818
        %1835 = vst [vmem:[#allocation2 + $0x48] sm:$0xff] %v1819
        %1836 = vst [vmem:[#allocation2 + $0x50] sm:$0xff] %v1820
        %1837 = vst [vmem:[#allocation2 + $0x58] sm:$0xff] %v1821
        %1838 = vst [vmem:[#allocation2 + $0x60] sm:$0xff] %v1822
        %1839 = vst [vmem:[#allocation2 + $0x68] sm:$0xff] %v1823
        %1840 = vst [vmem:[#allocation2 + $0x70] sm:$0xff] %v1824
        %1841 = vst [vmem:[#allocation2 + $0x78] sm:$0xff] %v1825
        %s1842 = scalar_lea.vmem %s281, 128
        %v1843 = vld [vmem:[%s1842] sm:$0xf]
        %v1844 = vld [vmem:[%s1842 + $0x4] sm:$0xf]
        %v1845 = vld [vmem:[%s1842 + $0x8] sm:$0xf]
        %v1846 = vld [vmem:[%s1842 + $0xc] sm:$0xf]
        %v1847 = vld [vmem:[%s1842 + $0x10] sm:$0xf]
        %v1848 = vld [vmem:[%s1842 + $0x14] sm:$0xf]
        %v1849 = vld [vmem:[%s1842 + $0x18] sm:$0xf]
        %v1850 = vld [vmem:[%s1842 + $0x1c] sm:$0xf]
        %v1851 = vld [vmem:[%s1842 + $0x20] sm:$0xf]
        %v1852 = vld [vmem:[%s1842 + $0x24] sm:$0xf]
        %v1853 = vld [vmem:[%s1842 + $0x28] sm:$0xf]
        %v1854 = vld [vmem:[%s1842 + $0x2c] sm:$0xf]
        %v1855 = vld [vmem:[%s1842 + $0x30] sm:$0xf]
        %v1856 = vld [vmem:[%s1842 + $0x34] sm:$0xf]
        %v1857 = vld [vmem:[%s1842 + $0x38] sm:$0xf]
        %v1858 = vld [vmem:[%s1842 + $0x3c] sm:$0xf]
        %s1859 = scalar_lea.vmem %s287, 128
        %v1860 = vld [vmem:[%s1859] sm:$0xf]
        %v1861 = vld [vmem:[%s1859 + $0x4] sm:$0xf]
        %v1862 = vld [vmem:[%s1859 + $0x8] sm:$0xf]
        %v1863 = vld [vmem:[%s1859 + $0xc] sm:$0xf]
        %v1864 = vld [vmem:[%s1859 + $0x10] sm:$0xf]
        %v1865 = vld [vmem:[%s1859 + $0x14] sm:$0xf]
        %v1866 = vld [vmem:[%s1859 + $0x18] sm:$0xf]
        %v1867 = vld [vmem:[%s1859 + $0x1c] sm:$0xf]
        %v1868 = vld [vmem:[%s1859 + $0x20] sm:$0xf]
        %v1869 = vld [vmem:[%s1859 + $0x24] sm:$0xf]
        %v1870 = vld [vmem:[%s1859 + $0x28] sm:$0xf]
        %v1871 = vld [vmem:[%s1859 + $0x2c] sm:$0xf]
        %v1872 = vld [vmem:[%s1859 + $0x30] sm:$0xf]
        %v1873 = vld [vmem:[%s1859 + $0x34] sm:$0xf]
        %v1874 = vld [vmem:[%s1859 + $0x38] sm:$0xf]
        %v1875 = vld [vmem:[%s1859 + $0x3c] sm:$0xf]
        %s1876 = scalar_lea.vmem %s292, 128
        %v1877 = vld [vmem:[%s1876] sm:$0xf]
        %v1878 = vld [vmem:[%s1876 + $0x4] sm:$0xf]
        %v1879 = vld [vmem:[%s1876 + $0x8] sm:$0xf]
        %v1880 = vld [vmem:[%s1876 + $0xc] sm:$0xf]
        %v1881 = vld [vmem:[%s1876 + $0x10] sm:$0xf]
        %v1882 = vld [vmem:[%s1876 + $0x14] sm:$0xf]
        %v1883 = vld [vmem:[%s1876 + $0x18] sm:$0xf]
        %v1884 = vld [vmem:[%s1876 + $0x1c] sm:$0xf]
        %v1885 = vld [vmem:[%s1876 + $0x20] sm:$0xf]
        %v1886 = vld [vmem:[%s1876 + $0x24] sm:$0xf]
        %v1887 = vld [vmem:[%s1876 + $0x28] sm:$0xf]
        %v1888 = vld [vmem:[%s1876 + $0x2c] sm:$0xf]
        %v1889 = vld [vmem:[%s1876 + $0x30] sm:$0xf]
        %v1890 = vld [vmem:[%s1876 + $0x34] sm:$0xf]
        %v1891 = vld [vmem:[%s1876 + $0x38] sm:$0xf]
        %v1892 = vld [vmem:[%s1876 + $0x3c] sm:$0xf]
        %v1909 = vunpack.c.l.b16 %v1843
        %v1910 = vunpack.c.l.b16 %v1844
        %v1911 = vunpack.c.l.b16 %v1845
        %v1912 = vunpack.c.l.b16 %v1846
        %v1913 = vunpack.c.l.b16 %v1847
        %v1914 = vunpack.c.l.b16 %v1848
        %v1915 = vunpack.c.l.b16 %v1849
        %v1916 = vunpack.c.l.b16 %v1850
        %v1917 = vunpack.c.l.b16 %v1851
        %v1918 = vunpack.c.l.b16 %v1852
        %v1919 = vunpack.c.l.b16 %v1853
        %v1920 = vunpack.c.l.b16 %v1854
        %v1921 = vunpack.c.l.b16 %v1855
        %v1922 = vunpack.c.l.b16 %v1856
        %v1923 = vunpack.c.l.b16 %v1857
        %v1924 = vunpack.c.l.b16 %v1858
        %v1925 = vpack.c.b16 %v1910, %v1909
        %v1926 = vpack.c.b16 %v1912, %v1911
        %v1927 = vpack.c.b16 %v1914, %v1913
        %v1928 = vpack.c.b16 %v1916, %v1915
        %v1929 = vpack.c.b16 %v1918, %v1917
        %v1930 = vpack.c.b16 %v1920, %v1919
        %v1931 = vpack.c.b16 %v1922, %v1921
        %v1932 = vpack.c.b16 %v1924, %v1923
        %v1949 = vunpack.c.l.b16 %v1860
        %v1950 = vunpack.c.l.b16 %v1861
        %v1951 = vunpack.c.l.b16 %v1862
        %v1952 = vunpack.c.l.b16 %v1863
        %v1953 = vunpack.c.l.b16 %v1864
        %v1954 = vunpack.c.l.b16 %v1865
        %v1955 = vunpack.c.l.b16 %v1866
        %v1956 = vunpack.c.l.b16 %v1867
        %v1957 = vunpack.c.l.b16 %v1868
        %v1958 = vunpack.c.l.b16 %v1869
        %v1959 = vunpack.c.l.b16 %v1870
        %v1960 = vunpack.c.l.b16 %v1871
        %v1961 = vunpack.c.l.b16 %v1872
        %v1962 = vunpack.c.l.b16 %v1873
        %v1963 = vunpack.c.l.b16 %v1874
        %v1964 = vunpack.c.l.b16 %v1875
        %v1965 = vpack.c.b16 %v1950, %v1949
        %v1966 = vpack.c.b16 %v1952, %v1951
        %v1967 = vpack.c.b16 %v1954, %v1953
        %v1968 = vpack.c.b16 %v1956, %v1955
        %v1969 = vpack.c.b16 %v1958, %v1957
        %v1970 = vpack.c.b16 %v1960, %v1959
        %v1971 = vpack.c.b16 %v1962, %v1961
        %v1972 = vpack.c.b16 %v1964, %v1963
        %v1974 = vsel %vm439, %v1925, 0
        %v1977 = vsel %vm439, %v1926, 0
        %v1980 = vsel %vm439, %v1927, 0
        %v1983 = vsel %vm439, %v1928, 0
        %v1986 = vsel %vm439, %v1929, 0
        %v1989 = vsel %vm439, %v1930, 0
        %v1992 = vsel %vm439, %v1931, 0
        %v1995 = vsel %vm439, %v1932, 0
        %v1998 = vsel %vm439, %v1965, 0
        %v2001 = vsel %vm439, %v1966, 0
        %v2004 = vsel %vm439, %v1967, 0
        %v2007 = vsel %vm439, %v1968, 0
        %v2010 = vsel %vm439, %v1969, 0
        %v2013 = vsel %vm439, %v1970, 0
        %v2016 = vsel %vm439, %v1971, 0
        %v2019 = vsel %vm439, %v1972, 0
        %2021 = vmatprep.subr.bf16.mxu0 0
        %2022 = vmatpush1.bf16.xpose.msra.mxu0 %v1998
        %2023 = vmatprep.subr.bf16.mxu0 0
        %2024 = vmatpush1.bf16.xpose.msra.mxu0 %v2001
        %2025 = vmatprep.subr.bf16.mxu0 0
        %2026 = vmatpush1.bf16.xpose.msra.mxu0 %v2004
        %2027 = vmatprep.subr.bf16.mxu0 0
        %2028 = vmatpush1.bf16.xpose.msra.mxu0 %v2007
        %2029 = vmatprep.subr.bf16.mxu0 0
        %2030 = vmatpush1.bf16.xpose.msra.mxu0 %v2010
        %2031 = vmatprep.subr.bf16.mxu0 0
        %2032 = vmatpush1.bf16.xpose.msra.mxu0 %v2013
        %2033 = vmatprep.subr.bf16.mxu0 0
        %2034 = vmatpush1.bf16.xpose.msra.mxu0 %v2016
        %2035 = vmatprep.subr.bf16.mxu0 0
        %2036 = vmatpush1.bf16.xpose.msra.mxu0 %v2019
        %2037 = vmatprep.subr.bf16.mxu0 0
        %2038 = vmatpush1.bf16.xpose.msra.mxu0 0
        %2039 = vmatprep.subr.bf16.mxu0 0
        %2040 = vmatpush1.bf16.xpose.msra.mxu0 0
        %2041 = vmatprep.subr.bf16.mxu0 0
        %2042 = vmatpush1.bf16.xpose.msra.mxu0 0
        %2043 = vmatprep.subr.bf16.mxu0 0
        %2044 = vmatpush1.bf16.xpose.msra.mxu0 0
        %2045 = vmatprep.subr.bf16.mxu0 0
        %2046 = vmatpush1.bf16.xpose.msra.mxu0 0
        %2047 = vmatprep.subr.bf16.mxu0 0
        %2048 = vmatpush1.bf16.xpose.msra.mxu0 0
        %2049 = vmatprep.subr.bf16.mxu0 0
        %2050 = vmatpush1.bf16.xpose.msra.mxu0 0
        %2051 = vmatprep.subr.bf16.mxu0 0
        %2052 = vmatpush1.bf16.xpose.msra.mxu0 0
        %2053 = vmatprep.mubr.bf16.mxu0 0
        %2054 = vmatmul.mubr.bf16.gmra.mrb[0].mxu0 %v1974
        %v2055 = vpop.f32.mrb[0].mxu0
        %v2056 = vadd.f32 0.0, %v2055
        %v2057 = vpop.f32.mrb[0].mxu0
        %v2058 = vpop.f32.mrb[0].mxu0
        %v2059 = vadd.f32 0.0, %v2058
        %v2060 = vpop.f32.mrb[0].mxu0
        %2061 = vmatprep.mubr.bf16.mxu0 0
        %2062 = vmatmul.mubr.bf16.gmra.mrb[0].mxu0 %v1977
        %v2063 = vpop.f32.mrb[0].mxu0
        %v2064 = vadd.f32 0.0, %v2063
        %v2065 = vpop.f32.mrb[0].mxu0
        %v2066 = vpop.f32.mrb[0].mxu0
        %v2067 = vadd.f32 0.0, %v2066
        %v2068 = vpop.f32.mrb[0].mxu0
        %2069 = vmatprep.mubr.bf16.mxu0 0
        %2070 = vmatmul.mubr.bf16.gmra.mrb[0].mxu0 %v1980
        %v2071 = vpop.f32.mrb[0].mxu0
        %v2072 = vadd.f32 0.0, %v2071
        %v2073 = vpop.f32.mrb[0].mxu0
        %v2074 = vpop.f32.mrb[0].mxu0
        %v2075 = vadd.f32 0.0, %v2074
        %v2076 = vpop.f32.mrb[0].mxu0
        %2077 = vmatprep.mubr.bf16.mxu0 0
        %2078 = vmatmul.mubr.bf16.gmra.mrb[0].mxu0 %v1983
        %v2079 = vpop.f32.mrb[0].mxu0
        %v2080 = vadd.f32 0.0, %v2079
        %v2081 = vpop.f32.mrb[0].mxu0
        %v2082 = vpop.f32.mrb[0].mxu0
        %v2083 = vadd.f32 0.0, %v2082
        %v2084 = vpop.f32.mrb[0].mxu0
        %2085 = vmatprep.mubr.bf16.mxu0 0
        %2086 = vmatmul.mubr.bf16.gmra.mrb[0].mxu0 %v1986
        %v2087 = vpop.f32.mrb[0].mxu0
        %v2088 = vadd.f32 0.0, %v2087
        %v2089 = vpop.f32.mrb[0].mxu0
        %v2090 = vpop.f32.mrb[0].mxu0
        %v2091 = vadd.f32 0.0, %v2090
        %v2092 = vpop.f32.mrb[0].mxu0
        %2093 = vmatprep.mubr.bf16.mxu0 0
        %2094 = vmatmul.mubr.bf16.gmra.mrb[0].mxu0 %v1989
        %v2095 = vpop.f32.mrb[0].mxu0
        %v2096 = vadd.f32 0.0, %v2095
        %v2097 = vpop.f32.mrb[0].mxu0
        %v2098 = vpop.f32.mrb[0].mxu0
        %v2099 = vadd.f32 0.0, %v2098
        %v2100 = vpop.f32.mrb[0].mxu0
        %2101 = vmatprep.mubr.bf16.mxu0 0
        %2102 = vmatmul.mubr.bf16.gmra.mrb[0].mxu0 %v1992
        %v2103 = vpop.f32.mrb[0].mxu0
        %v2104 = vadd.f32 0.0, %v2103
        %v2105 = vpop.f32.mrb[0].mxu0
        %v2106 = vpop.f32.mrb[0].mxu0
        %v2107 = vadd.f32 0.0, %v2106
        %v2108 = vpop.f32.mrb[0].mxu0
        %2109 = vmatprep.mubr.bf16.mxu0 0
        %2110 = vmatmul.mubr.bf16.gmra.mrb[0].mxu0 %v1995
        %v2111 = vpop.f32.mrb[0].mxu0
        %v2112 = vadd.f32 0.0, %v2111
        %v2113 = vpop.f32.mrb[0].mxu0
        %v2114 = vpop.f32.mrb[0].mxu0
        %v2115 = vadd.f32 0.0, %v2114
        %v2116 = vpop.f32.mrb[0].mxu0
        %2117 = vdwg.mxu0
        %2118 = vmax.xlane.f32.xlu0 %v2056
        %v2119 = vpop.xlane.xlu0 %2118
        %2120 = vmax.xlane.f32.xlu0 %v2059
        %v2121 = vpop.xlane.xlu0 %2120
        %2122 = vmax.xlane.f32.xlu0 %v2064
        %v2123 = vpop.xlane.xlu0 %2122
        %2124 = vmax.xlane.f32.xlu0 %v2067
        %v2125 = vpop.xlane.xlu0 %2124
        %2126 = vmax.xlane.f32.xlu0 %v2072
        %v2127 = vpop.xlane.xlu0 %2126
        %2128 = vmax.xlane.f32.xlu0 %v2075
        %v2129 = vpop.xlane.xlu0 %2128
        %2130 = vmax.xlane.f32.xlu0 %v2080
        %v2131 = vpop.xlane.xlu0 %2130
        %2132 = vmax.xlane.f32.xlu0 %v2083
        %v2133 = vpop.xlane.xlu0 %2132
        %2134 = vmax.xlane.f32.xlu0 %v2088
        %v2135 = vpop.xlane.xlu0 %2134
        %2136 = vmax.xlane.f32.xlu0 %v2091
        %v2137 = vpop.xlane.xlu0 %2136
        %2138 = vmax.xlane.f32.xlu0 %v2096
        %v2139 = vpop.xlane.xlu0 %2138
        %2140 = vmax.xlane.f32.xlu0 %v2099
        %v2141 = vpop.xlane.xlu0 %2140
        %2142 = vmax.xlane.f32.xlu0 %v2104
        %v2143 = vpop.xlane.xlu0 %2142
        %2144 = vmax.xlane.f32.xlu0 %v2107
        %v2145 = vpop.xlane.xlu0 %2144
        %2146 = vmax.xlane.f32.xlu0 %v2112
        %v2147 = vpop.xlane.xlu0 %2146
        %2148 = vmax.xlane.f32.xlu0 %v2115
        %v2149 = vpop.xlane.xlu0 %2148
        %v2150 = vsub.f32 %v2056, %v2119
        %v2151 = vsub.f32 %v2059, %v2121
        %v2152 = vsub.f32 %v2064, %v2123
        %v2153 = vsub.f32 %v2067, %v2125
        %v2154 = vsub.f32 %v2072, %v2127
        %v2155 = vsub.f32 %v2075, %v2129
        %v2156 = vsub.f32 %v2080, %v2131
        %v2157 = vsub.f32 %v2083, %v2133
        %v2158 = vsub.f32 %v2088, %v2135
        %v2159 = vsub.f32 %v2091, %v2137
        %v2160 = vsub.f32 %v2096, %v2139
        %v2161 = vsub.f32 %v2099, %v2141
        %v2162 = vsub.f32 %v2104, %v2143
        %v2163 = vsub.f32 %v2107, %v2145
        %v2164 = vsub.f32 %v2112, %v2147
        %v2165 = vsub.f32 %v2115, %v2149
        %v2166 = vmul.f32 %v2150, 1.442695
        %v2167 = vpow.pop %v2166
        %v2168 = vmul.f32 %v2151, 1.442695
        %v2169 = vpow.pop %v2168
        %v2170 = vmul.f32 %v2152, 1.442695
        %v2171 = vpow.pop %v2170
        %v2172 = vmul.f32 %v2153, 1.442695
        %v2173 = vpow.pop %v2172
        %v2174 = vmul.f32 %v2154, 1.442695
        %v2175 = vpow.pop %v2174
        %v2176 = vmul.f32 %v2155, 1.442695
        %v2177 = vpow.pop %v2176
        %v2178 = vmul.f32 %v2156, 1.442695
        %v2179 = vpow.pop %v2178
        %v2180 = vmul.f32 %v2157, 1.442695
        %v2181 = vpow.pop %v2180
        %v2182 = vmul.f32 %v2158, 1.442695
        %v2183 = vpow.pop %v2182
        %v2184 = vmul.f32 %v2159, 1.442695
        %v2185 = vpow.pop %v2184
        %v2186 = vmul.f32 %v2160, 1.442695
        %v2187 = vpow.pop %v2186
        %v2188 = vmul.f32 %v2161, 1.442695
        %v2189 = vpow.pop %v2188
        %v2190 = vmul.f32 %v2162, 1.442695
        %v2191 = vpow.pop %v2190
        %v2192 = vmul.f32 %v2163, 1.442695
        %v2193 = vpow.pop %v2192
        %v2194 = vmul.f32 %v2164, 1.442695
        %v2195 = vpow.pop %v2194
        %v2196 = vmul.f32 %v2165, 1.442695
        %v2197 = vpow.pop %v2196
        %2198 = vadd.xlane.f32.xlu0 %v2167
        %v2199 = vpop.xlane.xlu0 %2198
        %2200 = vadd.xlane.f32.xlu0 %v2169
        %v2201 = vpop.xlane.xlu0 %2200
        %2202 = vadd.xlane.f32.xlu0 %v2171
        %v2203 = vpop.xlane.xlu0 %2202
        %2204 = vadd.xlane.f32.xlu0 %v2173
        %v2205 = vpop.xlane.xlu0 %2204
        %2206 = vadd.xlane.f32.xlu0 %v2175
        %v2207 = vpop.xlane.xlu0 %2206
        %2208 = vadd.xlane.f32.xlu0 %v2177
        %v2209 = vpop.xlane.xlu0 %2208
        %2210 = vadd.xlane.f32.xlu0 %v2179
        %v2211 = vpop.xlane.xlu0 %2210
        %2212 = vadd.xlane.f32.xlu0 %v2181
        %v2213 = vpop.xlane.xlu0 %2212
        %2214 = vadd.xlane.f32.xlu0 %v2183
        %v2215 = vpop.xlane.xlu0 %2214
        %2216 = vadd.xlane.f32.xlu0 %v2185
        %v2217 = vpop.xlane.xlu0 %2216
        %2218 = vadd.xlane.f32.xlu0 %v2187
        %v2219 = vpop.xlane.xlu0 %2218
        %2220 = vadd.xlane.f32.xlu0 %v2189
        %v2221 = vpop.xlane.xlu0 %2220
        %2222 = vadd.xlane.f32.xlu0 %v2191
        %v2223 = vpop.xlane.xlu0 %2222
        %2224 = vadd.xlane.f32.xlu0 %v2193
        %v2225 = vpop.xlane.xlu0 %2224
        %2226 = vadd.xlane.f32.xlu0 %v2195
        %v2227 = vpop.xlane.xlu0 %2226
        %2228 = vadd.xlane.f32.xlu0 %v2197
        %v2229 = vpop.xlane.xlu0 %2228
        %v2230 = vrcp.pop %v2199
        %v2231 = vrcp.pop %v2201
        %v2232 = vrcp.pop %v2203
        %v2233 = vrcp.pop %v2205
        %v2234 = vrcp.pop %v2207
        %v2235 = vrcp.pop %v2209
        %v2236 = vrcp.pop %v2211
        %v2237 = vrcp.pop %v2213
        %v2238 = vrcp.pop %v2215
        %v2239 = vrcp.pop %v2217
        %v2240 = vrcp.pop %v2219
        %v2241 = vrcp.pop %v2221
        %v2242 = vrcp.pop %v2223
        %v2243 = vrcp.pop %v2225
        %v2244 = vrcp.pop %v2227
        %v2245 = vrcp.pop %v2229
        %v2246 = vmul.f32 %v2167, %v2230
        %v2247 = vmul.f32 %v2169, %v2231
        %v2248 = vmul.f32 %v2171, %v2232
        %v2249 = vmul.f32 %v2173, %v2233
        %v2250 = vmul.f32 %v2175, %v2234
        %v2251 = vmul.f32 %v2177, %v2235
        %v2252 = vmul.f32 %v2179, %v2236
        %v2253 = vmul.f32 %v2181, %v2237
        %v2254 = vmul.f32 %v2183, %v2238
        %v2255 = vmul.f32 %v2185, %v2239
        %v2256 = vmul.f32 %v2187, %v2240
        %v2257 = vmul.f32 %v2189, %v2241
        %v2258 = vmul.f32 %v2191, %v2242
        %v2259 = vmul.f32 %v2193, %v2243
        %v2260 = vmul.f32 %v2195, %v2244
        %v2261 = vmul.f32 %v2197, %v2245
        %v2262 = vpack.c.bf16 %v2247, %v2246
        %v2263 = vpack.c.bf16 %v2249, %v2248
        %v2264 = vpack.c.bf16 %v2251, %v2250
        %v2265 = vpack.c.bf16 %v2253, %v2252
        %v2266 = vpack.c.bf16 %v2255, %v2254
        %v2267 = vpack.c.bf16 %v2257, %v2256
        %v2268 = vpack.c.bf16 %v2259, %v2258
        %v2269 = vpack.c.bf16 %v2261, %v2260
        %v2286 = vunpack.c.l.b16 %v1877
        %v2287 = vunpack.c.l.b16 %v1878
        %v2288 = vunpack.c.l.b16 %v1879
        %v2289 = vunpack.c.l.b16 %v1880
        %v2290 = vunpack.c.l.b16 %v1881
        %v2291 = vunpack.c.l.b16 %v1882
        %v2292 = vunpack.c.l.b16 %v1883
        %v2293 = vunpack.c.l.b16 %v1884
        %v2294 = vunpack.c.l.b16 %v1885
        %v2295 = vunpack.c.l.b16 %v1886
        %v2296 = vunpack.c.l.b16 %v1887
        %v2297 = vunpack.c.l.b16 %v1888
        %v2298 = vunpack.c.l.b16 %v1889
        %v2299 = vunpack.c.l.b16 %v1890
        %v2300 = vunpack.c.l.b16 %v1891
        %v2301 = vunpack.c.l.b16 %v1892
        %v2302 = vpack.c.b16 %v2287, %v2286
        %v2303 = vpack.c.b16 %v2289, %v2288
        %v2304 = vpack.c.b16 %v2291, %v2290
        %v2305 = vpack.c.b16 %v2293, %v2292
        %v2306 = vpack.c.b16 %v2295, %v2294
        %v2307 = vpack.c.b16 %v2297, %v2296
        %v2308 = vpack.c.b16 %v2299, %v2298
        %v2309 = vpack.c.b16 %v2301, %v2300
        %2318 = vmatprep.subr.bf16.mxu0 0
        %2319 = vmatpush1.bf16.msra.mxu0 %v2302
        %2320 = vmatprep.subr.bf16.mxu0 0
        %2321 = vmatpush1.bf16.msra.mxu0 %v2303
        %2322 = vmatprep.subr.bf16.mxu0 0
        %2323 = vmatpush1.bf16.msra.mxu0 %v2304
        %2324 = vmatprep.subr.bf16.mxu0 0
        %2325 = vmatpush1.bf16.msra.mxu0 %v2305
        %2326 = vmatprep.subr.bf16.mxu0 0
        %2327 = vmatpush1.bf16.msra.mxu0 %v2306
        %2328 = vmatprep.subr.bf16.mxu0 0
        %2329 = vmatpush1.bf16.msra.mxu0 %v2307
        %2330 = vmatprep.subr.bf16.mxu0 0
        %2331 = vmatpush1.bf16.msra.mxu0 %v2308
        %2332 = vmatprep.subr.bf16.mxu0 0
        %2333 = vmatpush1.bf16.msra.mxu0 %v2309
        %2334 = vmatprep.subr.bf16.mxu0 0
        %2335 = vmatpush1.bf16.msra.mxu0 0
        %2336 = vmatprep.subr.bf16.mxu0 0
        %2337 = vmatpush1.bf16.msra.mxu0 0
        %2338 = vmatprep.subr.bf16.mxu0 0
        %2339 = vmatpush1.bf16.msra.mxu0 0
        %2340 = vmatprep.subr.bf16.mxu0 0
        %2341 = vmatpush1.bf16.msra.mxu0 0
        %2342 = vmatprep.subr.bf16.mxu0 0
        %2343 = vmatpush1.bf16.msra.mxu0 0
        %2344 = vmatprep.subr.bf16.mxu0 0
        %2345 = vmatpush1.bf16.msra.mxu0 0
        %2346 = vmatprep.subr.bf16.mxu0 0
        %2347 = vmatpush1.bf16.msra.mxu0 0
        %2348 = vmatprep.subr.bf16.mxu0 0
        %2349 = vmatpush1.bf16.msra.mxu0 0
        %2350 = vmatprep.mubr.bf16.mxu0 0
        %2351 = vmatmul.mubr.bf16.gmra.mrb[0].mxu0 %v2262
        %v2352 = vpop.f32.mrb[0].mxu0
        %v2353 = vadd.f32 0.0, %v2352
        %v2354 = vpop.f32.mrb[0].mxu0
        %v2355 = vpop.f32.mrb[0].mxu0
        %v2356 = vadd.f32 0.0, %v2355
        %v2357 = vpop.f32.mrb[0].mxu0
        %2358 = vmatprep.mubr.bf16.mxu0 0
        %2359 = vmatmul.mubr.bf16.gmra.mrb[0].mxu0 %v2263
        %v2360 = vpop.f32.mrb[0].mxu0
        %v2361 = vadd.f32 0.0, %v2360
        %v2362 = vpop.f32.mrb[0].mxu0
        %v2363 = vpop.f32.mrb[0].mxu0
        %v2364 = vadd.f32 0.0, %v2363
        %v2365 = vpop.f32.mrb[0].mxu0
        %2366 = vmatprep.mubr.bf16.mxu0 0
        %2367 = vmatmul.mubr.bf16.gmra.mrb[0].mxu0 %v2264
        %v2368 = vpop.f32.mrb[0].mxu0
        %v2369 = vadd.f32 0.0, %v2368
        %v2370 = vpop.f32.mrb[0].mxu0
        %v2371 = vpop.f32.mrb[0].mxu0
        %v2372 = vadd.f32 0.0, %v2371
        %v2373 = vpop.f32.mrb[0].mxu0
        %2374 = vmatprep.mubr.bf16.mxu0 0
        %2375 = vmatmul.mubr.bf16.gmra.mrb[0].mxu0 %v2265
        %v2376 = vpop.f32.mrb[0].mxu0
        %v2377 = vadd.f32 0.0, %v2376
        %v2378 = vpop.f32.mrb[0].mxu0
        %v2379 = vpop.f32.mrb[0].mxu0
        %v2380 = vadd.f32 0.0, %v2379
        %v2381 = vpop.f32.mrb[0].mxu0
        %2382 = vmatprep.mubr.bf16.mxu0 0
        %2383 = vmatmul.mubr.bf16.gmra.mrb[0].mxu0 %v2266
        %v2384 = vpop.f32.mrb[0].mxu0
        %v2385 = vadd.f32 0.0, %v2384
        %v2386 = vpop.f32.mrb[0].mxu0
        %v2387 = vpop.f32.mrb[0].mxu0
        %v2388 = vadd.f32 0.0, %v2387
        %v2389 = vpop.f32.mrb[0].mxu0
        %2390 = vmatprep.mubr.bf16.mxu0 0
        %2391 = vmatmul.mubr.bf16.gmra.mrb[0].mxu0 %v2267
        %v2392 = vpop.f32.mrb[0].mxu0
        %v2393 = vadd.f32 0.0, %v2392
        %v2394 = vpop.f32.mrb[0].mxu0
        %v2395 = vpop.f32.mrb[0].mxu0
        %v2396 = vadd.f32 0.0, %v2395
        %v2397 = vpop.f32.mrb[0].mxu0
        %2398 = vmatprep.mubr.bf16.mxu0 0
        %2399 = vmatmul.mubr.bf16.gmra.mrb[0].mxu0 %v2268
        %v2400 = vpop.f32.mrb[0].mxu0
        %v2401 = vadd.f32 0.0, %v2400
        %v2402 = vpop.f32.mrb[0].mxu0
        %v2403 = vpop.f32.mrb[0].mxu0
        %v2404 = vadd.f32 0.0, %v2403
        %v2405 = vpop.f32.mrb[0].mxu0
        %2406 = vmatprep.mubr.bf16.mxu0 0
        %2407 = vmatmul.mubr.bf16.gmra.mrb[0].mxu0 %v2269
        %v2408 = vpop.f32.mrb[0].mxu0
        %v2409 = vadd.f32 0.0, %v2408
        %v2410 = vpop.f32.mrb[0].mxu0
        %v2411 = vpop.f32.mrb[0].mxu0
        %v2412 = vadd.f32 0.0, %v2411
        %v2413 = vpop.f32.mrb[0].mxu0
        %2414 = vdwg.mxu0
        %v2415 = vld [vmem:[#allocation2] sm:$0xff]
        %v2416 = vld [vmem:[#allocation2 + $0x8] sm:$0xff]
        %v2417 = vld [vmem:[#allocation2 + $0x10] sm:$0xff]
        %v2418 = vld [vmem:[#allocation2 + $0x18] sm:$0xff]
        %v2419 = vld [vmem:[#allocation2 + $0x20] sm:$0xff]
        %v2420 = vld [vmem:[#allocation2 + $0x28] sm:$0xff]
        %v2421 = vld [vmem:[#allocation2 + $0x30] sm:$0xff]
        %v2422 = vld [vmem:[#allocation2 + $0x38] sm:$0xff]
        %v2423 = vld [vmem:[#allocation2 + $0x40] sm:$0xff]
        %v2424 = vld [vmem:[#allocation2 + $0x48] sm:$0xff]
        %v2425 = vld [vmem:[#allocation2 + $0x50] sm:$0xff]
        %v2426 = vld [vmem:[#allocation2 + $0x58] sm:$0xff]
        %v2427 = vld [vmem:[#allocation2 + $0x60] sm:$0xff]
        %v2428 = vld [vmem:[#allocation2 + $0x68] sm:$0xff]
        %v2429 = vld [vmem:[#allocation2 + $0x70] sm:$0xff]
        %v2430 = vld [vmem:[#allocation2 + $0x78] sm:$0xff]
        %v2431 = vpack.c.bf16 %v2356, %v2353
        %v2432 = vpack.c.bf16 %v2364, %v2361
        %v2433 = vpack.c.bf16 %v2372, %v2369
        %v2434 = vpack.c.bf16 %v2380, %v2377
        %v2435 = vpack.c.bf16 %v2388, %v2385
        %v2436 = vpack.c.bf16 %v2396, %v2393
        %v2437 = vpack.c.bf16 %v2404, %v2401
        %v2438 = vpack.c.bf16 %v2412, %v2409
        %s2439 = scalar_lea.vmem %s3, 32
        %v2440 = vld [vmem:[%s2439] sm:$0xf]
        %v2441 = vld [vmem:[%s2439 + $0x4] sm:$0xf]
        %v2442 = vld [vmem:[%s2439 + $0x8] sm:$0xf]
        %v2443 = vld [vmem:[%s2439 + $0xc] sm:$0xf]
        %v2448 = vunpack.c.l.b16 %v2440
        %v2449 = vunpack.c.l.b16 %v2441
        %v2450 = vunpack.c.l.b16 %v2442
        %v2451 = vunpack.c.l.b16 %v2443
        %v2452 = vpack.c.b16 %v2449, %v2448
        %v2453 = vpack.c.b16 %v2451, %v2450
        %v2457 = vsel %vm439, %v2431, 0
        %v2460 = vsel %vm439, %v2432, 0
        %v2463 = vsel %vm439, %v2433, 0
        %v2466 = vsel %vm439, %v2434, 0
        %v2469 = vsel %vm439, %v2435, 0
        %v2472 = vsel %vm439, %v2436, 0
        %v2475 = vsel %vm439, %v2437, 0
        %v2478 = vsel %vm439, %v2438, 0
        %2480 = vmatprep.subr.bf16.mxu0 0
        %2481 = vmatpush1.bf16.msra.mxu0 %v2452
        %2482 = vmatprep.subr.bf16.mxu0 0
        %2483 = vmatpush1.bf16.msra.mxu0 %v2453
        %2484 = vmatprep.subr.bf16.mxu0 0
        %2485 = vmatpush1.bf16.msra.mxu0 0
        %2486 = vmatprep.subr.bf16.mxu0 0
        %2487 = vmatpush1.bf16.msra.mxu0 0
        %2488 = vmatprep.subr.bf16.mxu0 0
        %2489 = vmatpush1.bf16.msra.mxu0 0
        %2490 = vmatprep.subr.bf16.mxu0 0
        %2491 = vmatpush1.bf16.msra.mxu0 0
        %2492 = vmatprep.subr.bf16.mxu0 0
        %2493 = vmatpush1.bf16.msra.mxu0 0
        %2494 = vmatprep.subr.bf16.mxu0 0
        %2495 = vmatpush1.bf16.msra.mxu0 0
        %2496 = vmatprep.subr.bf16.mxu0 0
        %2497 = vmatpush1.bf16.msra.mxu0 0
        %2498 = vmatprep.subr.bf16.mxu0 0
        %2499 = vmatpush1.bf16.msra.mxu0 0
        %2500 = vmatprep.subr.bf16.mxu0 0
        %2501 = vmatpush1.bf16.msra.mxu0 0
        %2502 = vmatprep.subr.bf16.mxu0 0
        %2503 = vmatpush1.bf16.msra.mxu0 0
        %2504 = vmatprep.subr.bf16.mxu0 0
        %2505 = vmatpush1.bf16.msra.mxu0 0
        %2506 = vmatprep.subr.bf16.mxu0 0
        %2507 = vmatpush1.bf16.msra.mxu0 0
        %2508 = vmatprep.subr.bf16.mxu0 0
        %2509 = vmatpush1.bf16.msra.mxu0 0
        %2510 = vmatprep.subr.bf16.mxu0 0
        %2511 = vmatpush1.bf16.msra.mxu0 0
        %2512 = vmatprep.mubr.bf16.mxu0 0
        %2513 = vmatmul.mubr.bf16.gmra.mrb[0].mxu0 %v2457
        %v2514 = vpop.f32.mrb[0].mxu0
        %v2515 = vadd.f32 0.0, %v2514
        %v2516 = vpop.f32.mrb[0].mxu0
        %v2517 = vpop.f32.mrb[0].mxu0
        %v2518 = vadd.f32 0.0, %v2517
        %v2519 = vpop.f32.mrb[0].mxu0
        %2520 = vmatprep.mubr.bf16.mxu0 0
        %2521 = vmatmul.mubr.bf16.gmra.mrb[0].mxu0 %v2460
        %v2522 = vpop.f32.mrb[0].mxu0
        %v2523 = vadd.f32 0.0, %v2522
        %v2524 = vpop.f32.mrb[0].mxu0
        %v2525 = vpop.f32.mrb[0].mxu0
        %v2526 = vadd.f32 0.0, %v2525
        %v2527 = vpop.f32.mrb[0].mxu0
        %2528 = vmatprep.mubr.bf16.mxu0 0
        %2529 = vmatmul.mubr.bf16.gmra.mrb[0].mxu0 %v2463
        %v2530 = vpop.f32.mrb[0].mxu0
        %v2531 = vadd.f32 0.0, %v2530
        %v2532 = vpop.f32.mrb[0].mxu0
        %v2533 = vpop.f32.mrb[0].mxu0
        %v2534 = vadd.f32 0.0, %v2533
        %v2535 = vpop.f32.mrb[0].mxu0
        %2536 = vmatprep.mubr.bf16.mxu0 0
        %2537 = vmatmul.mubr.bf16.gmra.mrb[0].mxu0 %v2466
        %v2538 = vpop.f32.mrb[0].mxu0
        %v2539 = vadd.f32 0.0, %v2538
        %v2540 = vpop.f32.mrb[0].mxu0
        %v2541 = vpop.f32.mrb[0].mxu0
        %v2542 = vadd.f32 0.0, %v2541
        %v2543 = vpop.f32.mrb[0].mxu0
        %2544 = vmatprep.mubr.bf16.mxu0 0
        %2545 = vmatmul.mubr.bf16.gmra.mrb[0].mxu0 %v2469
        %v2546 = vpop.f32.mrb[0].mxu0
        %v2547 = vadd.f32 0.0, %v2546
        %v2548 = vpop.f32.mrb[0].mxu0
        %v2549 = vpop.f32.mrb[0].mxu0
        %v2550 = vadd.f32 0.0, %v2549
        %v2551 = vpop.f32.mrb[0].mxu0
        %2552 = vmatprep.mubr.bf16.mxu0 0
        %2553 = vmatmul.mubr.bf16.gmra.mrb[0].mxu0 %v2472
        %v2554 = vpop.f32.mrb[0].mxu0
        %v2555 = vadd.f32 0.0, %v2554
        %v2556 = vpop.f32.mrb[0].mxu0
        %v2557 = vpop.f32.mrb[0].mxu0
        %v2558 = vadd.f32 0.0, %v2557
        %v2559 = vpop.f32.mrb[0].mxu0
        %2560 = vmatprep.mubr.bf16.mxu0 0
        %2561 = vmatmul.mubr.bf16.gmra.mrb[0].mxu0 %v2475
        %v2562 = vpop.f32.mrb[0].mxu0
        %v2563 = vadd.f32 0.0, %v2562
        %v2564 = vpop.f32.mrb[0].mxu0
        %v2565 = vpop.f32.mrb[0].mxu0
        %v2566 = vadd.f32 0.0, %v2565
        %v2567 = vpop.f32.mrb[0].mxu0
        %2568 = vmatprep.mubr.bf16.mxu0 0
        %2569 = vmatmul.mubr.bf16.gmra.mrb[0].mxu0 %v2478
        %v2570 = vpop.f32.mrb[0].mxu0
        %v2571 = vadd.f32 0.0, %v2570
        %v2572 = vpop.f32.mrb[0].mxu0
        %v2573 = vpop.f32.mrb[0].mxu0
        %v2574 = vadd.f32 0.0, %v2573
        %v2575 = vpop.f32.mrb[0].mxu0
        %2576 = vdwg.mxu0
        %v2577 = vadd.f32 %v2415, %v2515
        %v2578 = vadd.f32 %v2416, %v2518
        %v2579 = vadd.f32 %v2417, %v2523
        %v2580 = vadd.f32 %v2418, %v2526
        %v2581 = vadd.f32 %v2419, %v2531
        %v2582 = vadd.f32 %v2420, %v2534
        %v2583 = vadd.f32 %v2421, %v2539
        %v2584 = vadd.f32 %v2422, %v2542
        %v2585 = vadd.f32 %v2423, %v2547
        %v2586 = vadd.f32 %v2424, %v2550
        %v2587 = vadd.f32 %v2425, %v2555
        %v2588 = vadd.f32 %v2426, %v2558
        %v2589 = vadd.f32 %v2427, %v2563
        %v2590 = vadd.f32 %v2428, %v2566
        %v2591 = vadd.f32 %v2429, %v2571
        %v2592 = vadd.f32 %v2430, %v2574
        %2593 = vst [vmem:[#allocation2] sm:$0xff] %v2577
        %2594 = vst [vmem:[#allocation2 + $0x8] sm:$0xff] %v2578
        %2595 = vst [vmem:[#allocation2 + $0x10] sm:$0xff] %v2579
        %2596 = vst [vmem:[#allocation2 + $0x18] sm:$0xff] %v2580
        %2597 = vst [vmem:[#allocation2 + $0x20] sm:$0xff] %v2581
        %2598 = vst [vmem:[#allocation2 + $0x28] sm:$0xff] %v2582
        %2599 = vst [vmem:[#allocation2 + $0x30] sm:$0xff] %v2583
        %2600 = vst [vmem:[#allocation2 + $0x38] sm:$0xff] %v2584
        %2601 = vst [vmem:[#allocation2 + $0x40] sm:$0xff] %v2585
        %2602 = vst [vmem:[#allocation2 + $0x48] sm:$0xff] %v2586
        %2603 = vst [vmem:[#allocation2 + $0x50] sm:$0xff] %v2587
        %2604 = vst [vmem:[#allocation2 + $0x58] sm:$0xff] %v2588
        %2605 = vst [vmem:[#allocation2 + $0x60] sm:$0xff] %v2589
        %2606 = vst [vmem:[#allocation2 + $0x68] sm:$0xff] %v2590
        %2607 = vst [vmem:[#allocation2 + $0x70] sm:$0xff] %v2591
        %2608 = vst [vmem:[#allocation2 + $0x78] sm:$0xff] %v2592
        %s2609 = scalar_lea.vmem %s281, 192
        %v2610 = vld [vmem:[%s2609] sm:$0xf]
        %v2611 = vld [vmem:[%s2609 + $0x4] sm:$0xf]
        %v2612 = vld [vmem:[%s2609 + $0x8] sm:$0xf]
        %v2613 = vld [vmem:[%s2609 + $0xc] sm:$0xf]
        %v2614 = vld [vmem:[%s2609 + $0x10] sm:$0xf]
        %v2615 = vld [vmem:[%s2609 + $0x14] sm:$0xf]
        %v2616 = vld [vmem:[%s2609 + $0x18] sm:$0xf]
        %v2617 = vld [vmem:[%s2609 + $0x1c] sm:$0xf]
        %v2618 = vld [vmem:[%s2609 + $0x20] sm:$0xf]
        %v2619 = vld [vmem:[%s2609 + $0x24] sm:$0xf]
        %v2620 = vld [vmem:[%s2609 + $0x28] sm:$0xf]
        %v2621 = vld [vmem:[%s2609 + $0x2c] sm:$0xf]
        %v2622 = vld [vmem:[%s2609 + $0x30] sm:$0xf]
        %v2623 = vld [vmem:[%s2609 + $0x34] sm:$0xf]
        %v2624 = vld [vmem:[%s2609 + $0x38] sm:$0xf]
        %v2625 = vld [vmem:[%s2609 + $0x3c] sm:$0xf]
        %s2626 = scalar_lea.vmem %s287, 192
        %v2627 = vld [vmem:[%s2626] sm:$0xf]
        %v2628 = vld [vmem:[%s2626 + $0x4] sm:$0xf]
        %v2629 = vld [vmem:[%s2626 + $0x8] sm:$0xf]
        %v2630 = vld [vmem:[%s2626 + $0xc] sm:$0xf]
        %v2631 = vld [vmem:[%s2626 + $0x10] sm:$0xf]
        %v2632 = vld [vmem:[%s2626 + $0x14] sm:$0xf]
        %v2633 = vld [vmem:[%s2626 + $0x18] sm:$0xf]
        %v2634 = vld [vmem:[%s2626 + $0x1c] sm:$0xf]
        %v2635 = vld [vmem:[%s2626 + $0x20] sm:$0xf]
        %v2636 = vld [vmem:[%s2626 + $0x24] sm:$0xf]
        %v2637 = vld [vmem:[%s2626 + $0x28] sm:$0xf]
        %v2638 = vld [vmem:[%s2626 + $0x2c] sm:$0xf]
        %v2639 = vld [vmem:[%s2626 + $0x30] sm:$0xf]
        %v2640 = vld [vmem:[%s2626 + $0x34] sm:$0xf]
        %v2641 = vld [vmem:[%s2626 + $0x38] sm:$0xf]
        %v2642 = vld [vmem:[%s2626 + $0x3c] sm:$0xf]
        %s2643 = scalar_lea.vmem %s292, 192
        %v2644 = vld [vmem:[%s2643] sm:$0xf]
        %v2645 = vld [vmem:[%s2643 + $0x4] sm:$0xf]
        %v2646 = vld [vmem:[%s2643 + $0x8] sm:$0xf]
        %v2647 = vld [vmem:[%s2643 + $0xc] sm:$0xf]
        %v2648 = vld [vmem:[%s2643 + $0x10] sm:$0xf]
        %v2649 = vld [vmem:[%s2643 + $0x14] sm:$0xf]
        %v2650 = vld [vmem:[%s2643 + $0x18] sm:$0xf]
        %v2651 = vld [vmem:[%s2643 + $0x1c] sm:$0xf]
        %v2652 = vld [vmem:[%s2643 + $0x20] sm:$0xf]
        %v2653 = vld [vmem:[%s2643 + $0x24] sm:$0xf]
        %v2654 = vld [vmem:[%s2643 + $0x28] sm:$0xf]
        %v2655 = vld [vmem:[%s2643 + $0x2c] sm:$0xf]
        %v2656 = vld [vmem:[%s2643 + $0x30] sm:$0xf]
        %v2657 = vld [vmem:[%s2643 + $0x34] sm:$0xf]
        %v2658 = vld [vmem:[%s2643 + $0x38] sm:$0xf]
        %v2659 = vld [vmem:[%s2643 + $0x3c] sm:$0xf]
        %v2676 = vunpack.c.l.b16 %v2610
        %v2677 = vunpack.c.l.b16 %v2611
        %v2678 = vunpack.c.l.b16 %v2612
        %v2679 = vunpack.c.l.b16 %v2613
        %v2680 = vunpack.c.l.b16 %v2614
        %v2681 = vunpack.c.l.b16 %v2615
        %v2682 = vunpack.c.l.b16 %v2616
        %v2683 = vunpack.c.l.b16 %v2617
        %v2684 = vunpack.c.l.b16 %v2618
        %v2685 = vunpack.c.l.b16 %v2619
        %v2686 = vunpack.c.l.b16 %v2620
        %v2687 = vunpack.c.l.b16 %v2621
        %v2688 = vunpack.c.l.b16 %v2622
        %v2689 = vunpack.c.l.b16 %v2623
        %v2690 = vunpack.c.l.b16 %v2624
        %v2691 = vunpack.c.l.b16 %v2625
        %v2692 = vpack.c.b16 %v2677, %v2676
        %v2693 = vpack.c.b16 %v2679, %v2678
        %v2694 = vpack.c.b16 %v2681, %v2680
        %v2695 = vpack.c.b16 %v2683, %v2682
        %v2696 = vpack.c.b16 %v2685, %v2684
        %v2697 = vpack.c.b16 %v2687, %v2686
        %v2698 = vpack.c.b16 %v2689, %v2688
        %v2699 = vpack.c.b16 %v2691, %v2690
        %v2716 = vunpack.c.l.b16 %v2627
        %v2717 = vunpack.c.l.b16 %v2628
        %v2718 = vunpack.c.l.b16 %v2629
        %v2719 = vunpack.c.l.b16 %v2630
        %v2720 = vunpack.c.l.b16 %v2631
        %v2721 = vunpack.c.l.b16 %v2632
        %v2722 = vunpack.c.l.b16 %v2633
        %v2723 = vunpack.c.l.b16 %v2634
        %v2724 = vunpack.c.l.b16 %v2635
        %v2725 = vunpack.c.l.b16 %v2636
        %v2726 = vunpack.c.l.b16 %v2637
        %v2727 = vunpack.c.l.b16 %v2638
        %v2728 = vunpack.c.l.b16 %v2639
        %v2729 = vunpack.c.l.b16 %v2640
        %v2730 = vunpack.c.l.b16 %v2641
        %v2731 = vunpack.c.l.b16 %v2642
        %v2732 = vpack.c.b16 %v2717, %v2716
        %v2733 = vpack.c.b16 %v2719, %v2718
        %v2734 = vpack.c.b16 %v2721, %v2720
        %v2735 = vpack.c.b16 %v2723, %v2722
        %v2736 = vpack.c.b16 %v2725, %v2724
        %v2737 = vpack.c.b16 %v2727, %v2726
        %v2738 = vpack.c.b16 %v2729, %v2728
        %v2739 = vpack.c.b16 %v2731, %v2730
        %v2741 = vsel %vm439, %v2692, 0
        %v2744 = vsel %vm439, %v2693, 0
        %v2747 = vsel %vm439, %v2694, 0
        %v2750 = vsel %vm439, %v2695, 0
        %v2753 = vsel %vm439, %v2696, 0
        %v2756 = vsel %vm439, %v2697, 0
        %v2759 = vsel %vm439, %v2698, 0
        %v2762 = vsel %vm439, %v2699, 0
        %v2765 = vsel %vm439, %v2732, 0
        %v2768 = vsel %vm439, %v2733, 0
        %v2771 = vsel %vm439, %v2734, 0
        %v2774 = vsel %vm439, %v2735, 0
        %v2777 = vsel %vm439, %v2736, 0
        %v2780 = vsel %vm439, %v2737, 0
        %v2783 = vsel %vm439, %v2738, 0
        %v2786 = vsel %vm439, %v2739, 0
        %2788 = vmatprep.subr.bf16.mxu0 0
        %2789 = vmatpush1.bf16.xpose.msra.mxu0 %v2765
        %2790 = vmatprep.subr.bf16.mxu0 0
        %2791 = vmatpush1.bf16.xpose.msra.mxu0 %v2768
        %2792 = vmatprep.subr.bf16.mxu0 0
        %2793 = vmatpush1.bf16.xpose.msra.mxu0 %v2771
        %2794 = vmatprep.subr.bf16.mxu0 0
        %2795 = vmatpush1.bf16.xpose.msra.mxu0 %v2774
        %2796 = vmatprep.subr.bf16.mxu0 0
        %2797 = vmatpush1.bf16.xpose.msra.mxu0 %v2777
        %2798 = vmatprep.subr.bf16.mxu0 0
        %2799 = vmatpush1.bf16.xpose.msra.mxu0 %v2780
        %2800 = vmatprep.subr.bf16.mxu0 0
        %2801 = vmatpush1.bf16.xpose.msra.mxu0 %v2783
        %2802 = vmatprep.subr.bf16.mxu0 0
        %2803 = vmatpush1.bf16.xpose.msra.mxu0 %v2786
        %2804 = vmatprep.subr.bf16.mxu0 0
        %2805 = vmatpush1.bf16.xpose.msra.mxu0 0
        %2806 = vmatprep.subr.bf16.mxu0 0
        %2807 = vmatpush1.bf16.xpose.msra.mxu0 0
        %2808 = vmatprep.subr.bf16.mxu0 0
        %2809 = vmatpush1.bf16.xpose.msra.mxu0 0
        %2810 = vmatprep.subr.bf16.mxu0 0
        %2811 = vmatpush1.bf16.xpose.msra.mxu0 0
        %2812 = vmatprep.subr.bf16.mxu0 0
        %2813 = vmatpush1.bf16.xpose.msra.mxu0 0
        %2814 = vmatprep.subr.bf16.mxu0 0
        %2815 = vmatpush1.bf16.xpose.msra.mxu0 0
        %2816 = vmatprep.subr.bf16.mxu0 0
        %2817 = vmatpush1.bf16.xpose.msra.mxu0 0
        %2818 = vmatprep.subr.bf16.mxu0 0
        %2819 = vmatpush1.bf16.xpose.msra.mxu0 0
        %2820 = vmatprep.mubr.bf16.mxu0 0
        %2821 = vmatmul.mubr.bf16.gmra.mrb[0].mxu0 %v2741
        %v2822 = vpop.f32.mrb[0].mxu0
        %v2823 = vadd.f32 0.0, %v2822
        %v2824 = vpop.f32.mrb[0].mxu0
        %v2825 = vpop.f32.mrb[0].mxu0
        %v2826 = vadd.f32 0.0, %v2825
        %v2827 = vpop.f32.mrb[0].mxu0
        %2828 = vmatprep.mubr.bf16.mxu0 0
        %2829 = vmatmul.mubr.bf16.gmra.mrb[0].mxu0 %v2744
        %v2830 = vpop.f32.mrb[0].mxu0
        %v2831 = vadd.f32 0.0, %v2830
        %v2832 = vpop.f32.mrb[0].mxu0
        %v2833 = vpop.f32.mrb[0].mxu0
        %v2834 = vadd.f32 0.0, %v2833
        %v2835 = vpop.f32.mrb[0].mxu0
        %2836 = vmatprep.mubr.bf16.mxu0 0
        %2837 = vmatmul.mubr.bf16.gmra.mrb[0].mxu0 %v2747
        %v2838 = vpop.f32.mrb[0].mxu0
        %v2839 = vadd.f32 0.0, %v2838
        %v2840 = vpop.f32.mrb[0].mxu0
        %v2841 = vpop.f32.mrb[0].mxu0
        %v2842 = vadd.f32 0.0, %v2841
        %v2843 = vpop.f32.mrb[0].mxu0
        %2844 = vmatprep.mubr.bf16.mxu0 0
        %2845 = vmatmul.mubr.bf16.gmra.mrb[0].mxu0 %v2750
        %v2846 = vpop.f32.mrb[0].mxu0
        %v2847 = vadd.f32 0.0, %v2846
        %v2848 = vpop.f32.mrb[0].mxu0
        %v2849 = vpop.f32.mrb[0].mxu0
        %v2850 = vadd.f32 0.0, %v2849
        %v2851 = vpop.f32.mrb[0].mxu0
        %2852 = vmatprep.mubr.bf16.mxu0 0
        %2853 = vmatmul.mubr.bf16.gmra.mrb[0].mxu0 %v2753
        %v2854 = vpop.f32.mrb[0].mxu0
        %v2855 = vadd.f32 0.0, %v2854
        %v2856 = vpop.f32.mrb[0].mxu0
        %v2857 = vpop.f32.mrb[0].mxu0
        %v2858 = vadd.f32 0.0, %v2857
        %v2859 = vpop.f32.mrb[0].mxu0
        %2860 = vmatprep.mubr.bf16.mxu0 0
        %2861 = vmatmul.mubr.bf16.gmra.mrb[0].mxu0 %v2756
        %v2862 = vpop.f32.mrb[0].mxu0
        %v2863 = vadd.f32 0.0, %v2862
        %v2864 = vpop.f32.mrb[0].mxu0
        %v2865 = vpop.f32.mrb[0].mxu0
        %v2866 = vadd.f32 0.0, %v2865
        %v2867 = vpop.f32.mrb[0].mxu0
        %2868 = vmatprep.mubr.bf16.mxu0 0
        %2869 = vmatmul.mubr.bf16.gmra.mrb[0].mxu0 %v2759
        %v2870 = vpop.f32.mrb[0].mxu0
        %v2871 = vadd.f32 0.0, %v2870
        %v2872 = vpop.f32.mrb[0].mxu0
        %v2873 = vpop.f32.mrb[0].mxu0
        %v2874 = vadd.f32 0.0, %v2873
        %v2875 = vpop.f32.mrb[0].mxu0
        %2876 = vmatprep.mubr.bf16.mxu0 0
        %2877 = vmatmul.mubr.bf16.gmra.mrb[0].mxu0 %v2762
        %v2878 = vpop.f32.mrb[0].mxu0
        %v2879 = vadd.f32 0.0, %v2878
        %v2880 = vpop.f32.mrb[0].mxu0
        %v2881 = vpop.f32.mrb[0].mxu0
        %v2882 = vadd.f32 0.0, %v2881
        %v2883 = vpop.f32.mrb[0].mxu0
        %2884 = vdwg.mxu0
        %2885 = vmax.xlane.f32.xlu0 %v2823
        %v2886 = vpop.xlane.xlu0 %2885
        %2887 = vmax.xlane.f32.xlu0 %v2826
        %v2888 = vpop.xlane.xlu0 %2887
        %2889 = vmax.xlane.f32.xlu0 %v2831
        %v2890 = vpop.xlane.xlu0 %2889
        %2891 = vmax.xlane.f32.xlu0 %v2834
        %v2892 = vpop.xlane.xlu0 %2891
        %2893 = vmax.xlane.f32.xlu0 %v2839
        %v2894 = vpop.xlane.xlu0 %2893
        %2895 = vmax.xlane.f32.xlu0 %v2842
        %v2896 = vpop.xlane.xlu0 %2895
        %2897 = vmax.xlane.f32.xlu0 %v2847
        %v2898 = vpop.xlane.xlu0 %2897
        %2899 = vmax.xlane.f32.xlu0 %v2850
        %v2900 = vpop.xlane.xlu0 %2899
        %2901 = vmax.xlane.f32.xlu0 %v2855
        %v2902 = vpop.xlane.xlu0 %2901
        %2903 = vmax.xlane.f32.xlu0 %v2858
        %v2904 = vpop.xlane.xlu0 %2903
        %2905 = vmax.xlane.f32.xlu0 %v2863
        %v2906 = vpop.xlane.xlu0 %2905
        %2907 = vmax.xlane.f32.xlu0 %v2866
        %v2908 = vpop.xlane.xlu0 %2907
        %2909 = vmax.xlane.f32.xlu0 %v2871
        %v2910 = vpop.xlane.xlu0 %2909
        %2911 = vmax.xlane.f32.xlu0 %v2874
        %v2912 = vpop.xlane.xlu0 %2911
        %2913 = vmax.xlane.f32.xlu0 %v2879
        %v2914 = vpop.xlane.xlu0 %2913
        %2915 = vmax.xlane.f32.xlu0 %v2882
        %v2916 = vpop.xlane.xlu0 %2915
        %v2917 = vsub.f32 %v2823, %v2886
        %v2918 = vsub.f32 %v2826, %v2888
        %v2919 = vsub.f32 %v2831, %v2890
        %v2920 = vsub.f32 %v2834, %v2892
        %v2921 = vsub.f32 %v2839, %v2894
        %v2922 = vsub.f32 %v2842, %v2896
        %v2923 = vsub.f32 %v2847, %v2898
        %v2924 = vsub.f32 %v2850, %v2900
        %v2925 = vsub.f32 %v2855, %v2902
        %v2926 = vsub.f32 %v2858, %v2904
        %v2927 = vsub.f32 %v2863, %v2906
        %v2928 = vsub.f32 %v2866, %v2908
        %v2929 = vsub.f32 %v2871, %v2910
        %v2930 = vsub.f32 %v2874, %v2912
        %v2931 = vsub.f32 %v2879, %v2914
        %v2932 = vsub.f32 %v2882, %v2916
        %v2933 = vmul.f32 %v2917, 1.442695
        %v2934 = vpow.pop %v2933
        %v2935 = vmul.f32 %v2918, 1.442695
        %v2936 = vpow.pop %v2935
        %v2937 = vmul.f32 %v2919, 1.442695
        %v2938 = vpow.pop %v2937
        %v2939 = vmul.f32 %v2920, 1.442695
        %v2940 = vpow.pop %v2939
        %v2941 = vmul.f32 %v2921, 1.442695
        %v2942 = vpow.pop %v2941
        %v2943 = vmul.f32 %v2922, 1.442695
        %v2944 = vpow.pop %v2943
        %v2945 = vmul.f32 %v2923, 1.442695
        %v2946 = vpow.pop %v2945
        %v2947 = vmul.f32 %v2924, 1.442695
        %v2948 = vpow.pop %v2947
        %v2949 = vmul.f32 %v2925, 1.442695
        %v2950 = vpow.pop %v2949
        %v2951 = vmul.f32 %v2926, 1.442695
        %v2952 = vpow.pop %v2951
        %v2953 = vmul.f32 %v2927, 1.442695
        %v2954 = vpow.pop %v2953
        %v2955 = vmul.f32 %v2928, 1.442695
        %v2956 = vpow.pop %v2955
        %v2957 = vmul.f32 %v2929, 1.442695
        %v2958 = vpow.pop %v2957
        %v2959 = vmul.f32 %v2930, 1.442695
        %v2960 = vpow.pop %v2959
        %v2961 = vmul.f32 %v2931, 1.442695
        %v2962 = vpow.pop %v2961
        %v2963 = vmul.f32 %v2932, 1.442695
        %v2964 = vpow.pop %v2963
        %2965 = vadd.xlane.f32.xlu0 %v2934
        %v2966 = vpop.xlane.xlu0 %2965
        %2967 = vadd.xlane.f32.xlu0 %v2936
        %v2968 = vpop.xlane.xlu0 %2967
        %2969 = vadd.xlane.f32.xlu0 %v2938
        %v2970 = vpop.xlane.xlu0 %2969
        %2971 = vadd.xlane.f32.xlu0 %v2940
        %v2972 = vpop.xlane.xlu0 %2971
        %2973 = vadd.xlane.f32.xlu0 %v2942
        %v2974 = vpop.xlane.xlu0 %2973
        %2975 = vadd.xlane.f32.xlu0 %v2944
        %v2976 = vpop.xlane.xlu0 %2975
        %2977 = vadd.xlane.f32.xlu0 %v2946
        %v2978 = vpop.xlane.xlu0 %2977
        %2979 = vadd.xlane.f32.xlu0 %v2948
        %v2980 = vpop.xlane.xlu0 %2979
        %2981 = vadd.xlane.f32.xlu0 %v2950
        %v2982 = vpop.xlane.xlu0 %2981
        %2983 = vadd.xlane.f32.xlu0 %v2952
        %v2984 = vpop.xlane.xlu0 %2983
        %2985 = vadd.xlane.f32.xlu0 %v2954
        %v2986 = vpop.xlane.xlu0 %2985
        %2987 = vadd.xlane.f32.xlu0 %v2956
        %v2988 = vpop.xlane.xlu0 %2987
        %2989 = vadd.xlane.f32.xlu0 %v2958
        %v2990 = vpop.xlane.xlu0 %2989
        %2991 = vadd.xlane.f32.xlu0 %v2960
        %v2992 = vpop.xlane.xlu0 %2991
        %2993 = vadd.xlane.f32.xlu0 %v2962
        %v2994 = vpop.xlane.xlu0 %2993
        %2995 = vadd.xlane.f32.xlu0 %v2964
        %v2996 = vpop.xlane.xlu0 %2995
        %v2997 = vrcp.pop %v2966
        %v2998 = vrcp.pop %v2968
        %v2999 = vrcp.pop %v2970
        %v3000 = vrcp.pop %v2972
        %v3001 = vrcp.pop %v2974
        %v3002 = vrcp.pop %v2976
        %v3003 = vrcp.pop %v2978
        %v3004 = vrcp.pop %v2980
        %v3005 = vrcp.pop %v2982
        %v3006 = vrcp.pop %v2984
        %v3007 = vrcp.pop %v2986
        %v3008 = vrcp.pop %v2988
        %v3009 = vrcp.pop %v2990
        %v3010 = vrcp.pop %v2992
        %v3011 = vrcp.pop %v2994
        %v3012 = vrcp.pop %v2996
        %v3013 = vmul.f32 %v2934, %v2997
        %v3014 = vmul.f32 %v2936, %v2998
        %v3015 = vmul.f32 %v2938, %v2999
        %v3016 = vmul.f32 %v2940, %v3000
        %v3017 = vmul.f32 %v2942, %v3001
        %v3018 = vmul.f32 %v2944, %v3002
        %v3019 = vmul.f32 %v2946, %v3003
        %v3020 = vmul.f32 %v2948, %v3004
        %v3021 = vmul.f32 %v2950, %v3005
        %v3022 = vmul.f32 %v2952, %v3006
        %v3023 = vmul.f32 %v2954, %v3007
        %v3024 = vmul.f32 %v2956, %v3008
        %v3025 = vmul.f32 %v2958, %v3009
        %v3026 = vmul.f32 %v2960, %v3010
        %v3027 = vmul.f32 %v2962, %v3011
        %v3028 = vmul.f32 %v2964, %v3012
        %v3029 = vpack.c.bf16 %v3014, %v3013
        %v3030 = vpack.c.bf16 %v3016, %v3015
        %v3031 = vpack.c.bf16 %v3018, %v3017
        %v3032 = vpack.c.bf16 %v3020, %v3019
        %v3033 = vpack.c.bf16 %v3022, %v3021
        %v3034 = vpack.c.bf16 %v3024, %v3023
        %v3035 = vpack.c.bf16 %v3026, %v3025
        %v3036 = vpack.c.bf16 %v3028, %v3027
        %v3053 = vunpack.c.l.b16 %v2644
        %v3054 = vunpack.c.l.b16 %v2645
        %v3055 = vunpack.c.l.b16 %v2646
        %v3056 = vunpack.c.l.b16 %v2647
        %v3057 = vunpack.c.l.b16 %v2648
        %v3058 = vunpack.c.l.b16 %v2649
        %v3059 = vunpack.c.l.b16 %v2650
        %v3060 = vunpack.c.l.b16 %v2651
        %v3061 = vunpack.c.l.b16 %v2652
        %v3062 = vunpack.c.l.b16 %v2653
        %v3063 = vunpack.c.l.b16 %v2654
        %v3064 = vunpack.c.l.b16 %v2655
        %v3065 = vunpack.c.l.b16 %v2656
        %v3066 = vunpack.c.l.b16 %v2657
        %v3067 = vunpack.c.l.b16 %v2658
        %v3068 = vunpack.c.l.b16 %v2659
        %v3069 = vpack.c.b16 %v3054, %v3053
        %v3070 = vpack.c.b16 %v3056, %v3055
        %v3071 = vpack.c.b16 %v3058, %v3057
        %v3072 = vpack.c.b16 %v3060, %v3059
        %v3073 = vpack.c.b16 %v3062, %v3061
        %v3074 = vpack.c.b16 %v3064, %v3063
        %v3075 = vpack.c.b16 %v3066, %v3065
        %v3076 = vpack.c.b16 %v3068, %v3067
        %3085 = vmatprep.subr.bf16.mxu0 0
        %3086 = vmatpush1.bf16.msra.mxu0 %v3069
        %3087 = vmatprep.subr.bf16.mxu0 0
        %3088 = vmatpush1.bf16.msra.mxu0 %v3070
        %3089 = vmatprep.subr.bf16.mxu0 0
        %3090 = vmatpush1.bf16.msra.mxu0 %v3071
        %3091 = vmatprep.subr.bf16.mxu0 0
        %3092 = vmatpush1.bf16.msra.mxu0 %v3072
        %3093 = vmatprep.subr.bf16.mxu0 0
        %3094 = vmatpush1.bf16.msra.mxu0 %v3073
        %3095 = vmatprep.subr.bf16.mxu0 0
        %3096 = vmatpush1.bf16.msra.mxu0 %v3074
        %3097 = vmatprep.subr.bf16.mxu0 0
        %3098 = vmatpush1.bf16.msra.mxu0 %v3075
        %3099 = vmatprep.subr.bf16.mxu0 0
        %3100 = vmatpush1.bf16.msra.mxu0 %v3076
        %3101 = vmatprep.subr.bf16.mxu0 0
        %3102 = vmatpush1.bf16.msra.mxu0 0
        %3103 = vmatprep.subr.bf16.mxu0 0
        %3104 = vmatpush1.bf16.msra.mxu0 0
        %3105 = vmatprep.subr.bf16.mxu0 0
        %3106 = vmatpush1.bf16.msra.mxu0 0
        %3107 = vmatprep.subr.bf16.mxu0 0
        %3108 = vmatpush1.bf16.msra.mxu0 0
        %3109 = vmatprep.subr.bf16.mxu0 0
        %3110 = vmatpush1.bf16.msra.mxu0 0
        %3111 = vmatprep.subr.bf16.mxu0 0
        %3112 = vmatpush1.bf16.msra.mxu0 0
        %3113 = vmatprep.subr.bf16.mxu0 0
        %3114 = vmatpush1.bf16.msra.mxu0 0
        %3115 = vmatprep.subr.bf16.mxu0 0
        %3116 = vmatpush1.bf16.msra.mxu0 0
        %3117 = vmatprep.mubr.bf16.mxu0 0
        %3118 = vmatmul.mubr.bf16.gmra.mrb[0].mxu0 %v3029
        %v3119 = vpop.f32.mrb[0].mxu0
        %v3120 = vadd.f32 0.0, %v3119
        %v3121 = vpop.f32.mrb[0].mxu0
        %v3122 = vpop.f32.mrb[0].mxu0
        %v3123 = vadd.f32 0.0, %v3122
        %v3124 = vpop.f32.mrb[0].mxu0
        %3125 = vmatprep.mubr.bf16.mxu0 0
        %3126 = vmatmul.mubr.bf16.gmra.mrb[0].mxu0 %v3030
        %v3127 = vpop.f32.mrb[0].mxu0
        %v3128 = vadd.f32 0.0, %v3127
        %v3129 = vpop.f32.mrb[0].mxu0
        %v3130 = vpop.f32.mrb[0].mxu0
        %v3131 = vadd.f32 0.0, %v3130
        %v3132 = vpop.f32.mrb[0].mxu0
        %3133 = vmatprep.mubr.bf16.mxu0 0
        %3134 = vmatmul.mubr.bf16.gmra.mrb[0].mxu0 %v3031
        %v3135 = vpop.f32.mrb[0].mxu0
        %v3136 = vadd.f32 0.0, %v3135
        %v3137 = vpop.f32.mrb[0].mxu0
        %v3138 = vpop.f32.mrb[0].mxu0
        %v3139 = vadd.f32 0.0, %v3138
        %v3140 = vpop.f32.mrb[0].mxu0
        %3141 = vmatprep.mubr.bf16.mxu0 0
        %3142 = vmatmul.mubr.bf16.gmra.mrb[0].mxu0 %v3032
        %v3143 = vpop.f32.mrb[0].mxu0
        %v3144 = vadd.f32 0.0, %v3143
        %v3145 = vpop.f32.mrb[0].mxu0
        %v3146 = vpop.f32.mrb[0].mxu0
        %v3147 = vadd.f32 0.0, %v3146
        %v3148 = vpop.f32.mrb[0].mxu0
        %3149 = vmatprep.mubr.bf16.mxu0 0
        %3150 = vmatmul.mubr.bf16.gmra.mrb[0].mxu0 %v3033
        %v3151 = vpop.f32.mrb[0].mxu0
        %v3152 = vadd.f32 0.0, %v3151
        %v3153 = vpop.f32.mrb[0].mxu0
        %v3154 = vpop.f32.mrb[0].mxu0
        %v3155 = vadd.f32 0.0, %v3154
        %v3156 = vpop.f32.mrb[0].mxu0
        %3157 = vmatprep.mubr.bf16.mxu0 0
        %3158 = vmatmul.mubr.bf16.gmra.mrb[0].mxu0 %v3034
        %v3159 = vpop.f32.mrb[0].mxu0
        %v3160 = vadd.f32 0.0, %v3159
        %v3161 = vpop.f32.mrb[0].mxu0
        %v3162 = vpop.f32.mrb[0].mxu0
        %v3163 = vadd.f32 0.0, %v3162
        %v3164 = vpop.f32.mrb[0].mxu0
        %3165 = vmatprep.mubr.bf16.mxu0 0
        %3166 = vmatmul.mubr.bf16.gmra.mrb[0].mxu0 %v3035
        %v3167 = vpop.f32.mrb[0].mxu0
        %v3168 = vadd.f32 0.0, %v3167
        %v3169 = vpop.f32.mrb[0].mxu0
        %v3170 = vpop.f32.mrb[0].mxu0
        %v3171 = vadd.f32 0.0, %v3170
        %v3172 = vpop.f32.mrb[0].mxu0
        %3173 = vmatprep.mubr.bf16.mxu0 0
        %3174 = vmatmul.mubr.bf16.gmra.mrb[0].mxu0 %v3036
        %v3175 = vpop.f32.mrb[0].mxu0
        %v3176 = vadd.f32 0.0, %v3175
        %v3177 = vpop.f32.mrb[0].mxu0
        %v3178 = vpop.f32.mrb[0].mxu0
        %v3179 = vadd.f32 0.0, %v3178
        %v3180 = vpop.f32.mrb[0].mxu0
        %3181 = vdwg.mxu0
        %v3182 = vld [vmem:[#allocation2] sm:$0xff]
        %v3183 = vld [vmem:[#allocation2 + $0x8] sm:$0xff]
        %v3184 = vld [vmem:[#allocation2 + $0x10] sm:$0xff]
        %v3185 = vld [vmem:[#allocation2 + $0x18] sm:$0xff]
        %v3186 = vld [vmem:[#allocation2 + $0x20] sm:$0xff]
        %v3187 = vld [vmem:[#allocation2 + $0x28] sm:$0xff]
        %v3188 = vld [vmem:[#allocation2 + $0x30] sm:$0xff]
        %v3189 = vld [vmem:[#allocation2 + $0x38] sm:$0xff]
        %v3190 = vld [vmem:[#allocation2 + $0x40] sm:$0xff]
        %v3191 = vld [vmem:[#allocation2 + $0x48] sm:$0xff]
        %v3192 = vld [vmem:[#allocation2 + $0x50] sm:$0xff]
        %v3193 = vld [vmem:[#allocation2 + $0x58] sm:$0xff]
        %v3194 = vld [vmem:[#allocation2 + $0x60] sm:$0xff]
        %v3195 = vld [vmem:[#allocation2 + $0x68] sm:$0xff]
        %v3196 = vld [vmem:[#allocation2 + $0x70] sm:$0xff]
        %v3197 = vld [vmem:[#allocation2 + $0x78] sm:$0xff]
        %v3198 = vpack.c.bf16 %v3123, %v3120
        %v3199 = vpack.c.bf16 %v3131, %v3128
        %v3200 = vpack.c.bf16 %v3139, %v3136
        %v3201 = vpack.c.bf16 %v3147, %v3144
        %v3202 = vpack.c.bf16 %v3155, %v3152
        %v3203 = vpack.c.bf16 %v3163, %v3160
        %v3204 = vpack.c.bf16 %v3171, %v3168
        %v3205 = vpack.c.bf16 %v3179, %v3176
        %s3206 = scalar_lea.vmem %s3, 48
        %v3207 = vld [vmem:[%s3206] sm:$0xf]
        %v3208 = vld [vmem:[%s3206 + $0x4] sm:$0xf]
        %v3209 = vld [vmem:[%s3206 + $0x8] sm:$0xf]
        %v3210 = vld [vmem:[%s3206 + $0xc] sm:$0xf]
        %v3215 = vunpack.c.l.b16 %v3207
        %v3216 = vunpack.c.l.b16 %v3208
        %v3217 = vunpack.c.l.b16 %v3209
        %v3218 = vunpack.c.l.b16 %v3210
        %v3219 = vpack.c.b16 %v3216, %v3215
        %v3220 = vpack.c.b16 %v3218, %v3217
        %v3224 = vsel %vm439, %v3198, 0
        %v3227 = vsel %vm439, %v3199, 0
        %v3230 = vsel %vm439, %v3200, 0
        %v3233 = vsel %vm439, %v3201, 0
        %v3236 = vsel %vm439, %v3202, 0
        %v3239 = vsel %vm439, %v3203, 0
        %v3242 = vsel %vm439, %v3204, 0
        %v3245 = vsel %vm439, %v3205, 0
        %3247 = vmatprep.subr.bf16.mxu0 0
        %3248 = vmatpush1.bf16.msra.mxu0 %v3219
        %3249 = vmatprep.subr.bf16.mxu0 0
        %3250 = vmatpush1.bf16.msra.mxu0 %v3220
        %3251 = vmatprep.subr.bf16.mxu0 0
        %3252 = vmatpush1.bf16.msra.mxu0 0
        %3253 = vmatprep.subr.bf16.mxu0 0
        %3254 = vmatpush1.bf16.msra.mxu0 0
        %3255 = vmatprep.subr.bf16.mxu0 0
        %3256 = vmatpush1.bf16.msra.mxu0 0
        %3257 = vmatprep.subr.bf16.mxu0 0
        %3258 = vmatpush1.bf16.msra.mxu0 0
        %3259 = vmatprep.subr.bf16.mxu0 0
        %3260 = vmatpush1.bf16.msra.mxu0 0
        %3261 = vmatprep.subr.bf16.mxu0 0
        %3262 = vmatpush1.bf16.msra.mxu0 0
        %3263 = vmatprep.subr.bf16.mxu0 0
        %3264 = vmatpush1.bf16.msra.mxu0 0
        %3265 = vmatprep.subr.bf16.mxu0 0
        %3266 = vmatpush1.bf16.msra.mxu0 0
        %3267 = vmatprep.subr.bf16.mxu0 0
        %3268 = vmatpush1.bf16.msra.mxu0 0
        %3269 = vmatprep.subr.bf16.mxu0 0
        %3270 = vmatpush1.bf16.msra.mxu0 0
        %3271 = vmatprep.subr.bf16.mxu0 0
        %3272 = vmatpush1.bf16.msra.mxu0 0
        %3273 = vmatprep.subr.bf16.mxu0 0
        %3274 = vmatpush1.bf16.msra.mxu0 0
        %3275 = vmatprep.subr.bf16.mxu0 0
        %3276 = vmatpush1.bf16.msra.mxu0 0
        %3277 = vmatprep.subr.bf16.mxu0 0
        %3278 = vmatpush1.bf16.msra.mxu0 0
        %3279 = vmatprep.mubr.bf16.mxu0 0
        %3280 = vmatmul.mubr.bf16.gmra.mrb[0].mxu0 %v3224
        %v3281 = vpop.f32.mrb[0].mxu0
        %v3282 = vadd.f32 0.0, %v3281
        %v3283 = vpop.f32.mrb[0].mxu0
        %v3284 = vpop.f32.mrb[0].mxu0
        %v3285 = vadd.f32 0.0, %v3284
        %v3286 = vpop.f32.mrb[0].mxu0
        %3287 = vmatprep.mubr.bf16.mxu0 0
        %3288 = vmatmul.mubr.bf16.gmra.mrb[0].mxu0 %v3227
        %v3289 = vpop.f32.mrb[0].mxu0
        %v3290 = vadd.f32 0.0, %v3289
        %v3291 = vpop.f32.mrb[0].mxu0
        %v3292 = vpop.f32.mrb[0].mxu0
        %v3293 = vadd.f32 0.0, %v3292
        %v3294 = vpop.f32.mrb[0].mxu0
        %3295 = vmatprep.mubr.bf16.mxu0 0
        %3296 = vmatmul.mubr.bf16.gmra.mrb[0].mxu0 %v3230
        %v3297 = vpop.f32.mrb[0].mxu0
        %v3298 = vadd.f32 0.0, %v3297
        %v3299 = vpop.f32.mrb[0].mxu0
        %v3300 = vpop.f32.mrb[0].mxu0
        %v3301 = vadd.f32 0.0, %v3300
        %v3302 = vpop.f32.mrb[0].mxu0
        %3303 = vmatprep.mubr.bf16.mxu0 0
        %3304 = vmatmul.mubr.bf16.gmra.mrb[0].mxu0 %v3233
        %v3305 = vpop.f32.mrb[0].mxu0
        %v3306 = vadd.f32 0.0, %v3305
        %v3307 = vpop.f32.mrb[0].mxu0
        %v3308 = vpop.f32.mrb[0].mxu0
        %v3309 = vadd.f32 0.0, %v3308
        %v3310 = vpop.f32.mrb[0].mxu0
        %3311 = vmatprep.mubr.bf16.mxu0 0
        %3312 = vmatmul.mubr.bf16.gmra.mrb[0].mxu0 %v3236
        %v3313 = vpop.f32.mrb[0].mxu0
        %v3314 = vadd.f32 0.0, %v3313
        %v3315 = vpop.f32.mrb[0].mxu0
        %v3316 = vpop.f32.mrb[0].mxu0
        %v3317 = vadd.f32 0.0, %v3316
        %v3318 = vpop.f32.mrb[0].mxu0
        %3319 = vmatprep.mubr.bf16.mxu0 0
        %3320 = vmatmul.mubr.bf16.gmra.mrb[0].mxu0 %v3239
        %v3321 = vpop.f32.mrb[0].mxu0
        %v3322 = vadd.f32 0.0, %v3321
        %v3323 = vpop.f32.mrb[0].mxu0
        %v3324 = vpop.f32.mrb[0].mxu0
        %v3325 = vadd.f32 0.0, %v3324
        %v3326 = vpop.f32.mrb[0].mxu0
        %3327 = vmatprep.mubr.bf16.mxu0 0
        %3328 = vmatmul.mubr.bf16.gmra.mrb[0].mxu0 %v3242
        %v3329 = vpop.f32.mrb[0].mxu0
        %v3330 = vadd.f32 0.0, %v3329
        %v3331 = vpop.f32.mrb[0].mxu0
        %v3332 = vpop.f32.mrb[0].mxu0
        %v3333 = vadd.f32 0.0, %v3332
        %v3334 = vpop.f32.mrb[0].mxu0
        %3335 = vmatprep.mubr.bf16.mxu0 0
        %3336 = vmatmul.mubr.bf16.gmra.mrb[0].mxu0 %v3245
        %v3337 = vpop.f32.mrb[0].mxu0
        %v3338 = vadd.f32 0.0, %v3337
        %v3339 = vpop.f32.mrb[0].mxu0
        %v3340 = vpop.f32.mrb[0].mxu0
        %v3341 = vadd.f32 0.0, %v3340
        %v3342 = vpop.f32.mrb[0].mxu0
        %3343 = vdwg.mxu0
        %v3344 = vadd.f32 %v3182, %v3282
        %v3345 = vadd.f32 %v3183, %v3285
        %v3346 = vadd.f32 %v3184, %v3290
        %v3347 = vadd.f32 %v3185, %v3293
        %v3348 = vadd.f32 %v3186, %v3298
        %v3349 = vadd.f32 %v3187, %v3301
        %v3350 = vadd.f32 %v3188, %v3306
        %v3351 = vadd.f32 %v3189, %v3309
        %v3352 = vadd.f32 %v3190, %v3314
        %v3353 = vadd.f32 %v3191, %v3317
        %v3354 = vadd.f32 %v3192, %v3322
        %v3355 = vadd.f32 %v3193, %v3325
        %v3356 = vadd.f32 %v3194, %v3330
        %v3357 = vadd.f32 %v3195, %v3333
        %v3358 = vadd.f32 %v3196, %v3338
        %v3359 = vadd.f32 %v3197, %v3341
        %3360 = vst [vmem:[#allocation2] sm:$0xff] %v3344
        %3361 = vst [vmem:[#allocation2 + $0x8] sm:$0xff] %v3345
        %3362 = vst [vmem:[#allocation2 + $0x10] sm:$0xff] %v3346
        %3363 = vst [vmem:[#allocation2 + $0x18] sm:$0xff] %v3347
        %3364 = vst [vmem:[#allocation2 + $0x20] sm:$0xff] %v3348
        %3365 = vst [vmem:[#allocation2 + $0x28] sm:$0xff] %v3349
        %3366 = vst [vmem:[#allocation2 + $0x30] sm:$0xff] %v3350
        %3367 = vst [vmem:[#allocation2 + $0x38] sm:$0xff] %v3351
        %3368 = vst [vmem:[#allocation2 + $0x40] sm:$0xff] %v3352
        %3369 = vst [vmem:[#allocation2 + $0x48] sm:$0xff] %v3353
        %3370 = vst [vmem:[#allocation2 + $0x50] sm:$0xff] %v3354
        %3371 = vst [vmem:[#allocation2 + $0x58] sm:$0xff] %v3355
        %3372 = vst [vmem:[#allocation2 + $0x60] sm:$0xff] %v3356
        %3373 = vst [vmem:[#allocation2 + $0x68] sm:$0xff] %v3357
        %3374 = vst [vmem:[#allocation2 + $0x70] sm:$0xff] %v3358
        %3375 = vst [vmem:[#allocation2 + $0x78] sm:$0xff] %v3359
        %v3376 = vld [vmem:[#allocation2] sm:$0xff]
        %v3377 = vld [vmem:[#allocation2 + $0x8] sm:$0xff]
        %v3378 = vld [vmem:[#allocation2 + $0x10] sm:$0xff]
        %v3379 = vld [vmem:[#allocation2 + $0x18] sm:$0xff]
        %v3380 = vld [vmem:[#allocation2 + $0x20] sm:$0xff]
        %v3381 = vld [vmem:[#allocation2 + $0x28] sm:$0xff]
        %v3382 = vld [vmem:[#allocation2 + $0x30] sm:$0xff]
        %v3383 = vld [vmem:[#allocation2 + $0x38] sm:$0xff]
        %v3384 = vld [vmem:[#allocation2 + $0x40] sm:$0xff]
        %v3385 = vld [vmem:[#allocation2 + $0x48] sm:$0xff]
        %v3386 = vld [vmem:[#allocation2 + $0x50] sm:$0xff]
        %v3387 = vld [vmem:[#allocation2 + $0x58] sm:$0xff]
        %v3388 = vld [vmem:[#allocation2 + $0x60] sm:$0xff]
        %v3389 = vld [vmem:[#allocation2 + $0x68] sm:$0xff]
        %v3390 = vld [vmem:[#allocation2 + $0x70] sm:$0xff]
        %v3391 = vld [vmem:[#allocation2 + $0x78] sm:$0xff]
        %v3392 = vld [vmem:[%s4] sm:$0x1]
        %v3394 = vlaneseq
        %v3395 = vshrl.u32 %v3394, 7
        %v3396 = vsub.s32 0, %v3395
        %v3397 = vrot.slane %v3392, %v3396
        %v3399 = vadd.f32 %v3376, %v3397
        %v3400 = vadd.f32 %v3377, %v3397
        %v3401 = vadd.f32 %v3378, %v3397
        %v3402 = vadd.f32 %v3379, %v3397
        %v3403 = vadd.f32 %v3380, %v3397
        %v3404 = vadd.f32 %v3381, %v3397
        %v3405 = vadd.f32 %v3382, %v3397
        %v3406 = vadd.f32 %v3383, %v3397
        %v3407 = vadd.f32 %v3384, %v3397
        %v3408 = vadd.f32 %v3385, %v3397
        %v3409 = vadd.f32 %v3386, %v3397
        %v3410 = vadd.f32 %v3387, %v3397
        %v3411 = vadd.f32 %v3388, %v3397
        %v3412 = vadd.f32 %v3389, %v3397
        %v3413 = vadd.f32 %v3390, %v3397
        %v3414 = vadd.f32 %v3391, %v3397
        %3415 = vst [vmem:[%s272] sm:$0xff] %v3399
        %3416 = vst [vmem:[%s272 + $0x8] sm:$0xff] %v3400
        %3417 = vst [vmem:[%s272 + $0x10] sm:$0xff] %v3401
        %3418 = vst [vmem:[%s272 + $0x18] sm:$0xff] %v3402
        %3419 = vst [vmem:[%s272 + $0x20] sm:$0xff] %v3403
        %3420 = vst [vmem:[%s272 + $0x28] sm:$0xff] %v3404
        %3421 = vst [vmem:[%s272 + $0x30] sm:$0xff] %v3405
        %3422 = vst [vmem:[%s272 + $0x38] sm:$0xff] %v3406
        %3423 = vst [vmem:[%s272 + $0x40] sm:$0xff] %v3407
        %3424 = vst [vmem:[%s272 + $0x48] sm:$0xff] %v3408
        %3425 = vst [vmem:[%s272 + $0x50] sm:$0xff] %v3409
        %3426 = vst [vmem:[%s272 + $0x58] sm:$0xff] %v3410
        %3427 = vst [vmem:[%s272 + $0x60] sm:$0xff] %v3411
        %3428 = vst [vmem:[%s272 + $0x68] sm:$0xff] %v3412
        %3429 = vst [vmem:[%s272 + $0x70] sm:$0xff] %v3413
        %3430 = vst [vmem:[%s272 + $0x78] sm:$0xff] %v3414
        %s3431 = sand.u32 %s163, 1
        %s3432 = scalar_lea.sflag [#allocation4], %s3431
        %s3433 = sand.u32 %s163, 1
        %s3434 = smul.addr %s3433, 128
        %s3435 = scalar_lea.vmem [#allocation3], %s3434
        // Predicated region
        $region41: #{multihead_attention.3} parent=39 // pred_check
          %p3436 = pneg %p173
        $region42: #{multihead_attention.3} parent=39 // pred_check_branch
          %3438 = sbr.rel (%p3436) target = $region44
        $region43: #{multihead_attention.3} parent=39 // pred_region
          %s3439 = smul.u32 16, %s24
          %s3441 = ssub.s32 2048, 2048
          %3442 = vsyncadd %s3432, %s3441
          %s3443 = smul.addr %s23, 16
          %s3444 = sadd.s32 %s3439, %s3443
          %s3445 = smul.addr %s3444, 128
          %s3446 = scalar_lea.hbm %s5, %s3445
          %s3447 = sshll.u32 %s3435, 4
          %s3448 = int_to_ptr.vmem [resolvable:$true] %s3447
          %3453 = dma.vmem_to_hbm [thread:$0]  %s3448, 2048, %s3446, %s3432, 128, 128, 8
        $region44: #{multihead_attention.3} parent=39 // pred_fallthru
          _
      $region40: #{multihead_attention.3} parent=5 // pred_fallthru
        _
      %p3454 = scmp.le.s32.totalorder 2, %s14
      // Predicated region
      $region45: #{multihead_attention.3} parent=5 // pred_check
        %p3455 = pneg %p3454
      $region46: #{multihead_attention.3} parent=5 // pred_check_branch
        %3457 = sbr.rel (%p3455) target = $region48
      $region47: #{multihead_attention.3} parent=5 // pred_region
        %s3458 = ssub.s32 %s14, 2
        // Predicated region
        $region49: #{multihead_attention.3} parent=47 // pred_check
          %p3459 = pneg %p179
        $region50: #{multihead_attention.3} parent=47 // pred_check_branch
          %3461 = sbr.rel (%p3459) target = $region52
        $region51: #{multihead_attention.3} parent=47 // pred_region
          %s3462 = sand.u32 %s164, 1
          %s3463 = scalar_lea.sflag [#allocation4], %s3462
          %s3464 = sand.u32 %s164, 1
          %s3465 = smul.addr %s3464, 128
          %s3466 = scalar_lea.vmem [#allocation3], %s3465
          %3467 = dma.done %s3463, 2048
        $region52: #{multihead_attention.3} parent=47 // pred_fallthru
          _
      $region48: #{multihead_attention.3} parent=5 // pred_fallthru
        _
    $region6: #{multihead_attention.3} parent=1 // loop_footer
      %s18 = sadd.s32 1, %s14
    $region7: #{multihead_attention.3} parent=1 // loop_footer_branch
      %13 = sbr.rel target = $region3
    $region8: #{multihead_attention.3} parent=1 // loop_exit
      _
    %3468 = vsyncpa [#allocation4], 1
    %s3469 = scalar_lea.sflag [#allocation4], 1
    %3470 = vsyncpa %s3469, 1

// kernel: multihead_attention.2
$region0: #{multihead_attention.2}
  #allocation0 [shape = 'u32[]', space=smem, size = 0x4, offset = 0x4, fixed_abs, tag = 'smem constant byte address 0x4 - core index']
  #allocation1 [shape = 'u32[144,128]{1,0:T(1,128)}', space=vmem, size = 0x12000, scoped, tag = 'internal scratch']
  %s0 = inlined_call_operand.vmem [shape: bf16[2,128,64], index: 0, kind: input, shape index: {}]
  %s1 = inlined_call_operand.vmem [shape: bf16[4,64,32], index: 1, kind: input, shape index: {}]
  %s2 = inlined_call_operand.vmem [shape: bf16[4,64,32], index: 2, kind: input, shape index: {}]
  %s3 = inlined_call_operand.vmem [shape: bf16[4,64,32], index: 3, kind: input, shape index: {}]
  %s4 = inlined_call_operand.vmem [shape: f32[4,1,32], index: 4, kind: input, shape index: {}]
  %s5 = inlined_call_operand.vmem [shape: f32[4,1,32], index: 5, kind: input, shape index: {}]
  %s6 = inlined_call_operand.vmem [shape: f32[4,1,32], index: 6, kind: input, shape index: {}]
  %s7 = inlined_call_operand.vmem [shape: bf16[2,4,128,32], index: 7, kind: output, shape index: {0}]
  %s8 = inlined_call_operand.vmem [shape: bf16[2,4,128,32], index: 8, kind: output, shape index: {1}]
  %s9 = inlined_call_operand.vmem [shape: bf16[2,4,128,32], index: 9, kind: output, shape index: {2}]
  %10 = xla_tuple %s7, %s8, %s9
  %s11 = sld [smem:[#allocation0]]
  $region77: #{multihead_attention.2} parent=0
    _
  %s13 = ssub.s32 1, %s11
  %s14 = scalar_select 0, %s13, %s11
  loop: start=0, step=1, limit=4
  $region2: #{multihead_attention.2} parent=0 // loop_pre_header
    _
  $region3: #{multihead_attention.2} parent=0 // loop_header
    %s16 = sphi 0, %s20
    %p17 = scmp.ge.s32.totalorder %s16, 4
    %s23 = sphi 0, %s35
    %s24 = sphi 0, %s31
    %s25 = sphi 0, %s23
    %s26 = sphi 0, %s24
    %s27 = sphi 0, %s25
    %s28 = sphi 0, %s26
    %s40 = sphi 0, %s42
    %s43 = sphi 0, %s40
    %s44 = sphi 0, %s43
    %s60 = sphi 0, %s44
    %s64 = sphi 0, %s64
    %s66 = sphi 0, %s64
    %s67 = sphi 0, %s66
    %s81 = sphi 0, %s67
    %s85 = sphi 0, %s85
    %s87 = sphi 0, %s85
    %s88 = sphi 0, %s87
    %s102 = sphi 0, %s88
    %s106 = sphi 0, %s106
    %s108 = sphi 0, %s106
    %s109 = sphi 0, %s108
    %s123 = sphi 0, %s109
    %s127 = sphi 0, %s127
    %s129 = sphi 0, %s127
    %s130 = sphi 0, %s129
    %s144 = sphi 0, %s130
    %s148 = sphi 0, %s148
    %s150 = sphi 0, %s148
    %s151 = sphi 0, %s150
    %s165 = sphi 0, %s151
    %s169 = sphi 0, %s169
    %s171 = sphi 0, %s169
    %s172 = sphi 0, %s171
    %s186 = sphi 0, %s172
    %s194 = sphi 0, %s196
    %s197 = sphi 0, %s194
    %s198 = sphi 0, %s197
    %s214 = sphi 0, %s198
    %s222 = sphi 0, %s224
    %s225 = sphi 0, %s222
    %s226 = sphi 0, %s225
    %s242 = sphi 0, %s226
    %s250 = sphi 0, %s252
    %s253 = sphi 0, %s250
    %s254 = sphi 0, %s253
    %s270 = sphi 0, %s254
  $region4: #{multihead_attention.2} parent=0 // loop_header_branch
    %19 = sbr.rel (%p17) target = $region8
  $region5: #{multihead_attention.2} parent=0 // loop_body
    %s21 = ssub.s32 %s16, 1
    %s22 = ssub.s32 %s16, 2
    %s29 = sadd.s32 1, %s24
    %p30 = scmp.ge.s32.totalorder %s29, 1
    %s31 = scalar_select %p30, 0, %s29
    %s32 = sadd.s32 1, %s23
    %s33 = scalar_select %p30, %s32, %s23
    %p34 = scmp.ge.s32.totalorder %s33, 2
    %s35 = scalar_select %p34, 0, %s33
    %s36 = ssub.s32 %s23, %s35
    %s37 = ssub.s32 %s24, %s31
    %s38 = sor.u32 %s36, %s37
    %p39 = scmp.eq.s32.totalorder %s38, 0
    %s41 = sadd.s32 %s40, 1
    %s42 = scalar_select %p39, %s40, %s41
    %p45 = pneg %p39
    %p46 = scmp.eq.s32.totalorder %s16, 1
    %p47 = por %p45, %p46
    %p48 = scmp.ne.s32.totalorder %s40, %s43
    %p49 = scmp.eq.s32.totalorder %s16, 0
    %p50 = por %p48, %p49
    %p51 = scmp.ne.s32.totalorder %s40, %s43
    %p52 = scmp.eq.s32.totalorder %s21, 1
    %p53 = por %p51, %p52
    %p54 = scmp.ne.s32.totalorder %s43, %s44
    %p55 = scmp.eq.s32.totalorder %s21, 0
    %p56 = por %p54, %p55
    %p57 = scmp.ne.s32.totalorder %s43, %s44
    %p58 = scmp.eq.s32.totalorder %s22, 1
    %p59 = por %p57, %p58
    %p61 = scmp.ne.s32.totalorder %s44, %s60
    %p62 = scmp.eq.s32.totalorder %s22, 0
    %p63 = por %p61, %p62
    %s65 = sadd.s32 %s64, 1
    %p68 = scmp.eq.s32.totalorder %s16, 1
    %p69 = scmp.ne.s32.totalorder %s64, %s66
    %p70 = scmp.eq.s32.totalorder %s16, 0
    %p71 = por %p69, %p70
    %p72 = scmp.ne.s32.totalorder %s64, %s66
    %p73 = scmp.eq.s32.totalorder %s21, 1
    %p74 = por %p72, %p73
    %p75 = scmp.ne.s32.totalorder %s66, %s67
    %p76 = scmp.eq.s32.totalorder %s21, 0
    %p77 = por %p75, %p76
    %p78 = scmp.ne.s32.totalorder %s66, %s67
    %p79 = scmp.eq.s32.totalorder %s22, 1
    %p80 = por %p78, %p79
    %p82 = scmp.ne.s32.totalorder %s67, %s81
    %p83 = scmp.eq.s32.totalorder %s22, 0
    %p84 = por %p82, %p83
    %s86 = sadd.s32 %s85, 1
    %p89 = scmp.eq.s32.totalorder %s16, 1
    %p90 = scmp.ne.s32.totalorder %s85, %s87
    %p91 = scmp.eq.s32.totalorder %s16, 0
    %p92 = por %p90, %p91
    %p93 = scmp.ne.s32.totalorder %s85, %s87
    %p94 = scmp.eq.s32.totalorder %s21, 1
    %p95 = por %p93, %p94
    %p96 = scmp.ne.s32.totalorder %s87, %s88
    %p97 = scmp.eq.s32.totalorder %s21, 0
    %p98 = por %p96, %p97
    %p99 = scmp.ne.s32.totalorder %s87, %s88
    %p100 = scmp.eq.s32.totalorder %s22, 1
    %p101 = por %p99, %p100
    %p103 = scmp.ne.s32.totalorder %s88, %s102
    %p104 = scmp.eq.s32.totalorder %s22, 0
    %p105 = por %p103, %p104
    %s107 = sadd.s32 %s106, 1
    %p110 = scmp.eq.s32.totalorder %s16, 1
    %p111 = scmp.ne.s32.totalorder %s106, %s108
    %p112 = scmp.eq.s32.totalorder %s16, 0
    %p113 = por %p111, %p112
    %p114 = scmp.ne.s32.totalorder %s106, %s108
    %p115 = scmp.eq.s32.totalorder %s21, 1
    %p116 = por %p114, %p115
    %p117 = scmp.ne.s32.totalorder %s108, %s109
    %p118 = scmp.eq.s32.totalorder %s21, 0
    %p119 = por %p117, %p118
    %p120 = scmp.ne.s32.totalorder %s108, %s109
    %p121 = scmp.eq.s32.totalorder %s22, 1
    %p122 = por %p120, %p121
    %p124 = scmp.ne.s32.totalorder %s109, %s123
    %p125 = scmp.eq.s32.totalorder %s22, 0
    %p126 = por %p124, %p125
    %s128 = sadd.s32 %s127, 1
    %p131 = scmp.eq.s32.totalorder %s16, 1
    %p132 = scmp.ne.s32.totalorder %s127, %s129
    %p133 = scmp.eq.s32.totalorder %s16, 0
    %p134 = por %p132, %p133
    %p135 = scmp.ne.s32.totalorder %s127, %s129
    %p136 = scmp.eq.s32.totalorder %s21, 1
    %p137 = por %p135, %p136
    %p138 = scmp.ne.s32.totalorder %s129, %s130
    %p139 = scmp.eq.s32.totalorder %s21, 0
    %p140 = por %p138, %p139
    %p141 = scmp.ne.s32.totalorder %s129, %s130
    %p142 = scmp.eq.s32.totalorder %s22, 1
    %p143 = por %p141, %p142
    %p145 = scmp.ne.s32.totalorder %s130, %s144
    %p146 = scmp.eq.s32.totalorder %s22, 0
    %p147 = por %p145, %p146
    %s149 = sadd.s32 %s148, 1
    %p152 = scmp.eq.s32.totalorder %s16, 1
    %p153 = scmp.ne.s32.totalorder %s148, %s150
    %p154 = scmp.eq.s32.totalorder %s16, 0
    %p155 = por %p153, %p154
    %p156 = scmp.ne.s32.totalorder %s148, %s150
    %p157 = scmp.eq.s32.totalorder %s21, 1
    %p158 = por %p156, %p157
    %p159 = scmp.ne.s32.totalorder %s150, %s151
    %p160 = scmp.eq.s32.totalorder %s21, 0
    %p161 = por %p159, %p160
    %p162 = scmp.ne.s32.totalorder %s150, %s151
    %p163 = scmp.eq.s32.totalorder %s22, 1
    %p164 = por %p162, %p163
    %p166 = scmp.ne.s32.totalorder %s151, %s165
    %p167 = scmp.eq.s32.totalorder %s22, 0
    %p168 = por %p166, %p167
    %s170 = sadd.s32 %s169, 1
    %p173 = scmp.eq.s32.totalorder %s16, 1
    %p174 = scmp.ne.s32.totalorder %s169, %s171
    %p175 = scmp.eq.s32.totalorder %s16, 0
    %p176 = por %p174, %p175
    %p177 = scmp.ne.s32.totalorder %s169, %s171
    %p178 = scmp.eq.s32.totalorder %s21, 1
    %p179 = por %p177, %p178
    %p180 = scmp.ne.s32.totalorder %s171, %s172
    %p181 = scmp.eq.s32.totalorder %s21, 0
    %p182 = por %p180, %p181
    %p183 = scmp.ne.s32.totalorder %s171, %s172
    %p184 = scmp.eq.s32.totalorder %s22, 1
    %p185 = por %p183, %p184
    %p187 = scmp.ne.s32.totalorder %s172, %s186
    %p188 = scmp.eq.s32.totalorder %s22, 0
    %p189 = por %p187, %p188
    %s190 = ssub.s32 %s23, %s35
    %s191 = ssub.s32 %s24, %s31
    %s192 = sor.u32 %s190, %s191
    %p193 = scmp.eq.s32.totalorder %s192, 0
    %s195 = sadd.s32 %s194, 1
    %s196 = scalar_select %p193, %s194, %s195
    %p199 = pneg %p193
    %p200 = scmp.eq.s32.totalorder %s16, 1
    %p201 = por %p199, %p200
    %p202 = scmp.ne.s32.totalorder %s194, %s197
    %p203 = scmp.eq.s32.totalorder %s16, 0
    %p204 = por %p202, %p203
    %p205 = scmp.ne.s32.totalorder %s194, %s197
    %p206 = scmp.eq.s32.totalorder %s21, 1
    %p207 = por %p205, %p206
    %p208 = scmp.ne.s32.totalorder %s197, %s198
    %p209 = scmp.eq.s32.totalorder %s21, 0
    %p210 = por %p208, %p209
    %p211 = scmp.ne.s32.totalorder %s197, %s198
    %p212 = scmp.eq.s32.totalorder %s22, 1
    %p213 = por %p211, %p212
    %p215 = scmp.ne.s32.totalorder %s198, %s214
    %p216 = scmp.eq.s32.totalorder %s22, 0
    %p217 = por %p215, %p216
    %s218 = ssub.s32 %s23, %s35
    %s219 = ssub.s32 %s24, %s31
    %s220 = sor.u32 %s218, %s219
    %p221 = scmp.eq.s32.totalorder %s220, 0
    %s223 = sadd.s32 %s222, 1
    %s224 = scalar_select %p221, %s222, %s223
    %p227 = pneg %p221
    %p228 = scmp.eq.s32.totalorder %s16, 1
    %p229 = por %p227, %p228
    %p230 = scmp.ne.s32.totalorder %s222, %s225
    %p231 = scmp.eq.s32.totalorder %s16, 0
    %p232 = por %p230, %p231
    %p233 = scmp.ne.s32.totalorder %s222, %s225
    %p234 = scmp.eq.s32.totalorder %s21, 1
    %p235 = por %p233, %p234
    %p236 = scmp.ne.s32.totalorder %s225, %s226
    %p237 = scmp.eq.s32.totalorder %s21, 0
    %p238 = por %p236, %p237
    %p239 = scmp.ne.s32.totalorder %s225, %s226
    %p240 = scmp.eq.s32.totalorder %s22, 1
    %p241 = por %p239, %p240
    %p243 = scmp.ne.s32.totalorder %s226, %s242
    %p244 = scmp.eq.s32.totalorder %s22, 0
    %p245 = por %p243, %p244
    %s246 = ssub.s32 %s23, %s35
    %s247 = ssub.s32 %s24, %s31
    %s248 = sor.u32 %s246, %s247
    %p249 = scmp.eq.s32.totalorder %s248, 0
    %s251 = sadd.s32 %s250, 1
    %s252 = scalar_select %p249, %s250, %s251
    %p255 = pneg %p249
    %p256 = scmp.eq.s32.totalorder %s16, 1
    %p257 = por %p255, %p256
    %p258 = scmp.ne.s32.totalorder %s250, %s253
    %p259 = scmp.eq.s32.totalorder %s16, 0
    %p260 = por %p258, %p259
    %p261 = scmp.ne.s32.totalorder %s250, %s253
    %p262 = scmp.eq.s32.totalorder %s21, 1
    %p263 = por %p261, %p262
    %p264 = scmp.ne.s32.totalorder %s253, %s254
    %p265 = scmp.eq.s32.totalorder %s21, 0
    %p266 = por %p264, %p265
    %p267 = scmp.ne.s32.totalorder %s253, %s254
    %p268 = scmp.eq.s32.totalorder %s22, 1
    %p269 = por %p267, %p268
    %p271 = scmp.ne.s32.totalorder %s254, %s270
    %p272 = scmp.eq.s32.totalorder %s22, 0
    %p273 = por %p271, %p272
    %p274 = scmp.le.s32.totalorder 1, %s16
    %p275 = scmp.lt.s32.totalorder %s16, 3
    %p276 = pnand %p274, %p275
    %p277 = pneg %p276
    // Predicated region
    $region9: #{multihead_attention.2} parent=5 // pred_check
      _
    $region10: #{multihead_attention.2} parent=5 // pred_check_branch
      %279 = sbr.rel (%p276) target = $region12
    $region11: #{multihead_attention.2} parent=5 // pred_region
      %s280 = ssub.s32 %s16, 1
      // Predicated region
      $region13: #{multihead_attention.2} parent=11 // pred_check
        %p281 = pneg %p77
      $region14: #{multihead_attention.2} parent=11 // pred_check_branch
        %283 = sbr.rel (%p281) target = $region16
      $region15: #{multihead_attention.2} parent=11 // pred_region
        _
      $region16: #{multihead_attention.2} parent=11 // pred_fallthru
        _
      // Predicated region
      $region17: #{multihead_attention.2} parent=11 // pred_check
        %p284 = pneg %p98
      $region18: #{multihead_attention.2} parent=11 // pred_check_branch
        %286 = sbr.rel (%p284) target = $region20
      $region19: #{multihead_attention.2} parent=11 // pred_region
        _
      $region20: #{multihead_attention.2} parent=11 // pred_fallthru
        _
      // Predicated region
      $region21: #{multihead_attention.2} parent=11 // pred_check
        %p287 = pneg %p119
      $region22: #{multihead_attention.2} parent=11 // pred_check_branch
        %289 = sbr.rel (%p287) target = $region24
      $region23: #{multihead_attention.2} parent=11 // pred_region
        _
      $region24: #{multihead_attention.2} parent=11 // pred_fallthru
        _
      // Predicated region
      $region25: #{multihead_attention.2} parent=11 // pred_check
        %p290 = pneg %p140
      $region26: #{multihead_attention.2} parent=11 // pred_check_branch
        %292 = sbr.rel (%p290) target = $region28
      $region27: #{multihead_attention.2} parent=11 // pred_region
        _
      $region28: #{multihead_attention.2} parent=11 // pred_fallthru
        _
      // Predicated region
      $region29: #{multihead_attention.2} parent=11 // pred_check
        %p293 = pneg %p161
      $region30: #{multihead_attention.2} parent=11 // pred_check_branch
        %295 = sbr.rel (%p293) target = $region32
      $region31: #{multihead_attention.2} parent=11 // pred_region
        _
      $region32: #{multihead_attention.2} parent=11 // pred_fallthru
        _
      // Predicated region
      $region33: #{multihead_attention.2} parent=11 // pred_check
        %p296 = pneg %p182
      $region34: #{multihead_attention.2} parent=11 // pred_check_branch
        %298 = sbr.rel (%p296) target = $region36
      $region35: #{multihead_attention.2} parent=11 // pred_region
        _
      $region36: #{multihead_attention.2} parent=11 // pred_fallthru
        _
    $region12: #{multihead_attention.2} parent=5 // pred_fallthru
      _
    %p299 = scmp.lt.s32.totalorder %s16, 2
    // Predicated region
    $region37: #{multihead_attention.2} parent=5 // pred_check
      %p300 = pneg %p299
    $region38: #{multihead_attention.2} parent=5 // pred_check_branch
      %302 = sbr.rel (%p300) target = $region40
    $region39: #{multihead_attention.2} parent=5 // pred_region
      // Predicated region
      $region41: #{multihead_attention.2} parent=39 // pred_check
        %p303 = pneg %p50
      $region42: #{multihead_attention.2} parent=39 // pred_check_branch
        %305 = sbr.rel (%p303) target = $region44
      $region43: #{multihead_attention.2} parent=39 // pred_region
        %s306 = smul.u32 16, %s24
        %p307 = scmp.lt.s32.totalorder %s23, 1
        %s308 = scalar_select %p307, %s23, 1
        %p309 = scmp.lt.s32.totalorder %s306, 15
        %s310 = scalar_select %p309, %s306, 15
        %s311 = smul.addr %s308, 16
        %s312 = sadd.s32 %s310, %s311
        %s313 = smul.addr %s312, 4
        %s314 = scalar_lea.vmem %s0, %s313
        %s315 = smul.u32 16, %s24
      $region44: #{multihead_attention.2} parent=39 // pred_fallthru
        _
    $region40: #{multihead_attention.2} parent=5 // pred_fallthru
      _
    %p316 = scmp.le.s32.totalorder 1, %s16
    %p317 = scmp.lt.s32.totalorder %s16, 3
    %p318 = pnand %p316, %p317
    %p319 = pneg %p318
    // Predicated region
    $region45: #{multihead_attention.2} parent=5 // pred_check
      _
    $region46: #{multihead_attention.2} parent=5 // pred_check_branch
      %321 = sbr.rel (%p318) target = $region48
    $region47: #{multihead_attention.2} parent=5 // pred_region
      %s322 = ssub.s32 %s16, 1
      %s323 = smul.u32 16, %s26
      %p324 = scmp.lt.s32.totalorder %s25, 1
      %s325 = scalar_select %p324, %s25, 1
      %p326 = scmp.lt.s32.totalorder %s323, 15
      %s327 = scalar_select %p326, %s323, 15
      %s328 = smul.addr %s325, 16
      %s329 = sadd.s32 %s327, %s328
      %s330 = smul.addr %s329, 4
      %s331 = scalar_lea.vmem %s0, %s330
      %p332 = pneg %p56
      %p333 = pneg %p53
      %p334 = pneg %p77
      %p335 = pneg %p74
      %p336 = pneg %p98
      %p337 = pneg %p95
      %p338 = pneg %p119
      %p339 = pneg %p116
      %p340 = pneg %p140
      %p341 = pneg %p137
      %p342 = pneg %p161
      %p343 = pneg %p158
      %p344 = pneg %p182
      %p345 = pneg %p179
      %p346 = pneg %p210
      %p347 = pneg %p207
      %s348 = smul.u32 16, %s26
      %p349 = scmp.lt.s32.totalorder %s25, 1
      %s350 = scalar_select %p349, %s25, 1
      %p351 = scmp.lt.s32.totalorder %s348, 15
      %s352 = scalar_select %p351, %s348, 15
      %s353 = smul.addr %s350, 64
      %s354 = sadd.s32 %s352, %s353
      %s355 = smul.addr %s354, 4
      %s356 = scalar_lea.vmem %s7, %s355
      %p357 = pneg %p238
      %p358 = pneg %p235
      %s359 = smul.u32 16, %s26
      %p360 = scmp.lt.s32.totalorder %s25, 1
      %s361 = scalar_select %p360, %s25, 1
      %p362 = scmp.lt.s32.totalorder %s359, 15
      %s363 = scalar_select %p362, %s359, 15
      %s364 = smul.addr %s361, 64
      %s365 = sadd.s32 %s363, %s364
      %s366 = smul.addr %s365, 4
      %s367 = scalar_lea.vmem %s8, %s366
      %p368 = pneg %p266
      %p369 = pneg %p263
      %s370 = smul.u32 16, %s26
      %p371 = scmp.lt.s32.totalorder %s25, 1
      %s372 = scalar_select %p371, %s25, 1
      %p373 = scmp.lt.s32.totalorder %s370, 15
      %s374 = scalar_select %p373, %s370, 15
      %s375 = smul.addr %s372, 64
      %s376 = sadd.s32 %s374, %s375
      %s377 = smul.addr %s376, 4
      %s378 = scalar_lea.vmem %s9, %s377
      %s379 = smul.u32 16, %s26
      %p380 = scmp.lt.s32.totalorder %s25, 1
      %s381 = scalar_select %p380, %s25, 1
      %p382 = scmp.lt.s32.totalorder %s379, 15
      %s383 = scalar_select %p382, %s379, 15
      %s384 = smul.addr %s381, 16
      %s385 = sadd.s32 %s383, %s384
      %s386 = smul.addr %s385, 4
      %s387 = scalar_lea.vmem %s0, %s386
      %s388 = smul.u32 16, %s26
      %s389 = smul.u32 16, %s26
      %p390 = scmp.lt.s32.totalorder %s25, 1
      %s391 = scalar_select %p390, %s25, 1
      %p392 = scmp.lt.s32.totalorder %s389, 15
      %s393 = scalar_select %p392, %s389, 15
      %s394 = smul.addr %s391, 64
      %s395 = sadd.s32 %s393, %s394
      %s396 = smul.addr %s395, 4
      %s397 = scalar_lea.vmem %s7, %s396
      %s398 = smul.u32 16, %s26
      %s399 = smul.u32 16, %s26
      %p400 = scmp.lt.s32.totalorder %s25, 1
      %s401 = scalar_select %p400, %s25, 1
      %p402 = scmp.lt.s32.totalorder %s399, 15
      %s403 = scalar_select %p402, %s399, 15
      %s404 = smul.addr %s401, 64
      %s405 = sadd.s32 %s403, %s404
      %s406 = smul.addr %s405, 4
      %s407 = scalar_lea.vmem %s8, %s406
      %s408 = smul.u32 16, %s26
      %s409 = smul.u32 16, %s26
      %p410 = scmp.lt.s32.totalorder %s25, 1
      %s411 = scalar_select %p410, %s25, 1
      %p412 = scmp.lt.s32.totalorder %s409, 15
      %s413 = scalar_select %p412, %s409, 15
      %s414 = smul.addr %s411, 64
      %s415 = sadd.s32 %s413, %s414
      %s416 = smul.addr %s415, 4
      %s417 = scalar_lea.vmem %s9, %s416
      %s418 = smul.u32 16, %s26
      %v420 = vld [vmem:[%s387] sm:$0xf]
      %v421 = vld [vmem:[%s387 + $0x4] sm:$0xf]
      %v422 = vld [vmem:[%s387 + $0x8] sm:$0xf]
      %v423 = vld [vmem:[%s387 + $0xc] sm:$0xf]
      %v424 = vld [vmem:[%s387 + $0x10] sm:$0xf]
      %v425 = vld [vmem:[%s387 + $0x14] sm:$0xf]
      %v426 = vld [vmem:[%s387 + $0x18] sm:$0xf]
      %v427 = vld [vmem:[%s387 + $0x1c] sm:$0xf]
      %v428 = vld [vmem:[%s387 + $0x20] sm:$0xf]
      %v429 = vld [vmem:[%s387 + $0x24] sm:$0xf]
      %v430 = vld [vmem:[%s387 + $0x28] sm:$0xf]
      %v431 = vld [vmem:[%s387 + $0x2c] sm:$0xf]
      %v432 = vld [vmem:[%s387 + $0x30] sm:$0xf]
      %v433 = vld [vmem:[%s387 + $0x34] sm:$0xf]
      %v434 = vld [vmem:[%s387 + $0x38] sm:$0xf]
      %v435 = vld [vmem:[%s387 + $0x3c] sm:$0xf]
      %v436 = vld [vmem:[%s1] sm:$0xf]
      %v437 = vld [vmem:[%s1 + $0x4] sm:$0xf]
      %v438 = vld [vmem:[%s1 + $0x8] sm:$0xf]
      %v439 = vld [vmem:[%s1 + $0xc] sm:$0xf]
      %v440 = vld [vmem:[%s1 + $0x10] sm:$0xf]
      %v441 = vld [vmem:[%s1 + $0x14] sm:$0xf]
      %v442 = vld [vmem:[%s1 + $0x18] sm:$0xf]
      %v443 = vld [vmem:[%s1 + $0x1c] sm:$0xf]
      %v444 = vld [vmem:[%s4] sm:$0x1]
      %v446 = vlaneseq
      %v447 = vshrl.u32 %v446, 7
      %v448 = vsub.s32 0, %v447
      %v449 = vrot.slane %v444, %v448
      %v467 = vunpack.c.l.b16 %v420
      %v468 = vunpack.c.l.b16 %v421
      %v469 = vunpack.c.l.b16 %v422
      %v470 = vunpack.c.l.b16 %v423
      %v471 = vunpack.c.l.b16 %v424
      %v472 = vunpack.c.l.b16 %v425
      %v473 = vunpack.c.l.b16 %v426
      %v474 = vunpack.c.l.b16 %v427
      %v475 = vunpack.c.l.b16 %v428
      %v476 = vunpack.c.l.b16 %v429
      %v477 = vunpack.c.l.b16 %v430
      %v478 = vunpack.c.l.b16 %v431
      %v479 = vunpack.c.l.b16 %v432
      %v480 = vunpack.c.l.b16 %v433
      %v481 = vunpack.c.l.b16 %v434
      %v482 = vunpack.c.l.b16 %v435
      %v483 = vpack.c.b16 %v468, %v467
      %v484 = vpack.c.b16 %v470, %v469
      %v485 = vpack.c.b16 %v472, %v471
      %v486 = vpack.c.b16 %v474, %v473
      %v487 = vpack.c.b16 %v476, %v475
      %v488 = vpack.c.b16 %v478, %v477
      %v489 = vpack.c.b16 %v480, %v479
      %v490 = vpack.c.b16 %v482, %v481
      %v499 = vunpack.c.l.b16 %v436
      %v500 = vunpack.c.l.b16 %v437
      %v501 = vunpack.c.l.b16 %v438
      %v502 = vunpack.c.l.b16 %v439
      %v503 = vunpack.c.l.b16 %v440
      %v504 = vunpack.c.l.b16 %v441
      %v505 = vunpack.c.l.b16 %v442
      %v506 = vunpack.c.l.b16 %v443
      %v507 = vpack.c.b16 %v500, %v499
      %v508 = vpack.c.b16 %v502, %v501
      %v509 = vpack.c.b16 %v504, %v503
      %v510 = vpack.c.b16 %v506, %v505
      %vm515 = vcmask 523264
      %v517 = vsel %vm515, %v483, 0
      %v520 = vsel %vm515, %v484, 0
      %v523 = vsel %vm515, %v485, 0
      %v526 = vsel %vm515, %v486, 0
      %v529 = vsel %vm515, %v487, 0
      %v532 = vsel %vm515, %v488, 0
      %v535 = vsel %vm515, %v489, 0
      %v538 = vsel %vm515, %v490, 0
      %540 = vmatprep.subr.bf16.mxu0 0
      %541 = vmatpush1.bf16.msra.mxu0 %v507
      %542 = vmatprep.subr.bf16.mxu0 0
      %543 = vmatpush1.bf16.msra.mxu0 %v508
      %544 = vmatprep.subr.bf16.mxu0 0
      %545 = vmatpush1.bf16.msra.mxu0 %v509
      %546 = vmatprep.subr.bf16.mxu0 0
      %547 = vmatpush1.bf16.msra.mxu0 %v510
      %548 = vmatprep.subr.bf16.mxu0 0
      %549 = vmatpush1.bf16.msra.mxu0 0
      %550 = vmatprep.subr.bf16.mxu0 0
      %551 = vmatpush1.bf16.msra.mxu0 0
      %552 = vmatprep.subr.bf16.mxu0 0
      %553 = vmatpush1.bf16.msra.mxu0 0
      %554 = vmatprep.subr.bf16.mxu0 0
      %555 = vmatpush1.bf16.msra.mxu0 0
      %556 = vmatprep.subr.bf16.mxu0 0
      %557 = vmatpush1.bf16.msra.mxu0 0
      %558 = vmatprep.subr.bf16.mxu0 0
      %559 = vmatpush1.bf16.msra.mxu0 0
      %560 = vmatprep.subr.bf16.mxu0 0
      %561 = vmatpush1.bf16.msra.mxu0 0
      %562 = vmatprep.subr.bf16.mxu0 0
      %563 = vmatpush1.bf16.msra.mxu0 0
      %564 = vmatprep.subr.bf16.mxu0 0
      %565 = vmatpush1.bf16.msra.mxu0 0
      %566 = vmatprep.subr.bf16.mxu0 0
      %567 = vmatpush1.bf16.msra.mxu0 0
      %568 = vmatprep.subr.bf16.mxu0 0
      %569 = vmatpush1.bf16.msra.mxu0 0
      %570 = vmatprep.subr.bf16.mxu0 0
      %571 = vmatpush1.bf16.msra.mxu0 0
      %572 = vmatprep.mubr.bf16.mxu0 0
      %573 = vmatmul.mubr.bf16.gmra.mrb[0].mxu0 %v517
      %v574 = vpop.f32.mrb[0].mxu0
      %v575 = vadd.f32 %v449, %v574
      %v576 = vpop.f32.mrb[0].mxu0
      %v577 = vpop.f32.mrb[0].mxu0
      %v578 = vadd.f32 %v449, %v577
      %v579 = vpop.f32.mrb[0].mxu0
      %580 = vmatprep.mubr.bf16.mxu0 0
      %581 = vmatmul.mubr.bf16.gmra.mrb[0].mxu0 %v520
      %v582 = vpop.f32.mrb[0].mxu0
      %v583 = vadd.f32 %v449, %v582
      %v584 = vpop.f32.mrb[0].mxu0
      %v585 = vpop.f32.mrb[0].mxu0
      %v586 = vadd.f32 %v449, %v585
      %v587 = vpop.f32.mrb[0].mxu0
      %588 = vmatprep.mubr.bf16.mxu0 0
      %589 = vmatmul.mubr.bf16.gmra.mrb[0].mxu0 %v523
      %v590 = vpop.f32.mrb[0].mxu0
      %v591 = vadd.f32 %v449, %v590
      %v592 = vpop.f32.mrb[0].mxu0
      %v593 = vpop.f32.mrb[0].mxu0
      %v594 = vadd.f32 %v449, %v593
      %v595 = vpop.f32.mrb[0].mxu0
      %596 = vmatprep.mubr.bf16.mxu0 0
      %597 = vmatmul.mubr.bf16.gmra.mrb[0].mxu0 %v526
      %v598 = vpop.f32.mrb[0].mxu0
      %v599 = vadd.f32 %v449, %v598
      %v600 = vpop.f32.mrb[0].mxu0
      %v601 = vpop.f32.mrb[0].mxu0
      %v602 = vadd.f32 %v449, %v601
      %v603 = vpop.f32.mrb[0].mxu0
      %604 = vmatprep.mubr.bf16.mxu0 0
      %605 = vmatmul.mubr.bf16.gmra.mrb[0].mxu0 %v529
      %v606 = vpop.f32.mrb[0].mxu0
      %v607 = vadd.f32 %v449, %v606
      %v608 = vpop.f32.mrb[0].mxu0
      %v609 = vpop.f32.mrb[0].mxu0
      %v610 = vadd.f32 %v449, %v609
      %v611 = vpop.f32.mrb[0].mxu0
      %612 = vmatprep.mubr.bf16.mxu0 0
      %613 = vmatmul.mubr.bf16.gmra.mrb[0].mxu0 %v532
      %v614 = vpop.f32.mrb[0].mxu0
      %v615 = vadd.f32 %v449, %v614
      %v616 = vpop.f32.mrb[0].mxu0
      %v617 = vpop.f32.mrb[0].mxu0
      %v618 = vadd.f32 %v449, %v617
      %v619 = vpop.f32.mrb[0].mxu0
      %620 = vmatprep.mubr.bf16.mxu0 0
      %621 = vmatmul.mubr.bf16.gmra.mrb[0].mxu0 %v535
      %v622 = vpop.f32.mrb[0].mxu0
      %v623 = vadd.f32 %v449, %v622
      %v624 = vpop.f32.mrb[0].mxu0
      %v625 = vpop.f32.mrb[0].mxu0
      %v626 = vadd.f32 %v449, %v625
      %v627 = vpop.f32.mrb[0].mxu0
      %628 = vmatprep.mubr.bf16.mxu0 0
      %629 = vmatmul.mubr.bf16.gmra.mrb[0].mxu0 %v538
      %v630 = vpop.f32.mrb[0].mxu0
      %v631 = vadd.f32 %v449, %v630
      %v632 = vpop.f32.mrb[0].mxu0
      %v633 = vpop.f32.mrb[0].mxu0
      %v634 = vadd.f32 %v449, %v633
      %v635 = vpop.f32.mrb[0].mxu0
      %636 = vdwg.mxu0
      %v637 = vld [vmem:[%s2] sm:$0xf]
      %v638 = vld [vmem:[%s2 + $0x4] sm:$0xf]
      %v639 = vld [vmem:[%s2 + $0x8] sm:$0xf]
      %v640 = vld [vmem:[%s2 + $0xc] sm:$0xf]
      %v641 = vld [vmem:[%s2 + $0x10] sm:$0xf]
      %v642 = vld [vmem:[%s2 + $0x14] sm:$0xf]
      %v643 = vld [vmem:[%s2 + $0x18] sm:$0xf]
      %v644 = vld [vmem:[%s2 + $0x1c] sm:$0xf]
      %v645 = vld [vmem:[%s5] sm:$0x1]
      %v647 = vlaneseq
      %v648 = vshrl.u32 %v647, 7
      %v649 = vsub.s32 0, %v648
      %v650 = vrot.slane %v645, %v649
      %v660 = vunpack.c.l.b16 %v637
      %v661 = vunpack.c.l.b16 %v638
      %v662 = vunpack.c.l.b16 %v639
      %v663 = vunpack.c.l.b16 %v640
      %v664 = vunpack.c.l.b16 %v641
      %v665 = vunpack.c.l.b16 %v642
      %v666 = vunpack.c.l.b16 %v643
      %v667 = vunpack.c.l.b16 %v644
      %v668 = vpack.c.b16 %v661, %v660
      %v669 = vpack.c.b16 %v663, %v662
      %v670 = vpack.c.b16 %v665, %v664
      %v671 = vpack.c.b16 %v667, %v666
      %676 = vmatprep.subr.bf16.mxu0 0
      %677 = vmatpush1.bf16.msra.mxu0 %v668
      %678 = vmatprep.subr.bf16.mxu0 0
      %679 = vmatpush1.bf16.msra.mxu0 %v669
      %680 = vmatprep.subr.bf16.mxu0 0
      %681 = vmatpush1.bf16.msra.mxu0 %v670
      %682 = vmatprep.subr.bf16.mxu0 0
      %683 = vmatpush1.bf16.msra.mxu0 %v671
      %684 = vmatprep.subr.bf16.mxu0 0
      %685 = vmatpush1.bf16.msra.mxu0 0
      %686 = vmatprep.subr.bf16.mxu0 0
      %687 = vmatpush1.bf16.msra.mxu0 0
      %688 = vmatprep.subr.bf16.mxu0 0
      %689 = vmatpush1.bf16.msra.mxu0 0
      %690 = vmatprep.subr.bf16.mxu0 0
      %691 = vmatpush1.bf16.msra.mxu0 0
      %692 = vmatprep.subr.bf16.mxu0 0
      %693 = vmatpush1.bf16.msra.mxu0 0
      %694 = vmatprep.subr.bf16.mxu0 0
      %695 = vmatpush1.bf16.msra.mxu0 0
      %696 = vmatprep.subr.bf16.mxu0 0
      %697 = vmatpush1.bf16.msra.mxu0 0
      %698 = vmatprep.subr.bf16.mxu0 0
      %699 = vmatpush1.bf16.msra.mxu0 0
      %700 = vmatprep.subr.bf16.mxu0 0
      %701 = vmatpush1.bf16.msra.mxu0 0
      %702 = vmatprep.subr.bf16.mxu0 0
      %703 = vmatpush1.bf16.msra.mxu0 0
      %704 = vmatprep.subr.bf16.mxu0 0
      %705 = vmatpush1.bf16.msra.mxu0 0
      %706 = vmatprep.subr.bf16.mxu0 0
      %707 = vmatpush1.bf16.msra.mxu0 0
      %708 = vmatprep.mubr.bf16.mxu0 0
      %709 = vmatmul.mubr.bf16.gmra.mrb[0].mxu0 %v517
      %v710 = vpop.f32.mrb[0].mxu0
      %v711 = vadd.f32 %v650, %v710
      %v712 = vpop.f32.mrb[0].mxu0
      %v713 = vpop.f32.mrb[0].mxu0
      %v714 = vadd.f32 %v650, %v713
      %v715 = vpop.f32.mrb[0].mxu0
      %716 = vmatprep.mubr.bf16.mxu0 0
      %717 = vmatmul.mubr.bf16.gmra.mrb[0].mxu0 %v520
      %v718 = vpop.f32.mrb[0].mxu0
      %v719 = vadd.f32 %v650, %v718
      %v720 = vpop.f32.mrb[0].mxu0
      %v721 = vpop.f32.mrb[0].mxu0
      %v722 = vadd.f32 %v650, %v721
      %v723 = vpop.f32.mrb[0].mxu0
      %724 = vmatprep.mubr.bf16.mxu0 0
      %725 = vmatmul.mubr.bf16.gmra.mrb[0].mxu0 %v523
      %v726 = vpop.f32.mrb[0].mxu0
      %v727 = vadd.f32 %v650, %v726
      %v728 = vpop.f32.mrb[0].mxu0
      %v729 = vpop.f32.mrb[0].mxu0
      %v730 = vadd.f32 %v650, %v729
      %v731 = vpop.f32.mrb[0].mxu0
      %732 = vmatprep.mubr.bf16.mxu0 0
      %733 = vmatmul.mubr.bf16.gmra.mrb[0].mxu0 %v526
      %v734 = vpop.f32.mrb[0].mxu0
      %v735 = vadd.f32 %v650, %v734
      %v736 = vpop.f32.mrb[0].mxu0
      %v737 = vpop.f32.mrb[0].mxu0
      %v738 = vadd.f32 %v650, %v737
      %v739 = vpop.f32.mrb[0].mxu0
      %740 = vmatprep.mubr.bf16.mxu0 0
      %741 = vmatmul.mubr.bf16.gmra.mrb[0].mxu0 %v529
      %v742 = vpop.f32.mrb[0].mxu0
      %v743 = vadd.f32 %v650, %v742
      %v744 = vpop.f32.mrb[0].mxu0
      %v745 = vpop.f32.mrb[0].mxu0
      %v746 = vadd.f32 %v650, %v745
      %v747 = vpop.f32.mrb[0].mxu0
      %748 = vmatprep.mubr.bf16.mxu0 0
      %749 = vmatmul.mubr.bf16.gmra.mrb[0].mxu0 %v532
      %v750 = vpop.f32.mrb[0].mxu0
      %v751 = vadd.f32 %v650, %v750
      %v752 = vpop.f32.mrb[0].mxu0
      %v753 = vpop.f32.mrb[0].mxu0
      %v754 = vadd.f32 %v650, %v753
      %v755 = vpop.f32.mrb[0].mxu0
      %756 = vmatprep.mubr.bf16.mxu0 0
      %757 = vmatmul.mubr.bf16.gmra.mrb[0].mxu0 %v535
      %v758 = vpop.f32.mrb[0].mxu0
      %v759 = vadd.f32 %v650, %v758
      %v760 = vpop.f32.mrb[0].mxu0
      %v761 = vpop.f32.mrb[0].mxu0
      %v762 = vadd.f32 %v650, %v761
      %v763 = vpop.f32.mrb[0].mxu0
      %764 = vmatprep.mubr.bf16.mxu0 0
      %765 = vmatmul.mubr.bf16.gmra.mrb[0].mxu0 %v538
      %v766 = vpop.f32.mrb[0].mxu0
      %v767 = vadd.f32 %v650, %v766
      %v768 = vpop.f32.mrb[0].mxu0
      %v769 = vpop.f32.mrb[0].mxu0
      %v770 = vadd.f32 %v650, %v769
      %v771 = vpop.f32.mrb[0].mxu0
      %772 = vdwg.mxu0
      %v773 = vld [vmem:[%s3] sm:$0xf]
      %v774 = vld [vmem:[%s3 + $0x4] sm:$0xf]
      %v775 = vld [vmem:[%s3 + $0x8] sm:$0xf]
      %v776 = vld [vmem:[%s3 + $0xc] sm:$0xf]
      %v777 = vld [vmem:[%s3 + $0x10] sm:$0xf]
      %v778 = vld [vmem:[%s3 + $0x14] sm:$0xf]
      %v779 = vld [vmem:[%s3 + $0x18] sm:$0xf]
      %v780 = vld [vmem:[%s3 + $0x1c] sm:$0xf]
      %v781 = vld [vmem:[%s6] sm:$0x1]
      %v783 = vlaneseq
      %v784 = vshrl.u32 %v783, 7
      %v785 = vsub.s32 0, %v784
      %v786 = vrot.slane %v781, %v785
      %v796 = vunpack.c.l.b16 %v773
      %v797 = vunpack.c.l.b16 %v774
      %v798 = vunpack.c.l.b16 %v775
      %v799 = vunpack.c.l.b16 %v776
      %v800 = vunpack.c.l.b16 %v777
      %v801 = vunpack.c.l.b16 %v778
      %v802 = vunpack.c.l.b16 %v779
      %v803 = vunpack.c.l.b16 %v780
      %v804 = vpack.c.b16 %v797, %v796
      %v805 = vpack.c.b16 %v799, %v798
      %v806 = vpack.c.b16 %v801, %v800
      %v807 = vpack.c.b16 %v803, %v802
      %812 = vmatprep.subr.bf16.mxu0 0
      %813 = vmatpush1.bf16.msra.mxu0 %v804
      %814 = vmatprep.subr.bf16.mxu0 0
      %815 = vmatpush1.bf16.msra.mxu0 %v805
      %816 = vmatprep.subr.bf16.mxu0 0
      %817 = vmatpush1.bf16.msra.mxu0 %v806
      %818 = vmatprep.subr.bf16.mxu0 0
      %819 = vmatpush1.bf16.msra.mxu0 %v807
      %820 = vmatprep.subr.bf16.mxu0 0
      %821 = vmatpush1.bf16.msra.mxu0 0
      %822 = vmatprep.subr.bf16.mxu0 0
      %823 = vmatpush1.bf16.msra.mxu0 0
      %824 = vmatprep.subr.bf16.mxu0 0
      %825 = vmatpush1.bf16.msra.mxu0 0
      %826 = vmatprep.subr.bf16.mxu0 0
      %827 = vmatpush1.bf16.msra.mxu0 0
      %828 = vmatprep.subr.bf16.mxu0 0
      %829 = vmatpush1.bf16.msra.mxu0 0
      %830 = vmatprep.subr.bf16.mxu0 0
      %831 = vmatpush1.bf16.msra.mxu0 0
      %832 = vmatprep.subr.bf16.mxu0 0
      %833 = vmatpush1.bf16.msra.mxu0 0
      %834 = vmatprep.subr.bf16.mxu0 0
      %835 = vmatpush1.bf16.msra.mxu0 0
      %836 = vmatprep.subr.bf16.mxu0 0
      %837 = vmatpush1.bf16.msra.mxu0 0
      %838 = vmatprep.subr.bf16.mxu0 0
      %839 = vmatpush1.bf16.msra.mxu0 0
      %840 = vmatprep.subr.bf16.mxu0 0
      %841 = vmatpush1.bf16.msra.mxu0 0
      %842 = vmatprep.subr.bf16.mxu0 0
      %843 = vmatpush1.bf16.msra.mxu0 0
      %844 = vmatprep.mubr.bf16.mxu0 0
      %845 = vmatmul.mubr.bf16.gmra.mrb[0].mxu0 %v517
      %v846 = vpop.f32.mrb[0].mxu0
      %v847 = vadd.f32 %v786, %v846
      %v848 = vpop.f32.mrb[0].mxu0
      %v849 = vpop.f32.mrb[0].mxu0
      %v850 = vadd.f32 %v786, %v849
      %v851 = vpop.f32.mrb[0].mxu0
      %852 = vmatprep.mubr.bf16.mxu0 0
      %853 = vmatmul.mubr.bf16.gmra.mrb[0].mxu0 %v520
      %v854 = vpop.f32.mrb[0].mxu0
      %v855 = vadd.f32 %v786, %v854
      %v856 = vpop.f32.mrb[0].mxu0
      %v857 = vpop.f32.mrb[0].mxu0
      %v858 = vadd.f32 %v786, %v857
      %v859 = vpop.f32.mrb[0].mxu0
      %860 = vmatprep.mubr.bf16.mxu0 0
      %861 = vmatmul.mubr.bf16.gmra.mrb[0].mxu0 %v523
      %v862 = vpop.f32.mrb[0].mxu0
      %v863 = vadd.f32 %v786, %v862
      %v864 = vpop.f32.mrb[0].mxu0
      %v865 = vpop.f32.mrb[0].mxu0
      %v866 = vadd.f32 %v786, %v865
      %v867 = vpop.f32.mrb[0].mxu0
      %868 = vmatprep.mubr.bf16.mxu0 0
      %869 = vmatmul.mubr.bf16.gmra.mrb[0].mxu0 %v526
      %v870 = vpop.f32.mrb[0].mxu0
      %v871 = vadd.f32 %v786, %v870
      %v872 = vpop.f32.mrb[0].mxu0
      %v873 = vpop.f32.mrb[0].mxu0
      %v874 = vadd.f32 %v786, %v873
      %v875 = vpop.f32.mrb[0].mxu0
      %876 = vmatprep.mubr.bf16.mxu0 0
      %877 = vmatmul.mubr.bf16.gmra.mrb[0].mxu0 %v529
      %v878 = vpop.f32.mrb[0].mxu0
      %v879 = vadd.f32 %v786, %v878
      %v880 = vpop.f32.mrb[0].mxu0
      %v881 = vpop.f32.mrb[0].mxu0
      %v882 = vadd.f32 %v786, %v881
      %v883 = vpop.f32.mrb[0].mxu0
      %884 = vmatprep.mubr.bf16.mxu0 0
      %885 = vmatmul.mubr.bf16.gmra.mrb[0].mxu0 %v532
      %v886 = vpop.f32.mrb[0].mxu0
      %v887 = vadd.f32 %v786, %v886
      %v888 = vpop.f32.mrb[0].mxu0
      %v889 = vpop.f32.mrb[0].mxu0
      %v890 = vadd.f32 %v786, %v889
      %v891 = vpop.f32.mrb[0].mxu0
      %892 = vmatprep.mubr.bf16.mxu0 0
      %893 = vmatmul.mubr.bf16.gmra.mrb[0].mxu0 %v535
      %v894 = vpop.f32.mrb[0].mxu0
      %v895 = vadd.f32 %v786, %v894
      %v896 = vpop.f32.mrb[0].mxu0
      %v897 = vpop.f32.mrb[0].mxu0
      %v898 = vadd.f32 %v786, %v897
      %v899 = vpop.f32.mrb[0].mxu0
      %900 = vmatprep.mubr.bf16.mxu0 0
      %901 = vmatmul.mubr.bf16.gmra.mrb[0].mxu0 %v538
      %v902 = vpop.f32.mrb[0].mxu0
      %v903 = vadd.f32 %v786, %v902
      %v904 = vpop.f32.mrb[0].mxu0
      %v905 = vpop.f32.mrb[0].mxu0
      %v906 = vadd.f32 %v786, %v905
      %v907 = vpop.f32.mrb[0].mxu0
      %908 = vdwg.mxu0
      %v909 = vmul.f32 %v575, 0.17677669
      %v910 = vmul.f32 %v578, 0.17677669
      %v911 = vmul.f32 %v583, 0.17677669
      %v912 = vmul.f32 %v586, 0.17677669
      %v913 = vmul.f32 %v591, 0.17677669
      %v914 = vmul.f32 %v594, 0.17677669
      %v915 = vmul.f32 %v599, 0.17677669
      %v916 = vmul.f32 %v602, 0.17677669
      %v917 = vmul.f32 %v607, 0.17677669
      %v918 = vmul.f32 %v610, 0.17677669
      %v919 = vmul.f32 %v615, 0.17677669
      %v920 = vmul.f32 %v618, 0.17677669
      %v921 = vmul.f32 %v623, 0.17677669
      %v922 = vmul.f32 %v626, 0.17677669
      %v923 = vmul.f32 %v631, 0.17677669
      %v924 = vmul.f32 %v634, 0.17677669
      %v925 = vpack.c.bf16 %v910, %v909
      %v926 = vpack.c.bf16 %v912, %v911
      %v927 = vpack.c.bf16 %v914, %v913
      %v928 = vpack.c.bf16 %v916, %v915
      %v929 = vpack.c.bf16 %v918, %v917
      %v930 = vpack.c.bf16 %v920, %v919
      %v931 = vpack.c.bf16 %v922, %v921
      %v932 = vpack.c.bf16 %v924, %v923
      %v941 = vunpack.c.l.b16 %v925
      %v942 = vunpack.c.h.b16 %v925
      %v943 = vunpack.c.l.b16 %v926
      %v944 = vunpack.c.h.b16 %v926
      %v945 = vunpack.c.l.b16 %v927
      %v946 = vunpack.c.h.b16 %v927
      %v947 = vunpack.c.l.b16 %v928
      %v948 = vunpack.c.h.b16 %v928
      %v949 = vunpack.c.l.b16 %v929
      %v950 = vunpack.c.h.b16 %v929
      %v951 = vunpack.c.l.b16 %v930
      %v952 = vunpack.c.h.b16 %v930
      %v953 = vunpack.c.l.b16 %v931
      %v954 = vunpack.c.h.b16 %v931
      %v955 = vunpack.c.l.b16 %v932
      %v956 = vunpack.c.h.b16 %v932
      %v957 = vpack.c.b16 %v941, %v941
      %v958 = vpack.c.b16 %v942, %v942
      %v959 = vpack.c.b16 %v943, %v943
      %v960 = vpack.c.b16 %v944, %v944
      %v961 = vpack.c.b16 %v945, %v945
      %v962 = vpack.c.b16 %v946, %v946
      %v963 = vpack.c.b16 %v947, %v947
      %v964 = vpack.c.b16 %v948, %v948
      %v965 = vpack.c.b16 %v949, %v949
      %v966 = vpack.c.b16 %v950, %v950
      %v967 = vpack.c.b16 %v951, %v951
      %v968 = vpack.c.b16 %v952, %v952
      %v969 = vpack.c.b16 %v953, %v953
      %v970 = vpack.c.b16 %v954, %v954
      %v971 = vpack.c.b16 %v955, %v955
      %v972 = vpack.c.b16 %v956, %v956
      %vm989 = vcmask 257024
      %990 = vst.msk [vmem:[%s397] sm:$0xf] %vm989, %v957
      %991 = vst.msk [vmem:[%s397 + $0x4] sm:$0xf] %vm989, %v958
      %992 = vst.msk [vmem:[%s397 + $0x8] sm:$0xf] %vm989, %v959
      %993 = vst.msk [vmem:[%s397 + $0xc] sm:$0xf] %vm989, %v960
      %994 = vst.msk [vmem:[%s397 + $0x10] sm:$0xf] %vm989, %v961
      %995 = vst.msk [vmem:[%s397 + $0x14] sm:$0xf] %vm989, %v962
      %996 = vst.msk [vmem:[%s397 + $0x18] sm:$0xf] %vm989, %v963
      %997 = vst.msk [vmem:[%s397 + $0x1c] sm:$0xf] %vm989, %v964
      %998 = vst.msk [vmem:[%s397 + $0x20] sm:$0xf] %vm989, %v965
      %999 = vst.msk [vmem:[%s397 + $0x24] sm:$0xf] %vm989, %v966
      %1000 = vst.msk [vmem:[%s397 + $0x28] sm:$0xf] %vm989, %v967
      %1001 = vst.msk [vmem:[%s397 + $0x2c] sm:$0xf] %vm989, %v968
      %1002 = vst.msk [vmem:[%s397 + $0x30] sm:$0xf] %vm989, %v969
      %1003 = vst.msk [vmem:[%s397 + $0x34] sm:$0xf] %vm989, %v970
      %1004 = vst.msk [vmem:[%s397 + $0x38] sm:$0xf] %vm989, %v971
      %1005 = vst.msk [vmem:[%s397 + $0x3c] sm:$0xf] %vm989, %v972
      %v1006 = vpack.c.bf16 %v714, %v711
      %v1007 = vpack.c.bf16 %v722, %v719
      %v1008 = vpack.c.bf16 %v730, %v727
      %v1009 = vpack.c.bf16 %v738, %v735
      %v1010 = vpack.c.bf16 %v746, %v743
      %v1011 = vpack.c.bf16 %v754, %v751
      %v1012 = vpack.c.bf16 %v762, %v759
      %v1013 = vpack.c.bf16 %v770, %v767
      %v1022 = vunpack.c.l.b16 %v1006
      %v1023 = vunpack.c.h.b16 %v1006
      %v1024 = vunpack.c.l.b16 %v1007
      %v1025 = vunpack.c.h.b16 %v1007
      %v1026 = vunpack.c.l.b16 %v1008
      %v1027 = vunpack.c.h.b16 %v1008
      %v1028 = vunpack.c.l.b16 %v1009
      %v1029 = vunpack.c.h.b16 %v1009
      %v1030 = vunpack.c.l.b16 %v1010
      %v1031 = vunpack.c.h.b16 %v1010
      %v1032 = vunpack.c.l.b16 %v1011
      %v1033 = vunpack.c.h.b16 %v1011
      %v1034 = vunpack.c.l.b16 %v1012
      %v1035 = vunpack.c.h.b16 %v1012
      %v1036 = vunpack.c.l.b16 %v1013
      %v1037 = vunpack.c.h.b16 %v1013
      %v1038 = vpack.c.b16 %v1022, %v1022
      %v1039 = vpack.c.b16 %v1023, %v1023
      %v1040 = vpack.c.b16 %v1024, %v1024
      %v1041 = vpack.c.b16 %v1025, %v1025
      %v1042 = vpack.c.b16 %v1026, %v1026
      %v1043 = vpack.c.b16 %v1027, %v1027
      %v1044 = vpack.c.b16 %v1028, %v1028
      %v1045 = vpack.c.b16 %v1029, %v1029
      %v1046 = vpack.c.b16 %v1030, %v1030
      %v1047 = vpack.c.b16 %v1031, %v1031
      %v1048 = vpack.c.b16 %v1032, %v1032
      %v1049 = vpack.c.b16 %v1033, %v1033
      %v1050 = vpack.c.b16 %v1034, %v1034
      %v1051 = vpack.c.b16 %v1035, %v1035
      %v1052 = vpack.c.b16 %v1036, %v1036
      %v1053 = vpack.c.b16 %v1037, %v1037
      %1070 = vst.msk [vmem:[%s407] sm:$0xf] %vm989, %v1038
      %1071 = vst.msk [vmem:[%s407 + $0x4] sm:$0xf] %vm989, %v1039
      %1072 = vst.msk [vmem:[%s407 + $0x8] sm:$0xf] %vm989, %v1040
      %1073 = vst.msk [vmem:[%s407 + $0xc] sm:$0xf] %vm989, %v1041
      %1074 = vst.msk [vmem:[%s407 + $0x10] sm:$0xf] %vm989, %v1042
      %1075 = vst.msk [vmem:[%s407 + $0x14] sm:$0xf] %vm989, %v1043
      %1076 = vst.msk [vmem:[%s407 + $0x18] sm:$0xf] %vm989, %v1044
      %1077 = vst.msk [vmem:[%s407 + $0x1c] sm:$0xf] %vm989, %v1045
      %1078 = vst.msk [vmem:[%s407 + $0x20] sm:$0xf] %vm989, %v1046
      %1079 = vst.msk [vmem:[%s407 + $0x24] sm:$0xf] %vm989, %v1047
      %1080 = vst.msk [vmem:[%s407 + $0x28] sm:$0xf] %vm989, %v1048
      %1081 = vst.msk [vmem:[%s407 + $0x2c] sm:$0xf] %vm989, %v1049
      %1082 = vst.msk [vmem:[%s407 + $0x30] sm:$0xf] %vm989, %v1050
      %1083 = vst.msk [vmem:[%s407 + $0x34] sm:$0xf] %vm989, %v1051
      %1084 = vst.msk [vmem:[%s407 + $0x38] sm:$0xf] %vm989, %v1052
      %1085 = vst.msk [vmem:[%s407 + $0x3c] sm:$0xf] %vm989, %v1053
      %v1086 = vpack.c.bf16 %v850, %v847
      %v1087 = vpack.c.bf16 %v858, %v855
      %v1088 = vpack.c.bf16 %v866, %v863
      %v1089 = vpack.c.bf16 %v874, %v871
      %v1090 = vpack.c.bf16 %v882, %v879
      %v1091 = vpack.c.bf16 %v890, %v887
      %v1092 = vpack.c.bf16 %v898, %v895
      %v1093 = vpack.c.bf16 %v906, %v903
      %v1102 = vunpack.c.l.b16 %v1086
      %v1103 = vunpack.c.h.b16 %v1086
      %v1104 = vunpack.c.l.b16 %v1087
      %v1105 = vunpack.c.h.b16 %v1087
      %v1106 = vunpack.c.l.b16 %v1088
      %v1107 = vunpack.c.h.b16 %v1088
      %v1108 = vunpack.c.l.b16 %v1089
      %v1109 = vunpack.c.h.b16 %v1089
      %v1110 = vunpack.c.l.b16 %v1090
      %v1111 = vunpack.c.h.b16 %v1090
      %v1112 = vunpack.c.l.b16 %v1091
      %v1113 = vunpack.c.h.b16 %v1091
      %v1114 = vunpack.c.l.b16 %v1092
      %v1115 = vunpack.c.h.b16 %v1092
      %v1116 = vunpack.c.l.b16 %v1093
      %v1117 = vunpack.c.h.b16 %v1093
      %v1118 = vpack.c.b16 %v1102, %v1102
      %v1119 = vpack.c.b16 %v1103, %v1103
      %v1120 = vpack.c.b16 %v1104, %v1104
      %v1121 = vpack.c.b16 %v1105, %v1105
      %v1122 = vpack.c.b16 %v1106, %v1106
      %v1123 = vpack.c.b16 %v1107, %v1107
      %v1124 = vpack.c.b16 %v1108, %v1108
      %v1125 = vpack.c.b16 %v1109, %v1109
      %v1126 = vpack.c.b16 %v1110, %v1110
      %v1127 = vpack.c.b16 %v1111, %v1111
      %v1128 = vpack.c.b16 %v1112, %v1112
      %v1129 = vpack.c.b16 %v1113, %v1113
      %v1130 = vpack.c.b16 %v1114, %v1114
      %v1131 = vpack.c.b16 %v1115, %v1115
      %v1132 = vpack.c.b16 %v1116, %v1116
      %v1133 = vpack.c.b16 %v1117, %v1117
      %1150 = vst.msk [vmem:[%s417] sm:$0xf] %vm989, %v1118
      %1151 = vst.msk [vmem:[%s417 + $0x4] sm:$0xf] %vm989, %v1119
      %1152 = vst.msk [vmem:[%s417 + $0x8] sm:$0xf] %vm989, %v1120
      %1153 = vst.msk [vmem:[%s417 + $0xc] sm:$0xf] %vm989, %v1121
      %1154 = vst.msk [vmem:[%s417 + $0x10] sm:$0xf] %vm989, %v1122
      %1155 = vst.msk [vmem:[%s417 + $0x14] sm:$0xf] %vm989, %v1123
      %1156 = vst.msk [vmem:[%s417 + $0x18] sm:$0xf] %vm989, %v1124
      %1157 = vst.msk [vmem:[%s417 + $0x1c] sm:$0xf] %vm989, %v1125
      %1158 = vst.msk [vmem:[%s417 + $0x20] sm:$0xf] %vm989, %v1126
      %1159 = vst.msk [vmem:[%s417 + $0x24] sm:$0xf] %vm989, %v1127
      %1160 = vst.msk [vmem:[%s417 + $0x28] sm:$0xf] %vm989, %v1128
      %1161 = vst.msk [vmem:[%s417 + $0x2c] sm:$0xf] %vm989, %v1129
      %1162 = vst.msk [vmem:[%s417 + $0x30] sm:$0xf] %vm989, %v1130
      %1163 = vst.msk [vmem:[%s417 + $0x34] sm:$0xf] %vm989, %v1131
      %1164 = vst.msk [vmem:[%s417 + $0x38] sm:$0xf] %vm989, %v1132
      %1165 = vst.msk [vmem:[%s417 + $0x3c] sm:$0xf] %vm989, %v1133
      %s1166 = scalar_lea.vmem %s1, 32
      %v1167 = vld [vmem:[%s1166] sm:$0xf]
      %v1168 = vld [vmem:[%s1166 + $0x4] sm:$0xf]
      %v1169 = vld [vmem:[%s1166 + $0x8] sm:$0xf]
      %v1170 = vld [vmem:[%s1166 + $0xc] sm:$0xf]
      %v1171 = vld [vmem:[%s1166 + $0x10] sm:$0xf]
      %v1172 = vld [vmem:[%s1166 + $0x14] sm:$0xf]
      %v1173 = vld [vmem:[%s1166 + $0x18] sm:$0xf]
      %v1174 = vld [vmem:[%s1166 + $0x1c] sm:$0xf]
      %s1175 = scalar_lea.vmem %s4, 1
      %v1176 = vld [vmem:[%s1175] sm:$0x1]
      %v1178 = vlaneseq
      %v1179 = vshrl.u32 %v1178, 7
      %v1180 = vsub.s32 0, %v1179
      %v1181 = vrot.slane %v1176, %v1180
      %v1191 = vunpack.c.l.b16 %v1167
      %v1192 = vunpack.c.l.b16 %v1168
      %v1193 = vunpack.c.l.b16 %v1169
      %v1194 = vunpack.c.l.b16 %v1170
      %v1195 = vunpack.c.l.b16 %v1171
      %v1196 = vunpack.c.l.b16 %v1172
      %v1197 = vunpack.c.l.b16 %v1173
      %v1198 = vunpack.c.l.b16 %v1174
      %v1199 = vpack.c.b16 %v1192, %v1191
      %v1200 = vpack.c.b16 %v1194, %v1193
      %v1201 = vpack.c.b16 %v1196, %v1195
      %v1202 = vpack.c.b16 %v1198, %v1197
      %1207 = vmatprep.subr.bf16.mxu0 0
      %1208 = vmatpush1.bf16.msra.mxu0 %v1199
      %1209 = vmatprep.subr.bf16.mxu0 0
      %1210 = vmatpush1.bf16.msra.mxu0 %v1200
      %1211 = vmatprep.subr.bf16.mxu0 0
      %1212 = vmatpush1.bf16.msra.mxu0 %v1201
      %1213 = vmatprep.subr.bf16.mxu0 0
      %1214 = vmatpush1.bf16.msra.mxu0 %v1202
      %1215 = vmatprep.subr.bf16.mxu0 0
      %1216 = vmatpush1.bf16.msra.mxu0 0
      %1217 = vmatprep.subr.bf16.mxu0 0
      %1218 = vmatpush1.bf16.msra.mxu0 0
      %1219 = vmatprep.subr.bf16.mxu0 0
      %1220 = vmatpush1.bf16.msra.mxu0 0
      %1221 = vmatprep.subr.bf16.mxu0 0
      %1222 = vmatpush1.bf16.msra.mxu0 0
      %1223 = vmatprep.subr.bf16.mxu0 0
      %1224 = vmatpush1.bf16.msra.mxu0 0
      %1225 = vmatprep.subr.bf16.mxu0 0
      %1226 = vmatpush1.bf16.msra.mxu0 0
      %1227 = vmatprep.subr.bf16.mxu0 0
      %1228 = vmatpush1.bf16.msra.mxu0 0
      %1229 = vmatprep.subr.bf16.mxu0 0
      %1230 = vmatpush1.bf16.msra.mxu0 0
      %1231 = vmatprep.subr.bf16.mxu0 0
      %1232 = vmatpush1.bf16.msra.mxu0 0
      %1233 = vmatprep.subr.bf16.mxu0 0
      %1234 = vmatpush1.bf16.msra.mxu0 0
      %1235 = vmatprep.subr.bf16.mxu0 0
      %1236 = vmatpush1.bf16.msra.mxu0 0
      %1237 = vmatprep.subr.bf16.mxu0 0
      %1238 = vmatpush1.bf16.msra.mxu0 0
      %1239 = vmatprep.mubr.bf16.mxu0 0
      %1240 = vmatmul.mubr.bf16.gmra.mrb[0].mxu0 %v517
      %v1241 = vpop.f32.mrb[0].mxu0
      %v1242 = vadd.f32 %v1181, %v1241
      %v1243 = vpop.f32.mrb[0].mxu0
      %v1244 = vpop.f32.mrb[0].mxu0
      %v1245 = vadd.f32 %v1181, %v1244
      %v1246 = vpop.f32.mrb[0].mxu0
      %1247 = vmatprep.mubr.bf16.mxu0 0
      %1248 = vmatmul.mubr.bf16.gmra.mrb[0].mxu0 %v520
      %v1249 = vpop.f32.mrb[0].mxu0
      %v1250 = vadd.f32 %v1181, %v1249
      %v1251 = vpop.f32.mrb[0].mxu0
      %v1252 = vpop.f32.mrb[0].mxu0
      %v1253 = vadd.f32 %v1181, %v1252
      %v1254 = vpop.f32.mrb[0].mxu0
      %1255 = vmatprep.mubr.bf16.mxu0 0
      %1256 = vmatmul.mubr.bf16.gmra.mrb[0].mxu0 %v523
      %v1257 = vpop.f32.mrb[0].mxu0
      %v1258 = vadd.f32 %v1181, %v1257
      %v1259 = vpop.f32.mrb[0].mxu0
      %v1260 = vpop.f32.mrb[0].mxu0
      %v1261 = vadd.f32 %v1181, %v1260
      %v1262 = vpop.f32.mrb[0].mxu0
      %1263 = vmatprep.mubr.bf16.mxu0 0
      %1264 = vmatmul.mubr.bf16.gmra.mrb[0].mxu0 %v526
      %v1265 = vpop.f32.mrb[0].mxu0
      %v1266 = vadd.f32 %v1181, %v1265
      %v1267 = vpop.f32.mrb[0].mxu0
      %v1268 = vpop.f32.mrb[0].mxu0
      %v1269 = vadd.f32 %v1181, %v1268
      %v1270 = vpop.f32.mrb[0].mxu0
      %1271 = vmatprep.mubr.bf16.mxu0 0
      %1272 = vmatmul.mubr.bf16.gmra.mrb[0].mxu0 %v529
      %v1273 = vpop.f32.mrb[0].mxu0
      %v1274 = vadd.f32 %v1181, %v1273
      %v1275 = vpop.f32.mrb[0].mxu0
      %v1276 = vpop.f32.mrb[0].mxu0
      %v1277 = vadd.f32 %v1181, %v1276
      %v1278 = vpop.f32.mrb[0].mxu0
      %1279 = vmatprep.mubr.bf16.mxu0 0
      %1280 = vmatmul.mubr.bf16.gmra.mrb[0].mxu0 %v532
      %v1281 = vpop.f32.mrb[0].mxu0
      %v1282 = vadd.f32 %v1181, %v1281
      %v1283 = vpop.f32.mrb[0].mxu0
      %v1284 = vpop.f32.mrb[0].mxu0
      %v1285 = vadd.f32 %v1181, %v1284
      %v1286 = vpop.f32.mrb[0].mxu0
      %1287 = vmatprep.mubr.bf16.mxu0 0
      %1288 = vmatmul.mubr.bf16.gmra.mrb[0].mxu0 %v535
      %v1289 = vpop.f32.mrb[0].mxu0
      %v1290 = vadd.f32 %v1181, %v1289
      %v1291 = vpop.f32.mrb[0].mxu0
      %v1292 = vpop.f32.mrb[0].mxu0
      %v1293 = vadd.f32 %v1181, %v1292
      %v1294 = vpop.f32.mrb[0].mxu0
      %1295 = vmatprep.mubr.bf16.mxu0 0
      %1296 = vmatmul.mubr.bf16.gmra.mrb[0].mxu0 %v538
      %v1297 = vpop.f32.mrb[0].mxu0
      %v1298 = vadd.f32 %v1181, %v1297
      %v1299 = vpop.f32.mrb[0].mxu0
      %v1300 = vpop.f32.mrb[0].mxu0
      %v1301 = vadd.f32 %v1181, %v1300
      %v1302 = vpop.f32.mrb[0].mxu0
      %1303 = vdwg.mxu0
      %s1304 = scalar_lea.vmem %s2, 32
      %v1305 = vld [vmem:[%s1304] sm:$0xf]
      %v1306 = vld [vmem:[%s1304 + $0x4] sm:$0xf]
      %v1307 = vld [vmem:[%s1304 + $0x8] sm:$0xf]
      %v1308 = vld [vmem:[%s1304 + $0xc] sm:$0xf]
      %v1309 = vld [vmem:[%s1304 + $0x10] sm:$0xf]
      %v1310 = vld [vmem:[%s1304 + $0x14] sm:$0xf]
      %v1311 = vld [vmem:[%s1304 + $0x18] sm:$0xf]
      %v1312 = vld [vmem:[%s1304 + $0x1c] sm:$0xf]
      %s1313 = scalar_lea.vmem %s5, 1
      %v1314 = vld [vmem:[%s1313] sm:$0x1]
      %v1316 = vlaneseq
      %v1317 = vshrl.u32 %v1316, 7
      %v1318 = vsub.s32 0, %v1317
      %v1319 = vrot.slane %v1314, %v1318
      %v1329 = vunpack.c.l.b16 %v1305
      %v1330 = vunpack.c.l.b16 %v1306
      %v1331 = vunpack.c.l.b16 %v1307
      %v1332 = vunpack.c.l.b16 %v1308
      %v1333 = vunpack.c.l.b16 %v1309
      %v1334 = vunpack.c.l.b16 %v1310
      %v1335 = vunpack.c.l.b16 %v1311
      %v1336 = vunpack.c.l.b16 %v1312
      %v1337 = vpack.c.b16 %v1330, %v1329
      %v1338 = vpack.c.b16 %v1332, %v1331
      %v1339 = vpack.c.b16 %v1334, %v1333
      %v1340 = vpack.c.b16 %v1336, %v1335
      %1345 = vmatprep.subr.bf16.mxu0 0
      %1346 = vmatpush1.bf16.msra.mxu0 %v1337
      %1347 = vmatprep.subr.bf16.mxu0 0
      %1348 = vmatpush1.bf16.msra.mxu0 %v1338
      %1349 = vmatprep.subr.bf16.mxu0 0
      %1350 = vmatpush1.bf16.msra.mxu0 %v1339
      %1351 = vmatprep.subr.bf16.mxu0 0
      %1352 = vmatpush1.bf16.msra.mxu0 %v1340
      %1353 = vmatprep.subr.bf16.mxu0 0
      %1354 = vmatpush1.bf16.msra.mxu0 0
      %1355 = vmatprep.subr.bf16.mxu0 0
      %1356 = vmatpush1.bf16.msra.mxu0 0
      %1357 = vmatprep.subr.bf16.mxu0 0
      %1358 = vmatpush1.bf16.msra.mxu0 0
      %1359 = vmatprep.subr.bf16.mxu0 0
      %1360 = vmatpush1.bf16.msra.mxu0 0
      %1361 = vmatprep.subr.bf16.mxu0 0
      %1362 = vmatpush1.bf16.msra.mxu0 0
      %1363 = vmatprep.subr.bf16.mxu0 0
      %1364 = vmatpush1.bf16.msra.mxu0 0
      %1365 = vmatprep.subr.bf16.mxu0 0
      %1366 = vmatpush1.bf16.msra.mxu0 0
      %1367 = vmatprep.subr.bf16.mxu0 0
      %1368 = vmatpush1.bf16.msra.mxu0 0
      %1369 = vmatprep.subr.bf16.mxu0 0
      %1370 = vmatpush1.bf16.msra.mxu0 0
      %1371 = vmatprep.subr.bf16.mxu0 0
      %1372 = vmatpush1.bf16.msra.mxu0 0
      %1373 = vmatprep.subr.bf16.mxu0 0
      %1374 = vmatpush1.bf16.msra.mxu0 0
      %1375 = vmatprep.subr.bf16.mxu0 0
      %1376 = vmatpush1.bf16.msra.mxu0 0
      %1377 = vmatprep.mubr.bf16.mxu0 0
      %1378 = vmatmul.mubr.bf16.gmra.mrb[0].mxu0 %v517
      %v1379 = vpop.f32.mrb[0].mxu0
      %v1380 = vadd.f32 %v1319, %v1379
      %v1381 = vpop.f32.mrb[0].mxu0
      %v1382 = vpop.f32.mrb[0].mxu0
      %v1383 = vadd.f32 %v1319, %v1382
      %v1384 = vpop.f32.mrb[0].mxu0
      %1385 = vmatprep.mubr.bf16.mxu0 0
      %1386 = vmatmul.mubr.bf16.gmra.mrb[0].mxu0 %v520
      %v1387 = vpop.f32.mrb[0].mxu0
      %v1388 = vadd.f32 %v1319, %v1387
      %v1389 = vpop.f32.mrb[0].mxu0
      %v1390 = vpop.f32.mrb[0].mxu0
      %v1391 = vadd.f32 %v1319, %v1390
      %v1392 = vpop.f32.mrb[0].mxu0
      %1393 = vmatprep.mubr.bf16.mxu0 0
      %1394 = vmatmul.mubr.bf16.gmra.mrb[0].mxu0 %v523
      %v1395 = vpop.f32.mrb[0].mxu0
      %v1396 = vadd.f32 %v1319, %v1395
      %v1397 = vpop.f32.mrb[0].mxu0
      %v1398 = vpop.f32.mrb[0].mxu0
      %v1399 = vadd.f32 %v1319, %v1398
      %v1400 = vpop.f32.mrb[0].mxu0
      %1401 = vmatprep.mubr.bf16.mxu0 0
      %1402 = vmatmul.mubr.bf16.gmra.mrb[0].mxu0 %v526
      %v1403 = vpop.f32.mrb[0].mxu0
      %v1404 = vadd.f32 %v1319, %v1403
      %v1405 = vpop.f32.mrb[0].mxu0
      %v1406 = vpop.f32.mrb[0].mxu0
      %v1407 = vadd.f32 %v1319, %v1406
      %v1408 = vpop.f32.mrb[0].mxu0
      %1409 = vmatprep.mubr.bf16.mxu0 0
      %1410 = vmatmul.mubr.bf16.gmra.mrb[0].mxu0 %v529
      %v1411 = vpop.f32.mrb[0].mxu0
      %v1412 = vadd.f32 %v1319, %v1411
      %v1413 = vpop.f32.mrb[0].mxu0
      %v1414 = vpop.f32.mrb[0].mxu0
      %v1415 = vadd.f32 %v1319, %v1414
      %v1416 = vpop.f32.mrb[0].mxu0
      %1417 = vmatprep.mubr.bf16.mxu0 0
      %1418 = vmatmul.mubr.bf16.gmra.mrb[0].mxu0 %v532
      %v1419 = vpop.f32.mrb[0].mxu0
      %v1420 = vadd.f32 %v1319, %v1419
      %v1421 = vpop.f32.mrb[0].mxu0
      %v1422 = vpop.f32.mrb[0].mxu0
      %v1423 = vadd.f32 %v1319, %v1422
      %v1424 = vpop.f32.mrb[0].mxu0
      %1425 = vmatprep.mubr.bf16.mxu0 0
      %1426 = vmatmul.mubr.bf16.gmra.mrb[0].mxu0 %v535
      %v1427 = vpop.f32.mrb[0].mxu0
      %v1428 = vadd.f32 %v1319, %v1427
      %v1429 = vpop.f32.mrb[0].mxu0
      %v1430 = vpop.f32.mrb[0].mxu0
      %v1431 = vadd.f32 %v1319, %v1430
      %v1432 = vpop.f32.mrb[0].mxu0
      %1433 = vmatprep.mubr.bf16.mxu0 0
      %1434 = vmatmul.mubr.bf16.gmra.mrb[0].mxu0 %v538
      %v1435 = vpop.f32.mrb[0].mxu0
      %v1436 = vadd.f32 %v1319, %v1435
      %v1437 = vpop.f32.mrb[0].mxu0
      %v1438 = vpop.f32.mrb[0].mxu0
      %v1439 = vadd.f32 %v1319, %v1438
      %v1440 = vpop.f32.mrb[0].mxu0
      %1441 = vdwg.mxu0
      %s1442 = scalar_lea.vmem %s3, 32
      %v1443 = vld [vmem:[%s1442] sm:$0xf]
      %v1444 = vld [vmem:[%s1442 + $0x4] sm:$0xf]
      %v1445 = vld [vmem:[%s1442 + $0x8] sm:$0xf]
      %v1446 = vld [vmem:[%s1442 + $0xc] sm:$0xf]
      %v1447 = vld [vmem:[%s1442 + $0x10] sm:$0xf]
      %v1448 = vld [vmem:[%s1442 + $0x14] sm:$0xf]
      %v1449 = vld [vmem:[%s1442 + $0x18] sm:$0xf]
      %v1450 = vld [vmem:[%s1442 + $0x1c] sm:$0xf]
      %s1451 = scalar_lea.vmem %s6, 1
      %v1452 = vld [vmem:[%s1451] sm:$0x1]
      %v1454 = vlaneseq
      %v1455 = vshrl.u32 %v1454, 7
      %v1456 = vsub.s32 0, %v1455
      %v1457 = vrot.slane %v1452, %v1456
      %v1467 = vunpack.c.l.b16 %v1443
      %v1468 = vunpack.c.l.b16 %v1444
      %v1469 = vunpack.c.l.b16 %v1445
      %v1470 = vunpack.c.l.b16 %v1446
      %v1471 = vunpack.c.l.b16 %v1447
      %v1472 = vunpack.c.l.b16 %v1448
      %v1473 = vunpack.c.l.b16 %v1449
      %v1474 = vunpack.c.l.b16 %v1450
      %v1475 = vpack.c.b16 %v1468, %v1467
      %v1476 = vpack.c.b16 %v1470, %v1469
      %v1477 = vpack.c.b16 %v1472, %v1471
      %v1478 = vpack.c.b16 %v1474, %v1473
      %1483 = vmatprep.subr.bf16.mxu0 0
      %1484 = vmatpush1.bf16.msra.mxu0 %v1475
      %1485 = vmatprep.subr.bf16.mxu0 0
      %1486 = vmatpush1.bf16.msra.mxu0 %v1476
      %1487 = vmatprep.subr.bf16.mxu0 0
      %1488 = vmatpush1.bf16.msra.mxu0 %v1477
      %1489 = vmatprep.subr.bf16.mxu0 0
      %1490 = vmatpush1.bf16.msra.mxu0 %v1478
      %1491 = vmatprep.subr.bf16.mxu0 0
      %1492 = vmatpush1.bf16.msra.mxu0 0
      %1493 = vmatprep.subr.bf16.mxu0 0
      %1494 = vmatpush1.bf16.msra.mxu0 0
      %1495 = vmatprep.subr.bf16.mxu0 0
      %1496 = vmatpush1.bf16.msra.mxu0 0
      %1497 = vmatprep.subr.bf16.mxu0 0
      %1498 = vmatpush1.bf16.msra.mxu0 0
      %1499 = vmatprep.subr.bf16.mxu0 0
      %1500 = vmatpush1.bf16.msra.mxu0 0
      %1501 = vmatprep.subr.bf16.mxu0 0
      %1502 = vmatpush1.bf16.msra.mxu0 0
      %1503 = vmatprep.subr.bf16.mxu0 0
      %1504 = vmatpush1.bf16.msra.mxu0 0
      %1505 = vmatprep.subr.bf16.mxu0 0
      %1506 = vmatpush1.bf16.msra.mxu0 0
      %1507 = vmatprep.subr.bf16.mxu0 0
      %1508 = vmatpush1.bf16.msra.mxu0 0
      %1509 = vmatprep.subr.bf16.mxu0 0
      %1510 = vmatpush1.bf16.msra.mxu0 0
      %1511 = vmatprep.subr.bf16.mxu0 0
      %1512 = vmatpush1.bf16.msra.mxu0 0
      %1513 = vmatprep.subr.bf16.mxu0 0
      %1514 = vmatpush1.bf16.msra.mxu0 0
      %1515 = vmatprep.mubr.bf16.mxu0 0
      %1516 = vmatmul.mubr.bf16.gmra.mrb[0].mxu0 %v517
      %v1517 = vpop.f32.mrb[0].mxu0
      %v1518 = vadd.f32 %v1457, %v1517
      %v1519 = vpop.f32.mrb[0].mxu0
      %v1520 = vpop.f32.mrb[0].mxu0
      %v1521 = vadd.f32 %v1457, %v1520
      %v1522 = vpop.f32.mrb[0].mxu0
      %1523 = vmatprep.mubr.bf16.mxu0 0
      %1524 = vmatmul.mubr.bf16.gmra.mrb[0].mxu0 %v520
      %v1525 = vpop.f32.mrb[0].mxu0
      %v1526 = vadd.f32 %v1457, %v1525
      %v1527 = vpop.f32.mrb[0].mxu0
      %v1528 = vpop.f32.mrb[0].mxu0
      %v1529 = vadd.f32 %v1457, %v1528
      %v1530 = vpop.f32.mrb[0].mxu0
      %1531 = vmatprep.mubr.bf16.mxu0 0
      %1532 = vmatmul.mubr.bf16.gmra.mrb[0].mxu0 %v523
      %v1533 = vpop.f32.mrb[0].mxu0
      %v1534 = vadd.f32 %v1457, %v1533
      %v1535 = vpop.f32.mrb[0].mxu0
      %v1536 = vpop.f32.mrb[0].mxu0
      %v1537 = vadd.f32 %v1457, %v1536
      %v1538 = vpop.f32.mrb[0].mxu0
      %1539 = vmatprep.mubr.bf16.mxu0 0
      %1540 = vmatmul.mubr.bf16.gmra.mrb[0].mxu0 %v526
      %v1541 = vpop.f32.mrb[0].mxu0
      %v1542 = vadd.f32 %v1457, %v1541
      %v1543 = vpop.f32.mrb[0].mxu0
      %v1544 = vpop.f32.mrb[0].mxu0
      %v1545 = vadd.f32 %v1457, %v1544
      %v1546 = vpop.f32.mrb[0].mxu0
      %1547 = vmatprep.mubr.bf16.mxu0 0
      %1548 = vmatmul.mubr.bf16.gmra.mrb[0].mxu0 %v529
      %v1549 = vpop.f32.mrb[0].mxu0
      %v1550 = vadd.f32 %v1457, %v1549
      %v1551 = vpop.f32.mrb[0].mxu0
      %v1552 = vpop.f32.mrb[0].mxu0
      %v1553 = vadd.f32 %v1457, %v1552
      %v1554 = vpop.f32.mrb[0].mxu0
      %1555 = vmatprep.mubr.bf16.mxu0 0
      %1556 = vmatmul.mubr.bf16.gmra.mrb[0].mxu0 %v532
      %v1557 = vpop.f32.mrb[0].mxu0
      %v1558 = vadd.f32 %v1457, %v1557
      %v1559 = vpop.f32.mrb[0].mxu0
      %v1560 = vpop.f32.mrb[0].mxu0
      %v1561 = vadd.f32 %v1457, %v1560
      %v1562 = vpop.f32.mrb[0].mxu0
      %1563 = vmatprep.mubr.bf16.mxu0 0
      %1564 = vmatmul.mubr.bf16.gmra.mrb[0].mxu0 %v535
      %v1565 = vpop.f32.mrb[0].mxu0
      %v1566 = vadd.f32 %v1457, %v1565
      %v1567 = vpop.f32.mrb[0].mxu0
      %v1568 = vpop.f32.mrb[0].mxu0
      %v1569 = vadd.f32 %v1457, %v1568
      %v1570 = vpop.f32.mrb[0].mxu0
      %1571 = vmatprep.mubr.bf16.mxu0 0
      %1572 = vmatmul.mubr.bf16.gmra.mrb[0].mxu0 %v538
      %v1573 = vpop.f32.mrb[0].mxu0
      %v1574 = vadd.f32 %v1457, %v1573
      %v1575 = vpop.f32.mrb[0].mxu0
      %v1576 = vpop.f32.mrb[0].mxu0
      %v1577 = vadd.f32 %v1457, %v1576
      %v1578 = vpop.f32.mrb[0].mxu0
      %1579 = vdwg.mxu0
      %v1580 = vmul.f32 %v1242, 0.17677669
      %v1581 = vmul.f32 %v1245, 0.17677669
      %v1582 = vmul.f32 %v1250, 0.17677669
      %v1583 = vmul.f32 %v1253, 0.17677669
      %v1584 = vmul.f32 %v1258, 0.17677669
      %v1585 = vmul.f32 %v1261, 0.17677669
      %v1586 = vmul.f32 %v1266, 0.17677669
      %v1587 = vmul.f32 %v1269, 0.17677669
      %v1588 = vmul.f32 %v1274, 0.17677669
      %v1589 = vmul.f32 %v1277, 0.17677669
      %v1590 = vmul.f32 %v1282, 0.17677669
      %v1591 = vmul.f32 %v1285, 0.17677669
      %v1592 = vmul.f32 %v1290, 0.17677669
      %v1593 = vmul.f32 %v1293, 0.17677669
      %v1594 = vmul.f32 %v1298, 0.17677669
      %v1595 = vmul.f32 %v1301, 0.17677669
      %v1596 = vpack.c.bf16 %v1581, %v1580
      %v1597 = vpack.c.bf16 %v1583, %v1582
      %v1598 = vpack.c.bf16 %v1585, %v1584
      %v1599 = vpack.c.bf16 %v1587, %v1586
      %v1600 = vpack.c.bf16 %v1589, %v1588
      %v1601 = vpack.c.bf16 %v1591, %v1590
      %v1602 = vpack.c.bf16 %v1593, %v1592
      %v1603 = vpack.c.bf16 %v1595, %v1594
      %v1612 = vunpack.c.l.b16 %v1596
      %v1613 = vunpack.c.h.b16 %v1596
      %v1614 = vunpack.c.l.b16 %v1597
      %v1615 = vunpack.c.h.b16 %v1597
      %v1616 = vunpack.c.l.b16 %v1598
      %v1617 = vunpack.c.h.b16 %v1598
      %v1618 = vunpack.c.l.b16 %v1599
      %v1619 = vunpack.c.h.b16 %v1599
      %v1620 = vunpack.c.l.b16 %v1600
      %v1621 = vunpack.c.h.b16 %v1600
      %v1622 = vunpack.c.l.b16 %v1601
      %v1623 = vunpack.c.h.b16 %v1601
      %v1624 = vunpack.c.l.b16 %v1602
      %v1625 = vunpack.c.h.b16 %v1602
      %v1626 = vunpack.c.l.b16 %v1603
      %v1627 = vunpack.c.h.b16 %v1603
      %v1628 = vpack.c.b16 %v1612, %v1612
      %v1629 = vpack.c.b16 %v1613, %v1613
      %v1630 = vpack.c.b16 %v1614, %v1614
      %v1631 = vpack.c.b16 %v1615, %v1615
      %v1632 = vpack.c.b16 %v1616, %v1616
      %v1633 = vpack.c.b16 %v1617, %v1617
      %v1634 = vpack.c.b16 %v1618, %v1618
      %v1635 = vpack.c.b16 %v1619, %v1619
      %v1636 = vpack.c.b16 %v1620, %v1620
      %v1637 = vpack.c.b16 %v1621, %v1621
      %v1638 = vpack.c.b16 %v1622, %v1622
      %v1639 = vpack.c.b16 %v1623, %v1623
      %v1640 = vpack.c.b16 %v1624, %v1624
      %v1641 = vpack.c.b16 %v1625, %v1625
      %v1642 = vpack.c.b16 %v1626, %v1626
      %v1643 = vpack.c.b16 %v1627, %v1627
      %s1660 = scalar_lea.vmem %s397, 64
      %1661 = vst.msk [vmem:[%s1660] sm:$0xf] %vm989, %v1628
      %1662 = vst.msk [vmem:[%s1660 + $0x4] sm:$0xf] %vm989, %v1629
      %1663 = vst.msk [vmem:[%s1660 + $0x8] sm:$0xf] %vm989, %v1630
      %1664 = vst.msk [vmem:[%s1660 + $0xc] sm:$0xf] %vm989, %v1631
      %1665 = vst.msk [vmem:[%s1660 + $0x10] sm:$0xf] %vm989, %v1632
      %1666 = vst.msk [vmem:[%s1660 + $0x14] sm:$0xf] %vm989, %v1633
      %1667 = vst.msk [vmem:[%s1660 + $0x18] sm:$0xf] %vm989, %v1634
      %1668 = vst.msk [vmem:[%s1660 + $0x1c] sm:$0xf] %vm989, %v1635
      %1669 = vst.msk [vmem:[%s1660 + $0x20] sm:$0xf] %vm989, %v1636
      %1670 = vst.msk [vmem:[%s1660 + $0x24] sm:$0xf] %vm989, %v1637
      %1671 = vst.msk [vmem:[%s1660 + $0x28] sm:$0xf] %vm989, %v1638
      %1672 = vst.msk [vmem:[%s1660 + $0x2c] sm:$0xf] %vm989, %v1639
      %1673 = vst.msk [vmem:[%s1660 + $0x30] sm:$0xf] %vm989, %v1640
      %1674 = vst.msk [vmem:[%s1660 + $0x34] sm:$0xf] %vm989, %v1641
      %1675 = vst.msk [vmem:[%s1660 + $0x38] sm:$0xf] %vm989, %v1642
      %1676 = vst.msk [vmem:[%s1660 + $0x3c] sm:$0xf] %vm989, %v1643
      %v1677 = vpack.c.bf16 %v1383, %v1380
      %v1678 = vpack.c.bf16 %v1391, %v1388
      %v1679 = vpack.c.bf16 %v1399, %v1396
      %v1680 = vpack.c.bf16 %v1407, %v1404
      %v1681 = vpack.c.bf16 %v1415, %v1412
      %v1682 = vpack.c.bf16 %v1423, %v1420
      %v1683 = vpack.c.bf16 %v1431, %v1428
      %v1684 = vpack.c.bf16 %v1439, %v1436
      %v1693 = vunpack.c.l.b16 %v1677
      %v1694 = vunpack.c.h.b16 %v1677
      %v1695 = vunpack.c.l.b16 %v1678
      %v1696 = vunpack.c.h.b16 %v1678
      %v1697 = vunpack.c.l.b16 %v1679
      %v1698 = vunpack.c.h.b16 %v1679
      %v1699 = vunpack.c.l.b16 %v1680
      %v1700 = vunpack.c.h.b16 %v1680
      %v1701 = vunpack.c.l.b16 %v1681
      %v1702 = vunpack.c.h.b16 %v1681
      %v1703 = vunpack.c.l.b16 %v1682
      %v1704 = vunpack.c.h.b16 %v1682
      %v1705 = vunpack.c.l.b16 %v1683
      %v1706 = vunpack.c.h.b16 %v1683
      %v1707 = vunpack.c.l.b16 %v1684
      %v1708 = vunpack.c.h.b16 %v1684
      %v1709 = vpack.c.b16 %v1693, %v1693
      %v1710 = vpack.c.b16 %v1694, %v1694
      %v1711 = vpack.c.b16 %v1695, %v1695
      %v1712 = vpack.c.b16 %v1696, %v1696
      %v1713 = vpack.c.b16 %v1697, %v1697
      %v1714 = vpack.c.b16 %v1698, %v1698
      %v1715 = vpack.c.b16 %v1699, %v1699
      %v1716 = vpack.c.b16 %v1700, %v1700
      %v1717 = vpack.c.b16 %v1701, %v1701
      %v1718 = vpack.c.b16 %v1702, %v1702
      %v1719 = vpack.c.b16 %v1703, %v1703
      %v1720 = vpack.c.b16 %v1704, %v1704
      %v1721 = vpack.c.b16 %v1705, %v1705
      %v1722 = vpack.c.b16 %v1706, %v1706
      %v1723 = vpack.c.b16 %v1707, %v1707
      %v1724 = vpack.c.b16 %v1708, %v1708
      %s1741 = scalar_lea.vmem %s407, 64
      %1742 = vst.msk [vmem:[%s1741] sm:$0xf] %vm989, %v1709
      %1743 = vst.msk [vmem:[%s1741 + $0x4] sm:$0xf] %vm989, %v1710
      %1744 = vst.msk [vmem:[%s1741 + $0x8] sm:$0xf] %vm989, %v1711
      %1745 = vst.msk [vmem:[%s1741 + $0xc] sm:$0xf] %vm989, %v1712
      %1746 = vst.msk [vmem:[%s1741 + $0x10] sm:$0xf] %vm989, %v1713
      %1747 = vst.msk [vmem:[%s1741 + $0x14] sm:$0xf] %vm989, %v1714
      %1748 = vst.msk [vmem:[%s1741 + $0x18] sm:$0xf] %vm989, %v1715
      %1749 = vst.msk [vmem:[%s1741 + $0x1c] sm:$0xf] %vm989, %v1716
      %1750 = vst.msk [vmem:[%s1741 + $0x20] sm:$0xf] %vm989, %v1717
      %1751 = vst.msk [vmem:[%s1741 + $0x24] sm:$0xf] %vm989, %v1718
      %1752 = vst.msk [vmem:[%s1741 + $0x28] sm:$0xf] %vm989, %v1719
      %1753 = vst.msk [vmem:[%s1741 + $0x2c] sm:$0xf] %vm989, %v1720
      %1754 = vst.msk [vmem:[%s1741 + $0x30] sm:$0xf] %vm989, %v1721
      %1755 = vst.msk [vmem:[%s1741 + $0x34] sm:$0xf] %vm989, %v1722
      %1756 = vst.msk [vmem:[%s1741 + $0x38] sm:$0xf] %vm989, %v1723
      %1757 = vst.msk [vmem:[%s1741 + $0x3c] sm:$0xf] %vm989, %v1724
      %v1758 = vpack.c.bf16 %v1521, %v1518
      %v1759 = vpack.c.bf16 %v1529, %v1526
      %v1760 = vpack.c.bf16 %v1537, %v1534
      %v1761 = vpack.c.bf16 %v1545, %v1542
      %v1762 = vpack.c.bf16 %v1553, %v1550
      %v1763 = vpack.c.bf16 %v1561, %v1558
      %v1764 = vpack.c.bf16 %v1569, %v1566
      %v1765 = vpack.c.bf16 %v1577, %v1574
      %v1774 = vunpack.c.l.b16 %v1758
      %v1775 = vunpack.c.h.b16 %v1758
      %v1776 = vunpack.c.l.b16 %v1759
      %v1777 = vunpack.c.h.b16 %v1759
      %v1778 = vunpack.c.l.b16 %v1760
      %v1779 = vunpack.c.h.b16 %v1760
      %v1780 = vunpack.c.l.b16 %v1761
      %v1781 = vunpack.c.h.b16 %v1761
      %v1782 = vunpack.c.l.b16 %v1762
      %v1783 = vunpack.c.h.b16 %v1762
      %v1784 = vunpack.c.l.b16 %v1763
      %v1785 = vunpack.c.h.b16 %v1763
      %v1786 = vunpack.c.l.b16 %v1764
      %v1787 = vunpack.c.h.b16 %v1764
      %v1788 = vunpack.c.l.b16 %v1765
      %v1789 = vunpack.c.h.b16 %v1765
      %v1790 = vpack.c.b16 %v1774, %v1774
      %v1791 = vpack.c.b16 %v1775, %v1775
      %v1792 = vpack.c.b16 %v1776, %v1776
      %v1793 = vpack.c.b16 %v1777, %v1777
      %v1794 = vpack.c.b16 %v1778, %v1778
      %v1795 = vpack.c.b16 %v1779, %v1779
      %v1796 = vpack.c.b16 %v1780, %v1780
      %v1797 = vpack.c.b16 %v1781, %v1781
      %v1798 = vpack.c.b16 %v1782, %v1782
      %v1799 = vpack.c.b16 %v1783, %v1783
      %v1800 = vpack.c.b16 %v1784, %v1784
      %v1801 = vpack.c.b16 %v1785, %v1785
      %v1802 = vpack.c.b16 %v1786, %v1786
      %v1803 = vpack.c.b16 %v1787, %v1787
      %v1804 = vpack.c.b16 %v1788, %v1788
      %v1805 = vpack.c.b16 %v1789, %v1789
      %s1822 = scalar_lea.vmem %s417, 64
      %1823 = vst.msk [vmem:[%s1822] sm:$0xf] %vm989, %v1790
      %1824 = vst.msk [vmem:[%s1822 + $0x4] sm:$0xf] %vm989, %v1791
      %1825 = vst.msk [vmem:[%s1822 + $0x8] sm:$0xf] %vm989, %v1792
      %1826 = vst.msk [vmem:[%s1822 + $0xc] sm:$0xf] %vm989, %v1793
      %1827 = vst.msk [vmem:[%s1822 + $0x10] sm:$0xf] %vm989, %v1794
      %1828 = vst.msk [vmem:[%s1822 + $0x14] sm:$0xf] %vm989, %v1795
      %1829 = vst.msk [vmem:[%s1822 + $0x18] sm:$0xf] %vm989, %v1796
      %1830 = vst.msk [vmem:[%s1822 + $0x1c] sm:$0xf] %vm989, %v1797
      %1831 = vst.msk [vmem:[%s1822 + $0x20] sm:$0xf] %vm989, %v1798
      %1832 = vst.msk [vmem:[%s1822 + $0x24] sm:$0xf] %vm989, %v1799
      %1833 = vst.msk [vmem:[%s1822 + $0x28] sm:$0xf] %vm989, %v1800
      %1834 = vst.msk [vmem:[%s1822 + $0x2c] sm:$0xf] %vm989, %v1801
      %1835 = vst.msk [vmem:[%s1822 + $0x30] sm:$0xf] %vm989, %v1802
      %1836 = vst.msk [vmem:[%s1822 + $0x34] sm:$0xf] %vm989, %v1803
      %1837 = vst.msk [vmem:[%s1822 + $0x38] sm:$0xf] %vm989, %v1804
      %1838 = vst.msk [vmem:[%s1822 + $0x3c] sm:$0xf] %vm989, %v1805
      %s1839 = scalar_lea.vmem %s1, 64
      %v1840 = vld [vmem:[%s1839] sm:$0xf]
      %v1841 = vld [vmem:[%s1839 + $0x4] sm:$0xf]
      %v1842 = vld [vmem:[%s1839 + $0x8] sm:$0xf]
      %v1843 = vld [vmem:[%s1839 + $0xc] sm:$0xf]
      %v1844 = vld [vmem:[%s1839 + $0x10] sm:$0xf]
      %v1845 = vld [vmem:[%s1839 + $0x14] sm:$0xf]
      %v1846 = vld [vmem:[%s1839 + $0x18] sm:$0xf]
      %v1847 = vld [vmem:[%s1839 + $0x1c] sm:$0xf]
      %s1848 = scalar_lea.vmem %s4, 2
      %v1849 = vld [vmem:[%s1848] sm:$0x1]
      %v1851 = vlaneseq
      %v1852 = vshrl.u32 %v1851, 7
      %v1853 = vsub.s32 0, %v1852
      %v1854 = vrot.slane %v1849, %v1853
      %v1864 = vunpack.c.l.b16 %v1840
      %v1865 = vunpack.c.l.b16 %v1841
      %v1866 = vunpack.c.l.b16 %v1842
      %v1867 = vunpack.c.l.b16 %v1843
      %v1868 = vunpack.c.l.b16 %v1844
      %v1869 = vunpack.c.l.b16 %v1845
      %v1870 = vunpack.c.l.b16 %v1846
      %v1871 = vunpack.c.l.b16 %v1847
      %v1872 = vpack.c.b16 %v1865, %v1864
      %v1873 = vpack.c.b16 %v1867, %v1866
      %v1874 = vpack.c.b16 %v1869, %v1868
      %v1875 = vpack.c.b16 %v1871, %v1870
      %1880 = vmatprep.subr.bf16.mxu0 0
      %1881 = vmatpush1.bf16.msra.mxu0 %v1872
      %1882 = vmatprep.subr.bf16.mxu0 0
      %1883 = vmatpush1.bf16.msra.mxu0 %v1873
      %1884 = vmatprep.subr.bf16.mxu0 0
      %1885 = vmatpush1.bf16.msra.mxu0 %v1874
      %1886 = vmatprep.subr.bf16.mxu0 0
      %1887 = vmatpush1.bf16.msra.mxu0 %v1875
      %1888 = vmatprep.subr.bf16.mxu0 0
      %1889 = vmatpush1.bf16.msra.mxu0 0
      %1890 = vmatprep.subr.bf16.mxu0 0
      %1891 = vmatpush1.bf16.msra.mxu0 0
      %1892 = vmatprep.subr.bf16.mxu0 0
      %1893 = vmatpush1.bf16.msra.mxu0 0
      %1894 = vmatprep.subr.bf16.mxu0 0
      %1895 = vmatpush1.bf16.msra.mxu0 0
      %1896 = vmatprep.subr.bf16.mxu0 0
      %1897 = vmatpush1.bf16.msra.mxu0 0
      %1898 = vmatprep.subr.bf16.mxu0 0
      %1899 = vmatpush1.bf16.msra.mxu0 0
      %1900 = vmatprep.subr.bf16.mxu0 0
      %1901 = vmatpush1.bf16.msra.mxu0 0
      %1902 = vmatprep.subr.bf16.mxu0 0
      %1903 = vmatpush1.bf16.msra.mxu0 0
      %1904 = vmatprep.subr.bf16.mxu0 0
      %1905 = vmatpush1.bf16.msra.mxu0 0
      %1906 = vmatprep.subr.bf16.mxu0 0
      %1907 = vmatpush1.bf16.msra.mxu0 0
      %1908 = vmatprep.subr.bf16.mxu0 0
      %1909 = vmatpush1.bf16.msra.mxu0 0
      %1910 = vmatprep.subr.bf16.mxu0 0
      %1911 = vmatpush1.bf16.msra.mxu0 0
      %1912 = vmatprep.mubr.bf16.mxu0 0
      %1913 = vmatmul.mubr.bf16.gmra.mrb[0].mxu0 %v517
      %v1914 = vpop.f32.mrb[0].mxu0
      %v1915 = vadd.f32 %v1854, %v1914
      %v1916 = vpop.f32.mrb[0].mxu0
      %v1917 = vpop.f32.mrb[0].mxu0
      %v1918 = vadd.f32 %v1854, %v1917
      %v1919 = vpop.f32.mrb[0].mxu0
      %1920 = vmatprep.mubr.bf16.mxu0 0
      %1921 = vmatmul.mubr.bf16.gmra.mrb[0].mxu0 %v520
      %v1922 = vpop.f32.mrb[0].mxu0
      %v1923 = vadd.f32 %v1854, %v1922
      %v1924 = vpop.f32.mrb[0].mxu0
      %v1925 = vpop.f32.mrb[0].mxu0
      %v1926 = vadd.f32 %v1854, %v1925
      %v1927 = vpop.f32.mrb[0].mxu0
      %1928 = vmatprep.mubr.bf16.mxu0 0
      %1929 = vmatmul.mubr.bf16.gmra.mrb[0].mxu0 %v523
      %v1930 = vpop.f32.mrb[0].mxu0
      %v1931 = vadd.f32 %v1854, %v1930
      %v1932 = vpop.f32.mrb[0].mxu0
      %v1933 = vpop.f32.mrb[0].mxu0
      %v1934 = vadd.f32 %v1854, %v1933
      %v1935 = vpop.f32.mrb[0].mxu0
      %1936 = vmatprep.mubr.bf16.mxu0 0
      %1937 = vmatmul.mubr.bf16.gmra.mrb[0].mxu0 %v526
      %v1938 = vpop.f32.mrb[0].mxu0
      %v1939 = vadd.f32 %v1854, %v1938
      %v1940 = vpop.f32.mrb[0].mxu0
      %v1941 = vpop.f32.mrb[0].mxu0
      %v1942 = vadd.f32 %v1854, %v1941
      %v1943 = vpop.f32.mrb[0].mxu0
      %1944 = vmatprep.mubr.bf16.mxu0 0
      %1945 = vmatmul.mubr.bf16.gmra.mrb[0].mxu0 %v529
      %v1946 = vpop.f32.mrb[0].mxu0
      %v1947 = vadd.f32 %v1854, %v1946
      %v1948 = vpop.f32.mrb[0].mxu0
      %v1949 = vpop.f32.mrb[0].mxu0
      %v1950 = vadd.f32 %v1854, %v1949
      %v1951 = vpop.f32.mrb[0].mxu0
      %1952 = vmatprep.mubr.bf16.mxu0 0
      %1953 = vmatmul.mubr.bf16.gmra.mrb[0].mxu0 %v532
      %v1954 = vpop.f32.mrb[0].mxu0
      %v1955 = vadd.f32 %v1854, %v1954
      %v1956 = vpop.f32.mrb[0].mxu0
      %v1957 = vpop.f32.mrb[0].mxu0
      %v1958 = vadd.f32 %v1854, %v1957
      %v1959 = vpop.f32.mrb[0].mxu0
      %1960 = vmatprep.mubr.bf16.mxu0 0
      %1961 = vmatmul.mubr.bf16.gmra.mrb[0].mxu0 %v535
      %v1962 = vpop.f32.mrb[0].mxu0
      %v1963 = vadd.f32 %v1854, %v1962
      %v1964 = vpop.f32.mrb[0].mxu0
      %v1965 = vpop.f32.mrb[0].mxu0
      %v1966 = vadd.f32 %v1854, %v1965
      %v1967 = vpop.f32.mrb[0].mxu0
      %1968 = vmatprep.mubr.bf16.mxu0 0
      %1969 = vmatmul.mubr.bf16.gmra.mrb[0].mxu0 %v538
      %v1970 = vpop.f32.mrb[0].mxu0
      %v1971 = vadd.f32 %v1854, %v1970
      %v1972 = vpop.f32.mrb[0].mxu0
      %v1973 = vpop.f32.mrb[0].mxu0
      %v1974 = vadd.f32 %v1854, %v1973
      %v1975 = vpop.f32.mrb[0].mxu0
      %1976 = vdwg.mxu0
      %s1977 = scalar_lea.vmem %s2, 64
      %v1978 = vld [vmem:[%s1977] sm:$0xf]
      %v1979 = vld [vmem:[%s1977 + $0x4] sm:$0xf]
      %v1980 = vld [vmem:[%s1977 + $0x8] sm:$0xf]
      %v1981 = vld [vmem:[%s1977 + $0xc] sm:$0xf]
      %v1982 = vld [vmem:[%s1977 + $0x10] sm:$0xf]
      %v1983 = vld [vmem:[%s1977 + $0x14] sm:$0xf]
      %v1984 = vld [vmem:[%s1977 + $0x18] sm:$0xf]
      %v1985 = vld [vmem:[%s1977 + $0x1c] sm:$0xf]
      %s1986 = scalar_lea.vmem %s5, 2
      %v1987 = vld [vmem:[%s1986] sm:$0x1]
      %v1989 = vlaneseq
      %v1990 = vshrl.u32 %v1989, 7
      %v1991 = vsub.s32 0, %v1990
      %v1992 = vrot.slane %v1987, %v1991
      %v2002 = vunpack.c.l.b16 %v1978
      %v2003 = vunpack.c.l.b16 %v1979
      %v2004 = vunpack.c.l.b16 %v1980
      %v2005 = vunpack.c.l.b16 %v1981
      %v2006 = vunpack.c.l.b16 %v1982
      %v2007 = vunpack.c.l.b16 %v1983
      %v2008 = vunpack.c.l.b16 %v1984
      %v2009 = vunpack.c.l.b16 %v1985
      %v2010 = vpack.c.b16 %v2003, %v2002
      %v2011 = vpack.c.b16 %v2005, %v2004
      %v2012 = vpack.c.b16 %v2007, %v2006
      %v2013 = vpack.c.b16 %v2009, %v2008
      %2018 = vmatprep.subr.bf16.mxu0 0
      %2019 = vmatpush1.bf16.msra.mxu0 %v2010
      %2020 = vmatprep.subr.bf16.mxu0 0
      %2021 = vmatpush1.bf16.msra.mxu0 %v2011
      %2022 = vmatprep.subr.bf16.mxu0 0
      %2023 = vmatpush1.bf16.msra.mxu0 %v2012
      %2024 = vmatprep.subr.bf16.mxu0 0
      %2025 = vmatpush1.bf16.msra.mxu0 %v2013
      %2026 = vmatprep.subr.bf16.mxu0 0
      %2027 = vmatpush1.bf16.msra.mxu0 0
      %2028 = vmatprep.subr.bf16.mxu0 0
      %2029 = vmatpush1.bf16.msra.mxu0 0
      %2030 = vmatprep.subr.bf16.mxu0 0
      %2031 = vmatpush1.bf16.msra.mxu0 0
      %2032 = vmatprep.subr.bf16.mxu0 0
      %2033 = vmatpush1.bf16.msra.mxu0 0
      %2034 = vmatprep.subr.bf16.mxu0 0
      %2035 = vmatpush1.bf16.msra.mxu0 0
      %2036 = vmatprep.subr.bf16.mxu0 0
      %2037 = vmatpush1.bf16.msra.mxu0 0
      %2038 = vmatprep.subr.bf16.mxu0 0
      %2039 = vmatpush1.bf16.msra.mxu0 0
      %2040 = vmatprep.subr.bf16.mxu0 0
      %2041 = vmatpush1.bf16.msra.mxu0 0
      %2042 = vmatprep.subr.bf16.mxu0 0
      %2043 = vmatpush1.bf16.msra.mxu0 0
      %2044 = vmatprep.subr.bf16.mxu0 0
      %2045 = vmatpush1.bf16.msra.mxu0 0
      %2046 = vmatprep.subr.bf16.mxu0 0
      %2047 = vmatpush1.bf16.msra.mxu0 0
      %2048 = vmatprep.subr.bf16.mxu0 0
      %2049 = vmatpush1.bf16.msra.mxu0 0
      %2050 = vmatprep.mubr.bf16.mxu0 0
      %2051 = vmatmul.mubr.bf16.gmra.mrb[0].mxu0 %v517
      %v2052 = vpop.f32.mrb[0].mxu0
      %v2053 = vadd.f32 %v1992, %v2052
      %v2054 = vpop.f32.mrb[0].mxu0
      %v2055 = vpop.f32.mrb[0].mxu0
      %v2056 = vadd.f32 %v1992, %v2055
      %v2057 = vpop.f32.mrb[0].mxu0
      %2058 = vmatprep.mubr.bf16.mxu0 0
      %2059 = vmatmul.mubr.bf16.gmra.mrb[0].mxu0 %v520
      %v2060 = vpop.f32.mrb[0].mxu0
      %v2061 = vadd.f32 %v1992, %v2060
      %v2062 = vpop.f32.mrb[0].mxu0
      %v2063 = vpop.f32.mrb[0].mxu0
      %v2064 = vadd.f32 %v1992, %v2063
      %v2065 = vpop.f32.mrb[0].mxu0
      %2066 = vmatprep.mubr.bf16.mxu0 0
      %2067 = vmatmul.mubr.bf16.gmra.mrb[0].mxu0 %v523
      %v2068 = vpop.f32.mrb[0].mxu0
      %v2069 = vadd.f32 %v1992, %v2068
      %v2070 = vpop.f32.mrb[0].mxu0
      %v2071 = vpop.f32.mrb[0].mxu0
      %v2072 = vadd.f32 %v1992, %v2071
      %v2073 = vpop.f32.mrb[0].mxu0
      %2074 = vmatprep.mubr.bf16.mxu0 0
      %2075 = vmatmul.mubr.bf16.gmra.mrb[0].mxu0 %v526
      %v2076 = vpop.f32.mrb[0].mxu0
      %v2077 = vadd.f32 %v1992, %v2076
      %v2078 = vpop.f32.mrb[0].mxu0
      %v2079 = vpop.f32.mrb[0].mxu0
      %v2080 = vadd.f32 %v1992, %v2079
      %v2081 = vpop.f32.mrb[0].mxu0
      %2082 = vmatprep.mubr.bf16.mxu0 0
      %2083 = vmatmul.mubr.bf16.gmra.mrb[0].mxu0 %v529
      %v2084 = vpop.f32.mrb[0].mxu0
      %v2085 = vadd.f32 %v1992, %v2084
      %v2086 = vpop.f32.mrb[0].mxu0
      %v2087 = vpop.f32.mrb[0].mxu0
      %v2088 = vadd.f32 %v1992, %v2087
      %v2089 = vpop.f32.mrb[0].mxu0
      %2090 = vmatprep.mubr.bf16.mxu0 0
      %2091 = vmatmul.mubr.bf16.gmra.mrb[0].mxu0 %v532
      %v2092 = vpop.f32.mrb[0].mxu0
      %v2093 = vadd.f32 %v1992, %v2092
      %v2094 = vpop.f32.mrb[0].mxu0
      %v2095 = vpop.f32.mrb[0].mxu0
      %v2096 = vadd.f32 %v1992, %v2095
      %v2097 = vpop.f32.mrb[0].mxu0
      %2098 = vmatprep.mubr.bf16.mxu0 0
      %2099 = vmatmul.mubr.bf16.gmra.mrb[0].mxu0 %v535
      %v2100 = vpop.f32.mrb[0].mxu0
      %v2101 = vadd.f32 %v1992, %v2100
      %v2102 = vpop.f32.mrb[0].mxu0
      %v2103 = vpop.f32.mrb[0].mxu0
      %v2104 = vadd.f32 %v1992, %v2103
      %v2105 = vpop.f32.mrb[0].mxu0
      %2106 = vmatprep.mubr.bf16.mxu0 0
      %2107 = vmatmul.mubr.bf16.gmra.mrb[0].mxu0 %v538
      %v2108 = vpop.f32.mrb[0].mxu0
      %v2109 = vadd.f32 %v1992, %v2108
      %v2110 = vpop.f32.mrb[0].mxu0
      %v2111 = vpop.f32.mrb[0].mxu0
      %v2112 = vadd.f32 %v1992, %v2111
      %v2113 = vpop.f32.mrb[0].mxu0
      %2114 = vdwg.mxu0
      %s2115 = scalar_lea.vmem %s3, 64
      %v2116 = vld [vmem:[%s2115] sm:$0xf]
      %v2117 = vld [vmem:[%s2115 + $0x4] sm:$0xf]
      %v2118 = vld [vmem:[%s2115 + $0x8] sm:$0xf]
      %v2119 = vld [vmem:[%s2115 + $0xc] sm:$0xf]
      %v2120 = vld [vmem:[%s2115 + $0x10] sm:$0xf]
      %v2121 = vld [vmem:[%s2115 + $0x14] sm:$0xf]
      %v2122 = vld [vmem:[%s2115 + $0x18] sm:$0xf]
      %v2123 = vld [vmem:[%s2115 + $0x1c] sm:$0xf]
      %s2124 = scalar_lea.vmem %s6, 2
      %v2125 = vld [vmem:[%s2124] sm:$0x1]
      %v2127 = vlaneseq
      %v2128 = vshrl.u32 %v2127, 7
      %v2129 = vsub.s32 0, %v2128
      %v2130 = vrot.slane %v2125, %v2129
      %v2140 = vunpack.c.l.b16 %v2116
      %v2141 = vunpack.c.l.b16 %v2117
      %v2142 = vunpack.c.l.b16 %v2118
      %v2143 = vunpack.c.l.b16 %v2119
      %v2144 = vunpack.c.l.b16 %v2120
      %v2145 = vunpack.c.l.b16 %v2121
      %v2146 = vunpack.c.l.b16 %v2122
      %v2147 = vunpack.c.l.b16 %v2123
      %v2148 = vpack.c.b16 %v2141, %v2140
      %v2149 = vpack.c.b16 %v2143, %v2142
      %v2150 = vpack.c.b16 %v2145, %v2144
      %v2151 = vpack.c.b16 %v2147, %v2146
      %2156 = vmatprep.subr.bf16.mxu0 0
      %2157 = vmatpush1.bf16.msra.mxu0 %v2148
      %2158 = vmatprep.subr.bf16.mxu0 0
      %2159 = vmatpush1.bf16.msra.mxu0 %v2149
      %2160 = vmatprep.subr.bf16.mxu0 0
      %2161 = vmatpush1.bf16.msra.mxu0 %v2150
      %2162 = vmatprep.subr.bf16.mxu0 0
      %2163 = vmatpush1.bf16.msra.mxu0 %v2151
      %2164 = vmatprep.subr.bf16.mxu0 0
      %2165 = vmatpush1.bf16.msra.mxu0 0
      %2166 = vmatprep.subr.bf16.mxu0 0
      %2167 = vmatpush1.bf16.msra.mxu0 0
      %2168 = vmatprep.subr.bf16.mxu0 0
      %2169 = vmatpush1.bf16.msra.mxu0 0
      %2170 = vmatprep.subr.bf16.mxu0 0
      %2171 = vmatpush1.bf16.msra.mxu0 0
      %2172 = vmatprep.subr.bf16.mxu0 0
      %2173 = vmatpush1.bf16.msra.mxu0 0
      %2174 = vmatprep.subr.bf16.mxu0 0
      %2175 = vmatpush1.bf16.msra.mxu0 0
      %2176 = vmatprep.subr.bf16.mxu0 0
      %2177 = vmatpush1.bf16.msra.mxu0 0
      %2178 = vmatprep.subr.bf16.mxu0 0
      %2179 = vmatpush1.bf16.msra.mxu0 0
      %2180 = vmatprep.subr.bf16.mxu0 0
      %2181 = vmatpush1.bf16.msra.mxu0 0
      %2182 = vmatprep.subr.bf16.mxu0 0
      %2183 = vmatpush1.bf16.msra.mxu0 0
      %2184 = vmatprep.subr.bf16.mxu0 0
      %2185 = vmatpush1.bf16.msra.mxu0 0
      %2186 = vmatprep.subr.bf16.mxu0 0
      %2187 = vmatpush1.bf16.msra.mxu0 0
      %2188 = vmatprep.mubr.bf16.mxu0 0
      %2189 = vmatmul.mubr.bf16.gmra.mrb[0].mxu0 %v517
      %v2190 = vpop.f32.mrb[0].mxu0
      %v2191 = vadd.f32 %v2130, %v2190
      %v2192 = vpop.f32.mrb[0].mxu0
      %v2193 = vpop.f32.mrb[0].mxu0
      %v2194 = vadd.f32 %v2130, %v2193
      %v2195 = vpop.f32.mrb[0].mxu0
      %2196 = vmatprep.mubr.bf16.mxu0 0
      %2197 = vmatmul.mubr.bf16.gmra.mrb[0].mxu0 %v520
      %v2198 = vpop.f32.mrb[0].mxu0
      %v2199 = vadd.f32 %v2130, %v2198
      %v2200 = vpop.f32.mrb[0].mxu0
      %v2201 = vpop.f32.mrb[0].mxu0
      %v2202 = vadd.f32 %v2130, %v2201
      %v2203 = vpop.f32.mrb[0].mxu0
      %2204 = vmatprep.mubr.bf16.mxu0 0
      %2205 = vmatmul.mubr.bf16.gmra.mrb[0].mxu0 %v523
      %v2206 = vpop.f32.mrb[0].mxu0
      %v2207 = vadd.f32 %v2130, %v2206
      %v2208 = vpop.f32.mrb[0].mxu0
      %v2209 = vpop.f32.mrb[0].mxu0
      %v2210 = vadd.f32 %v2130, %v2209
      %v2211 = vpop.f32.mrb[0].mxu0
      %2212 = vmatprep.mubr.bf16.mxu0 0
      %2213 = vmatmul.mubr.bf16.gmra.mrb[0].mxu0 %v526
      %v2214 = vpop.f32.mrb[0].mxu0
      %v2215 = vadd.f32 %v2130, %v2214
      %v2216 = vpop.f32.mrb[0].mxu0
      %v2217 = vpop.f32.mrb[0].mxu0
      %v2218 = vadd.f32 %v2130, %v2217
      %v2219 = vpop.f32.mrb[0].mxu0
      %2220 = vmatprep.mubr.bf16.mxu0 0
      %2221 = vmatmul.mubr.bf16.gmra.mrb[0].mxu0 %v529
      %v2222 = vpop.f32.mrb[0].mxu0
      %v2223 = vadd.f32 %v2130, %v2222
      %v2224 = vpop.f32.mrb[0].mxu0
      %v2225 = vpop.f32.mrb[0].mxu0
      %v2226 = vadd.f32 %v2130, %v2225
      %v2227 = vpop.f32.mrb[0].mxu0
      %2228 = vmatprep.mubr.bf16.mxu0 0
      %2229 = vmatmul.mubr.bf16.gmra.mrb[0].mxu0 %v532
      %v2230 = vpop.f32.mrb[0].mxu0
      %v2231 = vadd.f32 %v2130, %v2230
      %v2232 = vpop.f32.mrb[0].mxu0
      %v2233 = vpop.f32.mrb[0].mxu0
      %v2234 = vadd.f32 %v2130, %v2233
      %v2235 = vpop.f32.mrb[0].mxu0
      %2236 = vmatprep.mubr.bf16.mxu0 0
      %2237 = vmatmul.mubr.bf16.gmra.mrb[0].mxu0 %v535
      %v2238 = vpop.f32.mrb[0].mxu0
      %v2239 = vadd.f32 %v2130, %v2238
      %v2240 = vpop.f32.mrb[0].mxu0
      %v2241 = vpop.f32.mrb[0].mxu0
      %v2242 = vadd.f32 %v2130, %v2241
      %v2243 = vpop.f32.mrb[0].mxu0
      %2244 = vmatprep.mubr.bf16.mxu0 0
      %2245 = vmatmul.mubr.bf16.gmra.mrb[0].mxu0 %v538
      %v2246 = vpop.f32.mrb[0].mxu0
      %v2247 = vadd.f32 %v2130, %v2246
      %v2248 = vpop.f32.mrb[0].mxu0
      %v2249 = vpop.f32.mrb[0].mxu0
      %v2250 = vadd.f32 %v2130, %v2249
      %v2251 = vpop.f32.mrb[0].mxu0
      %2252 = vdwg.mxu0
      %v2253 = vmul.f32 %v1915, 0.17677669
      %v2254 = vmul.f32 %v1918, 0.17677669
      %v2255 = vmul.f32 %v1923, 0.17677669
      %v2256 = vmul.f32 %v1926, 0.17677669
      %v2257 = vmul.f32 %v1931, 0.17677669
      %v2258 = vmul.f32 %v1934, 0.17677669
      %v2259 = vmul.f32 %v1939, 0.17677669
      %v2260 = vmul.f32 %v1942, 0.17677669
      %v2261 = vmul.f32 %v1947, 0.17677669
      %v2262 = vmul.f32 %v1950, 0.17677669
      %v2263 = vmul.f32 %v1955, 0.17677669
      %v2264 = vmul.f32 %v1958, 0.17677669
      %v2265 = vmul.f32 %v1963, 0.17677669
      %v2266 = vmul.f32 %v1966, 0.17677669
      %v2267 = vmul.f32 %v1971, 0.17677669
      %v2268 = vmul.f32 %v1974, 0.17677669
      %v2269 = vpack.c.bf16 %v2254, %v2253
      %v2270 = vpack.c.bf16 %v2256, %v2255
      %v2271 = vpack.c.bf16 %v2258, %v2257
      %v2272 = vpack.c.bf16 %v2260, %v2259
      %v2273 = vpack.c.bf16 %v2262, %v2261
      %v2274 = vpack.c.bf16 %v2264, %v2263
      %v2275 = vpack.c.bf16 %v2266, %v2265
      %v2276 = vpack.c.bf16 %v2268, %v2267
      %v2285 = vunpack.c.l.b16 %v2269
      %v2286 = vunpack.c.h.b16 %v2269
      %v2287 = vunpack.c.l.b16 %v2270
      %v2288 = vunpack.c.h.b16 %v2270
      %v2289 = vunpack.c.l.b16 %v2271
      %v2290 = vunpack.c.h.b16 %v2271
      %v2291 = vunpack.c.l.b16 %v2272
      %v2292 = vunpack.c.h.b16 %v2272
      %v2293 = vunpack.c.l.b16 %v2273
      %v2294 = vunpack.c.h.b16 %v2273
      %v2295 = vunpack.c.l.b16 %v2274
      %v2296 = vunpack.c.h.b16 %v2274
      %v2297 = vunpack.c.l.b16 %v2275
      %v2298 = vunpack.c.h.b16 %v2275
      %v2299 = vunpack.c.l.b16 %v2276
      %v2300 = vunpack.c.h.b16 %v2276
      %v2301 = vpack.c.b16 %v2285, %v2285
      %v2302 = vpack.c.b16 %v2286, %v2286
      %v2303 = vpack.c.b16 %v2287, %v2287
      %v2304 = vpack.c.b16 %v2288, %v2288
      %v2305 = vpack.c.b16 %v2289, %v2289
      %v2306 = vpack.c.b16 %v2290, %v2290
      %v2307 = vpack.c.b16 %v2291, %v2291
      %v2308 = vpack.c.b16 %v2292, %v2292
      %v2309 = vpack.c.b16 %v2293, %v2293
      %v2310 = vpack.c.b16 %v2294, %v2294
      %v2311 = vpack.c.b16 %v2295, %v2295
      %v2312 = vpack.c.b16 %v2296, %v2296
      %v2313 = vpack.c.b16 %v2297, %v2297
      %v2314 = vpack.c.b16 %v2298, %v2298
      %v2315 = vpack.c.b16 %v2299, %v2299
      %v2316 = vpack.c.b16 %v2300, %v2300
      %s2333 = scalar_lea.vmem %s397, 128
      %2334 = vst.msk [vmem:[%s2333] sm:$0xf] %vm989, %v2301
      %2335 = vst.msk [vmem:[%s2333 + $0x4] sm:$0xf] %vm989, %v2302
      %2336 = vst.msk [vmem:[%s2333 + $0x8] sm:$0xf] %vm989, %v2303
      %2337 = vst.msk [vmem:[%s2333 + $0xc] sm:$0xf] %vm989, %v2304
      %2338 = vst.msk [vmem:[%s2333 + $0x10] sm:$0xf] %vm989, %v2305
      %2339 = vst.msk [vmem:[%s2333 + $0x14] sm:$0xf] %vm989, %v2306
      %2340 = vst.msk [vmem:[%s2333 + $0x18] sm:$0xf] %vm989, %v2307
      %2341 = vst.msk [vmem:[%s2333 + $0x1c] sm:$0xf] %vm989, %v2308
      %2342 = vst.msk [vmem:[%s2333 + $0x20] sm:$0xf] %vm989, %v2309
      %2343 = vst.msk [vmem:[%s2333 + $0x24] sm:$0xf] %vm989, %v2310
      %2344 = vst.msk [vmem:[%s2333 + $0x28] sm:$0xf] %vm989, %v2311
      %2345 = vst.msk [vmem:[%s2333 + $0x2c] sm:$0xf] %vm989, %v2312
      %2346 = vst.msk [vmem:[%s2333 + $0x30] sm:$0xf] %vm989, %v2313
      %2347 = vst.msk [vmem:[%s2333 + $0x34] sm:$0xf] %vm989, %v2314
      %2348 = vst.msk [vmem:[%s2333 + $0x38] sm:$0xf] %vm989, %v2315
      %2349 = vst.msk [vmem:[%s2333 + $0x3c] sm:$0xf] %vm989, %v2316
      %v2350 = vpack.c.bf16 %v2056, %v2053
      %v2351 = vpack.c.bf16 %v2064, %v2061
      %v2352 = vpack.c.bf16 %v2072, %v2069
      %v2353 = vpack.c.bf16 %v2080, %v2077
      %v2354 = vpack.c.bf16 %v2088, %v2085
      %v2355 = vpack.c.bf16 %v2096, %v2093
      %v2356 = vpack.c.bf16 %v2104, %v2101
      %v2357 = vpack.c.bf16 %v2112, %v2109
      %v2366 = vunpack.c.l.b16 %v2350
      %v2367 = vunpack.c.h.b16 %v2350
      %v2368 = vunpack.c.l.b16 %v2351
      %v2369 = vunpack.c.h.b16 %v2351
      %v2370 = vunpack.c.l.b16 %v2352
      %v2371 = vunpack.c.h.b16 %v2352
      %v2372 = vunpack.c.l.b16 %v2353
      %v2373 = vunpack.c.h.b16 %v2353
      %v2374 = vunpack.c.l.b16 %v2354
      %v2375 = vunpack.c.h.b16 %v2354
      %v2376 = vunpack.c.l.b16 %v2355
      %v2377 = vunpack.c.h.b16 %v2355
      %v2378 = vunpack.c.l.b16 %v2356
      %v2379 = vunpack.c.h.b16 %v2356
      %v2380 = vunpack.c.l.b16 %v2357
      %v2381 = vunpack.c.h.b16 %v2357
      %v2382 = vpack.c.b16 %v2366, %v2366
      %v2383 = vpack.c.b16 %v2367, %v2367
      %v2384 = vpack.c.b16 %v2368, %v2368
      %v2385 = vpack.c.b16 %v2369, %v2369
      %v2386 = vpack.c.b16 %v2370, %v2370
      %v2387 = vpack.c.b16 %v2371, %v2371
      %v2388 = vpack.c.b16 %v2372, %v2372
      %v2389 = vpack.c.b16 %v2373, %v2373
      %v2390 = vpack.c.b16 %v2374, %v2374
      %v2391 = vpack.c.b16 %v2375, %v2375
      %v2392 = vpack.c.b16 %v2376, %v2376
      %v2393 = vpack.c.b16 %v2377, %v2377
      %v2394 = vpack.c.b16 %v2378, %v2378
      %v2395 = vpack.c.b16 %v2379, %v2379
      %v2396 = vpack.c.b16 %v2380, %v2380
      %v2397 = vpack.c.b16 %v2381, %v2381
      %s2414 = scalar_lea.vmem %s407, 128
      %2415 = vst.msk [vmem:[%s2414] sm:$0xf] %vm989, %v2382
      %2416 = vst.msk [vmem:[%s2414 + $0x4] sm:$0xf] %vm989, %v2383
      %2417 = vst.msk [vmem:[%s2414 + $0x8] sm:$0xf] %vm989, %v2384
      %2418 = vst.msk [vmem:[%s2414 + $0xc] sm:$0xf] %vm989, %v2385
      %2419 = vst.msk [vmem:[%s2414 + $0x10] sm:$0xf] %vm989, %v2386
      %2420 = vst.msk [vmem:[%s2414 + $0x14] sm:$0xf] %vm989, %v2387
      %2421 = vst.msk [vmem:[%s2414 + $0x18] sm:$0xf] %vm989, %v2388
      %2422 = vst.msk [vmem:[%s2414 + $0x1c] sm:$0xf] %vm989, %v2389
      %2423 = vst.msk [vmem:[%s2414 + $0x20] sm:$0xf] %vm989, %v2390
      %2424 = vst.msk [vmem:[%s2414 + $0x24] sm:$0xf] %vm989, %v2391
      %2425 = vst.msk [vmem:[%s2414 + $0x28] sm:$0xf] %vm989, %v2392
      %2426 = vst.msk [vmem:[%s2414 + $0x2c] sm:$0xf] %vm989, %v2393
      %2427 = vst.msk [vmem:[%s2414 + $0x30] sm:$0xf] %vm989, %v2394
      %2428 = vst.msk [vmem:[%s2414 + $0x34] sm:$0xf] %vm989, %v2395
      %2429 = vst.msk [vmem:[%s2414 + $0x38] sm:$0xf] %vm989, %v2396
      %2430 = vst.msk [vmem:[%s2414 + $0x3c] sm:$0xf] %vm989, %v2397
      %v2431 = vpack.c.bf16 %v2194, %v2191
      %v2432 = vpack.c.bf16 %v2202, %v2199
      %v2433 = vpack.c.bf16 %v2210, %v2207
      %v2434 = vpack.c.bf16 %v2218, %v2215
      %v2435 = vpack.c.bf16 %v2226, %v2223
      %v2436 = vpack.c.bf16 %v2234, %v2231
      %v2437 = vpack.c.bf16 %v2242, %v2239
      %v2438 = vpack.c.bf16 %v2250, %v2247
      %v2447 = vunpack.c.l.b16 %v2431
      %v2448 = vunpack.c.h.b16 %v2431
      %v2449 = vunpack.c.l.b16 %v2432
      %v2450 = vunpack.c.h.b16 %v2432
      %v2451 = vunpack.c.l.b16 %v2433
      %v2452 = vunpack.c.h.b16 %v2433
      %v2453 = vunpack.c.l.b16 %v2434
      %v2454 = vunpack.c.h.b16 %v2434
      %v2455 = vunpack.c.l.b16 %v2435
      %v2456 = vunpack.c.h.b16 %v2435
      %v2457 = vunpack.c.l.b16 %v2436
      %v2458 = vunpack.c.h.b16 %v2436
      %v2459 = vunpack.c.l.b16 %v2437
      %v2460 = vunpack.c.h.b16 %v2437
      %v2461 = vunpack.c.l.b16 %v2438
      %v2462 = vunpack.c.h.b16 %v2438
      %v2463 = vpack.c.b16 %v2447, %v2447
      %v2464 = vpack.c.b16 %v2448, %v2448
      %v2465 = vpack.c.b16 %v2449, %v2449
      %v2466 = vpack.c.b16 %v2450, %v2450
      %v2467 = vpack.c.b16 %v2451, %v2451
      %v2468 = vpack.c.b16 %v2452, %v2452
      %v2469 = vpack.c.b16 %v2453, %v2453
      %v2470 = vpack.c.b16 %v2454, %v2454
      %v2471 = vpack.c.b16 %v2455, %v2455
      %v2472 = vpack.c.b16 %v2456, %v2456
      %v2473 = vpack.c.b16 %v2457, %v2457
      %v2474 = vpack.c.b16 %v2458, %v2458
      %v2475 = vpack.c.b16 %v2459, %v2459
      %v2476 = vpack.c.b16 %v2460, %v2460
      %v2477 = vpack.c.b16 %v2461, %v2461
      %v2478 = vpack.c.b16 %v2462, %v2462
      %s2495 = scalar_lea.vmem %s417, 128
      %2496 = vst.msk [vmem:[%s2495] sm:$0xf] %vm989, %v2463
      %2497 = vst.msk [vmem:[%s2495 + $0x4] sm:$0xf] %vm989, %v2464
      %2498 = vst.msk [vmem:[%s2495 + $0x8] sm:$0xf] %vm989, %v2465
      %2499 = vst.msk [vmem:[%s2495 + $0xc] sm:$0xf] %vm989, %v2466
      %2500 = vst.msk [vmem:[%s2495 + $0x10] sm:$0xf] %vm989, %v2467
      %2501 = vst.msk [vmem:[%s2495 + $0x14] sm:$0xf] %vm989, %v2468
      %2502 = vst.msk [vmem:[%s2495 + $0x18] sm:$0xf] %vm989, %v2469
      %2503 = vst.msk [vmem:[%s2495 + $0x1c] sm:$0xf] %vm989, %v2470
      %2504 = vst.msk [vmem:[%s2495 + $0x20] sm:$0xf] %vm989, %v2471
      %2505 = vst.msk [vmem:[%s2495 + $0x24] sm:$0xf] %vm989, %v2472
      %2506 = vst.msk [vmem:[%s2495 + $0x28] sm:$0xf] %vm989, %v2473
      %2507 = vst.msk [vmem:[%s2495 + $0x2c] sm:$0xf] %vm989, %v2474
      %2508 = vst.msk [vmem:[%s2495 + $0x30] sm:$0xf] %vm989, %v2475
      %2509 = vst.msk [vmem:[%s2495 + $0x34] sm:$0xf] %vm989, %v2476
      %2510 = vst.msk [vmem:[%s2495 + $0x38] sm:$0xf] %vm989, %v2477
      %2511 = vst.msk [vmem:[%s2495 + $0x3c] sm:$0xf] %vm989, %v2478
      %s2512 = scalar_lea.vmem %s1, 96
      %v2513 = vld [vmem:[%s2512] sm:$0xf]
      %v2514 = vld [vmem:[%s2512 + $0x4] sm:$0xf]
      %v2515 = vld [vmem:[%s2512 + $0x8] sm:$0xf]
      %v2516 = vld [vmem:[%s2512 + $0xc] sm:$0xf]
      %v2517 = vld [vmem:[%s2512 + $0x10] sm:$0xf]
      %v2518 = vld [vmem:[%s2512 + $0x14] sm:$0xf]
      %v2519 = vld [vmem:[%s2512 + $0x18] sm:$0xf]
      %v2520 = vld [vmem:[%s2512 + $0x1c] sm:$0xf]
      %s2521 = scalar_lea.vmem %s4, 3
      %v2522 = vld [vmem:[%s2521] sm:$0x1]
      %v2524 = vlaneseq
      %v2525 = vshrl.u32 %v2524, 7
      %v2526 = vsub.s32 0, %v2525
      %v2527 = vrot.slane %v2522, %v2526
      %v2537 = vunpack.c.l.b16 %v2513
      %v2538 = vunpack.c.l.b16 %v2514
      %v2539 = vunpack.c.l.b16 %v2515
      %v2540 = vunpack.c.l.b16 %v2516
      %v2541 = vunpack.c.l.b16 %v2517
      %v2542 = vunpack.c.l.b16 %v2518
      %v2543 = vunpack.c.l.b16 %v2519
      %v2544 = vunpack.c.l.b16 %v2520
      %v2545 = vpack.c.b16 %v2538, %v2537
      %v2546 = vpack.c.b16 %v2540, %v2539
      %v2547 = vpack.c.b16 %v2542, %v2541
      %v2548 = vpack.c.b16 %v2544, %v2543
      %2553 = vmatprep.subr.bf16.mxu0 0
      %2554 = vmatpush1.bf16.msra.mxu0 %v2545
      %2555 = vmatprep.subr.bf16.mxu0 0
      %2556 = vmatpush1.bf16.msra.mxu0 %v2546
      %2557 = vmatprep.subr.bf16.mxu0 0
      %2558 = vmatpush1.bf16.msra.mxu0 %v2547
      %2559 = vmatprep.subr.bf16.mxu0 0
      %2560 = vmatpush1.bf16.msra.mxu0 %v2548
      %2561 = vmatprep.subr.bf16.mxu0 0
      %2562 = vmatpush1.bf16.msra.mxu0 0
      %2563 = vmatprep.subr.bf16.mxu0 0
      %2564 = vmatpush1.bf16.msra.mxu0 0
      %2565 = vmatprep.subr.bf16.mxu0 0
      %2566 = vmatpush1.bf16.msra.mxu0 0
      %2567 = vmatprep.subr.bf16.mxu0 0
      %2568 = vmatpush1.bf16.msra.mxu0 0
      %2569 = vmatprep.subr.bf16.mxu0 0
      %2570 = vmatpush1.bf16.msra.mxu0 0
      %2571 = vmatprep.subr.bf16.mxu0 0
      %2572 = vmatpush1.bf16.msra.mxu0 0
      %2573 = vmatprep.subr.bf16.mxu0 0
      %2574 = vmatpush1.bf16.msra.mxu0 0
      %2575 = vmatprep.subr.bf16.mxu0 0
      %2576 = vmatpush1.bf16.msra.mxu0 0
      %2577 = vmatprep.subr.bf16.mxu0 0
      %2578 = vmatpush1.bf16.msra.mxu0 0
      %2579 = vmatprep.subr.bf16.mxu0 0
      %2580 = vmatpush1.bf16.msra.mxu0 0
      %2581 = vmatprep.subr.bf16.mxu0 0
      %2582 = vmatpush1.bf16.msra.mxu0 0
      %2583 = vmatprep.subr.bf16.mxu0 0
      %2584 = vmatpush1.bf16.msra.mxu0 0
      %2585 = vmatprep.mubr.bf16.mxu0 0
      %2586 = vmatmul.mubr.bf16.gmra.mrb[0].mxu0 %v517
      %v2587 = vpop.f32.mrb[0].mxu0
      %v2588 = vadd.f32 %v2527, %v2587
      %v2589 = vpop.f32.mrb[0].mxu0
      %v2590 = vpop.f32.mrb[0].mxu0
      %v2591 = vadd.f32 %v2527, %v2590
      %v2592 = vpop.f32.mrb[0].mxu0
      %2593 = vmatprep.mubr.bf16.mxu0 0
      %2594 = vmatmul.mubr.bf16.gmra.mrb[0].mxu0 %v520
      %v2595 = vpop.f32.mrb[0].mxu0
      %v2596 = vadd.f32 %v2527, %v2595
      %v2597 = vpop.f32.mrb[0].mxu0
      %v2598 = vpop.f32.mrb[0].mxu0
      %v2599 = vadd.f32 %v2527, %v2598
      %v2600 = vpop.f32.mrb[0].mxu0
      %2601 = vmatprep.mubr.bf16.mxu0 0
      %2602 = vmatmul.mubr.bf16.gmra.mrb[0].mxu0 %v523
      %v2603 = vpop.f32.mrb[0].mxu0
      %v2604 = vadd.f32 %v2527, %v2603
      %v2605 = vpop.f32.mrb[0].mxu0
      %v2606 = vpop.f32.mrb[0].mxu0
      %v2607 = vadd.f32 %v2527, %v2606
      %v2608 = vpop.f32.mrb[0].mxu0
      %2609 = vmatprep.mubr.bf16.mxu0 0
      %2610 = vmatmul.mubr.bf16.gmra.mrb[0].mxu0 %v526
      %v2611 = vpop.f32.mrb[0].mxu0
      %v2612 = vadd.f32 %v2527, %v2611
      %v2613 = vpop.f32.mrb[0].mxu0
      %v2614 = vpop.f32.mrb[0].mxu0
      %v2615 = vadd.f32 %v2527, %v2614
      %v2616 = vpop.f32.mrb[0].mxu0
      %2617 = vmatprep.mubr.bf16.mxu0 0
      %2618 = vmatmul.mubr.bf16.gmra.mrb[0].mxu0 %v529
      %v2619 = vpop.f32.mrb[0].mxu0
      %v2620 = vadd.f32 %v2527, %v2619
      %v2621 = vpop.f32.mrb[0].mxu0
      %v2622 = vpop.f32.mrb[0].mxu0
      %v2623 = vadd.f32 %v2527, %v2622
      %v2624 = vpop.f32.mrb[0].mxu0
      %2625 = vmatprep.mubr.bf16.mxu0 0
      %2626 = vmatmul.mubr.bf16.gmra.mrb[0].mxu0 %v532
      %v2627 = vpop.f32.mrb[0].mxu0
      %v2628 = vadd.f32 %v2527, %v2627
      %v2629 = vpop.f32.mrb[0].mxu0
      %v2630 = vpop.f32.mrb[0].mxu0
      %v2631 = vadd.f32 %v2527, %v2630
      %v2632 = vpop.f32.mrb[0].mxu0
      %2633 = vmatprep.mubr.bf16.mxu0 0
      %2634 = vmatmul.mubr.bf16.gmra.mrb[0].mxu0 %v535
      %v2635 = vpop.f32.mrb[0].mxu0
      %v2636 = vadd.f32 %v2527, %v2635
      %v2637 = vpop.f32.mrb[0].mxu0
      %v2638 = vpop.f32.mrb[0].mxu0
      %v2639 = vadd.f32 %v2527, %v2638
      %v2640 = vpop.f32.mrb[0].mxu0
      %2641 = vmatprep.mubr.bf16.mxu0 0
      %2642 = vmatmul.mubr.bf16.gmra.mrb[0].mxu0 %v538
      %v2643 = vpop.f32.mrb[0].mxu0
      %v2644 = vadd.f32 %v2527, %v2643
      %v2645 = vpop.f32.mrb[0].mxu0
      %v2646 = vpop.f32.mrb[0].mxu0
      %v2647 = vadd.f32 %v2527, %v2646
      %v2648 = vpop.f32.mrb[0].mxu0
      %2649 = vdwg.mxu0
      %s2650 = scalar_lea.vmem %s2, 96
      %v2651 = vld [vmem:[%s2650] sm:$0xf]
      %v2652 = vld [vmem:[%s2650 + $0x4] sm:$0xf]
      %v2653 = vld [vmem:[%s2650 + $0x8] sm:$0xf]
      %v2654 = vld [vmem:[%s2650 + $0xc] sm:$0xf]
      %v2655 = vld [vmem:[%s2650 + $0x10] sm:$0xf]
      %v2656 = vld [vmem:[%s2650 + $0x14] sm:$0xf]
      %v2657 = vld [vmem:[%s2650 + $0x18] sm:$0xf]
      %v2658 = vld [vmem:[%s2650 + $0x1c] sm:$0xf]
      %s2659 = scalar_lea.vmem %s5, 3
      %v2660 = vld [vmem:[%s2659] sm:$0x1]
      %v2662 = vlaneseq
      %v2663 = vshrl.u32 %v2662, 7
      %v2664 = vsub.s32 0, %v2663
      %v2665 = vrot.slane %v2660, %v2664
      %v2675 = vunpack.c.l.b16 %v2651
      %v2676 = vunpack.c.l.b16 %v2652
      %v2677 = vunpack.c.l.b16 %v2653
      %v2678 = vunpack.c.l.b16 %v2654
      %v2679 = vunpack.c.l.b16 %v2655
      %v2680 = vunpack.c.l.b16 %v2656
      %v2681 = vunpack.c.l.b16 %v2657
      %v2682 = vunpack.c.l.b16 %v2658
      %v2683 = vpack.c.b16 %v2676, %v2675
      %v2684 = vpack.c.b16 %v2678, %v2677
      %v2685 = vpack.c.b16 %v2680, %v2679
      %v2686 = vpack.c.b16 %v2682, %v2681
      %2691 = vmatprep.subr.bf16.mxu0 0
      %2692 = vmatpush1.bf16.msra.mxu0 %v2683
      %2693 = vmatprep.subr.bf16.mxu0 0
      %2694 = vmatpush1.bf16.msra.mxu0 %v2684
      %2695 = vmatprep.subr.bf16.mxu0 0
      %2696 = vmatpush1.bf16.msra.mxu0 %v2685
      %2697 = vmatprep.subr.bf16.mxu0 0
      %2698 = vmatpush1.bf16.msra.mxu0 %v2686
      %2699 = vmatprep.subr.bf16.mxu0 0
      %2700 = vmatpush1.bf16.msra.mxu0 0
      %2701 = vmatprep.subr.bf16.mxu0 0
      %2702 = vmatpush1.bf16.msra.mxu0 0
      %2703 = vmatprep.subr.bf16.mxu0 0
      %2704 = vmatpush1.bf16.msra.mxu0 0
      %2705 = vmatprep.subr.bf16.mxu0 0
      %2706 = vmatpush1.bf16.msra.mxu0 0
      %2707 = vmatprep.subr.bf16.mxu0 0
      %2708 = vmatpush1.bf16.msra.mxu0 0
      %2709 = vmatprep.subr.bf16.mxu0 0
      %2710 = vmatpush1.bf16.msra.mxu0 0
      %2711 = vmatprep.subr.bf16.mxu0 0
      %2712 = vmatpush1.bf16.msra.mxu0 0
      %2713 = vmatprep.subr.bf16.mxu0 0
      %2714 = vmatpush1.bf16.msra.mxu0 0
      %2715 = vmatprep.subr.bf16.mxu0 0
      %2716 = vmatpush1.bf16.msra.mxu0 0
      %2717 = vmatprep.subr.bf16.mxu0 0
      %2718 = vmatpush1.bf16.msra.mxu0 0
      %2719 = vmatprep.subr.bf16.mxu0 0
      %2720 = vmatpush1.bf16.msra.mxu0 0
      %2721 = vmatprep.subr.bf16.mxu0 0
      %2722 = vmatpush1.bf16.msra.mxu0 0
      %2723 = vmatprep.mubr.bf16.mxu0 0
      %2724 = vmatmul.mubr.bf16.gmra.mrb[0].mxu0 %v517
      %v2725 = vpop.f32.mrb[0].mxu0
      %v2726 = vadd.f32 %v2665, %v2725
      %v2727 = vpop.f32.mrb[0].mxu0
      %v2728 = vpop.f32.mrb[0].mxu0
      %v2729 = vadd.f32 %v2665, %v2728
      %v2730 = vpop.f32.mrb[0].mxu0
      %2731 = vmatprep.mubr.bf16.mxu0 0
      %2732 = vmatmul.mubr.bf16.gmra.mrb[0].mxu0 %v520
      %v2733 = vpop.f32.mrb[0].mxu0
      %v2734 = vadd.f32 %v2665, %v2733
      %v2735 = vpop.f32.mrb[0].mxu0
      %v2736 = vpop.f32.mrb[0].mxu0
      %v2737 = vadd.f32 %v2665, %v2736
      %v2738 = vpop.f32.mrb[0].mxu0
      %2739 = vmatprep.mubr.bf16.mxu0 0
      %2740 = vmatmul.mubr.bf16.gmra.mrb[0].mxu0 %v523
      %v2741 = vpop.f32.mrb[0].mxu0
      %v2742 = vadd.f32 %v2665, %v2741
      %v2743 = vpop.f32.mrb[0].mxu0
      %v2744 = vpop.f32.mrb[0].mxu0
      %v2745 = vadd.f32 %v2665, %v2744
      %v2746 = vpop.f32.mrb[0].mxu0
      %2747 = vmatprep.mubr.bf16.mxu0 0
      %2748 = vmatmul.mubr.bf16.gmra.mrb[0].mxu0 %v526
      %v2749 = vpop.f32.mrb[0].mxu0
      %v2750 = vadd.f32 %v2665, %v2749
      %v2751 = vpop.f32.mrb[0].mxu0
      %v2752 = vpop.f32.mrb[0].mxu0
      %v2753 = vadd.f32 %v2665, %v2752
      %v2754 = vpop.f32.mrb[0].mxu0
      %2755 = vmatprep.mubr.bf16.mxu0 0
      %2756 = vmatmul.mubr.bf16.gmra.mrb[0].mxu0 %v529
      %v2757 = vpop.f32.mrb[0].mxu0
      %v2758 = vadd.f32 %v2665, %v2757
      %v2759 = vpop.f32.mrb[0].mxu0
      %v2760 = vpop.f32.mrb[0].mxu0
      %v2761 = vadd.f32 %v2665, %v2760
      %v2762 = vpop.f32.mrb[0].mxu0
      %2763 = vmatprep.mubr.bf16.mxu0 0
      %2764 = vmatmul.mubr.bf16.gmra.mrb[0].mxu0 %v532
      %v2765 = vpop.f32.mrb[0].mxu0
      %v2766 = vadd.f32 %v2665, %v2765
      %v2767 = vpop.f32.mrb[0].mxu0
      %v2768 = vpop.f32.mrb[0].mxu0
      %v2769 = vadd.f32 %v2665, %v2768
      %v2770 = vpop.f32.mrb[0].mxu0
      %2771 = vmatprep.mubr.bf16.mxu0 0
      %2772 = vmatmul.mubr.bf16.gmra.mrb[0].mxu0 %v535
      %v2773 = vpop.f32.mrb[0].mxu0
      %v2774 = vadd.f32 %v2665, %v2773
      %v2775 = vpop.f32.mrb[0].mxu0
      %v2776 = vpop.f32.mrb[0].mxu0
      %v2777 = vadd.f32 %v2665, %v2776
      %v2778 = vpop.f32.mrb[0].mxu0
      %2779 = vmatprep.mubr.bf16.mxu0 0
      %2780 = vmatmul.mubr.bf16.gmra.mrb[0].mxu0 %v538
      %v2781 = vpop.f32.mrb[0].mxu0
      %v2782 = vadd.f32 %v2665, %v2781
      %v2783 = vpop.f32.mrb[0].mxu0
      %v2784 = vpop.f32.mrb[0].mxu0
      %v2785 = vadd.f32 %v2665, %v2784
      %v2786 = vpop.f32.mrb[0].mxu0
      %2787 = vdwg.mxu0
      %s2788 = scalar_lea.vmem %s3, 96
      %v2789 = vld [vmem:[%s2788] sm:$0xf]
      %v2790 = vld [vmem:[%s2788 + $0x4] sm:$0xf]
      %v2791 = vld [vmem:[%s2788 + $0x8] sm:$0xf]
      %v2792 = vld [vmem:[%s2788 + $0xc] sm:$0xf]
      %v2793 = vld [vmem:[%s2788 + $0x10] sm:$0xf]
      %v2794 = vld [vmem:[%s2788 + $0x14] sm:$0xf]
      %v2795 = vld [vmem:[%s2788 + $0x18] sm:$0xf]
      %v2796 = vld [vmem:[%s2788 + $0x1c] sm:$0xf]
      %s2797 = scalar_lea.vmem %s6, 3
      %v2798 = vld [vmem:[%s2797] sm:$0x1]
      %v2800 = vlaneseq
      %v2801 = vshrl.u32 %v2800, 7
      %v2802 = vsub.s32 0, %v2801
      %v2803 = vrot.slane %v2798, %v2802
      %v2813 = vunpack.c.l.b16 %v2789
      %v2814 = vunpack.c.l.b16 %v2790
      %v2815 = vunpack.c.l.b16 %v2791
      %v2816 = vunpack.c.l.b16 %v2792
      %v2817 = vunpack.c.l.b16 %v2793
      %v2818 = vunpack.c.l.b16 %v2794
      %v2819 = vunpack.c.l.b16 %v2795
      %v2820 = vunpack.c.l.b16 %v2796
      %v2821 = vpack.c.b16 %v2814, %v2813
      %v2822 = vpack.c.b16 %v2816, %v2815
      %v2823 = vpack.c.b16 %v2818, %v2817
      %v2824 = vpack.c.b16 %v2820, %v2819
      %2829 = vmatprep.subr.bf16.mxu0 0
      %2830 = vmatpush1.bf16.msra.mxu0 %v2821
      %2831 = vmatprep.subr.bf16.mxu0 0
      %2832 = vmatpush1.bf16.msra.mxu0 %v2822
      %2833 = vmatprep.subr.bf16.mxu0 0
      %2834 = vmatpush1.bf16.msra.mxu0 %v2823
      %2835 = vmatprep.subr.bf16.mxu0 0
      %2836 = vmatpush1.bf16.msra.mxu0 %v2824
      %2837 = vmatprep.subr.bf16.mxu0 0
      %2838 = vmatpush1.bf16.msra.mxu0 0
      %2839 = vmatprep.subr.bf16.mxu0 0
      %2840 = vmatpush1.bf16.msra.mxu0 0
      %2841 = vmatprep.subr.bf16.mxu0 0
      %2842 = vmatpush1.bf16.msra.mxu0 0
      %2843 = vmatprep.subr.bf16.mxu0 0
      %2844 = vmatpush1.bf16.msra.mxu0 0
      %2845 = vmatprep.subr.bf16.mxu0 0
      %2846 = vmatpush1.bf16.msra.mxu0 0
      %2847 = vmatprep.subr.bf16.mxu0 0
      %2848 = vmatpush1.bf16.msra.mxu0 0
      %2849 = vmatprep.subr.bf16.mxu0 0
      %2850 = vmatpush1.bf16.msra.mxu0 0
      %2851 = vmatprep.subr.bf16.mxu0 0
      %2852 = vmatpush1.bf16.msra.mxu0 0
      %2853 = vmatprep.subr.bf16.mxu0 0
      %2854 = vmatpush1.bf16.msra.mxu0 0
      %2855 = vmatprep.subr.bf16.mxu0 0
      %2856 = vmatpush1.bf16.msra.mxu0 0
      %2857 = vmatprep.subr.bf16.mxu0 0
      %2858 = vmatpush1.bf16.msra.mxu0 0
      %2859 = vmatprep.subr.bf16.mxu0 0
      %2860 = vmatpush1.bf16.msra.mxu0 0
      %2861 = vmatprep.mubr.bf16.mxu0 0
      %2862 = vmatmul.mubr.bf16.gmra.mrb[0].mxu0 %v517
      %v2863 = vpop.f32.mrb[0].mxu0
      %v2864 = vadd.f32 %v2803, %v2863
      %v2865 = vpop.f32.mrb[0].mxu0
      %v2866 = vpop.f32.mrb[0].mxu0
      %v2867 = vadd.f32 %v2803, %v2866
      %v2868 = vpop.f32.mrb[0].mxu0
      %2869 = vmatprep.mubr.bf16.mxu0 0
      %2870 = vmatmul.mubr.bf16.gmra.mrb[0].mxu0 %v520
      %v2871 = vpop.f32.mrb[0].mxu0
      %v2872 = vadd.f32 %v2803, %v2871
      %v2873 = vpop.f32.mrb[0].mxu0
      %v2874 = vpop.f32.mrb[0].mxu0
      %v2875 = vadd.f32 %v2803, %v2874
      %v2876 = vpop.f32.mrb[0].mxu0
      %2877 = vmatprep.mubr.bf16.mxu0 0
      %2878 = vmatmul.mubr.bf16.gmra.mrb[0].mxu0 %v523
      %v2879 = vpop.f32.mrb[0].mxu0
      %v2880 = vadd.f32 %v2803, %v2879
      %v2881 = vpop.f32.mrb[0].mxu0
      %v2882 = vpop.f32.mrb[0].mxu0
      %v2883 = vadd.f32 %v2803, %v2882
      %v2884 = vpop.f32.mrb[0].mxu0
      %2885 = vmatprep.mubr.bf16.mxu0 0
      %2886 = vmatmul.mubr.bf16.gmra.mrb[0].mxu0 %v526
      %v2887 = vpop.f32.mrb[0].mxu0
      %v2888 = vadd.f32 %v2803, %v2887
      %v2889 = vpop.f32.mrb[0].mxu0
      %v2890 = vpop.f32.mrb[0].mxu0
      %v2891 = vadd.f32 %v2803, %v2890
      %v2892 = vpop.f32.mrb[0].mxu0
      %2893 = vmatprep.mubr.bf16.mxu0 0
      %2894 = vmatmul.mubr.bf16.gmra.mrb[0].mxu0 %v529
      %v2895 = vpop.f32.mrb[0].mxu0
      %v2896 = vadd.f32 %v2803, %v2895
      %v2897 = vpop.f32.mrb[0].mxu0
      %v2898 = vpop.f32.mrb[0].mxu0
      %v2899 = vadd.f32 %v2803, %v2898
      %v2900 = vpop.f32.mrb[0].mxu0
      %2901 = vmatprep.mubr.bf16.mxu0 0
      %2902 = vmatmul.mubr.bf16.gmra.mrb[0].mxu0 %v532
      %v2903 = vpop.f32.mrb[0].mxu0
      %v2904 = vadd.f32 %v2803, %v2903
      %v2905 = vpop.f32.mrb[0].mxu0
      %v2906 = vpop.f32.mrb[0].mxu0
      %v2907 = vadd.f32 %v2803, %v2906
      %v2908 = vpop.f32.mrb[0].mxu0
      %2909 = vmatprep.mubr.bf16.mxu0 0
      %2910 = vmatmul.mubr.bf16.gmra.mrb[0].mxu0 %v535
      %v2911 = vpop.f32.mrb[0].mxu0
      %v2912 = vadd.f32 %v2803, %v2911
      %v2913 = vpop.f32.mrb[0].mxu0
      %v2914 = vpop.f32.mrb[0].mxu0
      %v2915 = vadd.f32 %v2803, %v2914
      %v2916 = vpop.f32.mrb[0].mxu0
      %2917 = vmatprep.mubr.bf16.mxu0 0
      %2918 = vmatmul.mubr.bf16.gmra.mrb[0].mxu0 %v538
      %v2919 = vpop.f32.mrb[0].mxu0
      %v2920 = vadd.f32 %v2803, %v2919
      %v2921 = vpop.f32.mrb[0].mxu0
      %v2922 = vpop.f32.mrb[0].mxu0
      %v2923 = vadd.f32 %v2803, %v2922
      %v2924 = vpop.f32.mrb[0].mxu0
      %2925 = vdwg.mxu0
      %v2926 = vmul.f32 %v2588, 0.17677669
      %v2927 = vmul.f32 %v2591, 0.17677669
      %v2928 = vmul.f32 %v2596, 0.17677669
      %v2929 = vmul.f32 %v2599, 0.17677669
      %v2930 = vmul.f32 %v2604, 0.17677669
      %v2931 = vmul.f32 %v2607, 0.17677669
      %v2932 = vmul.f32 %v2612, 0.17677669
      %v2933 = vmul.f32 %v2615, 0.17677669
      %v2934 = vmul.f32 %v2620, 0.17677669
      %v2935 = vmul.f32 %v2623, 0.17677669
      %v2936 = vmul.f32 %v2628, 0.17677669
      %v2937 = vmul.f32 %v2631, 0.17677669
      %v2938 = vmul.f32 %v2636, 0.17677669
      %v2939 = vmul.f32 %v2639, 0.17677669
      %v2940 = vmul.f32 %v2644, 0.17677669
      %v2941 = vmul.f32 %v2647, 0.17677669
      %v2942 = vpack.c.bf16 %v2927, %v2926
      %v2943 = vpack.c.bf16 %v2929, %v2928
      %v2944 = vpack.c.bf16 %v2931, %v2930
      %v2945 = vpack.c.bf16 %v2933, %v2932
      %v2946 = vpack.c.bf16 %v2935, %v2934
      %v2947 = vpack.c.bf16 %v2937, %v2936
      %v2948 = vpack.c.bf16 %v2939, %v2938
      %v2949 = vpack.c.bf16 %v2941, %v2940
      %v2958 = vunpack.c.l.b16 %v2942
      %v2959 = vunpack.c.h.b16 %v2942
      %v2960 = vunpack.c.l.b16 %v2943
      %v2961 = vunpack.c.h.b16 %v2943
      %v2962 = vunpack.c.l.b16 %v2944
      %v2963 = vunpack.c.h.b16 %v2944
      %v2964 = vunpack.c.l.b16 %v2945
      %v2965 = vunpack.c.h.b16 %v2945
      %v2966 = vunpack.c.l.b16 %v2946
      %v2967 = vunpack.c.h.b16 %v2946
      %v2968 = vunpack.c.l.b16 %v2947
      %v2969 = vunpack.c.h.b16 %v2947
      %v2970 = vunpack.c.l.b16 %v2948
      %v2971 = vunpack.c.h.b16 %v2948
      %v2972 = vunpack.c.l.b16 %v2949
      %v2973 = vunpack.c.h.b16 %v2949
      %v2974 = vpack.c.b16 %v2958, %v2958
      %v2975 = vpack.c.b16 %v2959, %v2959
      %v2976 = vpack.c.b16 %v2960, %v2960
      %v2977 = vpack.c.b16 %v2961, %v2961
      %v2978 = vpack.c.b16 %v2962, %v2962
      %v2979 = vpack.c.b16 %v2963, %v2963
      %v2980 = vpack.c.b16 %v2964, %v2964
      %v2981 = vpack.c.b16 %v2965, %v2965
      %v2982 = vpack.c.b16 %v2966, %v2966
      %v2983 = vpack.c.b16 %v2967, %v2967
      %v2984 = vpack.c.b16 %v2968, %v2968
      %v2985 = vpack.c.b16 %v2969, %v2969
      %v2986 = vpack.c.b16 %v2970, %v2970
      %v2987 = vpack.c.b16 %v2971, %v2971
      %v2988 = vpack.c.b16 %v2972, %v2972
      %v2989 = vpack.c.b16 %v2973, %v2973
      %s3006 = scalar_lea.vmem %s397, 192
      %3007 = vst.msk [vmem:[%s3006] sm:$0xf] %vm989, %v2974
      %3008 = vst.msk [vmem:[%s3006 + $0x4] sm:$0xf] %vm989, %v2975
      %3009 = vst.msk [vmem:[%s3006 + $0x8] sm:$0xf] %vm989, %v2976
      %3010 = vst.msk [vmem:[%s3006 + $0xc] sm:$0xf] %vm989, %v2977
      %3011 = vst.msk [vmem:[%s3006 + $0x10] sm:$0xf] %vm989, %v2978
      %3012 = vst.msk [vmem:[%s3006 + $0x14] sm:$0xf] %vm989, %v2979
      %3013 = vst.msk [vmem:[%s3006 + $0x18] sm:$0xf] %vm989, %v2980
      %3014 = vst.msk [vmem:[%s3006 + $0x1c] sm:$0xf] %vm989, %v2981
      %3015 = vst.msk [vmem:[%s3006 + $0x20] sm:$0xf] %vm989, %v2982
      %3016 = vst.msk [vmem:[%s3006 + $0x24] sm:$0xf] %vm989, %v2983
      %3017 = vst.msk [vmem:[%s3006 + $0x28] sm:$0xf] %vm989, %v2984
      %3018 = vst.msk [vmem:[%s3006 + $0x2c] sm:$0xf] %vm989, %v2985
      %3019 = vst.msk [vmem:[%s3006 + $0x30] sm:$0xf] %vm989, %v2986
      %3020 = vst.msk [vmem:[%s3006 + $0x34] sm:$0xf] %vm989, %v2987
      %3021 = vst.msk [vmem:[%s3006 + $0x38] sm:$0xf] %vm989, %v2988
      %3022 = vst.msk [vmem:[%s3006 + $0x3c] sm:$0xf] %vm989, %v2989
      %v3023 = vpack.c.bf16 %v2729, %v2726
      %v3024 = vpack.c.bf16 %v2737, %v2734
      %v3025 = vpack.c.bf16 %v2745, %v2742
      %v3026 = vpack.c.bf16 %v2753, %v2750
      %v3027 = vpack.c.bf16 %v2761, %v2758
      %v3028 = vpack.c.bf16 %v2769, %v2766
      %v3029 = vpack.c.bf16 %v2777, %v2774
      %v3030 = vpack.c.bf16 %v2785, %v2782
      %v3039 = vunpack.c.l.b16 %v3023
      %v3040 = vunpack.c.h.b16 %v3023
      %v3041 = vunpack.c.l.b16 %v3024
      %v3042 = vunpack.c.h.b16 %v3024
      %v3043 = vunpack.c.l.b16 %v3025
      %v3044 = vunpack.c.h.b16 %v3025
      %v3045 = vunpack.c.l.b16 %v3026
      %v3046 = vunpack.c.h.b16 %v3026
      %v3047 = vunpack.c.l.b16 %v3027
      %v3048 = vunpack.c.h.b16 %v3027
      %v3049 = vunpack.c.l.b16 %v3028
      %v3050 = vunpack.c.h.b16 %v3028
      %v3051 = vunpack.c.l.b16 %v3029
      %v3052 = vunpack.c.h.b16 %v3029
      %v3053 = vunpack.c.l.b16 %v3030
      %v3054 = vunpack.c.h.b16 %v3030
      %v3055 = vpack.c.b16 %v3039, %v3039
      %v3056 = vpack.c.b16 %v3040, %v3040
      %v3057 = vpack.c.b16 %v3041, %v3041
      %v3058 = vpack.c.b16 %v3042, %v3042
      %v3059 = vpack.c.b16 %v3043, %v3043
      %v3060 = vpack.c.b16 %v3044, %v3044
      %v3061 = vpack.c.b16 %v3045, %v3045
      %v3062 = vpack.c.b16 %v3046, %v3046
      %v3063 = vpack.c.b16 %v3047, %v3047
      %v3064 = vpack.c.b16 %v3048, %v3048
      %v3065 = vpack.c.b16 %v3049, %v3049
      %v3066 = vpack.c.b16 %v3050, %v3050
      %v3067 = vpack.c.b16 %v3051, %v3051
      %v3068 = vpack.c.b16 %v3052, %v3052
      %v3069 = vpack.c.b16 %v3053, %v3053
      %v3070 = vpack.c.b16 %v3054, %v3054
      %s3087 = scalar_lea.vmem %s407, 192
      %3088 = vst.msk [vmem:[%s3087] sm:$0xf] %vm989, %v3055
      %3089 = vst.msk [vmem:[%s3087 + $0x4] sm:$0xf] %vm989, %v3056
      %3090 = vst.msk [vmem:[%s3087 + $0x8] sm:$0xf] %vm989, %v3057
      %3091 = vst.msk [vmem:[%s3087 + $0xc] sm:$0xf] %vm989, %v3058
      %3092 = vst.msk [vmem:[%s3087 + $0x10] sm:$0xf] %vm989, %v3059
      %3093 = vst.msk [vmem:[%s3087 + $0x14] sm:$0xf] %vm989, %v3060
      %3094 = vst.msk [vmem:[%s3087 + $0x18] sm:$0xf] %vm989, %v3061
      %3095 = vst.msk [vmem:[%s3087 + $0x1c] sm:$0xf] %vm989, %v3062
      %3096 = vst.msk [vmem:[%s3087 + $0x20] sm:$0xf] %vm989, %v3063
      %3097 = vst.msk [vmem:[%s3087 + $0x24] sm:$0xf] %vm989, %v3064
      %3098 = vst.msk [vmem:[%s3087 + $0x28] sm:$0xf] %vm989, %v3065
      %3099 = vst.msk [vmem:[%s3087 + $0x2c] sm:$0xf] %vm989, %v3066
      %3100 = vst.msk [vmem:[%s3087 + $0x30] sm:$0xf] %vm989, %v3067
      %3101 = vst.msk [vmem:[%s3087 + $0x34] sm:$0xf] %vm989, %v3068
      %3102 = vst.msk [vmem:[%s3087 + $0x38] sm:$0xf] %vm989, %v3069
      %3103 = vst.msk [vmem:[%s3087 + $0x3c] sm:$0xf] %vm989, %v3070
      %v3104 = vpack.c.bf16 %v2867, %v2864
      %v3105 = vpack.c.bf16 %v2875, %v2872
      %v3106 = vpack.c.bf16 %v2883, %v2880
      %v3107 = vpack.c.bf16 %v2891, %v2888
      %v3108 = vpack.c.bf16 %v2899, %v2896
      %v3109 = vpack.c.bf16 %v2907, %v2904
      %v3110 = vpack.c.bf16 %v2915, %v2912
      %v3111 = vpack.c.bf16 %v2923, %v2920
      %v3120 = vunpack.c.l.b16 %v3104
      %v3121 = vunpack.c.h.b16 %v3104
      %v3122 = vunpack.c.l.b16 %v3105
      %v3123 = vunpack.c.h.b16 %v3105
      %v3124 = vunpack.c.l.b16 %v3106
      %v3125 = vunpack.c.h.b16 %v3106
      %v3126 = vunpack.c.l.b16 %v3107
      %v3127 = vunpack.c.h.b16 %v3107
      %v3128 = vunpack.c.l.b16 %v3108
      %v3129 = vunpack.c.h.b16 %v3108
      %v3130 = vunpack.c.l.b16 %v3109
      %v3131 = vunpack.c.h.b16 %v3109
      %v3132 = vunpack.c.l.b16 %v3110
      %v3133 = vunpack.c.h.b16 %v3110
      %v3134 = vunpack.c.l.b16 %v3111
      %v3135 = vunpack.c.h.b16 %v3111
      %v3136 = vpack.c.b16 %v3120, %v3120
      %v3137 = vpack.c.b16 %v3121, %v3121
      %v3138 = vpack.c.b16 %v3122, %v3122
      %v3139 = vpack.c.b16 %v3123, %v3123
      %v3140 = vpack.c.b16 %v3124, %v3124
      %v3141 = vpack.c.b16 %v3125, %v3125
      %v3142 = vpack.c.b16 %v3126, %v3126
      %v3143 = vpack.c.b16 %v3127, %v3127
      %v3144 = vpack.c.b16 %v3128, %v3128
      %v3145 = vpack.c.b16 %v3129, %v3129
      %v3146 = vpack.c.b16 %v3130, %v3130
      %v3147 = vpack.c.b16 %v3131, %v3131
      %v3148 = vpack.c.b16 %v3132, %v3132
      %v3149 = vpack.c.b16 %v3133, %v3133
      %v3150 = vpack.c.b16 %v3134, %v3134
      %v3151 = vpack.c.b16 %v3135, %v3135
      %s3168 = scalar_lea.vmem %s417, 192
      %3169 = vst.msk [vmem:[%s3168] sm:$0xf] %vm989, %v3136
      %3170 = vst.msk [vmem:[%s3168 + $0x4] sm:$0xf] %vm989, %v3137
      %3171 = vst.msk [vmem:[%s3168 + $0x8] sm:$0xf] %vm989, %v3138
      %3172 = vst.msk [vmem:[%s3168 + $0xc] sm:$0xf] %vm989, %v3139
      %3173 = vst.msk [vmem:[%s3168 + $0x10] sm:$0xf] %vm989, %v3140
      %3174 = vst.msk [vmem:[%s3168 + $0x14] sm:$0xf] %vm989, %v3141
      %3175 = vst.msk [vmem:[%s3168 + $0x18] sm:$0xf] %vm989, %v3142
      %3176 = vst.msk [vmem:[%s3168 + $0x1c] sm:$0xf] %vm989, %v3143
      %3177 = vst.msk [vmem:[%s3168 + $0x20] sm:$0xf] %vm989, %v3144
      %3178 = vst.msk [vmem:[%s3168 + $0x24] sm:$0xf] %vm989, %v3145
      %3179 = vst.msk [vmem:[%s3168 + $0x28] sm:$0xf] %vm989, %v3146
      %3180 = vst.msk [vmem:[%s3168 + $0x2c] sm:$0xf] %vm989, %v3147
      %3181 = vst.msk [vmem:[%s3168 + $0x30] sm:$0xf] %vm989, %v3148
      %3182 = vst.msk [vmem:[%s3168 + $0x34] sm:$0xf] %vm989, %v3149
      %3183 = vst.msk [vmem:[%s3168 + $0x38] sm:$0xf] %vm989, %v3150
      %3184 = vst.msk [vmem:[%s3168 + $0x3c] sm:$0xf] %vm989, %v3151
      %s3185 = smul.u32 16, %s26
      %p3186 = scmp.lt.s32.totalorder %s25, 1
      %s3187 = scalar_select %p3186, %s25, 1
      %p3188 = scmp.lt.s32.totalorder %s3185, 15
      %s3189 = scalar_select %p3188, %s3185, 15
      %s3190 = smul.addr %s3187, 64
      %s3191 = sadd.s32 %s3189, %s3190
      %s3192 = smul.addr %s3191, 4
      %s3193 = scalar_lea.vmem %s7, %s3192
      %s3194 = smul.u32 16, %s26
      %p3195 = scmp.lt.s32.totalorder %s25, 1
      %s3196 = scalar_select %p3195, %s25, 1
      %p3197 = scmp.lt.s32.totalorder %s3194, 15
      %s3198 = scalar_select %p3197, %s3194, 15
      %s3199 = smul.addr %s3196, 64
      %s3200 = sadd.s32 %s3198, %s3199
      %s3201 = smul.addr %s3200, 4
      %s3202 = scalar_lea.vmem %s8, %s3201
      %s3203 = smul.u32 16, %s26
      %p3204 = scmp.lt.s32.totalorder %s25, 1
      %s3205 = scalar_select %p3204, %s25, 1
      %p3206 = scmp.lt.s32.totalorder %s3203, 15
      %s3207 = scalar_select %p3206, %s3203, 15
      %s3208 = smul.addr %s3205, 64
      %s3209 = sadd.s32 %s3207, %s3208
      %s3210 = smul.addr %s3209, 4
      %s3211 = scalar_lea.vmem %s9, %s3210
      // Predicated region
      $region49: #{multihead_attention.2} parent=47 // pred_check
        %p3212 = pneg %p207
      $region50: #{multihead_attention.2} parent=47 // pred_check_branch
        %3214 = sbr.rel (%p3212) target = $region52
      $region51: #{multihead_attention.2} parent=47 // pred_region
        %s3215 = smul.u32 16, %s26
      $region52: #{multihead_attention.2} parent=47 // pred_fallthru
        _
      // Predicated region
      $region53: #{multihead_attention.2} parent=47 // pred_check
        %p3216 = pneg %p235
      $region54: #{multihead_attention.2} parent=47 // pred_check_branch
        %3218 = sbr.rel (%p3216) target = $region56
      $region55: #{multihead_attention.2} parent=47 // pred_region
        %s3219 = smul.u32 16, %s26
      $region56: #{multihead_attention.2} parent=47 // pred_fallthru
        _
      // Predicated region
      $region57: #{multihead_attention.2} parent=47 // pred_check
        %p3220 = pneg %p263
      $region58: #{multihead_attention.2} parent=47 // pred_check_branch
        %3222 = sbr.rel (%p3220) target = $region60
      $region59: #{multihead_attention.2} parent=47 // pred_region
        %s3223 = smul.u32 16, %s26
      $region60: #{multihead_attention.2} parent=47 // pred_fallthru
        _
    $region48: #{multihead_attention.2} parent=5 // pred_fallthru
      _
    %p3224 = scmp.le.s32.totalorder 2, %s16
    // Predicated region
    $region61: #{multihead_attention.2} parent=5 // pred_check
      %p3225 = pneg %p3224
    $region62: #{multihead_attention.2} parent=5 // pred_check_branch
      %3227 = sbr.rel (%p3225) target = $region64
    $region63: #{multihead_attention.2} parent=5 // pred_region
      %s3228 = ssub.s32 %s16, 2
      // Predicated region
      $region65: #{multihead_attention.2} parent=63 // pred_check
        %p3229 = pneg %p213
      $region66: #{multihead_attention.2} parent=63 // pred_check_branch
        %3231 = sbr.rel (%p3229) target = $region68
      $region67: #{multihead_attention.2} parent=63 // pred_region
        %s3232 = smul.u32 16, %s28
        %p3233 = scmp.lt.s32.totalorder %s27, 1
        %s3234 = scalar_select %p3233, %s27, 1
        %p3235 = scmp.lt.s32.totalorder %s3232, 15
        %s3236 = scalar_select %p3235, %s3232, 15
        %s3237 = smul.addr %s3234, 64
        %s3238 = sadd.s32 %s3236, %s3237
        %s3239 = smul.addr %s3238, 4
        %s3240 = scalar_lea.vmem %s7, %s3239
      $region68: #{multihead_attention.2} parent=63 // pred_fallthru
        _
      // Predicated region
      $region69: #{multihead_attention.2} parent=63 // pred_check
        %p3241 = pneg %p241
      $region70: #{multihead_attention.2} parent=63 // pred_check_branch
        %3243 = sbr.rel (%p3241) target = $region72
      $region71: #{multihead_attention.2} parent=63 // pred_region
        %s3244 = smul.u32 16, %s28
        %p3245 = scmp.lt.s32.totalorder %s27, 1
        %s3246 = scalar_select %p3245, %s27, 1
        %p3247 = scmp.lt.s32.totalorder %s3244, 15
        %s3248 = scalar_select %p3247, %s3244, 15
        %s3249 = smul.addr %s3246, 64
        %s3250 = sadd.s32 %s3248, %s3249
        %s3251 = smul.addr %s3250, 4
        %s3252 = scalar_lea.vmem %s8, %s3251
      $region72: #{multihead_attention.2} parent=63 // pred_fallthru
        _
      // Predicated region
      $region73: #{multihead_attention.2} parent=63 // pred_check
        %p3253 = pneg %p269
      $region74: #{multihead_attention.2} parent=63 // pred_check_branch
        %3255 = sbr.rel (%p3253) target = $region76
      $region75: #{multihead_attention.2} parent=63 // pred_region
        %s3256 = smul.u32 16, %s28
        %p3257 = scmp.lt.s32.totalorder %s27, 1
        %s3258 = scalar_select %p3257, %s27, 1
        %p3259 = scmp.lt.s32.totalorder %s3256, 15
        %s3260 = scalar_select %p3259, %s3256, 15
        %s3261 = smul.addr %s3258, 64
        %s3262 = sadd.s32 %s3260, %s3261
        %s3263 = smul.addr %s3262, 4
        %s3264 = scalar_lea.vmem %s9, %s3263
      $region76: #{multihead_attention.2} parent=63 // pred_fallthru
        _
    $region64: #{multihead_attention.2} parent=5 // pred_fallthru
      _
  $region6: #{multihead_attention.2} parent=0 // loop_footer
    %s20 = sadd.s32 1, %s16
  $region7: #{multihead_attention.2} parent=0 // loop_footer_branch
    %15 = sbr.rel target = $region3
  $region8: #{multihead_attention.2} parent=0 // loop_exit
    _

</llo_original>
